<compile_context>
chip_gen: v5e
topology: v5e:2x2
jax: 0.10.0
libtpu: 0.0.40
codegen_flags: <defaults>
</compile_context>

<pallas_src>
import functools

import jax
import jax.numpy as jnp
from jax.experimental import pallas as pl
from jax.experimental.pallas import tpu as pltpu

LANE = 128
CP = 128                       # padded channel width (lane-dense activations)
VMEM_LIMIT = 32 * 1024 * 1024  # fits v5e/v6e (128 MiB) and v7x (64 MiB) comfortably
BN_EPS = 1e-5


def _round_up(x, m):
    return ((x + m - 1) // m) * m


def _compiler_params():
    return pltpu.CompilerParams(
        dimension_semantics=("parallel",),   # grid is over batch (>=2 steps)
        vmem_limit_bytes=VMEM_LIMIT,
    )


# ------------------------------------------------------------------ layer0 7x7 conv
def _conv0_kernel(p_ref, w_ref, t_ref, o_ref):
    # One image's im2col patch matrix x lane-dense weight; conv bias added as shift.
    acc = jnp.dot(p_ref[0], w_ref[...], preferred_element_type=jnp.float32)
    o_ref[0] = (acc + t_ref[...]).astype(o_ref.dtype)


def conv0_pallas(x, w, b, *, stride, padding):
    """7x7/s2 conv: wrapper im2col (K padded to a 128 multiple) + per-batch MXU matmul.
    Output: (N, OH, OW, CP) bf16 NHWC, channels zero-padded to 128 lanes.
    TODO(synk): at realistic resolutions replace the HBM im2col with implicit in-kernel
    im2col (halo BlockSpec) and fuse the 3x3/s2 maxpool+ReLU into the same kernel."""
    n, h, wd, cin = x.shape
    kh, kw, _, cout = w.shape
    oh = (h + 2 * padding - kh) // stride + 1
    ow = (wd + 2 * padding - kw) // stride + 1
    xp = jnp.pad(x, ((0, 0), (padding, padding), (padding, padding), (0, 0)))
    views = []
    for i in range(kh):
        for j in range(kw):
            views.append(xp[:, i:i + stride * oh:stride, j:j + stride * ow:stride, :])
    k = kh * kw * cin
    kpad = _round_up(k, LANE)
    m = oh * ow
    patches = jnp.stack(views, axis=3).reshape(n, m, k)
    patches = jnp.pad(patches, ((0, 0), (0, 0), (0, kpad - k))).astype(jnp.bfloat16)
    wf = jnp.pad(w.reshape(k, cout).astype(jnp.float32),
                 ((0, kpad - k), (0, CP - cout))).astype(jnp.bfloat16)
    t = jnp.pad(b.astype(jnp.float32), (0, CP - cout)).reshape(1, CP)
    out = pl.pallas_call(
        _conv0_kernel,
        grid=(n,),
        in_specs=[
            pl.BlockSpec((1, m, kpad), lambda i: (i, 0, 0)),   # patches: streamed
            pl.BlockSpec((kpad, CP), lambda i: (0, 0)),        # weights: VMEM-resident
            pl.BlockSpec((1, CP), lambda i: (0, 0)),
        ],
        out_specs=pl.BlockSpec((1, m, CP), lambda i: (i, 0, 0)),
        out_shape=jax.ShapeDtypeStruct((n, m, CP), jnp.bfloat16),
        compiler_params=_compiler_params(),
        cost_estimate=pl.CostEstimate(
            flops=2 * n * m * kpad * CP, transcendentals=0,
            bytes_accessed=n * m * kpad * 2 + kpad * CP * 2 + n * m * CP * 2),
    )(patches, wf, t)
    return out.reshape(n, oh, ow, CP)


def maxpool2d_relu(x, *, kernel, stride, padding):
    """MaxPool (-inf padding, PyTorch semantics) + ReLU as pairwise maxima in plain JAX
    on the bf16, 128-lane-padded activation (padded lanes stay exactly 0)."""
    n, h, w, c = x.shape
    oh = (h + 2 * padding - kernel) // stride + 1
    ow = (w + 2 * padding - kernel) // stride + 1
    xp = jnp.pad(x, ((0, 0), (padding, padding), (padding, padding), (0, 0)),
                 constant_values=-jnp.inf)
    out = None
    for i in range(kernel):
        for j in range(kernel):
            v = xp[:, i:i + stride * oh:stride, j:j + stride * ow:stride, :]
            out = v if out is None else jnp.maximum(out, v)
    return jnp.maximum(out, 0.0).astype(x.dtype)


# ------------------------------------------------------------ fused resblock kernel
def _resblock_kernel(x_ref, w1_ref, t1_ref, w2_ref, t2_ref, o_ref, hpad_ref, r_ref,
                     *, H, W):
    """One whole resblock for one image:
         h = ReLU(BN1(conv1(x)))      (BN scale folded into w1 columns 0:128)
         r = shortcut(x)              (1x1 proj + BN or identity; columns 128:256
                                        of the concatenated center-tap weight)
         out = ReLU(BN2(conv2(h)) + r)
       h and r live only in VMEM scratch -- no HBM round trip between the convs."""
    xv = x_ref[0]                                   # (H+2, W+2, CP) bf16, read once
    hpad_ref[...] = jnp.zeros_like(hpad_ref)        # zero halo for conv2
    # conv1 + shortcut projection: one 256-wide matmul per tap per output row.
    for y in range(H):
        acc = jnp.zeros((W, 2 * CP), jnp.float32)
        for di in range(3):
            for dj in range(3):
                win = xv[y + di, dj:dj + W, :]                         # (W, CP) bf16
                acc = acc + jnp.dot(win, w1_ref[di * 3 + dj],
                                    preferred_element_type=jnp.float32)
        acc = acc + t1_ref[...]
        hpad_ref[y + 1, 1:W + 1, :] = jnp.maximum(acc[:, :CP], 0.0)    # h (f32 scratch)
        r_ref[y] = acc[:, CP:]                                          # shortcut
    # conv2 + BN2 + residual add + final ReLU.
    for y in range(H):
        acc2 = jnp.zeros((W, CP), jnp.float32)
        for di in range(3):
            hrow = hpad_ref[y + di]                                     # (W+2, CP) f32
            for dj in range(3):
                acc2 = acc2 + jnp.dot(hrow[dj:dj + W, :].astype(jnp.bfloat16),
                                      w2_ref[di * 3 + dj],
                                      preferred_element_type=jnp.float32)
        o_ref[0, y] = jnp.maximum(acc2 + t2_ref[...] + r_ref[y], 0.0).astype(o_ref.dtype)


def resblock_pallas(x, p):
    """x: (N, H, W, CP) bf16 with channels padded to 128 lanes (padded lanes exactly 0).
    Returns the same layout; padded lanes stay 0 because all padded weight/shift
    entries are 0."""
    n, h, w, _ = x.shape
    xp = jnp.pad(x, ((0, 0), (1, 1), (1, 1), (0, 0)))     # spatial halo for conv1
    flops = 2 * n * h * w * 9 * CP * 3 * CP               # conv1+proj (2*CP) + conv2 (CP)
    # TODO(synk): for large H*W, tile the grid over output-row bands with a 1-row halo
    # (instead of whole images) so the per-step block keeps fitting v7x's 64 MiB VMEM.
    return pl.pallas_call(
        functools.partial(_resblock_kernel, H=h, W=w),
        grid=(n,),
        in_specs=[
            pl.BlockSpec((1, h + 2, w + 2, CP), lambda i: (i, 0, 0, 0)),  # x: streamed
            pl.BlockSpec((9, CP, 2 * CP), lambda i: (0, 0, 0)),   # conv1|proj weights
            pl.BlockSpec((1, 2 * CP), lambda i: (0, 0)),
            pl.BlockSpec((9, CP, CP), lambda i: (0, 0, 0)),       # conv2 weights
            pl.BlockSpec((1, CP), lambda i: (0, 0)),
        ],
        out_specs=pl.BlockSpec((1, h, w, CP), lambda i: (i, 0, 0, 0)),
        out_shape=jax.ShapeDtypeStruct((n, h, w, CP), jnp.bfloat16),
        scratch_shapes=[
            pltpu.VMEM((h + 2, w + 2, CP), jnp.float32),   # h with conv2 halo
            pltpu.VMEM((h, w, CP), jnp.float32),           # shortcut r
        ],
        compiler_params=_compiler_params(),
        cost_estimate=pl.CostEstimate(
            flops=flops, transcendentals=0,
            bytes_accessed=(n * (h + 2) * (w + 2) * CP * 2 + 9 * CP * 3 * CP * 2
                            + n * h * w * CP * 2)),
    )(xp, p["w1cat"], p["t1cat"], p["w2p"], p["t2p"])


# ---------------------------------------------------------------- parameter building
def _make_conv(key, kh, kw, cin, cout):
    kw_, kb = jax.random.split(key)
    fan_in = kh * kw * cin
    w = (jax.random.normal(kw_, (kh, kw, cin, cout)) / jnp.sqrt(fan_in)).astype(jnp.float32)
    b = (0.1 * jax.random.normal(kb, (cout,))).astype(jnp.float32)
    return w, b


def _make_bn(key, c):
    k1, k2, k3, k4 = jax.random.split(key, 4)
    gamma = 1.0 + 0.1 * jax.random.normal(k1, (c,))
    beta = 0.1 * jax.random.normal(k2, (c,))
    mean = 0.1 * jax.random.normal(k3, (c,))
    var = 1.0 + 0.1 * jax.random.uniform(k4, (c,))
    return gamma, beta, mean, var


def _fold_bn(bias, gamma, beta, mean, var):
    """BN(conv(x)+bias) == conv(x)*s + t; s gets folded into the weight columns."""
    s = gamma / jnp.sqrt(var + BN_EPS)
    t = (bias - mean) * s + beta
    return s.astype(jnp.float32), t.astype(jnp.float32)


def make_resblock_params(key, cin, cout):
    """Folded (inference-mode BN), channel-padded bf16 weights for the fused kernel,
    plus f32 unpadded copies for the pure-JAX reference path."""
    assert cin <= CP and cout <= CP
    k0, k1, k2 = jax.random.split(key, 3)
    w1, b1 = _make_conv(k0, 3, 3, cin, cout)
    w2, b2 = _make_conv(k1, 3, 3, cout, cout)
    s1, t1 = _fold_bn(b1, *_make_bn(jax.random.fold_in(k0, 1), cout))
    s2, t2 = _fold_bn(b2, *_make_bn(jax.random.fold_in(k1, 1), cout))
    w1f = w1 * s1                      # fold BN scale into output columns
    w2f = w2 * s2
    if cin != cout:                    # 1x1 conv + BN projection shortcut
        wp, bp = _make_conv(k2, 1, 1, cin, cout)
        sp, tp = _fold_bn(bp, *_make_bn(jax.random.fold_in(k2, 1), cout))
        wpf = wp.reshape(cin, cout) * sp
        ref_wp, ref_tp = wpf, tp
    else:                              # identity shortcut
        wpf = jnp.eye(cin, cout, dtype=jnp.float32)
        tp = jnp.zeros((cout,), jnp.float32)
        ref_wp, ref_tp = None, None
    center = 4                          # tap (1,1) of the 3x3 window
    w1cat = jnp.zeros((9, CP, 2 * CP), jnp.float32)
    w1cat = w1cat.at[:, :cin, :cout].set(w1f.reshape(9, cin, cout))
    w1cat = w1cat.at[center, :cin, CP:CP + cout].set(wpf)
    t1cat = jnp.zeros((1, 2 * CP), jnp.float32)
    t1cat = t1cat.at[0, :cout].set(t1).at[0, CP:CP + cout].set(tp)
    w2p = jnp.zeros((9, CP, CP), jnp.float32).at[:, :cout, :cout].set(
        w2f.reshape(9, cout, cout))
    t2p = jnp.zeros((1, CP), jnp.float32).at[0, :cout].set(t2)
    return {
        "w1cat": w1cat.astype(jnp.bfloat16), "t1cat": t1cat,
        "w2p": w2p.astype(jnp.bfloat16), "t2p": t2p,
        # f32 reference copies (BN folded identically).
        "ref_w1": w1f, "ref_t1": t1, "ref_w2": w2f, "ref_t2": t2,
        "ref_wp": ref_wp, "ref_tp": ref_tp,
    }


def make_enricher_params(key, in_channels, repeat0):
    filters = [64, 10, 10, 128, 128]          # useBottleneck=False
    ks = jax.random.split(key, 1 + repeat0)
    params = {}
    params["l0_w"], params["l0_b"] = _make_conv(ks[0], 7, 7, in_channels, 64)
    blocks = [make_resblock_params(ks[1], filters[0], filters[1])]
    for i in range(1, repeat0):
        blocks.append(make_resblock_params(ks[1 + i], filters[1], filters[1]))
    params["layer1"] = blocks
    return params


# ---------------------------------------------------------------------------- forward
@jax.jit
def enricher_forward(x_nchw, params):
    """EnricherCNN.forward: layer1(layer0(x)); NCHW in, NCHW out."""
    num_out = params["layer1"][-1]["ref_t2"].shape[0]
    x = jnp.transpose(x_nchw, (0, 2, 3, 1)).astype(jnp.float32)     # -> NHWC
    x = conv0_pallas(x, params["l0_w"], params["l0_b"], stride=2, padding=3)
    x = maxpool2d_relu(x, kernel=3, stride=2, padding=1)            # bf16, 128-lane padded
    for p in params["layer1"]:
        x = resblock_pallas(x, p)                                   # one fused call each
    return jnp.transpose(x[..., :num_out].astype(jnp.float32), (0, 3, 1, 2))


# -------------------------------------------------- pure-JAX f32 reference (self-check)
def _ref_conv(x, w, b, stride, padding):
    out = jax.lax.conv_general_dilated(
        x, w, window_strides=(stride, stride),
        padding=[(padding, padding), (padding, padding)],
        dimension_numbers=("NHWC", "HWIO", "NHWC"))
    return out + b


def _ref_resblock(x, p):
    h = jax.nn.relu(_ref_conv(x, p["ref_w1"], p["ref_t1"], 1, 1))
    y = _ref_conv(h, p["ref_w2"], p["ref_t2"], 1, 1)
    if p["ref_wp"] is not None:
        sc = jnp.einsum("nhwc,cd->nhwd", x, p["ref_wp"]) + p["ref_tp"]
    else:
        sc = x
    return jax.nn.relu(y + sc)


def reference_forward(x_nchw, params):
    x = jnp.transpose(x_nchw, (0, 2, 3, 1)).astype(jnp.float32)
    x = _ref_conv(x, params["l0_w"], params["l0_b"], 2, 3)
    x = jax.lax.reduce_window(x, -jnp.inf, jax.lax.max,
                              (1, 3, 3, 1), (1, 2, 2, 1),
                              [(0, 0), (1, 1), (1, 1), (0, 0)])
    x = jax.nn.relu(x)
    for p in params["layer1"]:
        x = _ref_resblock(x, p)
    return jnp.transpose(x, (0, 3, 1, 2))


if __name__ == "__main__":
    key = jax.random.PRNGKey(0)
    kx, kp = jax.random.split(key)
    x = jax.random.normal(kx, (2, 4, 16, 16), dtype=jnp.float32)    # NCHW
    params = make_enricher_params(kp, in_channels=4, repeat0=2)     # repeat=[2,2,2,2]
    out = jax.block_until_ready(enricher_forward(x, params))
    assert out.shape == (2, 10, 4, 4), out.shape
    assert bool(jnp.all(jnp.isfinite(out)))
    # Loose-tolerance parity vs an f32 pure-JAX reference (bf16 MXU inputs diverge from
    # exact f32 at the ~1e-2 level, so we check relative L2 error, not exact equality).
    ref = reference_forward(x, params)
    rel = float(jnp.linalg.norm(out - ref) / (jnp.linalg.norm(ref) + 1e-12))
    assert rel < 0.05, f"relative L2 error vs reference too large: {rel}"
    print("KERNEL_OK")
</pallas_src>

<mosaic_0001>
module attributes {stable_mosaic.version = 11 : i64} {
  func.func @_conv0_kernel(%arg0: i32, %arg1: memref<1x64x256xbf16, #tpu.memory_space<vmem>>, %arg2: memref<256x128xbf16, #tpu.memory_space<vmem>>, %arg3: memref<1x128xf32, #tpu.memory_space<vmem>>, %arg4: memref<1x64x128xbf16, #tpu.memory_space<vmem>>) attributes {dimension_semantics = [#tpu.dimension_semantics<parallel>], iteration_bounds = array<i64: 2>, scalar_prefetch = 0 : i64, scratch_operands = 0 : i64, tpu.core_type = #tpu.core_type<tc>, window_params = [{transform_indices = @transform_0, window_bounds = array<i64: 1, 64, 256>}, {pipeline_mode = #tpu.pipeline_mode<synchronous>, transform_indices = @transform_1, window_bounds = array<i64: 256, 128>}, {pipeline_mode = #tpu.pipeline_mode<synchronous>, transform_indices = @transform_2, window_bounds = array<i64: 1, 128>}, {transform_indices = @transform_3, window_bounds = array<i64: 1, 64, 128>}]} {
    %c0 = arith.constant 0 : index
    %c0_0 = arith.constant 0 : index
    %c0_1 = arith.constant 0 : index
    %0 = vector.load %arg1[%c0, %c0_0, %c0_1] : memref<1x64x256xbf16, #tpu.memory_space<vmem>>, vector<1x64x256xbf16>
    %1 = vector.shape_cast %0 : vector<1x64x256xbf16> to vector<64x256xbf16>
    %c0_2 = arith.constant 0 : index
    %c0_3 = arith.constant 0 : index
    %2 = vector.load %arg2[%c0_2, %c0_3] : memref<256x128xbf16, #tpu.memory_space<vmem>>, vector<256x128xbf16>
    %cst = arith.constant dense<0.000000e+00> : vector<64x128xf32>
    %3 = tpu.matmul %1, %2, %cst {dimension_numbers = #tpu.dot_dimension_numbers<[1], [0], [0], [1], [0, 0, 1, 1], [], []>} : vector<64x256xbf16>, vector<256x128xbf16>, vector<64x128xf32> -> vector<64x128xf32>
    %c0_4 = arith.constant 0 : index
    %c0_5 = arith.constant 0 : index
    %4 = vector.load %arg3[%c0_4, %c0_5] : memref<1x128xf32, #tpu.memory_space<vmem>>, vector<1x128xf32>
    %5 = vector.broadcast %4 : vector<1x128xf32> to vector<64x128xf32>
    %6 = arith.addf %3, %5 : vector<64x128xf32>
    %7 = arith.truncf %6 : vector<64x128xf32> to vector<64x128xbf16>
    %c0_6 = arith.constant 0 : index
    %c0_7 = arith.constant 0 : index
    %c0_8 = arith.constant 0 : index
    %8 = vector.load %arg4[%c0_6, %c0_7, %c0_8] : memref<1x64x128xbf16, #tpu.memory_space<vmem>>, vector<1x64x128xbf16>
    %9 = vector.shape_cast %8 : vector<1x64x128xbf16> to vector<64x128xbf16>
    %10 = vector.shape_cast %7 : vector<64x128xbf16> to vector<1x64x128xbf16>
    tpu.vector_store %arg4[%c0_6, %c0_7, %c0_8], %10 {strides = array<i32>} : memref<1x64x128xbf16, #tpu.memory_space<vmem>>, vector<1x64x128xbf16>,
    return
  }
  func.func @transform_0(%arg0: i32) -> (i32, i32, i32) {
    %c0_i32 = arith.constant 0 : i32
    %c0_i32_0 = arith.constant 0 : i32
    %c0_i32_1 = arith.constant 0 : i32
    return %arg0, %c0_i32, %c0_i32_0 : i32, i32, i32
  }
  func.func @transform_1(%arg0: i32) -> (i32, i32) {
    %c0_i32 = arith.constant 0 : i32
    %c0_i32_0 = arith.constant 0 : i32
    %c0_i32_1 = arith.constant 0 : i32
    return %c0_i32, %c0_i32_0 : i32, i32
  }
  func.func @transform_2(%arg0: i32) -> (i32, i32) {
    %c0_i32 = arith.constant 0 : i32
    %c0_i32_0 = arith.constant 0 : i32
    %c0_i32_1 = arith.constant 0 : i32
    return %c0_i32, %c0_i32_0 : i32, i32
  }
  func.func @transform_3(%arg0: i32) -> (i32, i32, i32) {
    %c0_i32 = arith.constant 0 : i32
    %c0_i32_0 = arith.constant 0 : i32
    %c0_i32_1 = arith.constant 0 : i32
    return %arg0, %c0_i32, %c0_i32_0 : i32, i32, i32
  }
}

module attributes {stable_mosaic.version = 11 : i64} {
  func.func @_resblock_kernel(%arg0: i32, %arg1: memref<1x6x6x128xbf16, #tpu.memory_space<vmem>>, %arg2: memref<9x128x256xbf16, #tpu.memory_space<vmem>>, %arg3: memref<1x256xf32, #tpu.memory_space<vmem>>, %arg4: memref<9x128x128xbf16, #tpu.memory_space<vmem>>, %arg5: memref<1x128xf32, #tpu.memory_space<vmem>>, %arg6: memref<1x4x4x128xbf16, #tpu.memory_space<vmem>>, %arg7: memref<6x6x128xf32, #tpu.memory_space<vmem>>, %arg8: memref<4x4x128xf32, #tpu.memory_space<vmem>>) attributes {dimension_semantics = [#tpu.dimension_semantics<parallel>], iteration_bounds = array<i64: 2>, scalar_prefetch = 0 : i64, scratch_operands = 2 : i64, tpu.core_type = #tpu.core_type<tc>, window_params = [{transform_indices = @transform_0, window_bounds = array<i64: 1, 6, 6, 128>}, {pipeline_mode = #tpu.pipeline_mode<synchronous>, transform_indices = @transform_1, window_bounds = array<i64: 9, 128, 256>}, {pipeline_mode = #tpu.pipeline_mode<synchronous>, transform_indices = @transform_2, window_bounds = array<i64: 1, 256>}, {pipeline_mode = #tpu.pipeline_mode<synchronous>, transform_indices = @transform_3, window_bounds = array<i64: 9, 128, 128>}, {pipeline_mode = #tpu.pipeline_mode<synchronous>, transform_indices = @transform_4, window_bounds = array<i64: 1, 128>}, {transform_indices = @transform_5, window_bounds = array<i64: 1, 4, 4, 128>}]} {
    %c0 = arith.constant 0 : index
    %c0_0 = arith.constant 0 : index
    %c0_1 = arith.constant 0 : index
    %c0_2 = arith.constant 0 : index
    %0 = vector.load %arg1[%c0, %c0_0, %c0_1, %c0_2] : memref<1x6x6x128xbf16, #tpu.memory_space<vmem>>, vector<1x6x6x128xbf16>
    %1 = vector.shape_cast %0 : vector<1x6x6x128xbf16> to vector<6x6x128xbf16>
    %cst = arith.constant 0.000000e+00 : f32
    %2 = vector.broadcast %cst : f32 to vector<6x6x128xf32>
    %c0_3 = arith.constant 0 : index
    %c0_4 = arith.constant 0 : index
    %c0_5 = arith.constant 0 : index
    %3 = vector.load %arg7[%c0_3, %c0_4, %c0_5] : memref<6x6x128xf32, #tpu.memory_space<vmem>>, vector<6x6x128xf32>
    tpu.vector_store %arg7[%c0_3, %c0_4, %c0_5], %2 {strides = array<i32>} : memref<6x6x128xf32, #tpu.memory_space<vmem>>, vector<6x6x128xf32>,
    %cst_6 = arith.constant 0.000000e+00 : f32
    %4 = vector.broadcast %cst_6 : f32 to vector<4x256xf32>
    %5 = vector.extract_strided_slice %1 {offsets = [0, 0, 0], sizes = [1, 4, 128], strides = [1, 1, 1]} : vector<6x6x128xbf16> to vector<1x4x128xbf16>
    %6 = vector.shape_cast %5 : vector<1x4x128xbf16> to vector<4x128xbf16>
    %c0_7 = arith.constant 0 : index
    %c0_8 = arith.constant 0 : index
    %c0_9 = arith.constant 0 : index
    %7 = vector.load %arg2[%c0_7, %c0_8, %c0_9] : memref<9x128x256xbf16, #tpu.memory_space<vmem>>, vector<1x128x256xbf16>
    %8 = vector.shape_cast %7 : vector<1x128x256xbf16> to vector<128x256xbf16>
    %cst_10 = arith.constant dense<0.000000e+00> : vector<4x256xf32>
    %9 = tpu.matmul %6, %8, %cst_10 {dimension_numbers = #tpu.dot_dimension_numbers<[1], [0], [0], [1], [0, 0, 1, 1], [], []>} : vector<4x128xbf16>, vector<128x256xbf16>, vector<4x256xf32> -> vector<4x256xf32>
    %10 = arith.addf %4, %9 : vector<4x256xf32>
    %11 = vector.extract_strided_slice %1 {offsets = [0, 1, 0], sizes = [1, 4, 128], strides = [1, 1, 1]} : vector<6x6x128xbf16> to vector<1x4x128xbf16>
    %12 = vector.shape_cast %11 : vector<1x4x128xbf16> to vector<4x128xbf16>
    %c1 = arith.constant 1 : index
    %c0_11 = arith.constant 0 : index
    %c0_12 = arith.constant 0 : index
    %13 = vector.load %arg2[%c1, %c0_11, %c0_12] : memref<9x128x256xbf16, #tpu.memory_space<vmem>>, vector<1x128x256xbf16>
    %14 = vector.shape_cast %13 : vector<1x128x256xbf16> to vector<128x256xbf16>
    %cst_13 = arith.constant dense<0.000000e+00> : vector<4x256xf32>
    %15 = tpu.matmul %12, %14, %cst_13 {dimension_numbers = #tpu.dot_dimension_numbers<[1], [0], [0], [1], [0, 0, 1, 1], [], []>} : vector<4x128xbf16>, vector<128x256xbf16>, vector<4x256xf32> -> vector<4x256xf32>
    %16 = arith.addf %10, %15 : vector<4x256xf32>
    %17 = vector.extract_strided_slice %1 {offsets = [0, 2, 0], sizes = [1, 4, 128], strides = [1, 1, 1]} : vector<6x6x128xbf16> to vector<1x4x128xbf16>
    %18 = vector.shape_cast %17 : vector<1x4x128xbf16> to vector<4x128xbf16>
    %c2 = arith.constant 2 : index
    %c0_14 = arith.constant 0 : index
    %c0_15 = arith.constant 0 : index
    %19 = vector.load %arg2[%c2, %c0_14, %c0_15] : memref<9x128x256xbf16, #tpu.memory_space<vmem>>, vector<1x128x256xbf16>
    %20 = vector.shape_cast %19 : vector<1x128x256xbf16> to vector<128x256xbf16>
    %cst_16 = arith.constant dense<0.000000e+00> : vector<4x256xf32>
    %21 = tpu.matmul %18, %20, %cst_16 {dimension_numbers = #tpu.dot_dimension_numbers<[1], [0], [0], [1], [0, 0, 1, 1], [], []>} : vector<4x128xbf16>, vector<128x256xbf16>, vector<4x256xf32> -> vector<4x256xf32>
    %22 = arith.addf %16, %21 : vector<4x256xf32>
    %23 = vector.extract_strided_slice %1 {offsets = [1, 0, 0], sizes = [1, 4, 128], strides = [1, 1, 1]} : vector<6x6x128xbf16> to vector<1x4x128xbf16>
    %24 = vector.shape_cast %23 : vector<1x4x128xbf16> to vector<4x128xbf16>
    %c3 = arith.constant 3 : index
    %c0_17 = arith.constant 0 : index
    %c0_18 = arith.constant 0 : index
    %25 = vector.load %arg2[%c3, %c0_17, %c0_18] : memref<9x128x256xbf16, #tpu.memory_space<vmem>>, vector<1x128x256xbf16>
    %26 = vector.shape_cast %25 : vector<1x128x256xbf16> to vector<128x256xbf16>
    %cst_19 = arith.constant dense<0.000000e+00> : vector<4x256xf32>
    %27 = tpu.matmul %24, %26, %cst_19 {dimension_numbers = #tpu.dot_dimension_numbers<[1], [0], [0], [1], [0, 0, 1, 1], [], []>} : vector<4x128xbf16>, vector<128x256xbf16>, vector<4x256xf32> -> vector<4x256xf32>
    %28 = arith.addf %22, %27 : vector<4x256xf32>
    %29 = vector.extract_strided_slice %1 {offsets = [1, 1, 0], sizes = [1, 4, 128], strides = [1, 1, 1]} : vector<6x6x128xbf16> to vector<1x4x128xbf16>
    %30 = vector.shape_cast %29 : vector<1x4x128xbf16> to vector<4x128xbf16>
    %c4 = arith.constant 4 : index
    %c0_20 = arith.constant 0 : index
    %c0_21 = arith.constant 0 : index
    %31 = vector.load %arg2[%c4, %c0_20, %c0_21] : memref<9x128x256xbf16, #tpu.memory_space<vmem>>, vector<1x128x256xbf16>
    %32 = vector.shape_cast %31 : vector<1x128x256xbf16> to vector<128x256xbf16>
    %cst_22 = arith.constant dense<0.000000e+00> : vector<4x256xf32>
    %33 = tpu.matmul %30, %32, %cst_22 {dimension_numbers = #tpu.dot_dimension_numbers<[1], [0], [0], [1], [0, 0, 1, 1], [], []>} : vector<4x128xbf16>, vector<128x256xbf16>, vector<4x256xf32> -> vector<4x256xf32>
    %34 = arith.addf %28, %33 : vector<4x256xf32>
    %35 = vector.extract_strided_slice %1 {offsets = [1, 2, 0], sizes = [1, 4, 128], strides = [1, 1, 1]} : vector<6x6x128xbf16> to vector<1x4x128xbf16>
    %36 = vector.shape_cast %35 : vector<1x4x128xbf16> to vector<4x128xbf16>
    %c5 = arith.constant 5 : index
    %c0_23 = arith.constant 0 : index
    %c0_24 = arith.constant 0 : index
    %37 = vector.load %arg2[%c5, %c0_23, %c0_24] : memref<9x128x256xbf16, #tpu.memory_space<vmem>>, vector<1x128x256xbf16>
    %38 = vector.shape_cast %37 : vector<1x128x256xbf16> to vector<128x256xbf16>
    %cst_25 = arith.constant dense<0.000000e+00> : vector<4x256xf32>
    %39 = tpu.matmul %36, %38, %cst_25 {dimension_numbers = #tpu.dot_dimension_numbers<[1], [0], [0], [1], [0, 0, 1, 1], [], []>} : vector<4x128xbf16>, vector<128x256xbf16>, vector<4x256xf32> -> vector<4x256xf32>
    %40 = arith.addf %34, %39 : vector<4x256xf32>
    %41 = vector.extract_strided_slice %1 {offsets = [2, 0, 0], sizes = [1, 4, 128], strides = [1, 1, 1]} : vector<6x6x128xbf16> to vector<1x4x128xbf16>
    %42 = vector.shape_cast %41 : vector<1x4x128xbf16> to vector<4x128xbf16>
    %c6 = arith.constant 6 : index
    %c0_26 = arith.constant 0 : index
    %c0_27 = arith.constant 0 : index
    %43 = vector.load %arg2[%c6, %c0_26, %c0_27] : memref<9x128x256xbf16, #tpu.memory_space<vmem>>, vector<1x128x256xbf16>
    %44 = vector.shape_cast %43 : vector<1x128x256xbf16> to vector<128x256xbf16>
    %cst_28 = arith.constant dense<0.000000e+00> : vector<4x256xf32>
    %45 = tpu.matmul %42, %44, %cst_28 {dimension_numbers = #tpu.dot_dimension_numbers<[1], [0], [0], [1], [0, 0, 1, 1], [], []>} : vector<4x128xbf16>, vector<128x256xbf16>, vector<4x256xf32> -> vector<4x256xf32>
    %46 = arith.addf %40, %45 : vector<4x256xf32>
    %47 = vector.extract_strided_slice %1 {offsets = [2, 1, 0], sizes = [1, 4, 128], strides = [1, 1, 1]} : vector<6x6x128xbf16> to vector<1x4x128xbf16>
    %48 = vector.shape_cast %47 : vector<1x4x128xbf16> to vector<4x128xbf16>
    %c7 = arith.constant 7 : index
    %c0_29 = arith.constant 0 : index
    %c0_30 = arith.constant 0 : index
    %49 = vector.load %arg2[%c7, %c0_29, %c0_30] : memref<9x128x256xbf16, #tpu.memory_space<vmem>>, vector<1x128x256xbf16>
    %50 = vector.shape_cast %49 : vector<1x128x256xbf16> to vector<128x256xbf16>
    %cst_31 = arith.constant dense<0.000000e+00> : vector<4x256xf32>
    %51 = tpu.matmul %48, %50, %cst_31 {dimension_numbers = #tpu.dot_dimension_numbers<[1], [0], [0], [1], [0, 0, 1, 1], [], []>} : vector<4x128xbf16>, vector<128x256xbf16>, vector<4x256xf32> -> vector<4x256xf32>
    %52 = arith.addf %46, %51 : vector<4x256xf32>
    %53 = vector.extract_strided_slice %1 {offsets = [2, 2, 0], sizes = [1, 4, 128], strides = [1, 1, 1]} : vector<6x6x128xbf16> to vector<1x4x128xbf16>
    %54 = vector.shape_cast %53 : vector<1x4x128xbf16> to vector<4x128xbf16>
    %c8 = arith.constant 8 : index
    %c0_32 = arith.constant 0 : index
    %c0_33 = arith.constant 0 : index
    %55 = vector.load %arg2[%c8, %c0_32, %c0_33] : memref<9x128x256xbf16, #tpu.memory_space<vmem>>, vector<1x128x256xbf16>
    %56 = vector.shape_cast %55 : vector<1x128x256xbf16> to vector<128x256xbf16>
    %cst_34 = arith.constant dense<0.000000e+00> : vector<4x256xf32>
    %57 = tpu.matmul %54, %56, %cst_34 {dimension_numbers = #tpu.dot_dimension_numbers<[1], [0], [0], [1], [0, 0, 1, 1], [], []>} : vector<4x128xbf16>, vector<128x256xbf16>, vector<4x256xf32> -> vector<4x256xf32>
    %58 = arith.addf %52, %57 : vector<4x256xf32>
    %c0_35 = arith.constant 0 : index
    %c0_36 = arith.constant 0 : index
    %59 = vector.load %arg3[%c0_35, %c0_36] : memref<1x256xf32, #tpu.memory_space<vmem>>, vector<1x256xf32>
    %60 = vector.broadcast %59 : vector<1x256xf32> to vector<4x256xf32>
    %61 = arith.addf %58, %60 : vector<4x256xf32>
    %62 = vector.extract_strided_slice %61 {offsets = [0, 0], sizes = [4, 128], strides = [1, 1]} : vector<4x256xf32> to vector<4x128xf32>
    %cst_37 = arith.constant 0.000000e+00 : f32
    %63 = vector.broadcast %cst_37 : f32 to vector<4x128xf32>
    %64 = arith.maximumf %62, %63 : vector<4x128xf32>
    %c1_38 = arith.constant 1 : index
    %c1_39 = arith.constant 1 : index
    %c0_40 = arith.constant 0 : index
    %65 = vector.load %arg7[%c1_38, %c1_39, %c0_40] : memref<6x6x128xf32, #tpu.memory_space<vmem>>, vector<1x4x128xf32>
    %66 = vector.shape_cast %65 : vector<1x4x128xf32> to vector<4x128xf32>
    %67 = vector.shape_cast %64 : vector<4x128xf32> to vector<1x4x128xf32>
    tpu.vector_store %arg7[%c1_38, %c1_39, %c0_40], %67 {strides = array<i32>} : memref<6x6x128xf32, #tpu.memory_space<vmem>>, vector<1x4x128xf32>,
    %68 = vector.extract_strided_slice %61 {offsets = [0, 128], sizes = [4, 128], strides = [1, 1]} : vector<4x256xf32> to vector<4x128xf32>
    %c0_41 = arith.constant 0 : index
    %c0_42 = arith.constant 0 : index
    %c0_43 = arith.constant 0 : index
    %69 = vector.load %arg8[%c0_41, %c0_42, %c0_43] : memref<4x4x128xf32, #tpu.memory_space<vmem>>, vector<1x4x128xf32>
    %70 = vector.shape_cast %69 : vector<1x4x128xf32> to vector<4x128xf32>
    %71 = vector.shape_cast %68 : vector<4x128xf32> to vector<1x4x128xf32>
    tpu.vector_store %arg8[%c0_41, %c0_42, %c0_43], %71 {strides = array<i32>} : memref<4x4x128xf32, #tpu.memory_space<vmem>>, vector<1x4x128xf32>,
    %cst_44 = arith.constant 0.000000e+00 : f32
    %72 = vector.broadcast %cst_44 : f32 to vector<4x256xf32>
    %73 = vector.extract_strided_slice %1 {offsets = [1, 0, 0], sizes = [1, 4, 128], strides = [1, 1, 1]} : vector<6x6x128xbf16> to vector<1x4x128xbf16>
    %74 = vector.shape_cast %73 : vector<1x4x128xbf16> to vector<4x128xbf16>
    %c0_45 = arith.constant 0 : index
    %c0_46 = arith.constant 0 : index
    %c0_47 = arith.constant 0 : index
    %75 = vector.load %arg2[%c0_45, %c0_46, %c0_47] : memref<9x128x256xbf16, #tpu.memory_space<vmem>>, vector<1x128x256xbf16>
    %76 = vector.shape_cast %75 : vector<1x128x256xbf16> to vector<128x256xbf16>
    %cst_48 = arith.constant dense<0.000000e+00> : vector<4x256xf32>
    %77 = tpu.matmul %74, %76, %cst_48 {dimension_numbers = #tpu.dot_dimension_numbers<[1], [0], [0], [1], [0, 0, 1, 1], [], []>} : vector<4x128xbf16>, vector<128x256xbf16>, vector<4x256xf32> -> vector<4x256xf32>
    %78 = arith.addf %72, %77 : vector<4x256xf32>
    %79 = vector.extract_strided_slice %1 {offsets = [1, 1, 0], sizes = [1, 4, 128], strides = [1, 1, 1]} : vector<6x6x128xbf16> to vector<1x4x128xbf16>
    %80 = vector.shape_cast %79 : vector<1x4x128xbf16> to vector<4x128xbf16>
    %c1_49 = arith.constant 1 : index
    %c0_50 = arith.constant 0 : index
    %c0_51 = arith.constant 0 : index
    %81 = vector.load %arg2[%c1_49, %c0_50, %c0_51] : memref<9x128x256xbf16, #tpu.memory_space<vmem>>, vector<1x128x256xbf16>
    %82 = vector.shape_cast %81 : vector<1x128x256xbf16> to vector<128x256xbf16>
    %cst_52 = arith.constant dense<0.000000e+00> : vector<4x256xf32>
    %83 = tpu.matmul %80, %82, %cst_52 {dimension_numbers = #tpu.dot_dimension_numbers<[1], [0], [0], [1], [0, 0, 1, 1], [], []>} : vector<4x128xbf16>, vector<128x256xbf16>, vector<4x256xf32> -> vector<4x256xf32>
    %84 = arith.addf %78, %83 : vector<4x256xf32>
    %85 = vector.extract_strided_slice %1 {offsets = [1, 2, 0], sizes = [1, 4, 128], strides = [1, 1, 1]} : vector<6x6x128xbf16> to vector<1x4x128xbf16>
    %86 = vector.shape_cast %85 : vector<1x4x128xbf16> to vector<4x128xbf16>
    %c2_53 = arith.constant 2 : index
    %c0_54 = arith.constant 0 : index
    %c0_55 = arith.constant 0 : index
    %87 = vector.load %arg2[%c2_53, %c0_54, %c0_55] : memref<9x128x256xbf16, #tpu.memory_space<vmem>>, vector<1x128x256xbf16>
    %88 = vector.shape_cast %87 : vector<1x128x256xbf16> to vector<128x256xbf16>
    %cst_56 = arith.constant dense<0.000000e+00> : vector<4x256xf32>
    %89 = tpu.matmul %86, %88, %cst_56 {dimension_numbers = #tpu.dot_dimension_numbers<[1], [0], [0], [1], [0, 0, 1, 1], [], []>} : vector<4x128xbf16>, vector<128x256xbf16>, vector<4x256xf32> -> vector<4x256xf32>
    %90 = arith.addf %84, %89 : vector<4x256xf32>
    %91 = vector.extract_strided_slice %1 {offsets = [2, 0, 0], sizes = [1, 4, 128], strides = [1, 1, 1]} : vector<6x6x128xbf16> to vector<1x4x128xbf16>
    %92 = vector.shape_cast %91 : vector<1x4x128xbf16> to vector<4x128xbf16>
    %c3_57 = arith.constant 3 : index
    %c0_58 = arith.constant 0 : index
    %c0_59 = arith.constant 0 : index
    %93 = vector.load %arg2[%c3_57, %c0_58, %c0_59] : memref<9x128x256xbf16, #tpu.memory_space<vmem>>, vector<1x128x256xbf16>
    %94 = vector.shape_cast %93 : vector<1x128x256xbf16> to vector<128x256xbf16>
    %cst_60 = arith.constant dense<0.000000e+00> : vector<4x256xf32>
    %95 = tpu.matmul %92, %94, %cst_60 {dimension_numbers = #tpu.dot_dimension_numbers<[1], [0], [0], [1], [0, 0, 1, 1], [], []>} : vector<4x128xbf16>, vector<128x256xbf16>, vector<4x256xf32> -> vector<4x256xf32>
    %96 = arith.addf %90, %95 : vector<4x256xf32>
    %97 = vector.extract_strided_slice %1 {offsets = [2, 1, 0], sizes = [1, 4, 128], strides = [1, 1, 1]} : vector<6x6x128xbf16> to vector<1x4x128xbf16>
    %98 = vector.shape_cast %97 : vector<1x4x128xbf16> to vector<4x128xbf16>
    %c4_61 = arith.constant 4 : index
    %c0_62 = arith.constant 0 : index
    %c0_63 = arith.constant 0 : index
    %99 = vector.load %arg2[%c4_61, %c0_62, %c0_63] : memref<9x128x256xbf16, #tpu.memory_space<vmem>>, vector<1x128x256xbf16>
    %100 = vector.shape_cast %99 : vector<1x128x256xbf16> to vector<128x256xbf16>
    %cst_64 = arith.constant dense<0.000000e+00> : vector<4x256xf32>
    %101 = tpu.matmul %98, %100, %cst_64 {dimension_numbers = #tpu.dot_dimension_numbers<[1], [0], [0], [1], [0, 0, 1, 1], [], []>} : vector<4x128xbf16>, vector<128x256xbf16>, vector<4x256xf32> -> vector<4x256xf32>
    %102 = arith.addf %96, %101 : vector<4x256xf32>
    %103 = vector.extract_strided_slice %1 {offsets = [2, 2, 0], sizes = [1, 4, 128], strides = [1, 1, 1]} : vector<6x6x128xbf16> to vector<1x4x128xbf16>
    %104 = vector.shape_cast %103 : vector<1x4x128xbf16> to vector<4x128xbf16>
    %c5_65 = arith.constant 5 : index
    %c0_66 = arith.constant 0 : index
    %c0_67 = arith.constant 0 : index
    %105 = vector.load %arg2[%c5_65, %c0_66, %c0_67] : memref<9x128x256xbf16, #tpu.memory_space<vmem>>, vector<1x128x256xbf16>
    %106 = vector.shape_cast %105 : vector<1x128x256xbf16> to vector<128x256xbf16>
    %cst_68 = arith.constant dense<0.000000e+00> : vector<4x256xf32>
    %107 = tpu.matmul %104, %106, %cst_68 {dimension_numbers = #tpu.dot_dimension_numbers<[1], [0], [0], [1], [0, 0, 1, 1], [], []>} : vector<4x128xbf16>, vector<128x256xbf16>, vector<4x256xf32> -> vector<4x256xf32>
    %108 = arith.addf %102, %107 : vector<4x256xf32>
    %109 = vector.extract_strided_slice %1 {offsets = [3, 0, 0], sizes = [1, 4, 128], strides = [1, 1, 1]} : vector<6x6x128xbf16> to vector<1x4x128xbf16>
    %110 = vector.shape_cast %109 : vector<1x4x128xbf16> to vector<4x128xbf16>
    %c6_69 = arith.constant 6 : index
    %c0_70 = arith.constant 0 : index
    %c0_71 = arith.constant 0 : index
    %111 = vector.load %arg2[%c6_69, %c0_70, %c0_71] : memref<9x128x256xbf16, #tpu.memory_space<vmem>>, vector<1x128x256xbf16>
    %112 = vector.shape_cast %111 : vector<1x128x256xbf16> to vector<128x256xbf16>
    %cst_72 = arith.constant dense<0.000000e+00> : vector<4x256xf32>
    %113 = tpu.matmul %110, %112, %cst_72 {dimension_numbers = #tpu.dot_dimension_numbers<[1], [0], [0], [1], [0, 0, 1, 1], [], []>} : vector<4x128xbf16>, vector<128x256xbf16>, vector<4x256xf32> -> vector<4x256xf32>
    %114 = arith.addf %108, %113 : vector<4x256xf32>
    %115 = vector.extract_strided_slice %1 {offsets = [3, 1, 0], sizes = [1, 4, 128], strides = [1, 1, 1]} : vector<6x6x128xbf16> to vector<1x4x128xbf16>
    %116 = vector.shape_cast %115 : vector<1x4x128xbf16> to vector<4x128xbf16>
    %c7_73 = arith.constant 7 : index
    %c0_74 = arith.constant 0 : index
    %c0_75 = arith.constant 0 : index
    %117 = vector.load %arg2[%c7_73, %c0_74, %c0_75] : memref<9x128x256xbf16, #tpu.memory_space<vmem>>, vector<1x128x256xbf16>
    %118 = vector.shape_cast %117 : vector<1x128x256xbf16> to vector<128x256xbf16>
    %cst_76 = arith.constant dense<0.000000e+00> : vector<4x256xf32>
    %119 = tpu.matmul %116, %118, %cst_76 {dimension_numbers = #tpu.dot_dimension_numbers<[1], [0], [0], [1], [0, 0, 1, 1], [], []>} : vector<4x128xbf16>, vector<128x256xbf16>, vector<4x256xf32> -> vector<4x256xf32>
    %120 = arith.addf %114, %119 : vector<4x256xf32>
    %121 = vector.extract_strided_slice %1 {offsets = [3, 2, 0], sizes = [1, 4, 128], strides = [1, 1, 1]} : vector<6x6x128xbf16> to vector<1x4x128xbf16>
    %122 = vector.shape_cast %121 : vector<1x4x128xbf16> to vector<4x128xbf16>
    %c8_77 = arith.constant 8 : index
    %c0_78 = arith.constant 0 : index
    %c0_79 = arith.constant 0 : index
    %123 = vector.load %arg2[%c8_77, %c0_78, %c0_79] : memref<9x128x256xbf16, #tpu.memory_space<vmem>>, vector<1x128x256xbf16>
    %124 = vector.shape_cast %123 : vector<1x128x256xbf16> to vector<128x256xbf16>
    %cst_80 = arith.constant dense<0.000000e+00> : vector<4x256xf32>
    %125 = tpu.matmul %122, %124, %cst_80 {dimension_numbers = #tpu.dot_dimension_numbers<[1], [0], [0], [1], [0, 0, 1, 1], [], []>} : vector<4x128xbf16>, vector<128x256xbf16>, vector<4x256xf32> -> vector<4x256xf32>
    %126 = arith.addf %120, %125 : vector<4x256xf32>
    %c0_81 = arith.constant 0 : index
    %c0_82 = arith.constant 0 : index
    %127 = vector.load %arg3[%c0_81, %c0_82] : memref<1x256xf32, #tpu.memory_space<vmem>>, vector<1x256xf32>
    %128 = vector.broadcast %127 : vector<1x256xf32> to vector<4x256xf32>
    %129 = arith.addf %126, %128 : vector<4x256xf32>
    %130 = vector.extract_strided_slice %129 {offsets = [0, 0], sizes = [4, 128], strides = [1, 1]} : vector<4x256xf32> to vector<4x128xf32>
    %cst_83 = arith.constant 0.000000e+00 : f32
    %131 = vector.broadcast %cst_83 : f32 to vector<4x128xf32>
    %132 = arith.maximumf %130, %131 : vector<4x128xf32>
    %c2_84 = arith.constant 2 : index
    %c1_85 = arith.constant 1 : index
    %c0_86 = arith.constant 0 : index
    %133 = vector.load %arg7[%c2_84, %c1_85, %c0_86] : memref<6x6x128xf32, #tpu.memory_space<vmem>>, vector<1x4x128xf32>
    %134 = vector.shape_cast %133 : vector<1x4x128xf32> to vector<4x128xf32>
    %135 = vector.shape_cast %132 : vector<4x128xf32> to vector<1x4x128xf32>
    tpu.vector_store %arg7[%c2_84, %c1_85, %c0_86], %135 {strides = array<i32>} : memref<6x6x128xf32, #tpu.memory_space<vmem>>, vector<1x4x128xf32>,
    %136 = vector.extract_strided_slice %129 {offsets = [0, 128], sizes = [4, 128], strides = [1, 1]} : vector<4x256xf32> to vector<4x128xf32>
    %c1_87 = arith.constant 1 : index
    %c0_88 = arith.constant 0 : index
    %c0_89 = arith.constant 0 : index
    %137 = vector.load %arg8[%c1_87, %c0_88, %c0_89] : memref<4x4x128xf32, #tpu.memory_space<vmem>>, vector<1x4x128xf32>
    %138 = vector.shape_cast %137 : vector<1x4x128xf32> to vector<4x128xf32>
    %139 = vector.shape_cast %136 : vector<4x128xf32> to vector<1x4x128xf32>
    tpu.vector_store %arg8[%c1_87, %c0_88, %c0_89], %139 {strides = array<i32>} : memref<4x4x128xf32, #tpu.memory_space<vmem>>, vector<1x4x128xf32>,
    %cst_90 = arith.constant 0.000000e+00 : f32
    %140 = vector.broadcast %cst_90 : f32 to vector<4x256xf32>
    %141 = vector.extract_strided_slice %1 {offsets = [2, 0, 0], sizes = [1, 4, 128], strides = [1, 1, 1]} : vector<6x6x128xbf16> to vector<1x4x128xbf16>
    %142 = vector.shape_cast %141 : vector<1x4x128xbf16> to vector<4x128xbf16>
    %c0_91 = arith.constant 0 : index
    %c0_92 = arith.constant 0 : index
    %c0_93 = arith.constant 0 : index
    %143 = vector.load %arg2[%c0_91, %c0_92, %c0_93] : memref<9x128x256xbf16, #tpu.memory_space<vmem>>, vector<1x128x256xbf16>
    %144 = vector.shape_cast %143 : vector<1x128x256xbf16> to vector<128x256xbf16>
    %cst_94 = arith.constant dense<0.000000e+00> : vector<4x256xf32>
    %145 = tpu.matmul %142, %144, %cst_94 {dimension_numbers = #tpu.dot_dimension_numbers<[1], [0], [0], [1], [0, 0, 1, 1], [], []>} : vector<4x128xbf16>, vector<128x256xbf16>, vector<4x256xf32> -> vector<4x256xf32>
    %146 = arith.addf %140, %145 : vector<4x256xf32>
    %147 = vector.extract_strided_slice %1 {offsets = [2, 1, 0], sizes = [1, 4, 128], strides = [1, 1, 1]} : vector<6x6x128xbf16> to vector<1x4x128xbf16>
    %148 = vector.shape_cast %147 : vector<1x4x128xbf16> to vector<4x128xbf16>
    %c1_95 = arith.constant 1 : index
    %c0_96 = arith.constant 0 : index
    %c0_97 = arith.constant 0 : index
    %149 = vector.load %arg2[%c1_95, %c0_96, %c0_97] : memref<9x128x256xbf16, #tpu.memory_space<vmem>>, vector<1x128x256xbf16>
    %150 = vector.shape_cast %149 : vector<1x128x256xbf16> to vector<128x256xbf16>
    %cst_98 = arith.constant dense<0.000000e+00> : vector<4x256xf32>
    %151 = tpu.matmul %148, %150, %cst_98 {dimension_numbers = #tpu.dot_dimension_numbers<[1], [0], [0], [1], [0, 0, 1, 1], [], []>} : vector<4x128xbf16>, vector<128x256xbf16>, vector<4x256xf32> -> vector<4x256xf32>
    %152 = arith.addf %146, %151 : vector<4x256xf32>
    %153 = vector.extract_strided_slice %1 {offsets = [2, 2, 0], sizes = [1, 4, 128], strides = [1, 1, 1]} : vector<6x6x128xbf16> to vector<1x4x128xbf16>
    %154 = vector.shape_cast %153 : vector<1x4x128xbf16> to vector<4x128xbf16>
    %c2_99 = arith.constant 2 : index
    %c0_100 = arith.constant 0 : index
    %c0_101 = arith.constant 0 : index
    %155 = vector.load %arg2[%c2_99, %c0_100, %c0_101] : memref<9x128x256xbf16, #tpu.memory_space<vmem>>, vector<1x128x256xbf16>
    %156 = vector.shape_cast %155 : vector<1x128x256xbf16> to vector<128x256xbf16>
    %cst_102 = arith.constant dense<0.000000e+00> : vector<4x256xf32>
    %157 = tpu.matmul %154, %156, %cst_102 {dimension_numbers = #tpu.dot_dimension_numbers<[1], [0], [0], [1], [0, 0, 1, 1], [], []>} : vector<4x128xbf16>, vector<128x256xbf16>, vector<4x256xf32> -> vector<4x256xf32>
    %158 = arith.addf %152, %157 : vector<4x256xf32>
    %159 = vector.extract_strided_slice %1 {offsets = [3, 0, 0], sizes = [1, 4, 128], strides = [1, 1, 1]} : vector<6x6x128xbf16> to vector<1x4x128xbf16>
    %160 = vector.shape_cast %159 : vector<1x4x128xbf16> to vector<4x128xbf16>
    %c3_103 = arith.constant 3 : index
    %c0_104 = arith.constant 0 : index
    %c0_105 = arith.constant 0 : index
    %161 = vector.load %arg2[%c3_103, %c0_104, %c0_105] : memref<9x128x256xbf16, #tpu.memory_space<vmem>>, vector<1x128x256xbf16>
    %162 = vector.shape_cast %161 : vector<1x128x256xbf16> to vector<128x256xbf16>
    %cst_106 = arith.constant dense<0.000000e+00> : vector<4x256xf32>
    %163 = tpu.matmul %160, %162, %cst_106 {dimension_numbers = #tpu.dot_dimension_numbers<[1], [0], [0], [1], [0, 0, 1, 1], [], []>} : vector<4x128xbf16>, vector<128x256xbf16>, vector<4x256xf32> -> vector<4x256xf32>
    %164 = arith.addf %158, %163 : vector<4x256xf32>
    %165 = vector.extract_strided_slice %1 {offsets = [3, 1, 0], sizes = [1, 4, 128], strides = [1, 1, 1]} : vector<6x6x128xbf16> to vector<1x4x128xbf16>
    %166 = vector.shape_cast %165 : vector<1x4x128xbf16> to vector<4x128xbf16>
    %c4_107 = arith.constant 4 : index
    %c0_108 = arith.constant 0 : index
    %c0_109 = arith.constant 0 : index
    %167 = vector.load %arg2[%c4_107, %c0_108, %c0_109] : memref<9x128x256xbf16, #tpu.memory_space<vmem>>, vector<1x128x256xbf16>
    %168 = vector.shape_cast %167 : vector<1x128x256xbf16> to vector<128x256xbf16>
    %cst_110 = arith.constant dense<0.000000e+00> : vector<4x256xf32>
    %169 = tpu.matmul %166, %168, %cst_110 {dimension_numbers = #tpu.dot_dimension_numbers<[1], [0], [0], [1], [0, 0, 1, 1], [], []>} : vector<4x128xbf16>, vector<128x256xbf16>, vector<4x256xf32> -> vector<4x256xf32>
    %170 = arith.addf %164, %169 : vector<4x256xf32>
    %171 = vector.extract_strided_slice %1 {offsets = [3, 2, 0], sizes = [1, 4, 128], strides = [1, 1, 1]} : vector<6x6x128xbf16> to vector<1x4x128xbf16>
    %172 = vector.shape_cast %171 : vector<1x4x128xbf16> to vector<4x128xbf16>
    %c5_111 = arith.constant 5 : index
    %c0_112 = arith.constant 0 : index
    %c0_113 = arith.constant 0 : index
    %173 = vector.load %arg2[%c5_111, %c0_112, %c0_113] : memref<9x128x256xbf16, #tpu.memory_space<vmem>>, vector<1x128x256xbf16>
    %174 = vector.shape_cast %173 : vector<1x128x256xbf16> to vector<128x256xbf16>
    %cst_114 = arith.constant dense<0.000000e+00> : vector<4x256xf32>
    %175 = tpu.matmul %172, %174, %cst_114 {dimension_numbers = #tpu.dot_dimension_numbers<[1], [0], [0], [1], [0, 0, 1, 1], [], []>} : vector<4x128xbf16>, vector<128x256xbf16>, vector<4x256xf32> -> vector<4x256xf32>
    %176 = arith.addf %170, %175 : vector<4x256xf32>
    %177 = vector.extract_strided_slice %1 {offsets = [4, 0, 0], sizes = [1, 4, 128], strides = [1, 1, 1]} : vector<6x6x128xbf16> to vector<1x4x128xbf16>
    %178 = vector.shape_cast %177 : vector<1x4x128xbf16> to vector<4x128xbf16>
    %c6_115 = arith.constant 6 : index
    %c0_116 = arith.constant 0 : index
    %c0_117 = arith.constant 0 : index
    %179 = vector.load %arg2[%c6_115, %c0_116, %c0_117] : memref<9x128x256xbf16, #tpu.memory_space<vmem>>, vector<1x128x256xbf16>
    %180 = vector.shape_cast %179 : vector<1x128x256xbf16> to vector<128x256xbf16>
    %cst_118 = arith.constant dense<0.000000e+00> : vector<4x256xf32>
    %181 = tpu.matmul %178, %180, %cst_118 {dimension_numbers = #tpu.dot_dimension_numbers<[1], [0], [0], [1], [0, 0, 1, 1], [], []>} : vector<4x128xbf16>, vector<128x256xbf16>, vector<4x256xf32> -> vector<4x256xf32>
    %182 = arith.addf %176, %181 : vector<4x256xf32>
    %183 = vector.extract_strided_slice %1 {offsets = [4, 1, 0], sizes = [1, 4, 128], strides = [1, 1, 1]} : vector<6x6x128xbf16> to vector<1x4x128xbf16>
    %184 = vector.shape_cast %183 : vector<1x4x128xbf16> to vector<4x128xbf16>
    %c7_119 = arith.constant 7 : index
    %c0_120 = arith.constant 0 : index
    %c0_121 = arith.constant 0 : index
    %185 = vector.load %arg2[%c7_119, %c0_120, %c0_121] : memref<9x128x256xbf16, #tpu.memory_space<vmem>>, vector<1x128x256xbf16>
    %186 = vector.shape_cast %185 : vector<1x128x256xbf16> to vector<128x256xbf16>
    %cst_122 = arith.constant dense<0.000000e+00> : vector<4x256xf32>
    %187 = tpu.matmul %184, %186, %cst_122 {dimension_numbers = #tpu.dot_dimension_numbers<[1], [0], [0], [1], [0, 0, 1, 1], [], []>} : vector<4x128xbf16>, vector<128x256xbf16>, vector<4x256xf32> -> vector<4x256xf32>
    %188 = arith.addf %182, %187 : vector<4x256xf32>
    %189 = vector.extract_strided_slice %1 {offsets = [4, 2, 0], sizes = [1, 4, 128], strides = [1, 1, 1]} : vector<6x6x128xbf16> to vector<1x4x128xbf16>
    %190 = vector.shape_cast %189 : vector<1x4x128xbf16> to vector<4x128xbf16>
    %c8_123 = arith.constant 8 : index
    %c0_124 = arith.constant 0 : index
    %c0_125 = arith.constant 0 : index
    %191 = vector.load %arg2[%c8_123, %c0_124, %c0_125] : memref<9x128x256xbf16, #tpu.memory_space<vmem>>, vector<1x128x256xbf16>
    %192 = vector.shape_cast %191 : vector<1x128x256xbf16> to vector<128x256xbf16>
    %cst_126 = arith.constant dense<0.000000e+00> : vector<4x256xf32>
    %193 = tpu.matmul %190, %192, %cst_126 {dimension_numbers = #tpu.dot_dimension_numbers<[1], [0], [0], [1], [0, 0, 1, 1], [], []>} : vector<4x128xbf16>, vector<128x256xbf16>, vector<4x256xf32> -> vector<4x256xf32>
    %194 = arith.addf %188, %193 : vector<4x256xf32>
    %c0_127 = arith.constant 0 : index
    %c0_128 = arith.constant 0 : index
    %195 = vector.load %arg3[%c0_127, %c0_128] : memref<1x256xf32, #tpu.memory_space<vmem>>, vector<1x256xf32>
    %196 = vector.broadcast %195 : vector<1x256xf32> to vector<4x256xf32>
    %197 = arith.addf %194, %196 : vector<4x256xf32>
    %198 = vector.extract_strided_slice %197 {offsets = [0, 0], sizes = [4, 128], strides = [1, 1]} : vector<4x256xf32> to vector<4x128xf32>
    %cst_129 = arith.constant 0.000000e+00 : f32
    %199 = vector.broadcast %cst_129 : f32 to vector<4x128xf32>
    %200 = arith.maximumf %198, %199 : vector<4x128xf32>
    %c3_130 = arith.constant 3 : index
    %c1_131 = arith.constant 1 : index
    %c0_132 = arith.constant 0 : index
    %201 = vector.load %arg7[%c3_130, %c1_131, %c0_132] : memref<6x6x128xf32, #tpu.memory_space<vmem>>, vector<1x4x128xf32>
    %202 = vector.shape_cast %201 : vector<1x4x128xf32> to vector<4x128xf32>
    %203 = vector.shape_cast %200 : vector<4x128xf32> to vector<1x4x128xf32>
    tpu.vector_store %arg7[%c3_130, %c1_131, %c0_132], %203 {strides = array<i32>} : memref<6x6x128xf32, #tpu.memory_space<vmem>>, vector<1x4x128xf32>,
    %204 = vector.extract_strided_slice %197 {offsets = [0, 128], sizes = [4, 128], strides = [1, 1]} : vector<4x256xf32> to vector<4x128xf32>
    %c2_133 = arith.constant 2 : index
    %c0_134 = arith.constant 0 : index
    %c0_135 = arith.constant 0 : index
    %205 = vector.load %arg8[%c2_133, %c0_134, %c0_135] : memref<4x4x128xf32, #tpu.memory_space<vmem>>, vector<1x4x128xf32>
    %206 = vector.shape_cast %205 : vector<1x4x128xf32> to vector<4x128xf32>
    %207 = vector.shape_cast %204 : vector<4x128xf32> to vector<1x4x128xf32>
    tpu.vector_store %arg8[%c2_133, %c0_134, %c0_135], %207 {strides = array<i32>} : memref<4x4x128xf32, #tpu.memory_space<vmem>>, vector<1x4x128xf32>,
    %cst_136 = arith.constant 0.000000e+00 : f32
    %208 = vector.broadcast %cst_136 : f32 to vector<4x256xf32>
    %209 = vector.extract_strided_slice %1 {offsets = [3, 0, 0], sizes = [1, 4, 128], strides = [1, 1, 1]} : vector<6x6x128xbf16> to vector<1x4x128xbf16>
    %210 = vector.shape_cast %209 : vector<1x4x128xbf16> to vector<4x128xbf16>
    %c0_137 = arith.constant 0 : index
    %c0_138 = arith.constant 0 : index
    %c0_139 = arith.constant 0 : index
    %211 = vector.load %arg2[%c0_137, %c0_138, %c0_139] : memref<9x128x256xbf16, #tpu.memory_space<vmem>>, vector<1x128x256xbf16>
    %212 = vector.shape_cast %211 : vector<1x128x256xbf16> to vector<128x256xbf16>
    %cst_140 = arith.constant dense<0.000000e+00> : vector<4x256xf32>
    %213 = tpu.matmul %210, %212, %cst_140 {dimension_numbers = #tpu.dot_dimension_numbers<[1], [0], [0], [1], [0, 0, 1, 1], [], []>} : vector<4x128xbf16>, vector<128x256xbf16>, vector<4x256xf32> -> vector<4x256xf32>
    %214 = arith.addf %208, %213 : vector<4x256xf32>
    %215 = vector.extract_strided_slice %1 {offsets = [3, 1, 0], sizes = [1, 4, 128], strides = [1, 1, 1]} : vector<6x6x128xbf16> to vector<1x4x128xbf16>
    %216 = vector.shape_cast %215 : vector<1x4x128xbf16> to vector<4x128xbf16>
    %c1_141 = arith.constant 1 : index
    %c0_142 = arith.constant 0 : index
    %c0_143 = arith.constant 0 : index
    %217 = vector.load %arg2[%c1_141, %c0_142, %c0_143] : memref<9x128x256xbf16, #tpu.memory_space<vmem>>, vector<1x128x256xbf16>
    %218 = vector.shape_cast %217 : vector<1x128x256xbf16> to vector<128x256xbf16>
    %cst_144 = arith.constant dense<0.000000e+00> : vector<4x256xf32>
    %219 = tpu.matmul %216, %218, %cst_144 {dimension_numbers = #tpu.dot_dimension_numbers<[1], [0], [0], [1], [0, 0, 1, 1], [], []>} : vector<4x128xbf16>, vector<128x256xbf16>, vector<4x256xf32> -> vector<4x256xf32>
    %220 = arith.addf %214, %219 : vector<4x256xf32>
    %221 = vector.extract_strided_slice %1 {offsets = [3, 2, 0], sizes = [1, 4, 128], strides = [1, 1, 1]} : vector<6x6x128xbf16> to vector<1x4x128xbf16>
    %222 = vector.shape_cast %221 : vector<1x4x128xbf16> to vector<4x128xbf16>
    %c2_145 = arith.constant 2 : index
    %c0_146 = arith.constant 0 : index
    %c0_147 = arith.constant 0 : index
    %223 = vector.load %arg2[%c2_145, %c0_146, %c0_147] : memref<9x128x256xbf16, #tpu.memory_space<vmem>>, vector<1x128x256xbf16>
    %224 = vector.shape_cast %223 : vector<1x128x256xbf16> to vector<128x256xbf16>
    %cst_148 = arith.constant dense<0.000000e+00> : vector<4x256xf32>
    %225 = tpu.matmul %222, %224, %cst_148 {dimension_numbers = #tpu.dot_dimension_numbers<[1], [0], [0], [1], [0, 0, 1, 1], [], []>} : vector<4x128xbf16>, vector<128x256xbf16>, vector<4x256xf32> -> vector<4x256xf32>
    %226 = arith.addf %220, %225 : vector<4x256xf32>
    %227 = vector.extract_strided_slice %1 {offsets = [4, 0, 0], sizes = [1, 4, 128], strides = [1, 1, 1]} : vector<6x6x128xbf16> to vector<1x4x128xbf16>
    %228 = vector.shape_cast %227 : vector<1x4x128xbf16> to vector<4x128xbf16>
    %c3_149 = arith.constant 3 : index
    %c0_150 = arith.constant 0 : index
    %c0_151 = arith.constant 0 : index
    %229 = vector.load %arg2[%c3_149, %c0_150, %c0_151] : memref<9x128x256xbf16, #tpu.memory_space<vmem>>, vector<1x128x256xbf16>
    %230 = vector.shape_cast %229 : vector<1x128x256xbf16> to vector<128x256xbf16>
    %cst_152 = arith.constant dense<0.000000e+00> : vector<4x256xf32>
    %231 = tpu.matmul %228, %230, %cst_152 {dimension_numbers = #tpu.dot_dimension_numbers<[1], [0], [0], [1], [0, 0, 1, 1], [], []>} : vector<4x128xbf16>, vector<128x256xbf16>, vector<4x256xf32> -> vector<4x256xf32>
    %232 = arith.addf %226, %231 : vector<4x256xf32>
    %233 = vector.extract_strided_slice %1 {offsets = [4, 1, 0], sizes = [1, 4, 128], strides = [1, 1, 1]} : vector<6x6x128xbf16> to vector<1x4x128xbf16>
    %234 = vector.shape_cast %233 : vector<1x4x128xbf16> to vector<4x128xbf16>
    %c4_153 = arith.constant 4 : index
    %c0_154 = arith.constant 0 : index
    %c0_155 = arith.constant 0 : index
    %235 = vector.load %arg2[%c4_153, %c0_154, %c0_155] : memref<9x128x256xbf16, #tpu.memory_space<vmem>>, vector<1x128x256xbf16>
    %236 = vector.shape_cast %235 : vector<1x128x256xbf16> to vector<128x256xbf16>
    %cst_156 = arith.constant dense<0.000000e+00> : vector<4x256xf32>
    %237 = tpu.matmul %234, %236, %cst_156 {dimension_numbers = #tpu.dot_dimension_numbers<[1], [0], [0], [1], [0, 0, 1, 1], [], []>} : vector<4x128xbf16>, vector<128x256xbf16>, vector<4x256xf32> -> vector<4x256xf32>
    %238 = arith.addf %232, %237 : vector<4x256xf32>
    %239 = vector.extract_strided_slice %1 {offsets = [4, 2, 0], sizes = [1, 4, 128], strides = [1, 1, 1]} : vector<6x6x128xbf16> to vector<1x4x128xbf16>
    %240 = vector.shape_cast %239 : vector<1x4x128xbf16> to vector<4x128xbf16>
    %c5_157 = arith.constant 5 : index
    %c0_158 = arith.constant 0 : index
    %c0_159 = arith.constant 0 : index
    %241 = vector.load %arg2[%c5_157, %c0_158, %c0_159] : memref<9x128x256xbf16, #tpu.memory_space<vmem>>, vector<1x128x256xbf16>
    %242 = vector.shape_cast %241 : vector<1x128x256xbf16> to vector<128x256xbf16>
    %cst_160 = arith.constant dense<0.000000e+00> : vector<4x256xf32>
    %243 = tpu.matmul %240, %242, %cst_160 {dimension_numbers = #tpu.dot_dimension_numbers<[1], [0], [0], [1], [0, 0, 1, 1], [], []>} : vector<4x128xbf16>, vector<128x256xbf16>, vector<4x256xf32> -> vector<4x256xf32>
    %244 = arith.addf %238, %243 : vector<4x256xf32>
    %245 = vector.extract_strided_slice %1 {offsets = [5, 0, 0], sizes = [1, 4, 128], strides = [1, 1, 1]} : vector<6x6x128xbf16> to vector<1x4x128xbf16>
    %246 = vector.shape_cast %245 : vector<1x4x128xbf16> to vector<4x128xbf16>
    %c6_161 = arith.constant 6 : index
    %c0_162 = arith.constant 0 : index
    %c0_163 = arith.constant 0 : index
    %247 = vector.load %arg2[%c6_161, %c0_162, %c0_163] : memref<9x128x256xbf16, #tpu.memory_space<vmem>>, vector<1x128x256xbf16>
    %248 = vector.shape_cast %247 : vector<1x128x256xbf16> to vector<128x256xbf16>
    %cst_164 = arith.constant dense<0.000000e+00> : vector<4x256xf32>
    %249 = tpu.matmul %246, %248, %cst_164 {dimension_numbers = #tpu.dot_dimension_numbers<[1], [0], [0], [1], [0, 0, 1, 1], [], []>} : vector<4x128xbf16>, vector<128x256xbf16>, vector<4x256xf32> -> vector<4x256xf32>
    %250 = arith.addf %244, %249 : vector<4x256xf32>
    %251 = vector.extract_strided_slice %1 {offsets = [5, 1, 0], sizes = [1, 4, 128], strides = [1, 1, 1]} : vector<6x6x128xbf16> to vector<1x4x128xbf16>
    %252 = vector.shape_cast %251 : vector<1x4x128xbf16> to vector<4x128xbf16>
    %c7_165 = arith.constant 7 : index
    %c0_166 = arith.constant 0 : index
    %c0_167 = arith.constant 0 : index
    %253 = vector.load %arg2[%c7_165, %c0_166, %c0_167] : memref<9x128x256xbf16, #tpu.memory_space<vmem>>, vector<1x128x256xbf16>
    %254 = vector.shape_cast %253 : vector<1x128x256xbf16> to vector<128x256xbf16>
    %cst_168 = arith.constant dense<0.000000e+00> : vector<4x256xf32>
    %255 = tpu.matmul %252, %254, %cst_168 {dimension_numbers = #tpu.dot_dimension_numbers<[1], [0], [0], [1], [0, 0, 1, 1], [], []>} : vector<4x128xbf16>, vector<128x256xbf16>, vector<4x256xf32> -> vector<4x256xf32>
    %256 = arith.addf %250, %255 : vector<4x256xf32>
    %257 = vector.extract_strided_slice %1 {offsets = [5, 2, 0], sizes = [1, 4, 128], strides = [1, 1, 1]} : vector<6x6x128xbf16> to vector<1x4x128xbf16>
    %258 = vector.shape_cast %257 : vector<1x4x128xbf16> to vector<4x128xbf16>
    %c8_169 = arith.constant 8 : index
    %c0_170 = arith.constant 0 : index
    %c0_171 = arith.constant 0 : index
    %259 = vector.load %arg2[%c8_169, %c0_170, %c0_171] : memref<9x128x256xbf16, #tpu.memory_space<vmem>>, vector<1x128x256xbf16>
    %260 = vector.shape_cast %259 : vector<1x128x256xbf16> to vector<128x256xbf16>
    %cst_172 = arith.constant dense<0.000000e+00> : vector<4x256xf32>
    %261 = tpu.matmul %258, %260, %cst_172 {dimension_numbers = #tpu.dot_dimension_numbers<[1], [0], [0], [1], [0, 0, 1, 1], [], []>} : vector<4x128xbf16>, vector<128x256xbf16>, vector<4x256xf32> -> vector<4x256xf32>
    %262 = arith.addf %256, %261 : vector<4x256xf32>
    %c0_173 = arith.constant 0 : index
    %c0_174 = arith.constant 0 : index
    %263 = vector.load %arg3[%c0_173, %c0_174] : memref<1x256xf32, #tpu.memory_space<vmem>>, vector<1x256xf32>
    %264 = vector.broadcast %263 : vector<1x256xf32> to vector<4x256xf32>
    %265 = arith.addf %262, %264 : vector<4x256xf32>
    %266 = vector.extract_strided_slice %265 {offsets = [0, 0], sizes = [4, 128], strides = [1, 1]} : vector<4x256xf32> to vector<4x128xf32>
    %cst_175 = arith.constant 0.000000e+00 : f32
    %267 = vector.broadcast %cst_175 : f32 to vector<4x128xf32>
    %268 = arith.maximumf %266, %267 : vector<4x128xf32>
    %c4_176 = arith.constant 4 : index
    %c1_177 = arith.constant 1 : index
    %c0_178 = arith.constant 0 : index
    %269 = vector.load %arg7[%c4_176, %c1_177, %c0_178] : memref<6x6x128xf32, #tpu.memory_space<vmem>>, vector<1x4x128xf32>
    %270 = vector.shape_cast %269 : vector<1x4x128xf32> to vector<4x128xf32>
    %271 = vector.shape_cast %268 : vector<4x128xf32> to vector<1x4x128xf32>
    tpu.vector_store %arg7[%c4_176, %c1_177, %c0_178], %271 {strides = array<i32>} : memref<6x6x128xf32, #tpu.memory_space<vmem>>, vector<1x4x128xf32>,
    %272 = vector.extract_strided_slice %265 {offsets = [0, 128], sizes = [4, 128], strides = [1, 1]} : vector<4x256xf32> to vector<4x128xf32>
    %c3_179 = arith.constant 3 : index
    %c0_180 = arith.constant 0 : index
    %c0_181 = arith.constant 0 : index
    %273 = vector.load %arg8[%c3_179, %c0_180, %c0_181] : memref<4x4x128xf32, #tpu.memory_space<vmem>>, vector<1x4x128xf32>
    %274 = vector.shape_cast %273 : vector<1x4x128xf32> to vector<4x128xf32>
    %275 = vector.shape_cast %272 : vector<4x128xf32> to vector<1x4x128xf32>
    tpu.vector_store %arg8[%c3_179, %c0_180, %c0_181], %275 {strides = array<i32>} : memref<4x4x128xf32, #tpu.memory_space<vmem>>, vector<1x4x128xf32>,
    %cst_182 = arith.constant 0.000000e+00 : f32
    %276 = vector.broadcast %cst_182 : f32 to vector<4x128xf32>
    %c0_183 = arith.constant 0 : index
    %c0_184 = arith.constant 0 : index
    %c0_185 = arith.constant 0 : index
    %277 = vector.load %arg7[%c0_183, %c0_184, %c0_185] : memref<6x6x128xf32, #tpu.memory_space<vmem>>, vector<1x6x128xf32>
    %278 = vector.shape_cast %277 : vector<1x6x128xf32> to vector<6x128xf32>
    %279 = vector.extract_strided_slice %278 {offsets = [0, 0], sizes = [4, 128], strides = [1, 1]} : vector<6x128xf32> to vector<4x128xf32>
    %280 = arith.truncf %279 : vector<4x128xf32> to vector<4x128xbf16>
    %c0_186 = arith.constant 0 : index
    %c0_187 = arith.constant 0 : index
    %c0_188 = arith.constant 0 : index
    %281 = vector.load %arg4[%c0_186, %c0_187, %c0_188] : memref<9x128x128xbf16, #tpu.memory_space<vmem>>, vector<1x128x128xbf16>
    %282 = vector.shape_cast %281 : vector<1x128x128xbf16> to vector<128x128xbf16>
    %cst_189 = arith.constant dense<0.000000e+00> : vector<4x128xf32>
    %283 = tpu.matmul %280, %282, %cst_189 {dimension_numbers = #tpu.dot_dimension_numbers<[1], [0], [0], [1], [0, 0, 1, 1], [], []>} : vector<4x128xbf16>, vector<128x128xbf16>, vector<4x128xf32> -> vector<4x128xf32>
    %284 = arith.addf %276, %283 : vector<4x128xf32>
    %285 = vector.extract_strided_slice %278 {offsets = [1, 0], sizes = [4, 128], strides = [1, 1]} : vector<6x128xf32> to vector<4x128xf32>
    %286 = arith.truncf %285 : vector<4x128xf32> to vector<4x128xbf16>
    %c1_190 = arith.constant 1 : index
    %c0_191 = arith.constant 0 : index
    %c0_192 = arith.constant 0 : index
    %287 = vector.load %arg4[%c1_190, %c0_191, %c0_192] : memref<9x128x128xbf16, #tpu.memory_space<vmem>>, vector<1x128x128xbf16>
    %288 = vector.shape_cast %287 : vector<1x128x128xbf16> to vector<128x128xbf16>
    %cst_193 = arith.constant dense<0.000000e+00> : vector<4x128xf32>
    %289 = tpu.matmul %286, %288, %cst_193 {dimension_numbers = #tpu.dot_dimension_numbers<[1], [0], [0], [1], [0, 0, 1, 1], [], []>} : vector<4x128xbf16>, vector<128x128xbf16>, vector<4x128xf32> -> vector<4x128xf32>
    %290 = arith.addf %284, %289 : vector<4x128xf32>
    %291 = vector.extract_strided_slice %278 {offsets = [2, 0], sizes = [4, 128], strides = [1, 1]} : vector<6x128xf32> to vector<4x128xf32>
    %292 = arith.truncf %291 : vector<4x128xf32> to vector<4x128xbf16>
    %c2_194 = arith.constant 2 : index
    %c0_195 = arith.constant 0 : index
    %c0_196 = arith.constant 0 : index
    %293 = vector.load %arg4[%c2_194, %c0_195, %c0_196] : memref<9x128x128xbf16, #tpu.memory_space<vmem>>, vector<1x128x128xbf16>
    %294 = vector.shape_cast %293 : vector<1x128x128xbf16> to vector<128x128xbf16>
    %cst_197 = arith.constant dense<0.000000e+00> : vector<4x128xf32>
    %295 = tpu.matmul %292, %294, %cst_197 {dimension_numbers = #tpu.dot_dimension_numbers<[1], [0], [0], [1], [0, 0, 1, 1], [], []>} : vector<4x128xbf16>, vector<128x128xbf16>, vector<4x128xf32> -> vector<4x128xf32>
    %296 = arith.addf %290, %295 : vector<4x128xf32>
    %c1_198 = arith.constant 1 : index
    %c0_199 = arith.constant 0 : index
    %c0_200 = arith.constant 0 : index
    %297 = vector.load %arg7[%c1_198, %c0_199, %c0_200] : memref<6x6x128xf32, #tpu.memory_space<vmem>>, vector<1x6x128xf32>
    %298 = vector.shape_cast %297 : vector<1x6x128xf32> to vector<6x128xf32>
    %299 = vector.extract_strided_slice %298 {offsets = [0, 0], sizes = [4, 128], strides = [1, 1]} : vector<6x128xf32> to vector<4x128xf32>
    %300 = arith.truncf %299 : vector<4x128xf32> to vector<4x128xbf16>
    %c3_201 = arith.constant 3 : index
    %c0_202 = arith.constant 0 : index
    %c0_203 = arith.constant 0 : index
    %301 = vector.load %arg4[%c3_201, %c0_202, %c0_203] : memref<9x128x128xbf16, #tpu.memory_space<vmem>>, vector<1x128x128xbf16>
    %302 = vector.shape_cast %301 : vector<1x128x128xbf16> to vector<128x128xbf16>
    %cst_204 = arith.constant dense<0.000000e+00> : vector<4x128xf32>
    %303 = tpu.matmul %300, %302, %cst_204 {dimension_numbers = #tpu.dot_dimension_numbers<[1], [0], [0], [1], [0, 0, 1, 1], [], []>} : vector<4x128xbf16>, vector<128x128xbf16>, vector<4x128xf32> -> vector<4x128xf32>
    %304 = arith.addf %296, %303 : vector<4x128xf32>
    %305 = vector.extract_strided_slice %298 {offsets = [1, 0], sizes = [4, 128], strides = [1, 1]} : vector<6x128xf32> to vector<4x128xf32>
    %306 = arith.truncf %305 : vector<4x128xf32> to vector<4x128xbf16>
    %c4_205 = arith.constant 4 : index
    %c0_206 = arith.constant 0 : index
    %c0_207 = arith.constant 0 : index
    %307 = vector.load %arg4[%c4_205, %c0_206, %c0_207] : memref<9x128x128xbf16, #tpu.memory_space<vmem>>, vector<1x128x128xbf16>
    %308 = vector.shape_cast %307 : vector<1x128x128xbf16> to vector<128x128xbf16>
    %cst_208 = arith.constant dense<0.000000e+00> : vector<4x128xf32>
    %309 = tpu.matmul %306, %308, %cst_208 {dimension_numbers = #tpu.dot_dimension_numbers<[1], [0], [0], [1], [0, 0, 1, 1], [], []>} : vector<4x128xbf16>, vector<128x128xbf16>, vector<4x128xf32> -> vector<4x128xf32>
    %310 = arith.addf %304, %309 : vector<4x128xf32>
    %311 = vector.extract_strided_slice %298 {offsets = [2, 0], sizes = [4, 128], strides = [1, 1]} : vector<6x128xf32> to vector<4x128xf32>
    %312 = arith.truncf %311 : vector<4x128xf32> to vector<4x128xbf16>
    %c5_209 = arith.constant 5 : index
    %c0_210 = arith.constant 0 : index
    %c0_211 = arith.constant 0 : index
    %313 = vector.load %arg4[%c5_209, %c0_210, %c0_211] : memref<9x128x128xbf16, #tpu.memory_space<vmem>>, vector<1x128x128xbf16>
    %314 = vector.shape_cast %313 : vector<1x128x128xbf16> to vector<128x128xbf16>
    %cst_212 = arith.constant dense<0.000000e+00> : vector<4x128xf32>
    %315 = tpu.matmul %312, %314, %cst_212 {dimension_numbers = #tpu.dot_dimension_numbers<[1], [0], [0], [1], [0, 0, 1, 1], [], []>} : vector<4x128xbf16>, vector<128x128xbf16>, vector<4x128xf32> -> vector<4x128xf32>
    %316 = arith.addf %310, %315 : vector<4x128xf32>
    %c2_213 = arith.constant 2 : index
    %c0_214 = arith.constant 0 : index
    %c0_215 = arith.constant 0 : index
    %317 = vector.load %arg7[%c2_213, %c0_214, %c0_215] : memref<6x6x128xf32, #tpu.memory_space<vmem>>, vector<1x6x128xf32>
    %318 = vector.shape_cast %317 : vector<1x6x128xf32> to vector<6x128xf32>
    %319 = vector.extract_strided_slice %318 {offsets = [0, 0], sizes = [4, 128], strides = [1, 1]} : vector<6x128xf32> to vector<4x128xf32>
    %320 = arith.truncf %319 : vector<4x128xf32> to vector<4x128xbf16>
    %c6_216 = arith.constant 6 : index
    %c0_217 = arith.constant 0 : index
    %c0_218 = arith.constant 0 : index
    %321 = vector.load %arg4[%c6_216, %c0_217, %c0_218] : memref<9x128x128xbf16, #tpu.memory_space<vmem>>, vector<1x128x128xbf16>
    %322 = vector.shape_cast %321 : vector<1x128x128xbf16> to vector<128x128xbf16>
    %cst_219 = arith.constant dense<0.000000e+00> : vector<4x128xf32>
    %323 = tpu.matmul %320, %322, %cst_219 {dimension_numbers = #tpu.dot_dimension_numbers<[1], [0], [0], [1], [0, 0, 1, 1], [], []>} : vector<4x128xbf16>, vector<128x128xbf16>, vector<4x128xf32> -> vector<4x128xf32>
    %324 = arith.addf %316, %323 : vector<4x128xf32>
    %325 = vector.extract_strided_slice %318 {offsets = [1, 0], sizes = [4, 128], strides = [1, 1]} : vector<6x128xf32> to vector<4x128xf32>
    %326 = arith.truncf %325 : vector<4x128xf32> to vector<4x128xbf16>
    %c7_220 = arith.constant 7 : index
    %c0_221 = arith.constant 0 : index
    %c0_222 = arith.constant 0 : index
    %327 = vector.load %arg4[%c7_220, %c0_221, %c0_222] : memref<9x128x128xbf16, #tpu.memory_space<vmem>>, vector<1x128x128xbf16>
    %328 = vector.shape_cast %327 : vector<1x128x128xbf16> to vector<128x128xbf16>
    %cst_223 = arith.constant dense<0.000000e+00> : vector<4x128xf32>
    %329 = tpu.matmul %326, %328, %cst_223 {dimension_numbers = #tpu.dot_dimension_numbers<[1], [0], [0], [1], [0, 0, 1, 1], [], []>} : vector<4x128xbf16>, vector<128x128xbf16>, vector<4x128xf32> -> vector<4x128xf32>
    %330 = arith.addf %324, %329 : vector<4x128xf32>
    %331 = vector.extract_strided_slice %318 {offsets = [2, 0], sizes = [4, 128], strides = [1, 1]} : vector<6x128xf32> to vector<4x128xf32>
    %332 = arith.truncf %331 : vector<4x128xf32> to vector<4x128xbf16>
    %c8_224 = arith.constant 8 : index
    %c0_225 = arith.constant 0 : index
    %c0_226 = arith.constant 0 : index
    %333 = vector.load %arg4[%c8_224, %c0_225, %c0_226] : memref<9x128x128xbf16, #tpu.memory_space<vmem>>, vector<1x128x128xbf16>
    %334 = vector.shape_cast %333 : vector<1x128x128xbf16> to vector<128x128xbf16>
    %cst_227 = arith.constant dense<0.000000e+00> : vector<4x128xf32>
    %335 = tpu.matmul %332, %334, %cst_227 {dimension_numbers = #tpu.dot_dimension_numbers<[1], [0], [0], [1], [0, 0, 1, 1], [], []>} : vector<4x128xbf16>, vector<128x128xbf16>, vector<4x128xf32> -> vector<4x128xf32>
    %336 = arith.addf %330, %335 : vector<4x128xf32>
    %c0_228 = arith.constant 0 : index
    %c0_229 = arith.constant 0 : index
    %337 = vector.load %arg5[%c0_228, %c0_229] : memref<1x128xf32, #tpu.memory_space<vmem>>, vector<1x128xf32>
    %338 = vector.broadcast %337 : vector<1x128xf32> to vector<4x128xf32>
    %339 = arith.addf %336, %338 : vector<4x128xf32>
    %c0_230 = arith.constant 0 : index
    %c0_231 = arith.constant 0 : index
    %c0_232 = arith.constant 0 : index
    %340 = vector.load %arg8[%c0_230, %c0_231, %c0_232] : memref<4x4x128xf32, #tpu.memory_space<vmem>>, vector<1x4x128xf32>
    %341 = vector.shape_cast %340 : vector<1x4x128xf32> to vector<4x128xf32>
    %342 = arith.addf %339, %341 : vector<4x128xf32>
    %cst_233 = arith.constant 0.000000e+00 : f32
    %343 = vector.broadcast %cst_233 : f32 to vector<4x128xf32>
    %344 = arith.maximumf %342, %343 : vector<4x128xf32>
    %345 = arith.truncf %344 : vector<4x128xf32> to vector<4x128xbf16>
    %c0_234 = arith.constant 0 : index
    %c0_235 = arith.constant 0 : index
    %c0_236 = arith.constant 0 : index
    %c0_237 = arith.constant 0 : index
    %346 = vector.load %arg6[%c0_234, %c0_235, %c0_236, %c0_237] : memref<1x4x4x128xbf16, #tpu.memory_space<vmem>>, vector<1x1x4x128xbf16>
    %347 = vector.shape_cast %346 : vector<1x1x4x128xbf16> to vector<4x128xbf16>
    %348 = vector.shape_cast %345 : vector<4x128xbf16> to vector<1x1x4x128xbf16>
    tpu.vector_store %arg6[%c0_234, %c0_235, %c0_236, %c0_237], %348 {strides = array<i32>} : memref<1x4x4x128xbf16, #tpu.memory_space<vmem>>, vector<1x1x4x128xbf16>,
    %cst_238 = arith.constant 0.000000e+00 : f32
    %349 = vector.broadcast %cst_238 : f32 to vector<4x128xf32>
    %c1_239 = arith.constant 1 : index
    %c0_240 = arith.constant 0 : index
    %c0_241 = arith.constant 0 : index
    %350 = vector.load %arg7[%c1_239, %c0_240, %c0_241] : memref<6x6x128xf32, #tpu.memory_space<vmem>>, vector<1x6x128xf32>
    %351 = vector.shape_cast %350 : vector<1x6x128xf32> to vector<6x128xf32>
    %352 = vector.extract_strided_slice %351 {offsets = [0, 0], sizes = [4, 128], strides = [1, 1]} : vector<6x128xf32> to vector<4x128xf32>
    %353 = arith.truncf %352 : vector<4x128xf32> to vector<4x128xbf16>
    %c0_242 = arith.constant 0 : index
    %c0_243 = arith.constant 0 : index
    %c0_244 = arith.constant 0 : index
    %354 = vector.load %arg4[%c0_242, %c0_243, %c0_244] : memref<9x128x128xbf16, #tpu.memory_space<vmem>>, vector<1x128x128xbf16>
    %355 = vector.shape_cast %354 : vector<1x128x128xbf16> to vector<128x128xbf16>
    %cst_245 = arith.constant dense<0.000000e+00> : vector<4x128xf32>
    %356 = tpu.matmul %353, %355, %cst_245 {dimension_numbers = #tpu.dot_dimension_numbers<[1], [0], [0], [1], [0, 0, 1, 1], [], []>} : vector<4x128xbf16>, vector<128x128xbf16>, vector<4x128xf32> -> vector<4x128xf32>
    %357 = arith.addf %349, %356 : vector<4x128xf32>
    %358 = vector.extract_strided_slice %351 {offsets = [1, 0], sizes = [4, 128], strides = [1, 1]} : vector<6x128xf32> to vector<4x128xf32>
    %359 = arith.truncf %358 : vector<4x128xf32> to vector<4x128xbf16>
    %c1_246 = arith.constant 1 : index
    %c0_247 = arith.constant 0 : index
    %c0_248 = arith.constant 0 : index
    %360 = vector.load %arg4[%c1_246, %c0_247, %c0_248] : memref<9x128x128xbf16, #tpu.memory_space<vmem>>, vector<1x128x128xbf16>
    %361 = vector.shape_cast %360 : vector<1x128x128xbf16> to vector<128x128xbf16>
    %cst_249 = arith.constant dense<0.000000e+00> : vector<4x128xf32>
    %362 = tpu.matmul %359, %361, %cst_249 {dimension_numbers = #tpu.dot_dimension_numbers<[1], [0], [0], [1], [0, 0, 1, 1], [], []>} : vector<4x128xbf16>, vector<128x128xbf16>, vector<4x128xf32> -> vector<4x128xf32>
    %363 = arith.addf %357, %362 : vector<4x128xf32>
    %364 = vector.extract_strided_slice %351 {offsets = [2, 0], sizes = [4, 128], strides = [1, 1]} : vector<6x128xf32> to vector<4x128xf32>
    %365 = arith.truncf %364 : vector<4x128xf32> to vector<4x128xbf16>
    %c2_250 = arith.constant 2 : index
    %c0_251 = arith.constant 0 : index
    %c0_252 = arith.constant 0 : index
    %366 = vector.load %arg4[%c2_250, %c0_251, %c0_252] : memref<9x128x128xbf16, #tpu.memory_space<vmem>>, vector<1x128x128xbf16>
    %367 = vector.shape_cast %366 : vector<1x128x128xbf16> to vector<128x128xbf16>
    %cst_253 = arith.constant dense<0.000000e+00> : vector<4x128xf32>
    %368 = tpu.matmul %365, %367, %cst_253 {dimension_numbers = #tpu.dot_dimension_numbers<[1], [0], [0], [1], [0, 0, 1, 1], [], []>} : vector<4x128xbf16>, vector<128x128xbf16>, vector<4x128xf32> -> vector<4x128xf32>
    %369 = arith.addf %363, %368 : vector<4x128xf32>
    %c2_254 = arith.constant 2 : index
    %c0_255 = arith.constant 0 : index
    %c0_256 = arith.constant 0 : index
    %370 = vector.load %arg7[%c2_254, %c0_255, %c0_256] : memref<6x6x128xf32, #tpu.memory_space<vmem>>, vector<1x6x128xf32>
    %371 = vector.shape_cast %370 : vector<1x6x128xf32> to vector<6x128xf32>
    %372 = vector.extract_strided_slice %371 {offsets = [0, 0], sizes = [4, 128], strides = [1, 1]} : vector<6x128xf32> to vector<4x128xf32>
    %373 = arith.truncf %372 : vector<4x128xf32> to vector<4x128xbf16>
    %c3_257 = arith.constant 3 : index
    %c0_258 = arith.constant 0 : index
    %c0_259 = arith.constant 0 : index
    %374 = vector.load %arg4[%c3_257, %c0_258, %c0_259] : memref<9x128x128xbf16, #tpu.memory_space<vmem>>, vector<1x128x128xbf16>
    %375 = vector.shape_cast %374 : vector<1x128x128xbf16> to vector<128x128xbf16>
    %cst_260 = arith.constant dense<0.000000e+00> : vector<4x128xf32>
    %376 = tpu.matmul %373, %375, %cst_260 {dimension_numbers = #tpu.dot_dimension_numbers<[1], [0], [0], [1], [0, 0, 1, 1], [], []>} : vector<4x128xbf16>, vector<128x128xbf16>, vector<4x128xf32> -> vector<4x128xf32>
    %377 = arith.addf %369, %376 : vector<4x128xf32>
    %378 = vector.extract_strided_slice %371 {offsets = [1, 0], sizes = [4, 128], strides = [1, 1]} : vector<6x128xf32> to vector<4x128xf32>
    %379 = arith.truncf %378 : vector<4x128xf32> to vector<4x128xbf16>
    %c4_261 = arith.constant 4 : index
    %c0_262 = arith.constant 0 : index
    %c0_263 = arith.constant 0 : index
    %380 = vector.load %arg4[%c4_261, %c0_262, %c0_263] : memref<9x128x128xbf16, #tpu.memory_space<vmem>>, vector<1x128x128xbf16>
    %381 = vector.shape_cast %380 : vector<1x128x128xbf16> to vector<128x128xbf16>
    %cst_264 = arith.constant dense<0.000000e+00> : vector<4x128xf32>
    %382 = tpu.matmul %379, %381, %cst_264 {dimension_numbers = #tpu.dot_dimension_numbers<[1], [0], [0], [1], [0, 0, 1, 1], [], []>} : vector<4x128xbf16>, vector<128x128xbf16>, vector<4x128xf32> -> vector<4x128xf32>
    %383 = arith.addf %377, %382 : vector<4x128xf32>
    %384 = vector.extract_strided_slice %371 {offsets = [2, 0], sizes = [4, 128], strides = [1, 1]} : vector<6x128xf32> to vector<4x128xf32>
    %385 = arith.truncf %384 : vector<4x128xf32> to vector<4x128xbf16>
    %c5_265 = arith.constant 5 : index
    %c0_266 = arith.constant 0 : index
    %c0_267 = arith.constant 0 : index
    %386 = vector.load %arg4[%c5_265, %c0_266, %c0_267] : memref<9x128x128xbf16, #tpu.memory_space<vmem>>, vector<1x128x128xbf16>
    %387 = vector.shape_cast %386 : vector<1x128x128xbf16> to vector<128x128xbf16>
    %cst_268 = arith.constant dense<0.000000e+00> : vector<4x128xf32>
    %388 = tpu.matmul %385, %387, %cst_268 {dimension_numbers = #tpu.dot_dimension_numbers<[1], [0], [0], [1], [0, 0, 1, 1], [], []>} : vector<4x128xbf16>, vector<128x128xbf16>, vector<4x128xf32> -> vector<4x128xf32>
    %389 = arith.addf %383, %388 : vector<4x128xf32>
    %c3_269 = arith.constant 3 : index
    %c0_270 = arith.constant 0 : index
    %c0_271 = arith.constant 0 : index
    %390 = vector.load %arg7[%c3_269, %c0_270, %c0_271] : memref<6x6x128xf32, #tpu.memory_space<vmem>>, vector<1x6x128xf32>
    %391 = vector.shape_cast %390 : vector<1x6x128xf32> to vector<6x128xf32>
    %392 = vector.extract_strided_slice %391 {offsets = [0, 0], sizes = [4, 128], strides = [1, 1]} : vector<6x128xf32> to vector<4x128xf32>
    %393 = arith.truncf %392 : vector<4x128xf32> to vector<4x128xbf16>
    %c6_272 = arith.constant 6 : index
    %c0_273 = arith.constant 0 : index
    %c0_274 = arith.constant 0 : index
    %394 = vector.load %arg4[%c6_272, %c0_273, %c0_274] : memref<9x128x128xbf16, #tpu.memory_space<vmem>>, vector<1x128x128xbf16>
    %395 = vector.shape_cast %394 : vector<1x128x128xbf16> to vector<128x128xbf16>
    %cst_275 = arith.constant dense<0.000000e+00> : vector<4x128xf32>
    %396 = tpu.matmul %393, %395, %cst_275 {dimension_numbers = #tpu.dot_dimension_numbers<[1], [0], [0], [1], [0, 0, 1, 1], [], []>} : vector<4x128xbf16>, vector<128x128xbf16>, vector<4x128xf32> -> vector<4x128xf32>
    %397 = arith.addf %389, %396 : vector<4x128xf32>
    %398 = vector.extract_strided_slice %391 {offsets = [1, 0], sizes = [4, 128], strides = [1, 1]} : vector<6x128xf32> to vector<4x128xf32>
    %399 = arith.truncf %398 : vector<4x128xf32> to vector<4x128xbf16>
    %c7_276 = arith.constant 7 : index
    %c0_277 = arith.constant 0 : index
    %c0_278 = arith.constant 0 : index
    %400 = vector.load %arg4[%c7_276, %c0_277, %c0_278] : memref<9x128x128xbf16, #tpu.memory_space<vmem>>, vector<1x128x128xbf16>
    %401 = vector.shape_cast %400 : vector<1x128x128xbf16> to vector<128x128xbf16>
    %cst_279 = arith.constant dense<0.000000e+00> : vector<4x128xf32>
    %402 = tpu.matmul %399, %401, %cst_279 {dimension_numbers = #tpu.dot_dimension_numbers<[1], [0], [0], [1], [0, 0, 1, 1], [], []>} : vector<4x128xbf16>, vector<128x128xbf16>, vector<4x128xf32> -> vector<4x128xf32>
    %403 = arith.addf %397, %402 : vector<4x128xf32>
    %404 = vector.extract_strided_slice %391 {offsets = [2, 0], sizes = [4, 128], strides = [1, 1]} : vector<6x128xf32> to vector<4x128xf32>
    %405 = arith.truncf %404 : vector<4x128xf32> to vector<4x128xbf16>
    %c8_280 = arith.constant 8 : index
    %c0_281 = arith.constant 0 : index
    %c0_282 = arith.constant 0 : index
    %406 = vector.load %arg4[%c8_280, %c0_281, %c0_282] : memref<9x128x128xbf16, #tpu.memory_space<vmem>>, vector<1x128x128xbf16>
    %407 = vector.shape_cast %406 : vector<1x128x128xbf16> to vector<128x128xbf16>
    %cst_283 = arith.constant dense<0.000000e+00> : vector<4x128xf32>
    %408 = tpu.matmul %405, %407, %cst_283 {dimension_numbers = #tpu.dot_dimension_numbers<[1], [0], [0], [1], [0, 0, 1, 1], [], []>} : vector<4x128xbf16>, vector<128x128xbf16>, vector<4x128xf32> -> vector<4x128xf32>
    %409 = arith.addf %403, %408 : vector<4x128xf32>
    %c0_284 = arith.constant 0 : index
    %c0_285 = arith.constant 0 : index
    %410 = vector.load %arg5[%c0_284, %c0_285] : memref<1x128xf32, #tpu.memory_space<vmem>>, vector<1x128xf32>
    %411 = vector.broadcast %410 : vector<1x128xf32> to vector<4x128xf32>
    %412 = arith.addf %409, %411 : vector<4x128xf32>
    %c1_286 = arith.constant 1 : index
    %c0_287 = arith.constant 0 : index
    %c0_288 = arith.constant 0 : index
    %413 = vector.load %arg8[%c1_286, %c0_287, %c0_288] : memref<4x4x128xf32, #tpu.memory_space<vmem>>, vector<1x4x128xf32>
    %414 = vector.shape_cast %413 : vector<1x4x128xf32> to vector<4x128xf32>
    %415 = arith.addf %412, %414 : vector<4x128xf32>
    %cst_289 = arith.constant 0.000000e+00 : f32
    %416 = vector.broadcast %cst_289 : f32 to vector<4x128xf32>
    %417 = arith.maximumf %415, %416 : vector<4x128xf32>
    %418 = arith.truncf %417 : vector<4x128xf32> to vector<4x128xbf16>
    %c0_290 = arith.constant 0 : index
    %c1_291 = arith.constant 1 : index
    %c0_292 = arith.constant 0 : index
    %c0_293 = arith.constant 0 : index
    %419 = vector.load %arg6[%c0_290, %c1_291, %c0_292, %c0_293] : memref<1x4x4x128xbf16, #tpu.memory_space<vmem>>, vector<1x1x4x128xbf16>
    %420 = vector.shape_cast %419 : vector<1x1x4x128xbf16> to vector<4x128xbf16>
    %421 = vector.shape_cast %418 : vector<4x128xbf16> to vector<1x1x4x128xbf16>
    tpu.vector_store %arg6[%c0_290, %c1_291, %c0_292, %c0_293], %421 {strides = array<i32>} : memref<1x4x4x128xbf16, #tpu.memory_space<vmem>>, vector<1x1x4x128xbf16>,
    %cst_294 = arith.constant 0.000000e+00 : f32
    %422 = vector.broadcast %cst_294 : f32 to vector<4x128xf32>
    %c2_295 = arith.constant 2 : index
    %c0_296 = arith.constant 0 : index
    %c0_297 = arith.constant 0 : index
    %423 = vector.load %arg7[%c2_295, %c0_296, %c0_297] : memref<6x6x128xf32, #tpu.memory_space<vmem>>, vector<1x6x128xf32>
    %424 = vector.shape_cast %423 : vector<1x6x128xf32> to vector<6x128xf32>
    %425 = vector.extract_strided_slice %424 {offsets = [0, 0], sizes = [4, 128], strides = [1, 1]} : vector<6x128xf32> to vector<4x128xf32>
    %426 = arith.truncf %425 : vector<4x128xf32> to vector<4x128xbf16>
    %c0_298 = arith.constant 0 : index
    %c0_299 = arith.constant 0 : index
    %c0_300 = arith.constant 0 : index
    %427 = vector.load %arg4[%c0_298, %c0_299, %c0_300] : memref<9x128x128xbf16, #tpu.memory_space<vmem>>, vector<1x128x128xbf16>
    %428 = vector.shape_cast %427 : vector<1x128x128xbf16> to vector<128x128xbf16>
    %cst_301 = arith.constant dense<0.000000e+00> : vector<4x128xf32>
    %429 = tpu.matmul %426, %428, %cst_301 {dimension_numbers = #tpu.dot_dimension_numbers<[1], [0], [0], [1], [0, 0, 1, 1], [], []>} : vector<4x128xbf16>, vector<128x128xbf16>, vector<4x128xf32> -> vector<4x128xf32>
    %430 = arith.addf %422, %429 : vector<4x128xf32>
    %431 = vector.extract_strided_slice %424 {offsets = [1, 0], sizes = [4, 128], strides = [1, 1]} : vector<6x128xf32> to vector<4x128xf32>
    %432 = arith.truncf %431 : vector<4x128xf32> to vector<4x128xbf16>
    %c1_302 = arith.constant 1 : index
    %c0_303 = arith.constant 0 : index
    %c0_304 = arith.constant 0 : index
    %433 = vector.load %arg4[%c1_302, %c0_303, %c0_304] : memref<9x128x128xbf16, #tpu.memory_space<vmem>>, vector<1x128x128xbf16>
    %434 = vector.shape_cast %433 : vector<1x128x128xbf16> to vector<128x128xbf16>
    %cst_305 = arith.constant dense<0.000000e+00> : vector<4x128xf32>
    %435 = tpu.matmul %432, %434, %cst_305 {dimension_numbers = #tpu.dot_dimension_numbers<[1], [0], [0], [1], [0, 0, 1, 1], [], []>} : vector<4x128xbf16>, vector<128x128xbf16>, vector<4x128xf32> -> vector<4x128xf32>
    %436 = arith.addf %430, %435 : vector<4x128xf32>
    %437 = vector.extract_strided_slice %424 {offsets = [2, 0], sizes = [4, 128], strides = [1, 1]} : vector<6x128xf32> to vector<4x128xf32>
    %438 = arith.truncf %437 : vector<4x128xf32> to vector<4x128xbf16>
    %c2_306 = arith.constant 2 : index
    %c0_307 = arith.constant 0 : index
    %c0_308 = arith.constant 0 : index
    %439 = vector.load %arg4[%c2_306, %c0_307, %c0_308] : memref<9x128x128xbf16, #tpu.memory_space<vmem>>, vector<1x128x128xbf16>
    %440 = vector.shape_cast %439 : vector<1x128x128xbf16> to vector<128x128xbf16>
    %cst_309 = arith.constant dense<0.000000e+00> : vector<4x128xf32>
    %441 = tpu.matmul %438, %440, %cst_309 {dimension_numbers = #tpu.dot_dimension_numbers<[1], [0], [0], [1], [0, 0, 1, 1], [], []>} : vector<4x128xbf16>, vector<128x128xbf16>, vector<4x128xf32> -> vector<4x128xf32>
    %442 = arith.addf %436, %441 : vector<4x128xf32>
    %c3_310 = arith.constant 3 : index
    %c0_311 = arith.constant 0 : index
    %c0_312 = arith.constant 0 : index
    %443 = vector.load %arg7[%c3_310, %c0_311, %c0_312] : memref<6x6x128xf32, #tpu.memory_space<vmem>>, vector<1x6x128xf32>
    %444 = vector.shape_cast %443 : vector<1x6x128xf32> to vector<6x128xf32>
    %445 = vector.extract_strided_slice %444 {offsets = [0, 0], sizes = [4, 128], strides = [1, 1]} : vector<6x128xf32> to vector<4x128xf32>
    %446 = arith.truncf %445 : vector<4x128xf32> to vector<4x128xbf16>
    %c3_313 = arith.constant 3 : index
    %c0_314 = arith.constant 0 : index
    %c0_315 = arith.constant 0 : index
    %447 = vector.load %arg4[%c3_313, %c0_314, %c0_315] : memref<9x128x128xbf16, #tpu.memory_space<vmem>>, vector<1x128x128xbf16>
    %448 = vector.shape_cast %447 : vector<1x128x128xbf16> to vector<128x128xbf16>
    %cst_316 = arith.constant dense<0.000000e+00> : vector<4x128xf32>
    %449 = tpu.matmul %446, %448, %cst_316 {dimension_numbers = #tpu.dot_dimension_numbers<[1], [0], [0], [1], [0, 0, 1, 1], [], []>} : vector<4x128xbf16>, vector<128x128xbf16>, vector<4x128xf32> -> vector<4x128xf32>
    %450 = arith.addf %442, %449 : vector<4x128xf32>
    %451 = vector.extract_strided_slice %444 {offsets = [1, 0], sizes = [4, 128], strides = [1, 1]} : vector<6x128xf32> to vector<4x128xf32>
    %452 = arith.truncf %451 : vector<4x128xf32> to vector<4x128xbf16>
    %c4_317 = arith.constant 4 : index
    %c0_318 = arith.constant 0 : index
    %c0_319 = arith.constant 0 : index
    %453 = vector.load %arg4[%c4_317, %c0_318, %c0_319] : memref<9x128x128xbf16, #tpu.memory_space<vmem>>, vector<1x128x128xbf16>
    %454 = vector.shape_cast %453 : vector<1x128x128xbf16> to vector<128x128xbf16>
    %cst_320 = arith.constant dense<0.000000e+00> : vector<4x128xf32>
    %455 = tpu.matmul %452, %454, %cst_320 {dimension_numbers = #tpu.dot_dimension_numbers<[1], [0], [0], [1], [0, 0, 1, 1], [], []>} : vector<4x128xbf16>, vector<128x128xbf16>, vector<4x128xf32> -> vector<4x128xf32>
    %456 = arith.addf %450, %455 : vector<4x128xf32>
    %457 = vector.extract_strided_slice %444 {offsets = [2, 0], sizes = [4, 128], strides = [1, 1]} : vector<6x128xf32> to vector<4x128xf32>
    %458 = arith.truncf %457 : vector<4x128xf32> to vector<4x128xbf16>
    %c5_321 = arith.constant 5 : index
    %c0_322 = arith.constant 0 : index
    %c0_323 = arith.constant 0 : index
    %459 = vector.load %arg4[%c5_321, %c0_322, %c0_323] : memref<9x128x128xbf16, #tpu.memory_space<vmem>>, vector<1x128x128xbf16>
    %460 = vector.shape_cast %459 : vector<1x128x128xbf16> to vector<128x128xbf16>
    %cst_324 = arith.constant dense<0.000000e+00> : vector<4x128xf32>
    %461 = tpu.matmul %458, %460, %cst_324 {dimension_numbers = #tpu.dot_dimension_numbers<[1], [0], [0], [1], [0, 0, 1, 1], [], []>} : vector<4x128xbf16>, vector<128x128xbf16>, vector<4x128xf32> -> vector<4x128xf32>
    %462 = arith.addf %456, %461 : vector<4x128xf32>
    %c4_325 = arith.constant 4 : index
    %c0_326 = arith.constant 0 : index
    %c0_327 = arith.constant 0 : index
    %463 = vector.load %arg7[%c4_325, %c0_326, %c0_327] : memref<6x6x128xf32, #tpu.memory_space<vmem>>, vector<1x6x128xf32>
    %464 = vector.shape_cast %463 : vector<1x6x128xf32> to vector<6x128xf32>
    %465 = vector.extract_strided_slice %464 {offsets = [0, 0], sizes = [4, 128], strides = [1, 1]} : vector<6x128xf32> to vector<4x128xf32>
    %466 = arith.truncf %465 : vector<4x128xf32> to vector<4x128xbf16>
    %c6_328 = arith.constant 6 : index
    %c0_329 = arith.constant 0 : index
    %c0_330 = arith.constant 0 : index
    %467 = vector.load %arg4[%c6_328, %c0_329, %c0_330] : memref<9x128x128xbf16, #tpu.memory_space<vmem>>, vector<1x128x128xbf16>
    %468 = vector.shape_cast %467 : vector<1x128x128xbf16> to vector<128x128xbf16>
    %cst_331 = arith.constant dense<0.000000e+00> : vector<4x128xf32>
    %469 = tpu.matmul %466, %468, %cst_331 {dimension_numbers = #tpu.dot_dimension_numbers<[1], [0], [0], [1], [0, 0, 1, 1], [], []>} : vector<4x128xbf16>, vector<128x128xbf16>, vector<4x128xf32> -> vector<4x128xf32>
    %470 = arith.addf %462, %469 : vector<4x128xf32>
    %471 = vector.extract_strided_slice %464 {offsets = [1, 0], sizes = [4, 128], strides = [1, 1]} : vector<6x128xf32> to vector<4x128xf32>
    %472 = arith.truncf %471 : vector<4x128xf32> to vector<4x128xbf16>
    %c7_332 = arith.constant 7 : index
    %c0_333 = arith.constant 0 : index
    %c0_334 = arith.constant 0 : index
    %473 = vector.load %arg4[%c7_332, %c0_333, %c0_334] : memref<9x128x128xbf16, #tpu.memory_space<vmem>>, vector<1x128x128xbf16>
    %474 = vector.shape_cast %473 : vector<1x128x128xbf16> to vector<128x128xbf16>
    %cst_335 = arith.constant dense<0.000000e+00> : vector<4x128xf32>
    %475 = tpu.matmul %472, %474, %cst_335 {dimension_numbers = #tpu.dot_dimension_numbers<[1], [0], [0], [1], [0, 0, 1, 1], [], []>} : vector<4x128xbf16>, vector<128x128xbf16>, vector<4x128xf32> -> vector<4x128xf32>
    %476 = arith.addf %470, %475 : vector<4x128xf32>
    %477 = vector.extract_strided_slice %464 {offsets = [2, 0], sizes = [4, 128], strides = [1, 1]} : vector<6x128xf32> to vector<4x128xf32>
    %478 = arith.truncf %477 : vector<4x128xf32> to vector<4x128xbf16>
    %c8_336 = arith.constant 8 : index
    %c0_337 = arith.constant 0 : index
    %c0_338 = arith.constant 0 : index
    %479 = vector.load %arg4[%c8_336, %c0_337, %c0_338] : memref<9x128x128xbf16, #tpu.memory_space<vmem>>, vector<1x128x128xbf16>
    %480 = vector.shape_cast %479 : vector<1x128x128xbf16> to vector<128x128xbf16>
    %cst_339 = arith.constant dense<0.000000e+00> : vector<4x128xf32>
    %481 = tpu.matmul %478, %480, %cst_339 {dimension_numbers = #tpu.dot_dimension_numbers<[1], [0], [0], [1], [0, 0, 1, 1], [], []>} : vector<4x128xbf16>, vector<128x128xbf16>, vector<4x128xf32> -> vector<4x128xf32>
    %482 = arith.addf %476, %481 : vector<4x128xf32>
    %c0_340 = arith.constant 0 : index
    %c0_341 = arith.constant 0 : index
    %483 = vector.load %arg5[%c0_340, %c0_341] : memref<1x128xf32, #tpu.memory_space<vmem>>, vector<1x128xf32>
    %484 = vector.broadcast %483 : vector<1x128xf32> to vector<4x128xf32>
    %485 = arith.addf %482, %484 : vector<4x128xf32>
    %c2_342 = arith.constant 2 : index
    %c0_343 = arith.constant 0 : index
    %c0_344 = arith.constant 0 : index
    %486 = vector.load %arg8[%c2_342, %c0_343, %c0_344] : memref<4x4x128xf32, #tpu.memory_space<vmem>>, vector<1x4x128xf32>
    %487 = vector.shape_cast %486 : vector<1x4x128xf32> to vector<4x128xf32>
    %488 = arith.addf %485, %487 : vector<4x128xf32>
    %cst_345 = arith.constant 0.000000e+00 : f32
    %489 = vector.broadcast %cst_345 : f32 to vector<4x128xf32>
    %490 = arith.maximumf %488, %489 : vector<4x128xf32>
    %491 = arith.truncf %490 : vector<4x128xf32> to vector<4x128xbf16>
    %c0_346 = arith.constant 0 : index
    %c2_347 = arith.constant 2 : index
    %c0_348 = arith.constant 0 : index
    %c0_349 = arith.constant 0 : index
    %492 = vector.load %arg6[%c0_346, %c2_347, %c0_348, %c0_349] : memref<1x4x4x128xbf16, #tpu.memory_space<vmem>>, vector<1x1x4x128xbf16>
    %493 = vector.shape_cast %492 : vector<1x1x4x128xbf16> to vector<4x128xbf16>
    %494 = vector.shape_cast %491 : vector<4x128xbf16> to vector<1x1x4x128xbf16>
    tpu.vector_store %arg6[%c0_346, %c2_347, %c0_348, %c0_349], %494 {strides = array<i32>} : memref<1x4x4x128xbf16, #tpu.memory_space<vmem>>, vector<1x1x4x128xbf16>,
    %cst_350 = arith.constant 0.000000e+00 : f32
    %495 = vector.broadcast %cst_350 : f32 to vector<4x128xf32>
    %c3_351 = arith.constant 3 : index
    %c0_352 = arith.constant 0 : index
    %c0_353 = arith.constant 0 : index
    %496 = vector.load %arg7[%c3_351, %c0_352, %c0_353] : memref<6x6x128xf32, #tpu.memory_space<vmem>>, vector<1x6x128xf32>
    %497 = vector.shape_cast %496 : vector<1x6x128xf32> to vector<6x128xf32>
    %498 = vector.extract_strided_slice %497 {offsets = [0, 0], sizes = [4, 128], strides = [1, 1]} : vector<6x128xf32> to vector<4x128xf32>
    %499 = arith.truncf %498 : vector<4x128xf32> to vector<4x128xbf16>
    %c0_354 = arith.constant 0 : index
    %c0_355 = arith.constant 0 : index
    %c0_356 = arith.constant 0 : index
    %500 = vector.load %arg4[%c0_354, %c0_355, %c0_356] : memref<9x128x128xbf16, #tpu.memory_space<vmem>>, vector<1x128x128xbf16>
    %501 = vector.shape_cast %500 : vector<1x128x128xbf16> to vector<128x128xbf16>
    %cst_357 = arith.constant dense<0.000000e+00> : vector<4x128xf32>
    %502 = tpu.matmul %499, %501, %cst_357 {dimension_numbers = #tpu.dot_dimension_numbers<[1], [0], [0], [1], [0, 0, 1, 1], [], []>} : vector<4x128xbf16>, vector<128x128xbf16>, vector<4x128xf32> -> vector<4x128xf32>
    %503 = arith.addf %495, %502 : vector<4x128xf32>
    %504 = vector.extract_strided_slice %497 {offsets = [1, 0], sizes = [4, 128], strides = [1, 1]} : vector<6x128xf32> to vector<4x128xf32>
    %505 = arith.truncf %504 : vector<4x128xf32> to vector<4x128xbf16>
    %c1_358 = arith.constant 1 : index
    %c0_359 = arith.constant 0 : index
    %c0_360 = arith.constant 0 : index
    %506 = vector.load %arg4[%c1_358, %c0_359, %c0_360] : memref<9x128x128xbf16, #tpu.memory_space<vmem>>, vector<1x128x128xbf16>
    %507 = vector.shape_cast %506 : vector<1x128x128xbf16> to vector<128x128xbf16>
    %cst_361 = arith.constant dense<0.000000e+00> : vector<4x128xf32>
    %508 = tpu.matmul %505, %507, %cst_361 {dimension_numbers = #tpu.dot_dimension_numbers<[1], [0], [0], [1], [0, 0, 1, 1], [], []>} : vector<4x128xbf16>, vector<128x128xbf16>, vector<4x128xf32> -> vector<4x128xf32>
    %509 = arith.addf %503, %508 : vector<4x128xf32>
    %510 = vector.extract_strided_slice %497 {offsets = [2, 0], sizes = [4, 128], strides = [1, 1]} : vector<6x128xf32> to vector<4x128xf32>
    %511 = arith.truncf %510 : vector<4x128xf32> to vector<4x128xbf16>
    %c2_362 = arith.constant 2 : index
    %c0_363 = arith.constant 0 : index
    %c0_364 = arith.constant 0 : index
    %512 = vector.load %arg4[%c2_362, %c0_363, %c0_364] : memref<9x128x128xbf16, #tpu.memory_space<vmem>>, vector<1x128x128xbf16>
    %513 = vector.shape_cast %512 : vector<1x128x128xbf16> to vector<128x128xbf16>
    %cst_365 = arith.constant dense<0.000000e+00> : vector<4x128xf32>
    %514 = tpu.matmul %511, %513, %cst_365 {dimension_numbers = #tpu.dot_dimension_numbers<[1], [0], [0], [1], [0, 0, 1, 1], [], []>} : vector<4x128xbf16>, vector<128x128xbf16>, vector<4x128xf32> -> vector<4x128xf32>
    %515 = arith.addf %509, %514 : vector<4x128xf32>
    %c4_366 = arith.constant 4 : index
    %c0_367 = arith.constant 0 : index
    %c0_368 = arith.constant 0 : index
    %516 = vector.load %arg7[%c4_366, %c0_367, %c0_368] : memref<6x6x128xf32, #tpu.memory_space<vmem>>, vector<1x6x128xf32>
    %517 = vector.shape_cast %516 : vector<1x6x128xf32> to vector<6x128xf32>
    %518 = vector.extract_strided_slice %517 {offsets = [0, 0], sizes = [4, 128], strides = [1, 1]} : vector<6x128xf32> to vector<4x128xf32>
    %519 = arith.truncf %518 : vector<4x128xf32> to vector<4x128xbf16>
    %c3_369 = arith.constant 3 : index
    %c0_370 = arith.constant 0 : index
    %c0_371 = arith.constant 0 : index
    %520 = vector.load %arg4[%c3_369, %c0_370, %c0_371] : memref<9x128x128xbf16, #tpu.memory_space<vmem>>, vector<1x128x128xbf16>
    %521 = vector.shape_cast %520 : vector<1x128x128xbf16> to vector<128x128xbf16>
    %cst_372 = arith.constant dense<0.000000e+00> : vector<4x128xf32>
    %522 = tpu.matmul %519, %521, %cst_372 {dimension_numbers = #tpu.dot_dimension_numbers<[1], [0], [0], [1], [0, 0, 1, 1], [], []>} : vector<4x128xbf16>, vector<128x128xbf16>, vector<4x128xf32> -> vector<4x128xf32>
    %523 = arith.addf %515, %522 : vector<4x128xf32>
    %524 = vector.extract_strided_slice %517 {offsets = [1, 0], sizes = [4, 128], strides = [1, 1]} : vector<6x128xf32> to vector<4x128xf32>
    %525 = arith.truncf %524 : vector<4x128xf32> to vector<4x128xbf16>
    %c4_373 = arith.constant 4 : index
    %c0_374 = arith.constant 0 : index
    %c0_375 = arith.constant 0 : index
    %526 = vector.load %arg4[%c4_373, %c0_374, %c0_375] : memref<9x128x128xbf16, #tpu.memory_space<vmem>>, vector<1x128x128xbf16>
    %527 = vector.shape_cast %526 : vector<1x128x128xbf16> to vector<128x128xbf16>
    %cst_376 = arith.constant dense<0.000000e+00> : vector<4x128xf32>
    %528 = tpu.matmul %525, %527, %cst_376 {dimension_numbers = #tpu.dot_dimension_numbers<[1], [0], [0], [1], [0, 0, 1, 1], [], []>} : vector<4x128xbf16>, vector<128x128xbf16>, vector<4x128xf32> -> vector<4x128xf32>
    %529 = arith.addf %523, %528 : vector<4x128xf32>
    %530 = vector.extract_strided_slice %517 {offsets = [2, 0], sizes = [4, 128], strides = [1, 1]} : vector<6x128xf32> to vector<4x128xf32>
    %531 = arith.truncf %530 : vector<4x128xf32> to vector<4x128xbf16>
    %c5_377 = arith.constant 5 : index
    %c0_378 = arith.constant 0 : index
    %c0_379 = arith.constant 0 : index
    %532 = vector.load %arg4[%c5_377, %c0_378, %c0_379] : memref<9x128x128xbf16, #tpu.memory_space<vmem>>, vector<1x128x128xbf16>
    %533 = vector.shape_cast %532 : vector<1x128x128xbf16> to vector<128x128xbf16>
    %cst_380 = arith.constant dense<0.000000e+00> : vector<4x128xf32>
    %534 = tpu.matmul %531, %533, %cst_380 {dimension_numbers = #tpu.dot_dimension_numbers<[1], [0], [0], [1], [0, 0, 1, 1], [], []>} : vector<4x128xbf16>, vector<128x128xbf16>, vector<4x128xf32> -> vector<4x128xf32>
    %535 = arith.addf %529, %534 : vector<4x128xf32>
    %c5_381 = arith.constant 5 : index
    %c0_382 = arith.constant 0 : index
    %c0_383 = arith.constant 0 : index
    %536 = vector.load %arg7[%c5_381, %c0_382, %c0_383] : memref<6x6x128xf32, #tpu.memory_space<vmem>>, vector<1x6x128xf32>
    %537 = vector.shape_cast %536 : vector<1x6x128xf32> to vector<6x128xf32>
    %538 = vector.extract_strided_slice %537 {offsets = [0, 0], sizes = [4, 128], strides = [1, 1]} : vector<6x128xf32> to vector<4x128xf32>
    %539 = arith.truncf %538 : vector<4x128xf32> to vector<4x128xbf16>
    %c6_384 = arith.constant 6 : index
    %c0_385 = arith.constant 0 : index
    %c0_386 = arith.constant 0 : index
    %540 = vector.load %arg4[%c6_384, %c0_385, %c0_386] : memref<9x128x128xbf16, #tpu.memory_space<vmem>>, vector<1x128x128xbf16>
    %541 = vector.shape_cast %540 : vector<1x128x128xbf16> to vector<128x128xbf16>
    %cst_387 = arith.constant dense<0.000000e+00> : vector<4x128xf32>
    %542 = tpu.matmul %539, %541, %cst_387 {dimension_numbers = #tpu.dot_dimension_numbers<[1], [0], [0], [1], [0, 0, 1, 1], [], []>} : vector<4x128xbf16>, vector<128x128xbf16>, vector<4x128xf32> -> vector<4x128xf32>
    %543 = arith.addf %535, %542 : vector<4x128xf32>
    %544 = vector.extract_strided_slice %537 {offsets = [1, 0], sizes = [4, 128], strides = [1, 1]} : vector<6x128xf32> to vector<4x128xf32>
    %545 = arith.truncf %544 : vector<4x128xf32> to vector<4x128xbf16>
    %c7_388 = arith.constant 7 : index
    %c0_389 = arith.constant 0 : index
    %c0_390 = arith.constant 0 : index
    %546 = vector.load %arg4[%c7_388, %c0_389, %c0_390] : memref<9x128x128xbf16, #tpu.memory_space<vmem>>, vector<1x128x128xbf16>
    %547 = vector.shape_cast %546 : vector<1x128x128xbf16> to vector<128x128xbf16>
    %cst_391 = arith.constant dense<0.000000e+00> : vector<4x128xf32>
    %548 = tpu.matmul %545, %547, %cst_391 {dimension_numbers = #tpu.dot_dimension_numbers<[1], [0], [0], [1], [0, 0, 1, 1], [], []>} : vector<4x128xbf16>, vector<128x128xbf16>, vector<4x128xf32> -> vector<4x128xf32>
    %549 = arith.addf %543, %548 : vector<4x128xf32>
    %550 = vector.extract_strided_slice %537 {offsets = [2, 0], sizes = [4, 128], strides = [1, 1]} : vector<6x128xf32> to vector<4x128xf32>
    %551 = arith.truncf %550 : vector<4x128xf32> to vector<4x128xbf16>
    %c8_392 = arith.constant 8 : index
    %c0_393 = arith.constant 0 : index
    %c0_394 = arith.constant 0 : index
    %552 = vector.load %arg4[%c8_392, %c0_393, %c0_394] : memref<9x128x128xbf16, #tpu.memory_space<vmem>>, vector<1x128x128xbf16>
    %553 = vector.shape_cast %552 : vector<1x128x128xbf16> to vector<128x128xbf16>
    %cst_395 = arith.constant dense<0.000000e+00> : vector<4x128xf32>
    %554 = tpu.matmul %551, %553, %cst_395 {dimension_numbers = #tpu.dot_dimension_numbers<[1], [0], [0], [1], [0, 0, 1, 1], [], []>} : vector<4x128xbf16>, vector<128x128xbf16>, vector<4x128xf32> -> vector<4x128xf32>
    %555 = arith.addf %549, %554 : vector<4x128xf32>
    %c0_396 = arith.constant 0 : index
    %c0_397 = arith.constant 0 : index
    %556 = vector.load %arg5[%c0_396, %c0_397] : memref<1x128xf32, #tpu.memory_space<vmem>>, vector<1x128xf32>
    %557 = vector.broadcast %556 : vector<1x128xf32> to vector<4x128xf32>
    %558 = arith.addf %555, %557 : vector<4x128xf32>
    %c3_398 = arith.constant 3 : index
    %c0_399 = arith.constant 0 : index
    %c0_400 = arith.constant 0 : index
    %559 = vector.load %arg8[%c3_398, %c0_399, %c0_400] : memref<4x4x128xf32, #tpu.memory_space<vmem>>, vector<1x4x128xf32>
    %560 = vector.shape_cast %559 : vector<1x4x128xf32> to vector<4x128xf32>
    %561 = arith.addf %558, %560 : vector<4x128xf32>
    %cst_401 = arith.constant 0.000000e+00 : f32
    %562 = vector.broadcast %cst_401 : f32 to vector<4x128xf32>
    %563 = arith.maximumf %561, %562 : vector<4x128xf32>
    %564 = arith.truncf %563 : vector<4x128xf32> to vector<4x128xbf16>
    %c0_402 = arith.constant 0 : index
    %c3_403 = arith.constant 3 : index
    %c0_404 = arith.constant 0 : index
    %c0_405 = arith.constant 0 : index
    %565 = vector.load %arg6[%c0_402, %c3_403, %c0_404, %c0_405] : memref<1x4x4x128xbf16, #tpu.memory_space<vmem>>, vector<1x1x4x128xbf16>
    %566 = vector.shape_cast %565 : vector<1x1x4x128xbf16> to vector<4x128xbf16>
    %567 = vector.shape_cast %564 : vector<4x128xbf16> to vector<1x1x4x128xbf16>
    tpu.vector_store %arg6[%c0_402, %c3_403, %c0_404, %c0_405], %567 {strides = array<i32>} : memref<1x4x4x128xbf16, #tpu.memory_space<vmem>>, vector<1x1x4x128xbf16>,
    return
  }
  func.func @transform_0(%arg0: i32) -> (i32, i32, i32, i32) {
    %c0_i32 = arith.constant 0 : i32
    %c0_i32_0 = arith.constant 0 : i32
    %c0_i32_1 = arith.constant 0 : i32
    %c0_i32_2 = arith.constant 0 : i32
    return %arg0, %c0_i32, %c0_i32_0, %c0_i32_1 : i32, i32, i32, i32
  }
  func.func @transform_1(%arg0: i32) -> (i32, i32, i32) {
    %c0_i32 = arith.constant 0 : i32
    %c0_i32_0 = arith.constant 0 : i32
    %c0_i32_1 = arith.constant 0 : i32
    %c0_i32_2 = arith.constant 0 : i32
    return %c0_i32, %c0_i32_0, %c0_i32_1 : i32, i32, i32
  }
  func.func @transform_2(%arg0: i32) -> (i32, i32) {
    %c0_i32 = arith.constant 0 : i32
    %c0_i32_0 = arith.constant 0 : i32
    %c0_i32_1 = arith.constant 0 : i32
    return %c0_i32, %c0_i32_0 : i32, i32
  }
  func.func @transform_3(%arg0: i32) -> (i32, i32, i32) {
    %c0_i32 = arith.constant 0 : i32
    %c0_i32_0 = arith.constant 0 : i32
    %c0_i32_1 = arith.constant 0 : i32
    %c0_i32_2 = arith.constant 0 : i32
    return %c0_i32, %c0_i32_0, %c0_i32_1 : i32, i32, i32
  }
  func.func @transform_4(%arg0: i32) -> (i32, i32) {
    %c0_i32 = arith.constant 0 : i32
    %c0_i32_0 = arith.constant 0 : i32
    %c0_i32_1 = arith.constant 0 : i32
    return %c0_i32, %c0_i32_0 : i32, i32
  }
  func.func @transform_5(%arg0: i32) -> (i32, i32, i32, i32) {
    %c0_i32 = arith.constant 0 : i32
    %c0_i32_0 = arith.constant 0 : i32
    %c0_i32_1 = arith.constant 0 : i32
    %c0_i32_2 = arith.constant 0 : i32
    return %arg0, %c0_i32, %c0_i32_0, %c0_i32_1 : i32, i32, i32, i32
  }
}

</mosaic_0001>

<llo_original>
// kernel: enricher_forward.3
$region0: #{enricher_forward.3}
  #allocation0 [shape = 'u32[]', space=smem, size = 0x4, offset = 0x4, fixed_abs, tag = 'smem constant byte address 0x4 - core index']
  #allocation1 [shape = 'u32[72,128]{1,0:T(1,128)}', space=vmem, size = 0x9000, scoped, tag = 'internal scratch']
  %s0 = inlined_call_operand.vmem [shape: bf16[2,64,256], index: 0, kind: input, shape index: {}]
  %s1 = inlined_call_operand.vmem [shape: bf16[256,128], index: 1, kind: input, shape index: {}]
  %s2 = inlined_call_operand.vmem [shape: f32[1,128], index: 2, kind: input, shape index: {}]
  %s3 = inlined_call_operand.vmem [shape: bf16[2,64,128], index: 3, kind: output, shape index: {}]
  %s4 = sld [smem:[#allocation0]]
  $region45: #{enricher_forward.3} parent=0
    _
  %s6 = ssub.s32 1, %s4
  %s7 = scalar_select 0, %s6, %s4
  loop: start=0, step=1, limit=4
  $region2: #{enricher_forward.3} parent=0 // loop_pre_header
    _
  $region3: #{enricher_forward.3} parent=0 // loop_header
    %s9 = sphi 0, %s13
    %p10 = scmp.ge.s32.totalorder %s9, 4
    %s19 = sphi 0, %s21
    %s22 = sphi 0, %s19
    %s23 = sphi 0, %s22
    %s39 = sphi 0, %s23
    %s43 = sphi 0, %s43
    %s45 = sphi 0, %s43
    %s46 = sphi 0, %s45
    %s60 = sphi 0, %s46
    %s64 = sphi 0, %s64
    %s66 = sphi 0, %s64
    %s67 = sphi 0, %s66
    %s81 = sphi 0, %s67
    %s87 = sphi 0, %s89
    %s90 = sphi 0, %s87
    %s91 = sphi 0, %s90
    %s107 = sphi 0, %s91
  $region4: #{enricher_forward.3} parent=0 // loop_header_branch
    %12 = sbr.rel (%p10) target = $region8
  $region5: #{enricher_forward.3} parent=0 // loop_body
    %s14 = ssub.s32 %s9, 1
    %s15 = ssub.s32 %s9, 2
    %s16 = sadd.s32 %s9, 1
    %s17 = ssub.s32 %s9, %s16
    %p18 = scmp.eq.s32.totalorder %s17, 0
    %s20 = sadd.s32 %s19, 1
    %s21 = scalar_select %p18, %s19, %s20
    %p24 = pneg %p18
    %p25 = scmp.eq.s32.totalorder %s9, 1
    %p26 = por %p24, %p25
    %p27 = scmp.ne.s32.totalorder %s19, %s22
    %p28 = scmp.eq.s32.totalorder %s9, 0
    %p29 = por %p27, %p28
    %p30 = scmp.ne.s32.totalorder %s19, %s22
    %p31 = scmp.eq.s32.totalorder %s14, 1
    %p32 = por %p30, %p31
    %p33 = scmp.ne.s32.totalorder %s22, %s23
    %p34 = scmp.eq.s32.totalorder %s14, 0
    %p35 = por %p33, %p34
    %p36 = scmp.ne.s32.totalorder %s22, %s23
    %p37 = scmp.eq.s32.totalorder %s15, 1
    %p38 = por %p36, %p37
    %p40 = scmp.ne.s32.totalorder %s23, %s39
    %p41 = scmp.eq.s32.totalorder %s15, 0
    %p42 = por %p40, %p41
    %s44 = sadd.s32 %s43, 1
    %p47 = scmp.eq.s32.totalorder %s9, 1
    %p48 = scmp.ne.s32.totalorder %s43, %s45
    %p49 = scmp.eq.s32.totalorder %s9, 0
    %p50 = por %p48, %p49
    %p51 = scmp.ne.s32.totalorder %s43, %s45
    %p52 = scmp.eq.s32.totalorder %s14, 1
    %p53 = por %p51, %p52
    %p54 = scmp.ne.s32.totalorder %s45, %s46
    %p55 = scmp.eq.s32.totalorder %s14, 0
    %p56 = por %p54, %p55
    %p57 = scmp.ne.s32.totalorder %s45, %s46
    %p58 = scmp.eq.s32.totalorder %s15, 1
    %p59 = por %p57, %p58
    %p61 = scmp.ne.s32.totalorder %s46, %s60
    %p62 = scmp.eq.s32.totalorder %s15, 0
    %p63 = por %p61, %p62
    %s65 = sadd.s32 %s64, 1
    %p68 = scmp.eq.s32.totalorder %s9, 1
    %p69 = scmp.ne.s32.totalorder %s64, %s66
    %p70 = scmp.eq.s32.totalorder %s9, 0
    %p71 = por %p69, %p70
    %p72 = scmp.ne.s32.totalorder %s64, %s66
    %p73 = scmp.eq.s32.totalorder %s14, 1
    %p74 = por %p72, %p73
    %p75 = scmp.ne.s32.totalorder %s66, %s67
    %p76 = scmp.eq.s32.totalorder %s14, 0
    %p77 = por %p75, %p76
    %p78 = scmp.ne.s32.totalorder %s66, %s67
    %p79 = scmp.eq.s32.totalorder %s15, 1
    %p80 = por %p78, %p79
    %p82 = scmp.ne.s32.totalorder %s67, %s81
    %p83 = scmp.eq.s32.totalorder %s15, 0
    %p84 = por %p82, %p83
    %s85 = ssub.s32 %s9, %s16
    %p86 = scmp.eq.s32.totalorder %s85, 0
    %s88 = sadd.s32 %s87, 1
    %s89 = scalar_select %p86, %s87, %s88
    %p92 = pneg %p86
    %p93 = scmp.eq.s32.totalorder %s9, 1
    %p94 = por %p92, %p93
    %p95 = scmp.ne.s32.totalorder %s87, %s90
    %p96 = scmp.eq.s32.totalorder %s9, 0
    %p97 = por %p95, %p96
    %p98 = scmp.ne.s32.totalorder %s87, %s90
    %p99 = scmp.eq.s32.totalorder %s14, 1
    %p100 = por %p98, %p99
    %p101 = scmp.ne.s32.totalorder %s90, %s91
    %p102 = scmp.eq.s32.totalorder %s14, 0
    %p103 = por %p101, %p102
    %p104 = scmp.ne.s32.totalorder %s90, %s91
    %p105 = scmp.eq.s32.totalorder %s15, 1
    %p106 = por %p104, %p105
    %p108 = scmp.ne.s32.totalorder %s91, %s107
    %p109 = scmp.eq.s32.totalorder %s15, 0
    %p110 = por %p108, %p109
    %p111 = scmp.le.s32.totalorder 1, %s9
    %p112 = scmp.lt.s32.totalorder %s9, 3
    %p113 = pnand %p111, %p112
    %p114 = pneg %p113
    // Predicated region
    $region9: #{enricher_forward.3} parent=5 // pred_check
      _
    $region10: #{enricher_forward.3} parent=5 // pred_check_branch
      %116 = sbr.rel (%p113) target = $region12
    $region11: #{enricher_forward.3} parent=5 // pred_region
      %s117 = ssub.s32 %s9, 1
      // Predicated region
      $region13: #{enricher_forward.3} parent=11 // pred_check
        %p118 = pneg %p56
      $region14: #{enricher_forward.3} parent=11 // pred_check_branch
        %120 = sbr.rel (%p118) target = $region16
      $region15: #{enricher_forward.3} parent=11 // pred_region
        _
      $region16: #{enricher_forward.3} parent=11 // pred_fallthru
        _
      // Predicated region
      $region17: #{enricher_forward.3} parent=11 // pred_check
        %p121 = pneg %p77
      $region18: #{enricher_forward.3} parent=11 // pred_check_branch
        %123 = sbr.rel (%p121) target = $region20
      $region19: #{enricher_forward.3} parent=11 // pred_region
        _
      $region20: #{enricher_forward.3} parent=11 // pred_fallthru
        _
    $region12: #{enricher_forward.3} parent=5 // pred_fallthru
      _
    %p124 = scmp.lt.s32.totalorder %s9, 2
    // Predicated region
    $region21: #{enricher_forward.3} parent=5 // pred_check
      %p125 = pneg %p124
    $region22: #{enricher_forward.3} parent=5 // pred_check_branch
      %127 = sbr.rel (%p125) target = $region24
    $region23: #{enricher_forward.3} parent=5 // pred_region
      // Predicated region
      $region25: #{enricher_forward.3} parent=23 // pred_check
        %p128 = pneg %p29
      $region26: #{enricher_forward.3} parent=23 // pred_check_branch
        %130 = sbr.rel (%p128) target = $region28
      $region27: #{enricher_forward.3} parent=23 // pred_region
        %p131 = scmp.lt.s32.totalorder %s9, 1
        %s132 = scalar_select %p131, %s9, 1
        %s133 = smul.addr %s132, 16
        %s134 = smul.addr %s133, 4
        %s135 = scalar_lea.vmem %s0, %s134
      $region28: #{enricher_forward.3} parent=23 // pred_fallthru
        _
    $region24: #{enricher_forward.3} parent=5 // pred_fallthru
      _
    %p136 = scmp.le.s32.totalorder 1, %s9
    %p137 = scmp.lt.s32.totalorder %s9, 3
    %p138 = pnand %p136, %p137
    %p139 = pneg %p138
    // Predicated region
    $region29: #{enricher_forward.3} parent=5 // pred_check
      _
    $region30: #{enricher_forward.3} parent=5 // pred_check_branch
      %141 = sbr.rel (%p138) target = $region32
    $region31: #{enricher_forward.3} parent=5 // pred_region
      %s142 = ssub.s32 %s9, 1
      %p143 = scmp.lt.s32.totalorder %s14, 1
      %s144 = scalar_select %p143, %s14, 1
      %s145 = smul.addr %s144, 16
      %s146 = smul.addr %s145, 4
      %s147 = scalar_lea.vmem %s0, %s146
      %p148 = pneg %p35
      %p149 = pneg %p32
      %p150 = pneg %p56
      %p151 = pneg %p53
      %p152 = pneg %p77
      %p153 = pneg %p74
      %p154 = pneg %p103
      %p155 = pneg %p100
      %p156 = scmp.lt.s32.totalorder %s14, 1
      %s157 = scalar_select %p156, %s14, 1
      %s158 = smul.addr %s157, 8
      %s159 = smul.addr %s158, 4
      %s160 = scalar_lea.vmem %s3, %s159
      %p161 = scmp.lt.s32.totalorder %s14, 1
      %s162 = scalar_select %p161, %s14, 1
      %s163 = smul.addr %s162, 16
      %s164 = smul.addr %s163, 4
      %s165 = scalar_lea.vmem %s0, %s164
      %p166 = scmp.lt.s32.totalorder %s14, 1
      %s167 = scalar_select %p166, %s14, 1
      %s168 = smul.addr %s167, 8
      %s169 = smul.addr %s168, 4
      %s170 = scalar_lea.vmem %s3, %s169
      %v171 = vld [vmem:[%s165] sm:$0xff]
      %v172 = vld [vmem:[%s165 + $0x8] sm:$0xff]
      %v173 = vld [vmem:[%s165 + $0x10] sm:$0xff]
      %v174 = vld [vmem:[%s165 + $0x18] sm:$0xff]
      %v175 = vld [vmem:[%s165 + $0x20] sm:$0xff]
      %v176 = vld [vmem:[%s165 + $0x28] sm:$0xff]
      %v177 = vld [vmem:[%s165 + $0x30] sm:$0xff]
      %v178 = vld [vmem:[%s165 + $0x38] sm:$0xff]
      %v179 = vld [vmem:[%s1] sm:$0xf]
      %v180 = vld [vmem:[%s1 + $0x4] sm:$0xf]
      %v181 = vld [vmem:[%s1 + $0x8] sm:$0xf]
      %v182 = vld [vmem:[%s1 + $0xc] sm:$0xf]
      %v183 = vld [vmem:[%s1 + $0x10] sm:$0xf]
      %v184 = vld [vmem:[%s1 + $0x14] sm:$0xf]
      %v185 = vld [vmem:[%s1 + $0x18] sm:$0xf]
      %v186 = vld [vmem:[%s1 + $0x1c] sm:$0xf]
      %v187 = vld [vmem:[%s1 + $0x20] sm:$0xf]
      %v188 = vld [vmem:[%s1 + $0x24] sm:$0xf]
      %v189 = vld [vmem:[%s1 + $0x28] sm:$0xf]
      %v190 = vld [vmem:[%s1 + $0x2c] sm:$0xf]
      %v191 = vld [vmem:[%s1 + $0x30] sm:$0xf]
      %v192 = vld [vmem:[%s1 + $0x34] sm:$0xf]
      %v193 = vld [vmem:[%s1 + $0x38] sm:$0xf]
      %v194 = vld [vmem:[%s1 + $0x3c] sm:$0xf]
      %v195 = vld [vmem:[%s1 + $0x40] sm:$0xf]
      %v196 = vld [vmem:[%s1 + $0x44] sm:$0xf]
      %v197 = vld [vmem:[%s1 + $0x48] sm:$0xf]
      %v198 = vld [vmem:[%s1 + $0x4c] sm:$0xf]
      %v199 = vld [vmem:[%s1 + $0x50] sm:$0xf]
      %v200 = vld [vmem:[%s1 + $0x54] sm:$0xf]
      %v201 = vld [vmem:[%s1 + $0x58] sm:$0xf]
      %v202 = vld [vmem:[%s1 + $0x5c] sm:$0xf]
      %v203 = vld [vmem:[%s1 + $0x60] sm:$0xf]
      %v204 = vld [vmem:[%s1 + $0x64] sm:$0xf]
      %v205 = vld [vmem:[%s1 + $0x68] sm:$0xf]
      %v206 = vld [vmem:[%s1 + $0x6c] sm:$0xf]
      %v207 = vld [vmem:[%s1 + $0x70] sm:$0xf]
      %v208 = vld [vmem:[%s1 + $0x74] sm:$0xf]
      %v209 = vld [vmem:[%s1 + $0x78] sm:$0xf]
      %v210 = vld [vmem:[%s1 + $0x7c] sm:$0xf]
      %v211 = vld [vmem:[%s2] sm:$0x1]
      %v213 = vperm.slane %v211, 0
      %v223 = vunpack.c.l.b16 %v171
      %v224 = vunpack.c.h.b16 %v171
      %v225 = vunpack.c.l.b16 %v172
      %v226 = vunpack.c.h.b16 %v172
      %v227 = vunpack.c.l.b16 %v173
      %v228 = vunpack.c.h.b16 %v173
      %v229 = vunpack.c.l.b16 %v174
      %v230 = vunpack.c.h.b16 %v174
      %v231 = vunpack.c.l.b16 %v175
      %v232 = vunpack.c.h.b16 %v175
      %v233 = vunpack.c.l.b16 %v176
      %v234 = vunpack.c.h.b16 %v176
      %v235 = vunpack.c.l.b16 %v177
      %v236 = vunpack.c.h.b16 %v177
      %v237 = vunpack.c.l.b16 %v178
      %v238 = vunpack.c.h.b16 %v178
      %v239 = vpack.c.b16 %v225, %v223
      %v240 = vpack.c.b16 %v226, %v224
      %v241 = vpack.c.b16 %v229, %v227
      %v242 = vpack.c.b16 %v230, %v228
      %v243 = vpack.c.b16 %v233, %v231
      %v244 = vpack.c.b16 %v234, %v232
      %v245 = vpack.c.b16 %v237, %v235
      %v246 = vpack.c.b16 %v238, %v236
      %v287 = vunpack.c.l.b16 %v179
      %v288 = vunpack.c.l.b16 %v180
      %v289 = vunpack.c.l.b16 %v181
      %v290 = vunpack.c.l.b16 %v182
      %v291 = vunpack.c.l.b16 %v183
      %v292 = vunpack.c.l.b16 %v184
      %v293 = vunpack.c.l.b16 %v185
      %v294 = vunpack.c.l.b16 %v186
      %v295 = vunpack.c.l.b16 %v187
      %v296 = vunpack.c.l.b16 %v188
      %v297 = vunpack.c.l.b16 %v189
      %v298 = vunpack.c.l.b16 %v190
      %v299 = vunpack.c.l.b16 %v191
      %v300 = vunpack.c.l.b16 %v192
      %v301 = vunpack.c.l.b16 %v193
      %v302 = vunpack.c.l.b16 %v194
      %v303 = vunpack.c.l.b16 %v195
      %v304 = vunpack.c.l.b16 %v196
      %v305 = vunpack.c.l.b16 %v197
      %v306 = vunpack.c.l.b16 %v198
      %v307 = vunpack.c.l.b16 %v199
      %v308 = vunpack.c.l.b16 %v200
      %v309 = vunpack.c.l.b16 %v201
      %v310 = vunpack.c.l.b16 %v202
      %v311 = vunpack.c.l.b16 %v203
      %v312 = vunpack.c.l.b16 %v204
      %v313 = vunpack.c.l.b16 %v205
      %v314 = vunpack.c.l.b16 %v206
      %v315 = vunpack.c.l.b16 %v207
      %v316 = vunpack.c.l.b16 %v208
      %v317 = vunpack.c.l.b16 %v209
      %v318 = vunpack.c.l.b16 %v210
      %v319 = vpack.c.b16 %v288, %v287
      %v320 = vpack.c.b16 %v290, %v289
      %v321 = vpack.c.b16 %v292, %v291
      %v322 = vpack.c.b16 %v294, %v293
      %v323 = vpack.c.b16 %v296, %v295
      %v324 = vpack.c.b16 %v298, %v297
      %v325 = vpack.c.b16 %v300, %v299
      %v326 = vpack.c.b16 %v302, %v301
      %v327 = vpack.c.b16 %v304, %v303
      %v328 = vpack.c.b16 %v306, %v305
      %v329 = vpack.c.b16 %v308, %v307
      %v330 = vpack.c.b16 %v310, %v309
      %v331 = vpack.c.b16 %v312, %v311
      %v332 = vpack.c.b16 %v314, %v313
      %v333 = vpack.c.b16 %v316, %v315
      %v334 = vpack.c.b16 %v318, %v317
      %351 = vmatpush.bf16.msra.mxu0 %v326
      %352 = vmatpush.bf16.msra.mxu0 %v325
      %353 = vmatpush.bf16.msra.mxu0 %v324
      %354 = vmatpush.bf16.msra.mxu0 %v323
      %355 = vmatpush.bf16.msra.mxu0 %v322
      %356 = vmatpush.bf16.msra.mxu0 %v321
      %357 = vmatpush.bf16.msra.mxu0 %v320
      %358 = vmatpush.bf16.msra.mxu0 %v319
      %359 = vmatmul.bf16.gmra.mxu0 %v239
      %v360 = vpop.f32.mrf.mxu0
      %v361 = vadd.f32 %v213, %v360
      %v362 = vpop.f32.mrf.mxu0
      %v363 = vadd.f32 %v213, %v362
      %364 = vmatmul.bf16.gmra.mxu0 %v241
      %v365 = vpop.f32.mrf.mxu0
      %v366 = vadd.f32 %v213, %v365
      %v367 = vpop.f32.mrf.mxu0
      %v368 = vadd.f32 %v213, %v367
      %369 = vmatmul.bf16.gmra.mxu0 %v243
      %v370 = vpop.f32.mrf.mxu0
      %v371 = vadd.f32 %v213, %v370
      %v372 = vpop.f32.mrf.mxu0
      %v373 = vadd.f32 %v213, %v372
      %374 = vmatmul.bf16.gmra.mxu0 %v245
      %v375 = vpop.f32.mrf.mxu0
      %v376 = vadd.f32 %v213, %v375
      %v377 = vpop.f32.mrf.mxu0
      %v378 = vadd.f32 %v213, %v377
      %379 = vdwg.mxu0
      %380 = vmatpush.bf16.msra.mxu0 %v334
      %381 = vmatpush.bf16.msra.mxu0 %v333
      %382 = vmatpush.bf16.msra.mxu0 %v332
      %383 = vmatpush.bf16.msra.mxu0 %v331
      %384 = vmatpush.bf16.msra.mxu0 %v330
      %385 = vmatpush.bf16.msra.mxu0 %v329
      %386 = vmatpush.bf16.msra.mxu0 %v328
      %387 = vmatpush.bf16.msra.mxu0 %v327
      %388 = vmatmul.bf16.gmra.mxu0 %v240
      %v389 = vpop.f32.mrf.mxu0
      %v390 = vadd.f32 %v361, %v389
      %v391 = vpop.f32.mrf.mxu0
      %v392 = vadd.f32 %v363, %v391
      %393 = vmatmul.bf16.gmra.mxu0 %v242
      %v394 = vpop.f32.mrf.mxu0
      %v395 = vadd.f32 %v366, %v394
      %v396 = vpop.f32.mrf.mxu0
      %v397 = vadd.f32 %v368, %v396
      %398 = vmatmul.bf16.gmra.mxu0 %v244
      %v399 = vpop.f32.mrf.mxu0
      %v400 = vadd.f32 %v371, %v399
      %v401 = vpop.f32.mrf.mxu0
      %v402 = vadd.f32 %v373, %v401
      %403 = vmatmul.bf16.gmra.mxu0 %v246
      %v404 = vpop.f32.mrf.mxu0
      %v405 = vadd.f32 %v376, %v404
      %v406 = vpop.f32.mrf.mxu0
      %v407 = vadd.f32 %v378, %v406
      %408 = vdwg.mxu0
      %v409 = vpack.c.bf16 %v390, %v390
      %v410 = vpack.c.bf16 %v392, %v392
      %v411 = vpack.c.bf16 %v395, %v395
      %v412 = vpack.c.bf16 %v397, %v397
      %v413 = vpack.c.bf16 %v400, %v400
      %v414 = vpack.c.bf16 %v402, %v402
      %v415 = vpack.c.bf16 %v405, %v405
      %v416 = vpack.c.bf16 %v407, %v407
      %417 = vst [vmem:[%s170] sm:$0xf] %v409
      %418 = vst [vmem:[%s170 + $0x4] sm:$0xf] %v410
      %419 = vst [vmem:[%s170 + $0x8] sm:$0xf] %v411
      %420 = vst [vmem:[%s170 + $0xc] sm:$0xf] %v412
      %421 = vst [vmem:[%s170 + $0x10] sm:$0xf] %v413
      %422 = vst [vmem:[%s170 + $0x14] sm:$0xf] %v414
      %423 = vst [vmem:[%s170 + $0x18] sm:$0xf] %v415
      %424 = vst [vmem:[%s170 + $0x1c] sm:$0xf] %v416
      %p425 = scmp.lt.s32.totalorder %s14, 1
      %s426 = scalar_select %p425, %s14, 1
      %s427 = smul.addr %s426, 8
      %s428 = smul.addr %s427, 4
      %s429 = scalar_lea.vmem %s3, %s428
      // Predicated region
      $region33: #{enricher_forward.3} parent=31 // pred_check
        %p430 = pneg %p100
      $region34: #{enricher_forward.3} parent=31 // pred_check_branch
        %432 = sbr.rel (%p430) target = $region36
      $region35: #{enricher_forward.3} parent=31 // pred_region
        _
      $region36: #{enricher_forward.3} parent=31 // pred_fallthru
        _
    $region32: #{enricher_forward.3} parent=5 // pred_fallthru
      _
    %p433 = scmp.le.s32.totalorder 2, %s9
    // Predicated region
    $region37: #{enricher_forward.3} parent=5 // pred_check
      %p434 = pneg %p433
    $region38: #{enricher_forward.3} parent=5 // pred_check_branch
      %436 = sbr.rel (%p434) target = $region40
    $region39: #{enricher_forward.3} parent=5 // pred_region
      %s437 = ssub.s32 %s9, 2
      // Predicated region
      $region41: #{enricher_forward.3} parent=39 // pred_check
        %p438 = pneg %p106
      $region42: #{enricher_forward.3} parent=39 // pred_check_branch
        %440 = sbr.rel (%p438) target = $region44
      $region43: #{enricher_forward.3} parent=39 // pred_region
        %p441 = scmp.lt.s32.totalorder %s15, 1
        %s442 = scalar_select %p441, %s15, 1
        %s443 = smul.addr %s442, 8
        %s444 = smul.addr %s443, 4
        %s445 = scalar_lea.vmem %s3, %s444
      $region44: #{enricher_forward.3} parent=39 // pred_fallthru
        _
    $region40: #{enricher_forward.3} parent=5 // pred_fallthru
      _
  $region6: #{enricher_forward.3} parent=0 // loop_footer
    %s13 = sadd.s32 1, %s9
  $region7: #{enricher_forward.3} parent=0 // loop_footer_branch
    %8 = sbr.rel target = $region3
  $region8: #{enricher_forward.3} parent=0 // loop_exit
    _

// kernel: enricher_forward.4
$region0: #{enricher_forward.4}
  #allocation0 [shape = 'u32[]', space=smem, size = 0x4, offset = 0x4, fixed_abs, tag = 'smem constant byte address 0x4 - core index']
  #allocation1 [shape = 'u32[72,128]{1,0:T(1,128)}', space=vmem, size = 0x9000, scoped, tag = 'internal scratch']
  #allocation2 [shape = 'f32[6,6,128]{2,1,0:T(8,128)}', space=vmem, size = 0x6000, scoped, tag = 'scratch operand']
  #allocation3 [shape = 'f32[4,4,128]{2,1,0:T(4,128)}', space=vmem, size = 0x2000, scoped, tag = 'scratch operand']
  %s0 = inlined_call_operand.vmem [shape: bf16[2,6,6,128], index: 0, kind: input, shape index: {}]
  %s1 = inlined_call_operand.vmem [shape: bf16[9,128,256], index: 1, kind: input, shape index: {}]
  %s2 = inlined_call_operand.vmem [shape: f32[1,256], index: 2, kind: input, shape index: {}]
  %s3 = inlined_call_operand.vmem [shape: bf16[9,128,128], index: 3, kind: input, shape index: {}]
  %s4 = inlined_call_operand.vmem [shape: f32[1,128], index: 4, kind: input, shape index: {}]
  %s5 = inlined_call_operand.vmem [shape: bf16[2,4,4,128], index: 5, kind: output, shape index: {}]
  %s6 = sld [smem:[#allocation0]]
  $region53: #{enricher_forward.4} parent=0
    _
  %s8 = ssub.s32 1, %s6
  %s9 = scalar_select 0, %s8, %s6
  loop: start=0, step=1, limit=4
  $region2: #{enricher_forward.4} parent=0 // loop_pre_header
    _
  $region3: #{enricher_forward.4} parent=0 // loop_header
    %s11 = sphi 0, %s15
    %p12 = scmp.ge.s32.totalorder %s11, 4
    %s21 = sphi 0, %s23
    %s24 = sphi 0, %s21
    %s25 = sphi 0, %s24
    %s41 = sphi 0, %s25
    %s45 = sphi 0, %s45
    %s47 = sphi 0, %s45
    %s48 = sphi 0, %s47
    %s62 = sphi 0, %s48
    %s66 = sphi 0, %s66
    %s68 = sphi 0, %s66
    %s69 = sphi 0, %s68
    %s83 = sphi 0, %s69
    %s87 = sphi 0, %s87
    %s89 = sphi 0, %s87
    %s90 = sphi 0, %s89
    %s104 = sphi 0, %s90
    %s108 = sphi 0, %s108
    %s110 = sphi 0, %s108
    %s111 = sphi 0, %s110
    %s125 = sphi 0, %s111
    %s131 = sphi 0, %s133
    %s134 = sphi 0, %s131
    %s135 = sphi 0, %s134
    %s151 = sphi 0, %s135
  $region4: #{enricher_forward.4} parent=0 // loop_header_branch
    %14 = sbr.rel (%p12) target = $region8
  $region5: #{enricher_forward.4} parent=0 // loop_body
    %s16 = ssub.s32 %s11, 1
    %s17 = ssub.s32 %s11, 2
    %s18 = sadd.s32 %s11, 1
    %s19 = ssub.s32 %s11, %s18
    %p20 = scmp.eq.s32.totalorder %s19, 0
    %s22 = sadd.s32 %s21, 1
    %s23 = scalar_select %p20, %s21, %s22
    %p26 = pneg %p20
    %p27 = scmp.eq.s32.totalorder %s11, 1
    %p28 = por %p26, %p27
    %p29 = scmp.ne.s32.totalorder %s21, %s24
    %p30 = scmp.eq.s32.totalorder %s11, 0
    %p31 = por %p29, %p30
    %p32 = scmp.ne.s32.totalorder %s21, %s24
    %p33 = scmp.eq.s32.totalorder %s16, 1
    %p34 = por %p32, %p33
    %p35 = scmp.ne.s32.totalorder %s24, %s25
    %p36 = scmp.eq.s32.totalorder %s16, 0
    %p37 = por %p35, %p36
    %p38 = scmp.ne.s32.totalorder %s24, %s25
    %p39 = scmp.eq.s32.totalorder %s17, 1
    %p40 = por %p38, %p39
    %p42 = scmp.ne.s32.totalorder %s25, %s41
    %p43 = scmp.eq.s32.totalorder %s17, 0
    %p44 = por %p42, %p43
    %s46 = sadd.s32 %s45, 1
    %p49 = scmp.eq.s32.totalorder %s11, 1
    %p50 = scmp.ne.s32.totalorder %s45, %s47
    %p51 = scmp.eq.s32.totalorder %s11, 0
    %p52 = por %p50, %p51
    %p53 = scmp.ne.s32.totalorder %s45, %s47
    %p54 = scmp.eq.s32.totalorder %s16, 1
    %p55 = por %p53, %p54
    %p56 = scmp.ne.s32.totalorder %s47, %s48
    %p57 = scmp.eq.s32.totalorder %s16, 0
    %p58 = por %p56, %p57
    %p59 = scmp.ne.s32.totalorder %s47, %s48
    %p60 = scmp.eq.s32.totalorder %s17, 1
    %p61 = por %p59, %p60
    %p63 = scmp.ne.s32.totalorder %s48, %s62
    %p64 = scmp.eq.s32.totalorder %s17, 0
    %p65 = por %p63, %p64
    %s67 = sadd.s32 %s66, 1
    %p70 = scmp.eq.s32.totalorder %s11, 1
    %p71 = scmp.ne.s32.totalorder %s66, %s68
    %p72 = scmp.eq.s32.totalorder %s11, 0
    %p73 = por %p71, %p72
    %p74 = scmp.ne.s32.totalorder %s66, %s68
    %p75 = scmp.eq.s32.totalorder %s16, 1
    %p76 = por %p74, %p75
    %p77 = scmp.ne.s32.totalorder %s68, %s69
    %p78 = scmp.eq.s32.totalorder %s16, 0
    %p79 = por %p77, %p78
    %p80 = scmp.ne.s32.totalorder %s68, %s69
    %p81 = scmp.eq.s32.totalorder %s17, 1
    %p82 = por %p80, %p81
    %p84 = scmp.ne.s32.totalorder %s69, %s83
    %p85 = scmp.eq.s32.totalorder %s17, 0
    %p86 = por %p84, %p85
    %s88 = sadd.s32 %s87, 1
    %p91 = scmp.eq.s32.totalorder %s11, 1
    %p92 = scmp.ne.s32.totalorder %s87, %s89
    %p93 = scmp.eq.s32.totalorder %s11, 0
    %p94 = por %p92, %p93
    %p95 = scmp.ne.s32.totalorder %s87, %s89
    %p96 = scmp.eq.s32.totalorder %s16, 1
    %p97 = por %p95, %p96
    %p98 = scmp.ne.s32.totalorder %s89, %s90
    %p99 = scmp.eq.s32.totalorder %s16, 0
    %p100 = por %p98, %p99
    %p101 = scmp.ne.s32.totalorder %s89, %s90
    %p102 = scmp.eq.s32.totalorder %s17, 1
    %p103 = por %p101, %p102
    %p105 = scmp.ne.s32.totalorder %s90, %s104
    %p106 = scmp.eq.s32.totalorder %s17, 0
    %p107 = por %p105, %p106
    %s109 = sadd.s32 %s108, 1
    %p112 = scmp.eq.s32.totalorder %s11, 1
    %p113 = scmp.ne.s32.totalorder %s108, %s110
    %p114 = scmp.eq.s32.totalorder %s11, 0
    %p115 = por %p113, %p114
    %p116 = scmp.ne.s32.totalorder %s108, %s110
    %p117 = scmp.eq.s32.totalorder %s16, 1
    %p118 = por %p116, %p117
    %p119 = scmp.ne.s32.totalorder %s110, %s111
    %p120 = scmp.eq.s32.totalorder %s16, 0
    %p121 = por %p119, %p120
    %p122 = scmp.ne.s32.totalorder %s110, %s111
    %p123 = scmp.eq.s32.totalorder %s17, 1
    %p124 = por %p122, %p123
    %p126 = scmp.ne.s32.totalorder %s111, %s125
    %p127 = scmp.eq.s32.totalorder %s17, 0
    %p128 = por %p126, %p127
    %s129 = ssub.s32 %s11, %s18
    %p130 = scmp.eq.s32.totalorder %s129, 0
    %s132 = sadd.s32 %s131, 1
    %s133 = scalar_select %p130, %s131, %s132
    %p136 = pneg %p130
    %p137 = scmp.eq.s32.totalorder %s11, 1
    %p138 = por %p136, %p137
    %p139 = scmp.ne.s32.totalorder %s131, %s134
    %p140 = scmp.eq.s32.totalorder %s11, 0
    %p141 = por %p139, %p140
    %p142 = scmp.ne.s32.totalorder %s131, %s134
    %p143 = scmp.eq.s32.totalorder %s16, 1
    %p144 = por %p142, %p143
    %p145 = scmp.ne.s32.totalorder %s134, %s135
    %p146 = scmp.eq.s32.totalorder %s16, 0
    %p147 = por %p145, %p146
    %p148 = scmp.ne.s32.totalorder %s134, %s135
    %p149 = scmp.eq.s32.totalorder %s17, 1
    %p150 = por %p148, %p149
    %p152 = scmp.ne.s32.totalorder %s135, %s151
    %p153 = scmp.eq.s32.totalorder %s17, 0
    %p154 = por %p152, %p153
    %p155 = scmp.le.s32.totalorder 1, %s11
    %p156 = scmp.lt.s32.totalorder %s11, 3
    %p157 = pnand %p155, %p156
    %p158 = pneg %p157
    // Predicated region
    $region9: #{enricher_forward.4} parent=5 // pred_check
      _
    $region10: #{enricher_forward.4} parent=5 // pred_check_branch
      %160 = sbr.rel (%p157) target = $region12
    $region11: #{enricher_forward.4} parent=5 // pred_region
      %s161 = ssub.s32 %s11, 1
      // Predicated region
      $region13: #{enricher_forward.4} parent=11 // pred_check
        %p162 = pneg %p58
      $region14: #{enricher_forward.4} parent=11 // pred_check_branch
        %164 = sbr.rel (%p162) target = $region16
      $region15: #{enricher_forward.4} parent=11 // pred_region
        _
      $region16: #{enricher_forward.4} parent=11 // pred_fallthru
        _
      // Predicated region
      $region17: #{enricher_forward.4} parent=11 // pred_check
        %p165 = pneg %p79
      $region18: #{enricher_forward.4} parent=11 // pred_check_branch
        %167 = sbr.rel (%p165) target = $region20
      $region19: #{enricher_forward.4} parent=11 // pred_region
        _
      $region20: #{enricher_forward.4} parent=11 // pred_fallthru
        _
      // Predicated region
      $region21: #{enricher_forward.4} parent=11 // pred_check
        %p168 = pneg %p100
      $region22: #{enricher_forward.4} parent=11 // pred_check_branch
        %170 = sbr.rel (%p168) target = $region24
      $region23: #{enricher_forward.4} parent=11 // pred_region
        _
      $region24: #{enricher_forward.4} parent=11 // pred_fallthru
        _
      // Predicated region
      $region25: #{enricher_forward.4} parent=11 // pred_check
        %p171 = pneg %p121
      $region26: #{enricher_forward.4} parent=11 // pred_check_branch
        %173 = sbr.rel (%p171) target = $region28
      $region27: #{enricher_forward.4} parent=11 // pred_region
        _
      $region28: #{enricher_forward.4} parent=11 // pred_fallthru
        _
    $region12: #{enricher_forward.4} parent=5 // pred_fallthru
      _
    %p174 = scmp.lt.s32.totalorder %s11, 2
    // Predicated region
    $region29: #{enricher_forward.4} parent=5 // pred_check
      %p175 = pneg %p174
    $region30: #{enricher_forward.4} parent=5 // pred_check_branch
      %177 = sbr.rel (%p175) target = $region32
    $region31: #{enricher_forward.4} parent=5 // pred_region
      // Predicated region
      $region33: #{enricher_forward.4} parent=31 // pred_check
        %p178 = pneg %p31
      $region34: #{enricher_forward.4} parent=31 // pred_check_branch
        %180 = sbr.rel (%p178) target = $region36
      $region35: #{enricher_forward.4} parent=31 // pred_region
        %p181 = scmp.lt.s32.totalorder %s11, 1
        %s182 = scalar_select %p181, %s11, 1
        %s183 = smul.addr %s182, 6
        %s184 = smul.addr %s183, 4
        %s185 = scalar_lea.vmem %s0, %s184
      $region36: #{enricher_forward.4} parent=31 // pred_fallthru
        _
    $region32: #{enricher_forward.4} parent=5 // pred_fallthru
      _
    %p186 = scmp.le.s32.totalorder 1, %s11
    %p187 = scmp.lt.s32.totalorder %s11, 3
    %p188 = pnand %p186, %p187
    %p189 = pneg %p188
    // Predicated region
    $region37: #{enricher_forward.4} parent=5 // pred_check
      _
    $region38: #{enricher_forward.4} parent=5 // pred_check_branch
      %191 = sbr.rel (%p188) target = $region40
    $region39: #{enricher_forward.4} parent=5 // pred_region
      %s192 = ssub.s32 %s11, 1
      %p193 = scmp.lt.s32.totalorder %s16, 1
      %s194 = scalar_select %p193, %s16, 1
      %s195 = smul.addr %s194, 6
      %s196 = smul.addr %s195, 4
      %s197 = scalar_lea.vmem %s0, %s196
      %p198 = pneg %p37
      %p199 = pneg %p34
      %p200 = pneg %p58
      %p201 = pneg %p55
      %p202 = pneg %p79
      %p203 = pneg %p76
      %p204 = pneg %p100
      %p205 = pneg %p97
      %p206 = pneg %p121
      %p207 = pneg %p118
      %p208 = pneg %p147
      %p209 = pneg %p144
      %p210 = scmp.lt.s32.totalorder %s16, 1
      %s211 = scalar_select %p210, %s16, 1
      %s212 = smul.addr %s211, 4
      %s213 = smul.addr %s212, 2
      %s214 = scalar_lea.vmem %s5, %s213
      %p215 = scmp.lt.s32.totalorder %s16, 1
      %s216 = scalar_select %p215, %s16, 1
      %s217 = smul.addr %s216, 6
      %s218 = smul.addr %s217, 4
      %s219 = scalar_lea.vmem %s0, %s218
      %p220 = scmp.lt.s32.totalorder %s16, 1
      %s221 = scalar_select %p220, %s16, 1
      %s222 = smul.addr %s221, 4
      %s223 = smul.addr %s222, 2
      %s224 = scalar_lea.vmem %s5, %s223
      %v225 = vld [vmem:[%s219] sm:$0x7]
      %v226 = vld [vmem:[%s219 + $0x4] sm:$0x7]
      %v227 = vld [vmem:[%s219 + $0x8] sm:$0x7]
      %v228 = vld [vmem:[%s219 + $0xc] sm:$0x7]
      %v229 = vld [vmem:[%s219 + $0x10] sm:$0x7]
      %v230 = vld [vmem:[%s219 + $0x14] sm:$0x7]
      %231 = vst [vmem:[#allocation2] sm:$0x3f] 0.0
      %232 = vst [vmem:[#allocation2 + $0x8] sm:$0x3f] 0.0
      %233 = vst [vmem:[#allocation2 + $0x10] sm:$0x3f] 0.0
      %234 = vst [vmem:[#allocation2 + $0x18] sm:$0x3f] 0.0
      %235 = vst [vmem:[#allocation2 + $0x20] sm:$0x3f] 0.0
      %236 = vst [vmem:[#allocation2 + $0x28] sm:$0x3f] 0.0
      %v237 = vld [vmem:[%s1] sm:$0xff]
      %v238 = vld [vmem:[%s1 + $0x8] sm:$0xff]
      %v239 = vld [vmem:[%s1 + $0x10] sm:$0xff]
      %v240 = vld [vmem:[%s1 + $0x18] sm:$0xff]
      %v241 = vld [vmem:[%s1 + $0x20] sm:$0xff]
      %v242 = vld [vmem:[%s1 + $0x28] sm:$0xff]
      %v243 = vld [vmem:[%s1 + $0x30] sm:$0xff]
      %v244 = vld [vmem:[%s1 + $0x38] sm:$0xff]
      %v245 = vld [vmem:[%s1 + $0x40] sm:$0xff]
      %v246 = vld [vmem:[%s1 + $0x48] sm:$0xff]
      %v247 = vld [vmem:[%s1 + $0x50] sm:$0xff]
      %v248 = vld [vmem:[%s1 + $0x58] sm:$0xff]
      %v249 = vld [vmem:[%s1 + $0x60] sm:$0xff]
      %v250 = vld [vmem:[%s1 + $0x68] sm:$0xff]
      %v251 = vld [vmem:[%s1 + $0x70] sm:$0xff]
      %v252 = vld [vmem:[%s1 + $0x78] sm:$0xff]
      %s253 = scalar_lea.vmem %s1, 128
      %v254 = vld [vmem:[%s253] sm:$0xff]
      %v255 = vld [vmem:[%s253 + $0x8] sm:$0xff]
      %v256 = vld [vmem:[%s253 + $0x10] sm:$0xff]
      %v257 = vld [vmem:[%s253 + $0x18] sm:$0xff]
      %v258 = vld [vmem:[%s253 + $0x20] sm:$0xff]
      %v259 = vld [vmem:[%s253 + $0x28] sm:$0xff]
      %v260 = vld [vmem:[%s253 + $0x30] sm:$0xff]
      %v261 = vld [vmem:[%s253 + $0x38] sm:$0xff]
      %v262 = vld [vmem:[%s253 + $0x40] sm:$0xff]
      %v263 = vld [vmem:[%s253 + $0x48] sm:$0xff]
      %v264 = vld [vmem:[%s253 + $0x50] sm:$0xff]
      %v265 = vld [vmem:[%s253 + $0x58] sm:$0xff]
      %v266 = vld [vmem:[%s253 + $0x60] sm:$0xff]
      %v267 = vld [vmem:[%s253 + $0x68] sm:$0xff]
      %v268 = vld [vmem:[%s253 + $0x70] sm:$0xff]
      %v269 = vld [vmem:[%s253 + $0x78] sm:$0xff]
      %v271 = vunpack.c.l.b16 %v225
      %v272 = vpack.c.b16 %v271, %v271
      %v274 = vshrl.u32 %v272, 16
      %v276 = vshll.u32 %v272, 16
      %v278 = vrot.slane %v276, 1
      %v279 = vor.u32 %v274, %v278
      %v297 = vunpack.c.l.b16 %v254
      %v298 = vunpack.c.h.b16 %v254
      %v299 = vunpack.c.l.b16 %v255
      %v300 = vunpack.c.h.b16 %v255
      %v301 = vunpack.c.l.b16 %v256
      %v302 = vunpack.c.h.b16 %v256
      %v303 = vunpack.c.l.b16 %v257
      %v304 = vunpack.c.h.b16 %v257
      %v305 = vunpack.c.l.b16 %v258
      %v306 = vunpack.c.h.b16 %v258
      %v307 = vunpack.c.l.b16 %v259
      %v308 = vunpack.c.h.b16 %v259
      %v309 = vunpack.c.l.b16 %v260
      %v310 = vunpack.c.h.b16 %v260
      %v311 = vunpack.c.l.b16 %v261
      %v312 = vunpack.c.h.b16 %v261
      %v313 = vunpack.c.l.b16 %v262
      %v314 = vunpack.c.h.b16 %v262
      %v315 = vunpack.c.l.b16 %v263
      %v316 = vunpack.c.h.b16 %v263
      %v317 = vunpack.c.l.b16 %v264
      %v318 = vunpack.c.h.b16 %v264
      %v319 = vunpack.c.l.b16 %v265
      %v320 = vunpack.c.h.b16 %v265
      %v321 = vunpack.c.l.b16 %v266
      %v322 = vunpack.c.h.b16 %v266
      %v323 = vunpack.c.l.b16 %v267
      %v324 = vunpack.c.h.b16 %v267
      %v325 = vunpack.c.l.b16 %v268
      %v326 = vunpack.c.h.b16 %v268
      %v327 = vunpack.c.l.b16 %v269
      %v328 = vunpack.c.h.b16 %v269
      %v329 = vpack.c.b16 %v299, %v297
      %v330 = vpack.c.b16 %v300, %v298
      %v331 = vpack.c.b16 %v303, %v301
      %v332 = vpack.c.b16 %v304, %v302
      %v333 = vpack.c.b16 %v307, %v305
      %v334 = vpack.c.b16 %v308, %v306
      %v335 = vpack.c.b16 %v311, %v309
      %v336 = vpack.c.b16 %v312, %v310
      %v337 = vpack.c.b16 %v315, %v313
      %v338 = vpack.c.b16 %v316, %v314
      %v339 = vpack.c.b16 %v319, %v317
      %v340 = vpack.c.b16 %v320, %v318
      %v341 = vpack.c.b16 %v323, %v321
      %v342 = vpack.c.b16 %v324, %v322
      %v343 = vpack.c.b16 %v327, %v325
      %v344 = vpack.c.b16 %v328, %v326
      %361 = vmatpush.bf16.msra.mxu0 %v343
      %362 = vmatpush.bf16.msra.mxu0 %v341
      %363 = vmatpush.bf16.msra.mxu0 %v339
      %364 = vmatpush.bf16.msra.mxu0 %v337
      %365 = vmatpush.bf16.msra.mxu0 %v335
      %366 = vmatpush.bf16.msra.mxu0 %v333
      %367 = vmatpush.bf16.msra.mxu0 %v331
      %368 = vmatpush.bf16.msra.mxu0 %v329
      %369 = vmatmul.bf16.gmra.mxu0 %v279
      %v370 = vpop.f32.mrf.mxu0
      %v371 = vadd.f32 0.0, %v370
      %v372 = vpop.f32.mrf.mxu0
      %373 = vdwg.mxu0
      %374 = vmatpush.bf16.msra.mxu0 %v344
      %375 = vmatpush.bf16.msra.mxu0 %v342
      %376 = vmatpush.bf16.msra.mxu0 %v340
      %377 = vmatpush.bf16.msra.mxu0 %v338
      %378 = vmatpush.bf16.msra.mxu0 %v336
      %379 = vmatpush.bf16.msra.mxu0 %v334
      %380 = vmatpush.bf16.msra.mxu0 %v332
      %381 = vmatpush.bf16.msra.mxu0 %v330
      %382 = vmatmul.bf16.gmra.mxu0 %v279
      %v383 = vpop.f32.mrf.mxu0
      %v384 = vadd.f32 0.0, %v383
      %v385 = vpop.f32.mrf.mxu0
      %386 = vdwg.mxu0
      %v403 = vunpack.c.l.b16 %v237
      %v404 = vunpack.c.h.b16 %v237
      %v405 = vunpack.c.l.b16 %v238
      %v406 = vunpack.c.h.b16 %v238
      %v407 = vunpack.c.l.b16 %v239
      %v408 = vunpack.c.h.b16 %v239
      %v409 = vunpack.c.l.b16 %v240
      %v410 = vunpack.c.h.b16 %v240
      %v411 = vunpack.c.l.b16 %v241
      %v412 = vunpack.c.h.b16 %v241
      %v413 = vunpack.c.l.b16 %v242
      %v414 = vunpack.c.h.b16 %v242
      %v415 = vunpack.c.l.b16 %v243
      %v416 = vunpack.c.h.b16 %v243
      %v417 = vunpack.c.l.b16 %v244
      %v418 = vunpack.c.h.b16 %v244
      %v419 = vunpack.c.l.b16 %v245
      %v420 = vunpack.c.h.b16 %v245
      %v421 = vunpack.c.l.b16 %v246
      %v422 = vunpack.c.h.b16 %v246
      %v423 = vunpack.c.l.b16 %v247
      %v424 = vunpack.c.h.b16 %v247
      %v425 = vunpack.c.l.b16 %v248
      %v426 = vunpack.c.h.b16 %v248
      %v427 = vunpack.c.l.b16 %v249
      %v428 = vunpack.c.h.b16 %v249
      %v429 = vunpack.c.l.b16 %v250
      %v430 = vunpack.c.h.b16 %v250
      %v431 = vunpack.c.l.b16 %v251
      %v432 = vunpack.c.h.b16 %v251
      %v433 = vunpack.c.l.b16 %v252
      %v434 = vunpack.c.h.b16 %v252
      %v435 = vpack.c.b16 %v405, %v403
      %v436 = vpack.c.b16 %v406, %v404
      %v437 = vpack.c.b16 %v409, %v407
      %v438 = vpack.c.b16 %v410, %v408
      %v439 = vpack.c.b16 %v413, %v411
      %v440 = vpack.c.b16 %v414, %v412
      %v441 = vpack.c.b16 %v417, %v415
      %v442 = vpack.c.b16 %v418, %v416
      %v443 = vpack.c.b16 %v421, %v419
      %v444 = vpack.c.b16 %v422, %v420
      %v445 = vpack.c.b16 %v425, %v423
      %v446 = vpack.c.b16 %v426, %v424
      %v447 = vpack.c.b16 %v429, %v427
      %v448 = vpack.c.b16 %v430, %v428
      %v449 = vpack.c.b16 %v433, %v431
      %v450 = vpack.c.b16 %v434, %v432
      %467 = vmatpush.bf16.msra.mxu0 %v449
      %468 = vmatpush.bf16.msra.mxu0 %v447
      %469 = vmatpush.bf16.msra.mxu0 %v445
      %470 = vmatpush.bf16.msra.mxu0 %v443
      %471 = vmatpush.bf16.msra.mxu0 %v441
      %472 = vmatpush.bf16.msra.mxu0 %v439
      %473 = vmatpush.bf16.msra.mxu0 %v437
      %474 = vmatpush.bf16.msra.mxu0 %v435
      %475 = vmatmul.bf16.gmra.mxu0 %v225
      %v476 = vpop.f32.mrf.mxu0
      %v477 = vadd.f32 %v371, %v476
      %v478 = vpop.f32.mrf.mxu0
      %479 = vdwg.mxu0
      %480 = vmatpush.bf16.msra.mxu0 %v450
      %481 = vmatpush.bf16.msra.mxu0 %v448
      %482 = vmatpush.bf16.msra.mxu0 %v446
      %483 = vmatpush.bf16.msra.mxu0 %v444
      %484 = vmatpush.bf16.msra.mxu0 %v442
      %485 = vmatpush.bf16.msra.mxu0 %v440
      %486 = vmatpush.bf16.msra.mxu0 %v438
      %487 = vmatpush.bf16.msra.mxu0 %v436
      %488 = vmatmul.bf16.gmra.mxu0 %v225
      %v489 = vpop.f32.mrf.mxu0
      %v490 = vadd.f32 %v384, %v489
      %v491 = vpop.f32.mrf.mxu0
      %492 = vdwg.mxu0
      %s493 = scalar_lea.vmem %s1, 256
      %v494 = vld [vmem:[%s493] sm:$0xff]
      %v495 = vld [vmem:[%s493 + $0x8] sm:$0xff]
      %v496 = vld [vmem:[%s493 + $0x10] sm:$0xff]
      %v497 = vld [vmem:[%s493 + $0x18] sm:$0xff]
      %v498 = vld [vmem:[%s493 + $0x20] sm:$0xff]
      %v499 = vld [vmem:[%s493 + $0x28] sm:$0xff]
      %v500 = vld [vmem:[%s493 + $0x30] sm:$0xff]
      %v501 = vld [vmem:[%s493 + $0x38] sm:$0xff]
      %v502 = vld [vmem:[%s493 + $0x40] sm:$0xff]
      %v503 = vld [vmem:[%s493 + $0x48] sm:$0xff]
      %v504 = vld [vmem:[%s493 + $0x50] sm:$0xff]
      %v505 = vld [vmem:[%s493 + $0x58] sm:$0xff]
      %v506 = vld [vmem:[%s493 + $0x60] sm:$0xff]
      %v507 = vld [vmem:[%s493 + $0x68] sm:$0xff]
      %v508 = vld [vmem:[%s493 + $0x70] sm:$0xff]
      %v509 = vld [vmem:[%s493 + $0x78] sm:$0xff]
      %v510 = vrot.slane %v272, 1
      %v528 = vunpack.c.l.b16 %v494
      %v529 = vunpack.c.h.b16 %v494
      %v530 = vunpack.c.l.b16 %v495
      %v531 = vunpack.c.h.b16 %v495
      %v532 = vunpack.c.l.b16 %v496
      %v533 = vunpack.c.h.b16 %v496
      %v534 = vunpack.c.l.b16 %v497
      %v535 = vunpack.c.h.b16 %v497
      %v536 = vunpack.c.l.b16 %v498
      %v537 = vunpack.c.h.b16 %v498
      %v538 = vunpack.c.l.b16 %v499
      %v539 = vunpack.c.h.b16 %v499
      %v540 = vunpack.c.l.b16 %v500
      %v541 = vunpack.c.h.b16 %v500
      %v542 = vunpack.c.l.b16 %v501
      %v543 = vunpack.c.h.b16 %v501
      %v544 = vunpack.c.l.b16 %v502
      %v545 = vunpack.c.h.b16 %v502
      %v546 = vunpack.c.l.b16 %v503
      %v547 = vunpack.c.h.b16 %v503
      %v548 = vunpack.c.l.b16 %v504
      %v549 = vunpack.c.h.b16 %v504
      %v550 = vunpack.c.l.b16 %v505
      %v551 = vunpack.c.h.b16 %v505
      %v552 = vunpack.c.l.b16 %v506
      %v553 = vunpack.c.h.b16 %v506
      %v554 = vunpack.c.l.b16 %v507
      %v555 = vunpack.c.h.b16 %v507
      %v556 = vunpack.c.l.b16 %v508
      %v557 = vunpack.c.h.b16 %v508
      %v558 = vunpack.c.l.b16 %v509
      %v559 = vunpack.c.h.b16 %v509
      %v560 = vpack.c.b16 %v530, %v528
      %v561 = vpack.c.b16 %v531, %v529
      %v562 = vpack.c.b16 %v534, %v532
      %v563 = vpack.c.b16 %v535, %v533
      %v564 = vpack.c.b16 %v538, %v536
      %v565 = vpack.c.b16 %v539, %v537
      %v566 = vpack.c.b16 %v542, %v540
      %v567 = vpack.c.b16 %v543, %v541
      %v568 = vpack.c.b16 %v546, %v544
      %v569 = vpack.c.b16 %v547, %v545
      %v570 = vpack.c.b16 %v550, %v548
      %v571 = vpack.c.b16 %v551, %v549
      %v572 = vpack.c.b16 %v554, %v552
      %v573 = vpack.c.b16 %v555, %v553
      %v574 = vpack.c.b16 %v558, %v556
      %v575 = vpack.c.b16 %v559, %v557
      %592 = vmatpush.bf16.msra.mxu0 %v574
      %593 = vmatpush.bf16.msra.mxu0 %v572
      %594 = vmatpush.bf16.msra.mxu0 %v570
      %595 = vmatpush.bf16.msra.mxu0 %v568
      %596 = vmatpush.bf16.msra.mxu0 %v566
      %597 = vmatpush.bf16.msra.mxu0 %v564
      %598 = vmatpush.bf16.msra.mxu0 %v562
      %599 = vmatpush.bf16.msra.mxu0 %v560
      %600 = vmatmul.bf16.gmra.mxu0 %v510
      %v601 = vpop.f32.mrf.mxu0
      %v602 = vadd.f32 0.0, %v601
      %v603 = vpop.f32.mrf.mxu0
      %604 = vdwg.mxu0
      %605 = vmatpush.bf16.msra.mxu0 %v575
      %606 = vmatpush.bf16.msra.mxu0 %v573
      %607 = vmatpush.bf16.msra.mxu0 %v571
      %608 = vmatpush.bf16.msra.mxu0 %v569
      %609 = vmatpush.bf16.msra.mxu0 %v567
      %610 = vmatpush.bf16.msra.mxu0 %v565
      %611 = vmatpush.bf16.msra.mxu0 %v563
      %612 = vmatpush.bf16.msra.mxu0 %v561
      %613 = vmatmul.bf16.gmra.mxu0 %v510
      %v614 = vpop.f32.mrf.mxu0
      %v615 = vadd.f32 0.0, %v614
      %v616 = vpop.f32.mrf.mxu0
      %617 = vdwg.mxu0
      %v618 = vadd.f32 %v477, %v602
      %v619 = vadd.f32 %v490, %v615
      %s620 = scalar_lea.vmem %s1, 384
      %v621 = vld [vmem:[%s620] sm:$0xff]
      %v622 = vld [vmem:[%s620 + $0x8] sm:$0xff]
      %v623 = vld [vmem:[%s620 + $0x10] sm:$0xff]
      %v624 = vld [vmem:[%s620 + $0x18] sm:$0xff]
      %v625 = vld [vmem:[%s620 + $0x20] sm:$0xff]
      %v626 = vld [vmem:[%s620 + $0x28] sm:$0xff]
      %v627 = vld [vmem:[%s620 + $0x30] sm:$0xff]
      %v628 = vld [vmem:[%s620 + $0x38] sm:$0xff]
      %v629 = vld [vmem:[%s620 + $0x40] sm:$0xff]
      %v630 = vld [vmem:[%s620 + $0x48] sm:$0xff]
      %v631 = vld [vmem:[%s620 + $0x50] sm:$0xff]
      %v632 = vld [vmem:[%s620 + $0x58] sm:$0xff]
      %v633 = vld [vmem:[%s620 + $0x60] sm:$0xff]
      %v634 = vld [vmem:[%s620 + $0x68] sm:$0xff]
      %v635 = vld [vmem:[%s620 + $0x70] sm:$0xff]
      %v636 = vld [vmem:[%s620 + $0x78] sm:$0xff]
      %v653 = vunpack.c.l.b16 %v621
      %v654 = vunpack.c.h.b16 %v621
      %v655 = vunpack.c.l.b16 %v622
      %v656 = vunpack.c.h.b16 %v622
      %v657 = vunpack.c.l.b16 %v623
      %v658 = vunpack.c.h.b16 %v623
      %v659 = vunpack.c.l.b16 %v624
      %v660 = vunpack.c.h.b16 %v624
      %v661 = vunpack.c.l.b16 %v625
      %v662 = vunpack.c.h.b16 %v625
      %v663 = vunpack.c.l.b16 %v626
      %v664 = vunpack.c.h.b16 %v626
      %v665 = vunpack.c.l.b16 %v627
      %v666 = vunpack.c.h.b16 %v627
      %v667 = vunpack.c.l.b16 %v628
      %v668 = vunpack.c.h.b16 %v628
      %v669 = vunpack.c.l.b16 %v629
      %v670 = vunpack.c.h.b16 %v629
      %v671 = vunpack.c.l.b16 %v630
      %v672 = vunpack.c.h.b16 %v630
      %v673 = vunpack.c.l.b16 %v631
      %v674 = vunpack.c.h.b16 %v631
      %v675 = vunpack.c.l.b16 %v632
      %v676 = vunpack.c.h.b16 %v632
      %v677 = vunpack.c.l.b16 %v633
      %v678 = vunpack.c.h.b16 %v633
      %v679 = vunpack.c.l.b16 %v634
      %v680 = vunpack.c.h.b16 %v634
      %v681 = vunpack.c.l.b16 %v635
      %v682 = vunpack.c.h.b16 %v635
      %v683 = vunpack.c.l.b16 %v636
      %v684 = vunpack.c.h.b16 %v636
      %v685 = vpack.c.b16 %v655, %v653
      %v686 = vpack.c.b16 %v656, %v654
      %v687 = vpack.c.b16 %v659, %v657
      %v688 = vpack.c.b16 %v660, %v658
      %v689 = vpack.c.b16 %v663, %v661
      %v690 = vpack.c.b16 %v664, %v662
      %v691 = vpack.c.b16 %v667, %v665
      %v692 = vpack.c.b16 %v668, %v666
      %v693 = vpack.c.b16 %v671, %v669
      %v694 = vpack.c.b16 %v672, %v670
      %v695 = vpack.c.b16 %v675, %v673
      %v696 = vpack.c.b16 %v676, %v674
      %v697 = vpack.c.b16 %v679, %v677
      %v698 = vpack.c.b16 %v680, %v678
      %v699 = vpack.c.b16 %v683, %v681
      %v700 = vpack.c.b16 %v684, %v682
      %717 = vmatpush.bf16.msra.mxu0 %v699
      %718 = vmatpush.bf16.msra.mxu0 %v697
      %719 = vmatpush.bf16.msra.mxu0 %v695
      %720 = vmatpush.bf16.msra.mxu0 %v693
      %721 = vmatpush.bf16.msra.mxu0 %v691
      %722 = vmatpush.bf16.msra.mxu0 %v689
      %723 = vmatpush.bf16.msra.mxu0 %v687
      %724 = vmatpush.bf16.msra.mxu0 %v685
      %725 = vmatmul.bf16.gmra.mxu0 %v226
      %v726 = vpop.f32.mrf.mxu0
      %v727 = vadd.f32 0.0, %v726
      %v728 = vpop.f32.mrf.mxu0
      %729 = vdwg.mxu0
      %730 = vmatpush.bf16.msra.mxu0 %v700
      %731 = vmatpush.bf16.msra.mxu0 %v698
      %732 = vmatpush.bf16.msra.mxu0 %v696
      %733 = vmatpush.bf16.msra.mxu0 %v694
      %734 = vmatpush.bf16.msra.mxu0 %v692
      %735 = vmatpush.bf16.msra.mxu0 %v690
      %736 = vmatpush.bf16.msra.mxu0 %v688
      %737 = vmatpush.bf16.msra.mxu0 %v686
      %738 = vmatmul.bf16.gmra.mxu0 %v226
      %v739 = vpop.f32.mrf.mxu0
      %v740 = vadd.f32 0.0, %v739
      %v741 = vpop.f32.mrf.mxu0
      %742 = vdwg.mxu0
      %v743 = vadd.f32 %v618, %v727
      %v744 = vadd.f32 %v619, %v740
      %s745 = scalar_lea.vmem %s1, 512
      %v746 = vld [vmem:[%s745] sm:$0xff]
      %v747 = vld [vmem:[%s745 + $0x8] sm:$0xff]
      %v748 = vld [vmem:[%s745 + $0x10] sm:$0xff]
      %v749 = vld [vmem:[%s745 + $0x18] sm:$0xff]
      %v750 = vld [vmem:[%s745 + $0x20] sm:$0xff]
      %v751 = vld [vmem:[%s745 + $0x28] sm:$0xff]
      %v752 = vld [vmem:[%s745 + $0x30] sm:$0xff]
      %v753 = vld [vmem:[%s745 + $0x38] sm:$0xff]
      %v754 = vld [vmem:[%s745 + $0x40] sm:$0xff]
      %v755 = vld [vmem:[%s745 + $0x48] sm:$0xff]
      %v756 = vld [vmem:[%s745 + $0x50] sm:$0xff]
      %v757 = vld [vmem:[%s745 + $0x58] sm:$0xff]
      %v758 = vld [vmem:[%s745 + $0x60] sm:$0xff]
      %v759 = vld [vmem:[%s745 + $0x68] sm:$0xff]
      %v760 = vld [vmem:[%s745 + $0x70] sm:$0xff]
      %v761 = vld [vmem:[%s745 + $0x78] sm:$0xff]
      %v763 = vunpack.c.l.b16 %v226
      %v764 = vpack.c.b16 %v763, %v763
      %v766 = vshrl.u32 %v764, 16
      %v768 = vshll.u32 %v764, 16
      %v770 = vrot.slane %v768, 1
      %v771 = vor.u32 %v766, %v770
      %v789 = vunpack.c.l.b16 %v746
      %v790 = vunpack.c.h.b16 %v746
      %v791 = vunpack.c.l.b16 %v747
      %v792 = vunpack.c.h.b16 %v747
      %v793 = vunpack.c.l.b16 %v748
      %v794 = vunpack.c.h.b16 %v748
      %v795 = vunpack.c.l.b16 %v749
      %v796 = vunpack.c.h.b16 %v749
      %v797 = vunpack.c.l.b16 %v750
      %v798 = vunpack.c.h.b16 %v750
      %v799 = vunpack.c.l.b16 %v751
      %v800 = vunpack.c.h.b16 %v751
      %v801 = vunpack.c.l.b16 %v752
      %v802 = vunpack.c.h.b16 %v752
      %v803 = vunpack.c.l.b16 %v753
      %v804 = vunpack.c.h.b16 %v753
      %v805 = vunpack.c.l.b16 %v754
      %v806 = vunpack.c.h.b16 %v754
      %v807 = vunpack.c.l.b16 %v755
      %v808 = vunpack.c.h.b16 %v755
      %v809 = vunpack.c.l.b16 %v756
      %v810 = vunpack.c.h.b16 %v756
      %v811 = vunpack.c.l.b16 %v757
      %v812 = vunpack.c.h.b16 %v757
      %v813 = vunpack.c.l.b16 %v758
      %v814 = vunpack.c.h.b16 %v758
      %v815 = vunpack.c.l.b16 %v759
      %v816 = vunpack.c.h.b16 %v759
      %v817 = vunpack.c.l.b16 %v760
      %v818 = vunpack.c.h.b16 %v760
      %v819 = vunpack.c.l.b16 %v761
      %v820 = vunpack.c.h.b16 %v761
      %v821 = vpack.c.b16 %v791, %v789
      %v822 = vpack.c.b16 %v792, %v790
      %v823 = vpack.c.b16 %v795, %v793
      %v824 = vpack.c.b16 %v796, %v794
      %v825 = vpack.c.b16 %v799, %v797
      %v826 = vpack.c.b16 %v800, %v798
      %v827 = vpack.c.b16 %v803, %v801
      %v828 = vpack.c.b16 %v804, %v802
      %v829 = vpack.c.b16 %v807, %v805
      %v830 = vpack.c.b16 %v808, %v806
      %v831 = vpack.c.b16 %v811, %v809
      %v832 = vpack.c.b16 %v812, %v810
      %v833 = vpack.c.b16 %v815, %v813
      %v834 = vpack.c.b16 %v816, %v814
      %v835 = vpack.c.b16 %v819, %v817
      %v836 = vpack.c.b16 %v820, %v818
      %853 = vmatpush.bf16.msra.mxu0 %v835
      %854 = vmatpush.bf16.msra.mxu0 %v833
      %855 = vmatpush.bf16.msra.mxu0 %v831
      %856 = vmatpush.bf16.msra.mxu0 %v829
      %857 = vmatpush.bf16.msra.mxu0 %v827
      %858 = vmatpush.bf16.msra.mxu0 %v825
      %859 = vmatpush.bf16.msra.mxu0 %v823
      %860 = vmatpush.bf16.msra.mxu0 %v821
      %861 = vmatmul.bf16.gmra.mxu0 %v771
      %v862 = vpop.f32.mrf.mxu0
      %v863 = vadd.f32 0.0, %v862
      %v864 = vpop.f32.mrf.mxu0
      %865 = vdwg.mxu0
      %866 = vmatpush.bf16.msra.mxu0 %v836
      %867 = vmatpush.bf16.msra.mxu0 %v834
      %868 = vmatpush.bf16.msra.mxu0 %v832
      %869 = vmatpush.bf16.msra.mxu0 %v830
      %870 = vmatpush.bf16.msra.mxu0 %v828
      %871 = vmatpush.bf16.msra.mxu0 %v826
      %872 = vmatpush.bf16.msra.mxu0 %v824
      %873 = vmatpush.bf16.msra.mxu0 %v822
      %874 = vmatmul.bf16.gmra.mxu0 %v771
      %v875 = vpop.f32.mrf.mxu0
      %v876 = vadd.f32 0.0, %v875
      %v877 = vpop.f32.mrf.mxu0
      %878 = vdwg.mxu0
      %v879 = vadd.f32 %v743, %v863
      %v880 = vadd.f32 %v744, %v876
      %s881 = scalar_lea.vmem %s1, 640
      %v882 = vld [vmem:[%s881] sm:$0xff]
      %v883 = vld [vmem:[%s881 + $0x8] sm:$0xff]
      %v884 = vld [vmem:[%s881 + $0x10] sm:$0xff]
      %v885 = vld [vmem:[%s881 + $0x18] sm:$0xff]
      %v886 = vld [vmem:[%s881 + $0x20] sm:$0xff]
      %v887 = vld [vmem:[%s881 + $0x28] sm:$0xff]
      %v888 = vld [vmem:[%s881 + $0x30] sm:$0xff]
      %v889 = vld [vmem:[%s881 + $0x38] sm:$0xff]
      %v890 = vld [vmem:[%s881 + $0x40] sm:$0xff]
      %v891 = vld [vmem:[%s881 + $0x48] sm:$0xff]
      %v892 = vld [vmem:[%s881 + $0x50] sm:$0xff]
      %v893 = vld [vmem:[%s881 + $0x58] sm:$0xff]
      %v894 = vld [vmem:[%s881 + $0x60] sm:$0xff]
      %v895 = vld [vmem:[%s881 + $0x68] sm:$0xff]
      %v896 = vld [vmem:[%s881 + $0x70] sm:$0xff]
      %v897 = vld [vmem:[%s881 + $0x78] sm:$0xff]
      %v898 = vrot.slane %v764, 1
      %v916 = vunpack.c.l.b16 %v882
      %v917 = vunpack.c.h.b16 %v882
      %v918 = vunpack.c.l.b16 %v883
      %v919 = vunpack.c.h.b16 %v883
      %v920 = vunpack.c.l.b16 %v884
      %v921 = vunpack.c.h.b16 %v884
      %v922 = vunpack.c.l.b16 %v885
      %v923 = vunpack.c.h.b16 %v885
      %v924 = vunpack.c.l.b16 %v886
      %v925 = vunpack.c.h.b16 %v886
      %v926 = vunpack.c.l.b16 %v887
      %v927 = vunpack.c.h.b16 %v887
      %v928 = vunpack.c.l.b16 %v888
      %v929 = vunpack.c.h.b16 %v888
      %v930 = vunpack.c.l.b16 %v889
      %v931 = vunpack.c.h.b16 %v889
      %v932 = vunpack.c.l.b16 %v890
      %v933 = vunpack.c.h.b16 %v890
      %v934 = vunpack.c.l.b16 %v891
      %v935 = vunpack.c.h.b16 %v891
      %v936 = vunpack.c.l.b16 %v892
      %v937 = vunpack.c.h.b16 %v892
      %v938 = vunpack.c.l.b16 %v893
      %v939 = vunpack.c.h.b16 %v893
      %v940 = vunpack.c.l.b16 %v894
      %v941 = vunpack.c.h.b16 %v894
      %v942 = vunpack.c.l.b16 %v895
      %v943 = vunpack.c.h.b16 %v895
      %v944 = vunpack.c.l.b16 %v896
      %v945 = vunpack.c.h.b16 %v896
      %v946 = vunpack.c.l.b16 %v897
      %v947 = vunpack.c.h.b16 %v897
      %v948 = vpack.c.b16 %v918, %v916
      %v949 = vpack.c.b16 %v919, %v917
      %v950 = vpack.c.b16 %v922, %v920
      %v951 = vpack.c.b16 %v923, %v921
      %v952 = vpack.c.b16 %v926, %v924
      %v953 = vpack.c.b16 %v927, %v925
      %v954 = vpack.c.b16 %v930, %v928
      %v955 = vpack.c.b16 %v931, %v929
      %v956 = vpack.c.b16 %v934, %v932
      %v957 = vpack.c.b16 %v935, %v933
      %v958 = vpack.c.b16 %v938, %v936
      %v959 = vpack.c.b16 %v939, %v937
      %v960 = vpack.c.b16 %v942, %v940
      %v961 = vpack.c.b16 %v943, %v941
      %v962 = vpack.c.b16 %v946, %v944
      %v963 = vpack.c.b16 %v947, %v945
      %980 = vmatpush.bf16.msra.mxu0 %v962
      %981 = vmatpush.bf16.msra.mxu0 %v960
      %982 = vmatpush.bf16.msra.mxu0 %v958
      %983 = vmatpush.bf16.msra.mxu0 %v956
      %984 = vmatpush.bf16.msra.mxu0 %v954
      %985 = vmatpush.bf16.msra.mxu0 %v952
      %986 = vmatpush.bf16.msra.mxu0 %v950
      %987 = vmatpush.bf16.msra.mxu0 %v948
      %988 = vmatmul.bf16.gmra.mxu0 %v898
      %v989 = vpop.f32.mrf.mxu0
      %v990 = vadd.f32 0.0, %v989
      %v991 = vpop.f32.mrf.mxu0
      %992 = vdwg.mxu0
      %993 = vmatpush.bf16.msra.mxu0 %v963
      %994 = vmatpush.bf16.msra.mxu0 %v961
      %995 = vmatpush.bf16.msra.mxu0 %v959
      %996 = vmatpush.bf16.msra.mxu0 %v957
      %997 = vmatpush.bf16.msra.mxu0 %v955
      %998 = vmatpush.bf16.msra.mxu0 %v953
      %999 = vmatpush.bf16.msra.mxu0 %v951
      %1000 = vmatpush.bf16.msra.mxu0 %v949
      %1001 = vmatmul.bf16.gmra.mxu0 %v898
      %v1002 = vpop.f32.mrf.mxu0
      %v1003 = vadd.f32 0.0, %v1002
      %v1004 = vpop.f32.mrf.mxu0
      %1005 = vdwg.mxu0
      %v1006 = vadd.f32 %v879, %v990
      %v1007 = vadd.f32 %v880, %v1003
      %s1008 = scalar_lea.vmem %s1, 768
      %v1009 = vld [vmem:[%s1008] sm:$0xff]
      %v1010 = vld [vmem:[%s1008 + $0x8] sm:$0xff]
      %v1011 = vld [vmem:[%s1008 + $0x10] sm:$0xff]
      %v1012 = vld [vmem:[%s1008 + $0x18] sm:$0xff]
      %v1013 = vld [vmem:[%s1008 + $0x20] sm:$0xff]
      %v1014 = vld [vmem:[%s1008 + $0x28] sm:$0xff]
      %v1015 = vld [vmem:[%s1008 + $0x30] sm:$0xff]
      %v1016 = vld [vmem:[%s1008 + $0x38] sm:$0xff]
      %v1017 = vld [vmem:[%s1008 + $0x40] sm:$0xff]
      %v1018 = vld [vmem:[%s1008 + $0x48] sm:$0xff]
      %v1019 = vld [vmem:[%s1008 + $0x50] sm:$0xff]
      %v1020 = vld [vmem:[%s1008 + $0x58] sm:$0xff]
      %v1021 = vld [vmem:[%s1008 + $0x60] sm:$0xff]
      %v1022 = vld [vmem:[%s1008 + $0x68] sm:$0xff]
      %v1023 = vld [vmem:[%s1008 + $0x70] sm:$0xff]
      %v1024 = vld [vmem:[%s1008 + $0x78] sm:$0xff]
      %v1041 = vunpack.c.l.b16 %v1009
      %v1042 = vunpack.c.h.b16 %v1009
      %v1043 = vunpack.c.l.b16 %v1010
      %v1044 = vunpack.c.h.b16 %v1010
      %v1045 = vunpack.c.l.b16 %v1011
      %v1046 = vunpack.c.h.b16 %v1011
      %v1047 = vunpack.c.l.b16 %v1012
      %v1048 = vunpack.c.h.b16 %v1012
      %v1049 = vunpack.c.l.b16 %v1013
      %v1050 = vunpack.c.h.b16 %v1013
      %v1051 = vunpack.c.l.b16 %v1014
      %v1052 = vunpack.c.h.b16 %v1014
      %v1053 = vunpack.c.l.b16 %v1015
      %v1054 = vunpack.c.h.b16 %v1015
      %v1055 = vunpack.c.l.b16 %v1016
      %v1056 = vunpack.c.h.b16 %v1016
      %v1057 = vunpack.c.l.b16 %v1017
      %v1058 = vunpack.c.h.b16 %v1017
      %v1059 = vunpack.c.l.b16 %v1018
      %v1060 = vunpack.c.h.b16 %v1018
      %v1061 = vunpack.c.l.b16 %v1019
      %v1062 = vunpack.c.h.b16 %v1019
      %v1063 = vunpack.c.l.b16 %v1020
      %v1064 = vunpack.c.h.b16 %v1020
      %v1065 = vunpack.c.l.b16 %v1021
      %v1066 = vunpack.c.h.b16 %v1021
      %v1067 = vunpack.c.l.b16 %v1022
      %v1068 = vunpack.c.h.b16 %v1022
      %v1069 = vunpack.c.l.b16 %v1023
      %v1070 = vunpack.c.h.b16 %v1023
      %v1071 = vunpack.c.l.b16 %v1024
      %v1072 = vunpack.c.h.b16 %v1024
      %v1073 = vpack.c.b16 %v1043, %v1041
      %v1074 = vpack.c.b16 %v1044, %v1042
      %v1075 = vpack.c.b16 %v1047, %v1045
      %v1076 = vpack.c.b16 %v1048, %v1046
      %v1077 = vpack.c.b16 %v1051, %v1049
      %v1078 = vpack.c.b16 %v1052, %v1050
      %v1079 = vpack.c.b16 %v1055, %v1053
      %v1080 = vpack.c.b16 %v1056, %v1054
      %v1081 = vpack.c.b16 %v1059, %v1057
      %v1082 = vpack.c.b16 %v1060, %v1058
      %v1083 = vpack.c.b16 %v1063, %v1061
      %v1084 = vpack.c.b16 %v1064, %v1062
      %v1085 = vpack.c.b16 %v1067, %v1065
      %v1086 = vpack.c.b16 %v1068, %v1066
      %v1087 = vpack.c.b16 %v1071, %v1069
      %v1088 = vpack.c.b16 %v1072, %v1070
      %1105 = vmatpush.bf16.msra.mxu0 %v1087
      %1106 = vmatpush.bf16.msra.mxu0 %v1085
      %1107 = vmatpush.bf16.msra.mxu0 %v1083
      %1108 = vmatpush.bf16.msra.mxu0 %v1081
      %1109 = vmatpush.bf16.msra.mxu0 %v1079
      %1110 = vmatpush.bf16.msra.mxu0 %v1077
      %1111 = vmatpush.bf16.msra.mxu0 %v1075
      %1112 = vmatpush.bf16.msra.mxu0 %v1073
      %1113 = vmatmul.bf16.gmra.mxu0 %v227
      %v1114 = vpop.f32.mrf.mxu0
      %v1115 = vadd.f32 0.0, %v1114
      %v1116 = vpop.f32.mrf.mxu0
      %1117 = vdwg.mxu0
      %1118 = vmatpush.bf16.msra.mxu0 %v1088
      %1119 = vmatpush.bf16.msra.mxu0 %v1086
      %1120 = vmatpush.bf16.msra.mxu0 %v1084
      %1121 = vmatpush.bf16.msra.mxu0 %v1082
      %1122 = vmatpush.bf16.msra.mxu0 %v1080
      %1123 = vmatpush.bf16.msra.mxu0 %v1078
      %1124 = vmatpush.bf16.msra.mxu0 %v1076
      %1125 = vmatpush.bf16.msra.mxu0 %v1074
      %1126 = vmatmul.bf16.gmra.mxu0 %v227
      %v1127 = vpop.f32.mrf.mxu0
      %v1128 = vadd.f32 0.0, %v1127
      %v1129 = vpop.f32.mrf.mxu0
      %1130 = vdwg.mxu0
      %v1131 = vadd.f32 %v1006, %v1115
      %v1132 = vadd.f32 %v1007, %v1128
      %s1133 = scalar_lea.vmem %s1, 896
      %v1134 = vld [vmem:[%s1133] sm:$0xff]
      %v1135 = vld [vmem:[%s1133 + $0x8] sm:$0xff]
      %v1136 = vld [vmem:[%s1133 + $0x10] sm:$0xff]
      %v1137 = vld [vmem:[%s1133 + $0x18] sm:$0xff]
      %v1138 = vld [vmem:[%s1133 + $0x20] sm:$0xff]
      %v1139 = vld [vmem:[%s1133 + $0x28] sm:$0xff]
      %v1140 = vld [vmem:[%s1133 + $0x30] sm:$0xff]
      %v1141 = vld [vmem:[%s1133 + $0x38] sm:$0xff]
      %v1142 = vld [vmem:[%s1133 + $0x40] sm:$0xff]
      %v1143 = vld [vmem:[%s1133 + $0x48] sm:$0xff]
      %v1144 = vld [vmem:[%s1133 + $0x50] sm:$0xff]
      %v1145 = vld [vmem:[%s1133 + $0x58] sm:$0xff]
      %v1146 = vld [vmem:[%s1133 + $0x60] sm:$0xff]
      %v1147 = vld [vmem:[%s1133 + $0x68] sm:$0xff]
      %v1148 = vld [vmem:[%s1133 + $0x70] sm:$0xff]
      %v1149 = vld [vmem:[%s1133 + $0x78] sm:$0xff]
      %v1151 = vunpack.c.l.b16 %v227
      %v1152 = vpack.c.b16 %v1151, %v1151
      %v1154 = vshrl.u32 %v1152, 16
      %v1156 = vshll.u32 %v1152, 16
      %v1158 = vrot.slane %v1156, 1
      %v1159 = vor.u32 %v1154, %v1158
      %v1177 = vunpack.c.l.b16 %v1134
      %v1178 = vunpack.c.h.b16 %v1134
      %v1179 = vunpack.c.l.b16 %v1135
      %v1180 = vunpack.c.h.b16 %v1135
      %v1181 = vunpack.c.l.b16 %v1136
      %v1182 = vunpack.c.h.b16 %v1136
      %v1183 = vunpack.c.l.b16 %v1137
      %v1184 = vunpack.c.h.b16 %v1137
      %v1185 = vunpack.c.l.b16 %v1138
      %v1186 = vunpack.c.h.b16 %v1138
      %v1187 = vunpack.c.l.b16 %v1139
      %v1188 = vunpack.c.h.b16 %v1139
      %v1189 = vunpack.c.l.b16 %v1140
      %v1190 = vunpack.c.h.b16 %v1140
      %v1191 = vunpack.c.l.b16 %v1141
      %v1192 = vunpack.c.h.b16 %v1141
      %v1193 = vunpack.c.l.b16 %v1142
      %v1194 = vunpack.c.h.b16 %v1142
      %v1195 = vunpack.c.l.b16 %v1143
      %v1196 = vunpack.c.h.b16 %v1143
      %v1197 = vunpack.c.l.b16 %v1144
      %v1198 = vunpack.c.h.b16 %v1144
      %v1199 = vunpack.c.l.b16 %v1145
      %v1200 = vunpack.c.h.b16 %v1145
      %v1201 = vunpack.c.l.b16 %v1146
      %v1202 = vunpack.c.h.b16 %v1146
      %v1203 = vunpack.c.l.b16 %v1147
      %v1204 = vunpack.c.h.b16 %v1147
      %v1205 = vunpack.c.l.b16 %v1148
      %v1206 = vunpack.c.h.b16 %v1148
      %v1207 = vunpack.c.l.b16 %v1149
      %v1208 = vunpack.c.h.b16 %v1149
      %v1209 = vpack.c.b16 %v1179, %v1177
      %v1210 = vpack.c.b16 %v1180, %v1178
      %v1211 = vpack.c.b16 %v1183, %v1181
      %v1212 = vpack.c.b16 %v1184, %v1182
      %v1213 = vpack.c.b16 %v1187, %v1185
      %v1214 = vpack.c.b16 %v1188, %v1186
      %v1215 = vpack.c.b16 %v1191, %v1189
      %v1216 = vpack.c.b16 %v1192, %v1190
      %v1217 = vpack.c.b16 %v1195, %v1193
      %v1218 = vpack.c.b16 %v1196, %v1194
      %v1219 = vpack.c.b16 %v1199, %v1197
      %v1220 = vpack.c.b16 %v1200, %v1198
      %v1221 = vpack.c.b16 %v1203, %v1201
      %v1222 = vpack.c.b16 %v1204, %v1202
      %v1223 = vpack.c.b16 %v1207, %v1205
      %v1224 = vpack.c.b16 %v1208, %v1206
      %1241 = vmatpush.bf16.msra.mxu0 %v1223
      %1242 = vmatpush.bf16.msra.mxu0 %v1221
      %1243 = vmatpush.bf16.msra.mxu0 %v1219
      %1244 = vmatpush.bf16.msra.mxu0 %v1217
      %1245 = vmatpush.bf16.msra.mxu0 %v1215
      %1246 = vmatpush.bf16.msra.mxu0 %v1213
      %1247 = vmatpush.bf16.msra.mxu0 %v1211
      %1248 = vmatpush.bf16.msra.mxu0 %v1209
      %1249 = vmatmul.bf16.gmra.mxu0 %v1159
      %v1250 = vpop.f32.mrf.mxu0
      %v1251 = vadd.f32 0.0, %v1250
      %v1252 = vpop.f32.mrf.mxu0
      %1253 = vdwg.mxu0
      %1254 = vmatpush.bf16.msra.mxu0 %v1224
      %1255 = vmatpush.bf16.msra.mxu0 %v1222
      %1256 = vmatpush.bf16.msra.mxu0 %v1220
      %1257 = vmatpush.bf16.msra.mxu0 %v1218
      %1258 = vmatpush.bf16.msra.mxu0 %v1216
      %1259 = vmatpush.bf16.msra.mxu0 %v1214
      %1260 = vmatpush.bf16.msra.mxu0 %v1212
      %1261 = vmatpush.bf16.msra.mxu0 %v1210
      %1262 = vmatmul.bf16.gmra.mxu0 %v1159
      %v1263 = vpop.f32.mrf.mxu0
      %v1264 = vadd.f32 0.0, %v1263
      %v1265 = vpop.f32.mrf.mxu0
      %1266 = vdwg.mxu0
      %v1267 = vadd.f32 %v1131, %v1251
      %v1268 = vadd.f32 %v1132, %v1264
      %s1269 = scalar_lea.vmem %s1, 1024
      %v1270 = vld [vmem:[%s1269] sm:$0xff]
      %v1271 = vld [vmem:[%s1269 + $0x8] sm:$0xff]
      %v1272 = vld [vmem:[%s1269 + $0x10] sm:$0xff]
      %v1273 = vld [vmem:[%s1269 + $0x18] sm:$0xff]
      %v1274 = vld [vmem:[%s1269 + $0x20] sm:$0xff]
      %v1275 = vld [vmem:[%s1269 + $0x28] sm:$0xff]
      %v1276 = vld [vmem:[%s1269 + $0x30] sm:$0xff]
      %v1277 = vld [vmem:[%s1269 + $0x38] sm:$0xff]
      %v1278 = vld [vmem:[%s1269 + $0x40] sm:$0xff]
      %v1279 = vld [vmem:[%s1269 + $0x48] sm:$0xff]
      %v1280 = vld [vmem:[%s1269 + $0x50] sm:$0xff]
      %v1281 = vld [vmem:[%s1269 + $0x58] sm:$0xff]
      %v1282 = vld [vmem:[%s1269 + $0x60] sm:$0xff]
      %v1283 = vld [vmem:[%s1269 + $0x68] sm:$0xff]
      %v1284 = vld [vmem:[%s1269 + $0x70] sm:$0xff]
      %v1285 = vld [vmem:[%s1269 + $0x78] sm:$0xff]
      %v1286 = vrot.slane %v1152, 1
      %v1304 = vunpack.c.l.b16 %v1270
      %v1305 = vunpack.c.h.b16 %v1270
      %v1306 = vunpack.c.l.b16 %v1271
      %v1307 = vunpack.c.h.b16 %v1271
      %v1308 = vunpack.c.l.b16 %v1272
      %v1309 = vunpack.c.h.b16 %v1272
      %v1310 = vunpack.c.l.b16 %v1273
      %v1311 = vunpack.c.h.b16 %v1273
      %v1312 = vunpack.c.l.b16 %v1274
      %v1313 = vunpack.c.h.b16 %v1274
      %v1314 = vunpack.c.l.b16 %v1275
      %v1315 = vunpack.c.h.b16 %v1275
      %v1316 = vunpack.c.l.b16 %v1276
      %v1317 = vunpack.c.h.b16 %v1276
      %v1318 = vunpack.c.l.b16 %v1277
      %v1319 = vunpack.c.h.b16 %v1277
      %v1320 = vunpack.c.l.b16 %v1278
      %v1321 = vunpack.c.h.b16 %v1278
      %v1322 = vunpack.c.l.b16 %v1279
      %v1323 = vunpack.c.h.b16 %v1279
      %v1324 = vunpack.c.l.b16 %v1280
      %v1325 = vunpack.c.h.b16 %v1280
      %v1326 = vunpack.c.l.b16 %v1281
      %v1327 = vunpack.c.h.b16 %v1281
      %v1328 = vunpack.c.l.b16 %v1282
      %v1329 = vunpack.c.h.b16 %v1282
      %v1330 = vunpack.c.l.b16 %v1283
      %v1331 = vunpack.c.h.b16 %v1283
      %v1332 = vunpack.c.l.b16 %v1284
      %v1333 = vunpack.c.h.b16 %v1284
      %v1334 = vunpack.c.l.b16 %v1285
      %v1335 = vunpack.c.h.b16 %v1285
      %v1336 = vpack.c.b16 %v1306, %v1304
      %v1337 = vpack.c.b16 %v1307, %v1305
      %v1338 = vpack.c.b16 %v1310, %v1308
      %v1339 = vpack.c.b16 %v1311, %v1309
      %v1340 = vpack.c.b16 %v1314, %v1312
      %v1341 = vpack.c.b16 %v1315, %v1313
      %v1342 = vpack.c.b16 %v1318, %v1316
      %v1343 = vpack.c.b16 %v1319, %v1317
      %v1344 = vpack.c.b16 %v1322, %v1320
      %v1345 = vpack.c.b16 %v1323, %v1321
      %v1346 = vpack.c.b16 %v1326, %v1324
      %v1347 = vpack.c.b16 %v1327, %v1325
      %v1348 = vpack.c.b16 %v1330, %v1328
      %v1349 = vpack.c.b16 %v1331, %v1329
      %v1350 = vpack.c.b16 %v1334, %v1332
      %v1351 = vpack.c.b16 %v1335, %v1333
      %1368 = vmatpush.bf16.msra.mxu0 %v1350
      %1369 = vmatpush.bf16.msra.mxu0 %v1348
      %1370 = vmatpush.bf16.msra.mxu0 %v1346
      %1371 = vmatpush.bf16.msra.mxu0 %v1344
      %1372 = vmatpush.bf16.msra.mxu0 %v1342
      %1373 = vmatpush.bf16.msra.mxu0 %v1340
      %1374 = vmatpush.bf16.msra.mxu0 %v1338
      %1375 = vmatpush.bf16.msra.mxu0 %v1336
      %1376 = vmatmul.bf16.gmra.mxu0 %v1286
      %v1377 = vpop.f32.mrf.mxu0
      %v1378 = vadd.f32 0.0, %v1377
      %v1379 = vpop.f32.mrf.mxu0
      %1380 = vdwg.mxu0
      %1381 = vmatpush.bf16.msra.mxu0 %v1351
      %1382 = vmatpush.bf16.msra.mxu0 %v1349
      %1383 = vmatpush.bf16.msra.mxu0 %v1347
      %1384 = vmatpush.bf16.msra.mxu0 %v1345
      %1385 = vmatpush.bf16.msra.mxu0 %v1343
      %1386 = vmatpush.bf16.msra.mxu0 %v1341
      %1387 = vmatpush.bf16.msra.mxu0 %v1339
      %1388 = vmatpush.bf16.msra.mxu0 %v1337
      %1389 = vmatmul.bf16.gmra.mxu0 %v1286
      %v1390 = vpop.f32.mrf.mxu0
      %v1391 = vadd.f32 0.0, %v1390
      %v1392 = vpop.f32.mrf.mxu0
      %1393 = vdwg.mxu0
      %v1394 = vadd.f32 %v1267, %v1378
      %v1395 = vadd.f32 %v1268, %v1391
      %v1396 = vld [vmem:[%s2] sm:$0x3]
      %v1398 = vperm.slane %v1396, 0
      %v1399 = vperm.slane %v1396, 1
      %v1402 = vadd.f32 %v1394, %v1398
      %v1403 = vadd.f32 %v1395, %v1399
      %v1404 = vmax.f32 %v1402, 0.0
      %s1405 = scalar_lea.vmem [#allocation2], 8
      %1406 = vst [vmem:[%s1405 + $0x1] sm:$0xf] %v1404
      %1407 = vst [vmem:[#allocation3] sm:$0xf] %v1403
      %v1408 = vld [vmem:[%s1] sm:$0xff]
      %v1409 = vld [vmem:[%s1 + $0x8] sm:$0xff]
      %v1410 = vld [vmem:[%s1 + $0x10] sm:$0xff]
      %v1411 = vld [vmem:[%s1 + $0x18] sm:$0xff]
      %v1412 = vld [vmem:[%s1 + $0x20] sm:$0xff]
      %v1413 = vld [vmem:[%s1 + $0x28] sm:$0xff]
      %v1414 = vld [vmem:[%s1 + $0x30] sm:$0xff]
      %v1415 = vld [vmem:[%s1 + $0x38] sm:$0xff]
      %v1416 = vld [vmem:[%s1 + $0x40] sm:$0xff]
      %v1417 = vld [vmem:[%s1 + $0x48] sm:$0xff]
      %v1418 = vld [vmem:[%s1 + $0x50] sm:$0xff]
      %v1419 = vld [vmem:[%s1 + $0x58] sm:$0xff]
      %v1420 = vld [vmem:[%s1 + $0x60] sm:$0xff]
      %v1421 = vld [vmem:[%s1 + $0x68] sm:$0xff]
      %v1422 = vld [vmem:[%s1 + $0x70] sm:$0xff]
      %v1423 = vld [vmem:[%s1 + $0x78] sm:$0xff]
      %v1424 = vld [vmem:[%s253] sm:$0xff]
      %v1425 = vld [vmem:[%s253 + $0x8] sm:$0xff]
      %v1426 = vld [vmem:[%s253 + $0x10] sm:$0xff]
      %v1427 = vld [vmem:[%s253 + $0x18] sm:$0xff]
      %v1428 = vld [vmem:[%s253 + $0x20] sm:$0xff]
      %v1429 = vld [vmem:[%s253 + $0x28] sm:$0xff]
      %v1430 = vld [vmem:[%s253 + $0x30] sm:$0xff]
      %v1431 = vld [vmem:[%s253 + $0x38] sm:$0xff]
      %v1432 = vld [vmem:[%s253 + $0x40] sm:$0xff]
      %v1433 = vld [vmem:[%s253 + $0x48] sm:$0xff]
      %v1434 = vld [vmem:[%s253 + $0x50] sm:$0xff]
      %v1435 = vld [vmem:[%s253 + $0x58] sm:$0xff]
      %v1436 = vld [vmem:[%s253 + $0x60] sm:$0xff]
      %v1437 = vld [vmem:[%s253 + $0x68] sm:$0xff]
      %v1438 = vld [vmem:[%s253 + $0x70] sm:$0xff]
      %v1439 = vld [vmem:[%s253 + $0x78] sm:$0xff]
      %v1456 = vunpack.c.l.b16 %v1424
      %v1457 = vunpack.c.h.b16 %v1424
      %v1458 = vunpack.c.l.b16 %v1425
      %v1459 = vunpack.c.h.b16 %v1425
      %v1460 = vunpack.c.l.b16 %v1426
      %v1461 = vunpack.c.h.b16 %v1426
      %v1462 = vunpack.c.l.b16 %v1427
      %v1463 = vunpack.c.h.b16 %v1427
      %v1464 = vunpack.c.l.b16 %v1428
      %v1465 = vunpack.c.h.b16 %v1428
      %v1466 = vunpack.c.l.b16 %v1429
      %v1467 = vunpack.c.h.b16 %v1429
      %v1468 = vunpack.c.l.b16 %v1430
      %v1469 = vunpack.c.h.b16 %v1430
      %v1470 = vunpack.c.l.b16 %v1431
      %v1471 = vunpack.c.h.b16 %v1431
      %v1472 = vunpack.c.l.b16 %v1432
      %v1473 = vunpack.c.h.b16 %v1432
      %v1474 = vunpack.c.l.b16 %v1433
      %v1475 = vunpack.c.h.b16 %v1433
      %v1476 = vunpack.c.l.b16 %v1434
      %v1477 = vunpack.c.h.b16 %v1434
      %v1478 = vunpack.c.l.b16 %v1435
      %v1479 = vunpack.c.h.b16 %v1435
      %v1480 = vunpack.c.l.b16 %v1436
      %v1481 = vunpack.c.h.b16 %v1436
      %v1482 = vunpack.c.l.b16 %v1437
      %v1483 = vunpack.c.h.b16 %v1437
      %v1484 = vunpack.c.l.b16 %v1438
      %v1485 = vunpack.c.h.b16 %v1438
      %v1486 = vunpack.c.l.b16 %v1439
      %v1487 = vunpack.c.h.b16 %v1439
      %v1488 = vpack.c.b16 %v1458, %v1456
      %v1489 = vpack.c.b16 %v1459, %v1457
      %v1490 = vpack.c.b16 %v1462, %v1460
      %v1491 = vpack.c.b16 %v1463, %v1461
      %v1492 = vpack.c.b16 %v1466, %v1464
      %v1493 = vpack.c.b16 %v1467, %v1465
      %v1494 = vpack.c.b16 %v1470, %v1468
      %v1495 = vpack.c.b16 %v1471, %v1469
      %v1496 = vpack.c.b16 %v1474, %v1472
      %v1497 = vpack.c.b16 %v1475, %v1473
      %v1498 = vpack.c.b16 %v1478, %v1476
      %v1499 = vpack.c.b16 %v1479, %v1477
      %v1500 = vpack.c.b16 %v1482, %v1480
      %v1501 = vpack.c.b16 %v1483, %v1481
      %v1502 = vpack.c.b16 %v1486, %v1484
      %v1503 = vpack.c.b16 %v1487, %v1485
      %1520 = vmatpush.bf16.msra.mxu0 %v1502
      %1521 = vmatpush.bf16.msra.mxu0 %v1500
      %1522 = vmatpush.bf16.msra.mxu0 %v1498
      %1523 = vmatpush.bf16.msra.mxu0 %v1496
      %1524 = vmatpush.bf16.msra.mxu0 %v1494
      %1525 = vmatpush.bf16.msra.mxu0 %v1492
      %1526 = vmatpush.bf16.msra.mxu0 %v1490
      %1527 = vmatpush.bf16.msra.mxu0 %v1488
      %1528 = vmatmul.bf16.gmra.mxu0 %v771
      %v1529 = vpop.f32.mrf.mxu0
      %v1530 = vadd.f32 0.0, %v1529
      %v1531 = vpop.f32.mrf.mxu0
      %1532 = vdwg.mxu0
      %1533 = vmatpush.bf16.msra.mxu0 %v1503
      %1534 = vmatpush.bf16.msra.mxu0 %v1501
      %1535 = vmatpush.bf16.msra.mxu0 %v1499
      %1536 = vmatpush.bf16.msra.mxu0 %v1497
      %1537 = vmatpush.bf16.msra.mxu0 %v1495
      %1538 = vmatpush.bf16.msra.mxu0 %v1493
      %1539 = vmatpush.bf16.msra.mxu0 %v1491
      %1540 = vmatpush.bf16.msra.mxu0 %v1489
      %1541 = vmatmul.bf16.gmra.mxu0 %v771
      %v1542 = vpop.f32.mrf.mxu0
      %v1543 = vadd.f32 0.0, %v1542
      %v1544 = vpop.f32.mrf.mxu0
      %1545 = vdwg.mxu0
      %v1562 = vunpack.c.l.b16 %v1408
      %v1563 = vunpack.c.h.b16 %v1408
      %v1564 = vunpack.c.l.b16 %v1409
      %v1565 = vunpack.c.h.b16 %v1409
      %v1566 = vunpack.c.l.b16 %v1410
      %v1567 = vunpack.c.h.b16 %v1410
      %v1568 = vunpack.c.l.b16 %v1411
      %v1569 = vunpack.c.h.b16 %v1411
      %v1570 = vunpack.c.l.b16 %v1412
      %v1571 = vunpack.c.h.b16 %v1412
      %v1572 = vunpack.c.l.b16 %v1413
      %v1573 = vunpack.c.h.b16 %v1413
      %v1574 = vunpack.c.l.b16 %v1414
      %v1575 = vunpack.c.h.b16 %v1414
      %v1576 = vunpack.c.l.b16 %v1415
      %v1577 = vunpack.c.h.b16 %v1415
      %v1578 = vunpack.c.l.b16 %v1416
      %v1579 = vunpack.c.h.b16 %v1416
      %v1580 = vunpack.c.l.b16 %v1417
      %v1581 = vunpack.c.h.b16 %v1417
      %v1582 = vunpack.c.l.b16 %v1418
      %v1583 = vunpack.c.h.b16 %v1418
      %v1584 = vunpack.c.l.b16 %v1419
      %v1585 = vunpack.c.h.b16 %v1419
      %v1586 = vunpack.c.l.b16 %v1420
      %v1587 = vunpack.c.h.b16 %v1420
      %v1588 = vunpack.c.l.b16 %v1421
      %v1589 = vunpack.c.h.b16 %v1421
      %v1590 = vunpack.c.l.b16 %v1422
      %v1591 = vunpack.c.h.b16 %v1422
      %v1592 = vunpack.c.l.b16 %v1423
      %v1593 = vunpack.c.h.b16 %v1423
      %v1594 = vpack.c.b16 %v1564, %v1562
      %v1595 = vpack.c.b16 %v1565, %v1563
      %v1596 = vpack.c.b16 %v1568, %v1566
      %v1597 = vpack.c.b16 %v1569, %v1567
      %v1598 = vpack.c.b16 %v1572, %v1570
      %v1599 = vpack.c.b16 %v1573, %v1571
      %v1600 = vpack.c.b16 %v1576, %v1574
      %v1601 = vpack.c.b16 %v1577, %v1575
      %v1602 = vpack.c.b16 %v1580, %v1578
      %v1603 = vpack.c.b16 %v1581, %v1579
      %v1604 = vpack.c.b16 %v1584, %v1582
      %v1605 = vpack.c.b16 %v1585, %v1583
      %v1606 = vpack.c.b16 %v1588, %v1586
      %v1607 = vpack.c.b16 %v1589, %v1587
      %v1608 = vpack.c.b16 %v1592, %v1590
      %v1609 = vpack.c.b16 %v1593, %v1591
      %1626 = vmatpush.bf16.msra.mxu0 %v1608
      %1627 = vmatpush.bf16.msra.mxu0 %v1606
      %1628 = vmatpush.bf16.msra.mxu0 %v1604
      %1629 = vmatpush.bf16.msra.mxu0 %v1602
      %1630 = vmatpush.bf16.msra.mxu0 %v1600
      %1631 = vmatpush.bf16.msra.mxu0 %v1598
      %1632 = vmatpush.bf16.msra.mxu0 %v1596
      %1633 = vmatpush.bf16.msra.mxu0 %v1594
      %1634 = vmatmul.bf16.gmra.mxu0 %v226
      %v1635 = vpop.f32.mrf.mxu0
      %v1636 = vadd.f32 %v1530, %v1635
      %v1637 = vpop.f32.mrf.mxu0
      %1638 = vdwg.mxu0
      %1639 = vmatpush.bf16.msra.mxu0 %v1609
      %1640 = vmatpush.bf16.msra.mxu0 %v1607
      %1641 = vmatpush.bf16.msra.mxu0 %v1605
      %1642 = vmatpush.bf16.msra.mxu0 %v1603
      %1643 = vmatpush.bf16.msra.mxu0 %v1601
      %1644 = vmatpush.bf16.msra.mxu0 %v1599
      %1645 = vmatpush.bf16.msra.mxu0 %v1597
      %1646 = vmatpush.bf16.msra.mxu0 %v1595
      %1647 = vmatmul.bf16.gmra.mxu0 %v226
      %v1648 = vpop.f32.mrf.mxu0
      %v1649 = vadd.f32 %v1543, %v1648
      %v1650 = vpop.f32.mrf.mxu0
      %1651 = vdwg.mxu0
      %v1652 = vld [vmem:[%s493] sm:$0xff]
      %v1653 = vld [vmem:[%s493 + $0x8] sm:$0xff]
      %v1654 = vld [vmem:[%s493 + $0x10] sm:$0xff]
      %v1655 = vld [vmem:[%s493 + $0x18] sm:$0xff]
      %v1656 = vld [vmem:[%s493 + $0x20] sm:$0xff]
      %v1657 = vld [vmem:[%s493 + $0x28] sm:$0xff]
      %v1658 = vld [vmem:[%s493 + $0x30] sm:$0xff]
      %v1659 = vld [vmem:[%s493 + $0x38] sm:$0xff]
      %v1660 = vld [vmem:[%s493 + $0x40] sm:$0xff]
      %v1661 = vld [vmem:[%s493 + $0x48] sm:$0xff]
      %v1662 = vld [vmem:[%s493 + $0x50] sm:$0xff]
      %v1663 = vld [vmem:[%s493 + $0x58] sm:$0xff]
      %v1664 = vld [vmem:[%s493 + $0x60] sm:$0xff]
      %v1665 = vld [vmem:[%s493 + $0x68] sm:$0xff]
      %v1666 = vld [vmem:[%s493 + $0x70] sm:$0xff]
      %v1667 = vld [vmem:[%s493 + $0x78] sm:$0xff]
      %v1684 = vunpack.c.l.b16 %v1652
      %v1685 = vunpack.c.h.b16 %v1652
      %v1686 = vunpack.c.l.b16 %v1653
      %v1687 = vunpack.c.h.b16 %v1653
      %v1688 = vunpack.c.l.b16 %v1654
      %v1689 = vunpack.c.h.b16 %v1654
      %v1690 = vunpack.c.l.b16 %v1655
      %v1691 = vunpack.c.h.b16 %v1655
      %v1692 = vunpack.c.l.b16 %v1656
      %v1693 = vunpack.c.h.b16 %v1656
      %v1694 = vunpack.c.l.b16 %v1657
      %v1695 = vunpack.c.h.b16 %v1657
      %v1696 = vunpack.c.l.b16 %v1658
      %v1697 = vunpack.c.h.b16 %v1658
      %v1698 = vunpack.c.l.b16 %v1659
      %v1699 = vunpack.c.h.b16 %v1659
      %v1700 = vunpack.c.l.b16 %v1660
      %v1701 = vunpack.c.h.b16 %v1660
      %v1702 = vunpack.c.l.b16 %v1661
      %v1703 = vunpack.c.h.b16 %v1661
      %v1704 = vunpack.c.l.b16 %v1662
      %v1705 = vunpack.c.h.b16 %v1662
      %v1706 = vunpack.c.l.b16 %v1663
      %v1707 = vunpack.c.h.b16 %v1663
      %v1708 = vunpack.c.l.b16 %v1664
      %v1709 = vunpack.c.h.b16 %v1664
      %v1710 = vunpack.c.l.b16 %v1665
      %v1711 = vunpack.c.h.b16 %v1665
      %v1712 = vunpack.c.l.b16 %v1666
      %v1713 = vunpack.c.h.b16 %v1666
      %v1714 = vunpack.c.l.b16 %v1667
      %v1715 = vunpack.c.h.b16 %v1667
      %v1716 = vpack.c.b16 %v1686, %v1684
      %v1717 = vpack.c.b16 %v1687, %v1685
      %v1718 = vpack.c.b16 %v1690, %v1688
      %v1719 = vpack.c.b16 %v1691, %v1689
      %v1720 = vpack.c.b16 %v1694, %v1692
      %v1721 = vpack.c.b16 %v1695, %v1693
      %v1722 = vpack.c.b16 %v1698, %v1696
      %v1723 = vpack.c.b16 %v1699, %v1697
      %v1724 = vpack.c.b16 %v1702, %v1700
      %v1725 = vpack.c.b16 %v1703, %v1701
      %v1726 = vpack.c.b16 %v1706, %v1704
      %v1727 = vpack.c.b16 %v1707, %v1705
      %v1728 = vpack.c.b16 %v1710, %v1708
      %v1729 = vpack.c.b16 %v1711, %v1709
      %v1730 = vpack.c.b16 %v1714, %v1712
      %v1731 = vpack.c.b16 %v1715, %v1713
      %1748 = vmatpush.bf16.msra.mxu0 %v1730
      %1749 = vmatpush.bf16.msra.mxu0 %v1728
      %1750 = vmatpush.bf16.msra.mxu0 %v1726
      %1751 = vmatpush.bf16.msra.mxu0 %v1724
      %1752 = vmatpush.bf16.msra.mxu0 %v1722
      %1753 = vmatpush.bf16.msra.mxu0 %v1720
      %1754 = vmatpush.bf16.msra.mxu0 %v1718
      %1755 = vmatpush.bf16.msra.mxu0 %v1716
      %1756 = vmatmul.bf16.gmra.mxu0 %v898
      %v1757 = vpop.f32.mrf.mxu0
      %v1758 = vadd.f32 0.0, %v1757
      %v1759 = vpop.f32.mrf.mxu0
      %1760 = vdwg.mxu0
      %1761 = vmatpush.bf16.msra.mxu0 %v1731
      %1762 = vmatpush.bf16.msra.mxu0 %v1729
      %1763 = vmatpush.bf16.msra.mxu0 %v1727
      %1764 = vmatpush.bf16.msra.mxu0 %v1725
      %1765 = vmatpush.bf16.msra.mxu0 %v1723
      %1766 = vmatpush.bf16.msra.mxu0 %v1721
      %1767 = vmatpush.bf16.msra.mxu0 %v1719
      %1768 = vmatpush.bf16.msra.mxu0 %v1717
      %1769 = vmatmul.bf16.gmra.mxu0 %v898
      %v1770 = vpop.f32.mrf.mxu0
      %v1771 = vadd.f32 0.0, %v1770
      %v1772 = vpop.f32.mrf.mxu0
      %1773 = vdwg.mxu0
      %v1774 = vadd.f32 %v1636, %v1758
      %v1775 = vadd.f32 %v1649, %v1771
      %v1776 = vld [vmem:[%s620] sm:$0xff]
      %v1777 = vld [vmem:[%s620 + $0x8] sm:$0xff]
      %v1778 = vld [vmem:[%s620 + $0x10] sm:$0xff]
      %v1779 = vld [vmem:[%s620 + $0x18] sm:$0xff]
      %v1780 = vld [vmem:[%s620 + $0x20] sm:$0xff]
      %v1781 = vld [vmem:[%s620 + $0x28] sm:$0xff]
      %v1782 = vld [vmem:[%s620 + $0x30] sm:$0xff]
      %v1783 = vld [vmem:[%s620 + $0x38] sm:$0xff]
      %v1784 = vld [vmem:[%s620 + $0x40] sm:$0xff]
      %v1785 = vld [vmem:[%s620 + $0x48] sm:$0xff]
      %v1786 = vld [vmem:[%s620 + $0x50] sm:$0xff]
      %v1787 = vld [vmem:[%s620 + $0x58] sm:$0xff]
      %v1788 = vld [vmem:[%s620 + $0x60] sm:$0xff]
      %v1789 = vld [vmem:[%s620 + $0x68] sm:$0xff]
      %v1790 = vld [vmem:[%s620 + $0x70] sm:$0xff]
      %v1791 = vld [vmem:[%s620 + $0x78] sm:$0xff]
      %v1808 = vunpack.c.l.b16 %v1776
      %v1809 = vunpack.c.h.b16 %v1776
      %v1810 = vunpack.c.l.b16 %v1777
      %v1811 = vunpack.c.h.b16 %v1777
      %v1812 = vunpack.c.l.b16 %v1778
      %v1813 = vunpack.c.h.b16 %v1778
      %v1814 = vunpack.c.l.b16 %v1779
      %v1815 = vunpack.c.h.b16 %v1779
      %v1816 = vunpack.c.l.b16 %v1780
      %v1817 = vunpack.c.h.b16 %v1780
      %v1818 = vunpack.c.l.b16 %v1781
      %v1819 = vunpack.c.h.b16 %v1781
      %v1820 = vunpack.c.l.b16 %v1782
      %v1821 = vunpack.c.h.b16 %v1782
      %v1822 = vunpack.c.l.b16 %v1783
      %v1823 = vunpack.c.h.b16 %v1783
      %v1824 = vunpack.c.l.b16 %v1784
      %v1825 = vunpack.c.h.b16 %v1784
      %v1826 = vunpack.c.l.b16 %v1785
      %v1827 = vunpack.c.h.b16 %v1785
      %v1828 = vunpack.c.l.b16 %v1786
      %v1829 = vunpack.c.h.b16 %v1786
      %v1830 = vunpack.c.l.b16 %v1787
      %v1831 = vunpack.c.h.b16 %v1787
      %v1832 = vunpack.c.l.b16 %v1788
      %v1833 = vunpack.c.h.b16 %v1788
      %v1834 = vunpack.c.l.b16 %v1789
      %v1835 = vunpack.c.h.b16 %v1789
      %v1836 = vunpack.c.l.b16 %v1790
      %v1837 = vunpack.c.h.b16 %v1790
      %v1838 = vunpack.c.l.b16 %v1791
      %v1839 = vunpack.c.h.b16 %v1791
      %v1840 = vpack.c.b16 %v1810, %v1808
      %v1841 = vpack.c.b16 %v1811, %v1809
      %v1842 = vpack.c.b16 %v1814, %v1812
      %v1843 = vpack.c.b16 %v1815, %v1813
      %v1844 = vpack.c.b16 %v1818, %v1816
      %v1845 = vpack.c.b16 %v1819, %v1817
      %v1846 = vpack.c.b16 %v1822, %v1820
      %v1847 = vpack.c.b16 %v1823, %v1821
      %v1848 = vpack.c.b16 %v1826, %v1824
      %v1849 = vpack.c.b16 %v1827, %v1825
      %v1850 = vpack.c.b16 %v1830, %v1828
      %v1851 = vpack.c.b16 %v1831, %v1829
      %v1852 = vpack.c.b16 %v1834, %v1832
      %v1853 = vpack.c.b16 %v1835, %v1833
      %v1854 = vpack.c.b16 %v1838, %v1836
      %v1855 = vpack.c.b16 %v1839, %v1837
      %1872 = vmatpush.bf16.msra.mxu0 %v1854
      %1873 = vmatpush.bf16.msra.mxu0 %v1852
      %1874 = vmatpush.bf16.msra.mxu0 %v1850
      %1875 = vmatpush.bf16.msra.mxu0 %v1848
      %1876 = vmatpush.bf16.msra.mxu0 %v1846
      %1877 = vmatpush.bf16.msra.mxu0 %v1844
      %1878 = vmatpush.bf16.msra.mxu0 %v1842
      %1879 = vmatpush.bf16.msra.mxu0 %v1840
      %1880 = vmatmul.bf16.gmra.mxu0 %v227
      %v1881 = vpop.f32.mrf.mxu0
      %v1882 = vadd.f32 0.0, %v1881
      %v1883 = vpop.f32.mrf.mxu0
      %1884 = vdwg.mxu0
      %1885 = vmatpush.bf16.msra.mxu0 %v1855
      %1886 = vmatpush.bf16.msra.mxu0 %v1853
      %1887 = vmatpush.bf16.msra.mxu0 %v1851
      %1888 = vmatpush.bf16.msra.mxu0 %v1849
      %1889 = vmatpush.bf16.msra.mxu0 %v1847
      %1890 = vmatpush.bf16.msra.mxu0 %v1845
      %1891 = vmatpush.bf16.msra.mxu0 %v1843
      %1892 = vmatpush.bf16.msra.mxu0 %v1841
      %1893 = vmatmul.bf16.gmra.mxu0 %v227
      %v1894 = vpop.f32.mrf.mxu0
      %v1895 = vadd.f32 0.0, %v1894
      %v1896 = vpop.f32.mrf.mxu0
      %1897 = vdwg.mxu0
      %v1898 = vadd.f32 %v1774, %v1882
      %v1899 = vadd.f32 %v1775, %v1895
      %v1900 = vld [vmem:[%s745] sm:$0xff]
      %v1901 = vld [vmem:[%s745 + $0x8] sm:$0xff]
      %v1902 = vld [vmem:[%s745 + $0x10] sm:$0xff]
      %v1903 = vld [vmem:[%s745 + $0x18] sm:$0xff]
      %v1904 = vld [vmem:[%s745 + $0x20] sm:$0xff]
      %v1905 = vld [vmem:[%s745 + $0x28] sm:$0xff]
      %v1906 = vld [vmem:[%s745 + $0x30] sm:$0xff]
      %v1907 = vld [vmem:[%s745 + $0x38] sm:$0xff]
      %v1908 = vld [vmem:[%s745 + $0x40] sm:$0xff]
      %v1909 = vld [vmem:[%s745 + $0x48] sm:$0xff]
      %v1910 = vld [vmem:[%s745 + $0x50] sm:$0xff]
      %v1911 = vld [vmem:[%s745 + $0x58] sm:$0xff]
      %v1912 = vld [vmem:[%s745 + $0x60] sm:$0xff]
      %v1913 = vld [vmem:[%s745 + $0x68] sm:$0xff]
      %v1914 = vld [vmem:[%s745 + $0x70] sm:$0xff]
      %v1915 = vld [vmem:[%s745 + $0x78] sm:$0xff]
      %v1932 = vunpack.c.l.b16 %v1900
      %v1933 = vunpack.c.h.b16 %v1900
      %v1934 = vunpack.c.l.b16 %v1901
      %v1935 = vunpack.c.h.b16 %v1901
      %v1936 = vunpack.c.l.b16 %v1902
      %v1937 = vunpack.c.h.b16 %v1902
      %v1938 = vunpack.c.l.b16 %v1903
      %v1939 = vunpack.c.h.b16 %v1903
      %v1940 = vunpack.c.l.b16 %v1904
      %v1941 = vunpack.c.h.b16 %v1904
      %v1942 = vunpack.c.l.b16 %v1905
      %v1943 = vunpack.c.h.b16 %v1905
      %v1944 = vunpack.c.l.b16 %v1906
      %v1945 = vunpack.c.h.b16 %v1906
      %v1946 = vunpack.c.l.b16 %v1907
      %v1947 = vunpack.c.h.b16 %v1907
      %v1948 = vunpack.c.l.b16 %v1908
      %v1949 = vunpack.c.h.b16 %v1908
      %v1950 = vunpack.c.l.b16 %v1909
      %v1951 = vunpack.c.h.b16 %v1909
      %v1952 = vunpack.c.l.b16 %v1910
      %v1953 = vunpack.c.h.b16 %v1910
      %v1954 = vunpack.c.l.b16 %v1911
      %v1955 = vunpack.c.h.b16 %v1911
      %v1956 = vunpack.c.l.b16 %v1912
      %v1957 = vunpack.c.h.b16 %v1912
      %v1958 = vunpack.c.l.b16 %v1913
      %v1959 = vunpack.c.h.b16 %v1913
      %v1960 = vunpack.c.l.b16 %v1914
      %v1961 = vunpack.c.h.b16 %v1914
      %v1962 = vunpack.c.l.b16 %v1915
      %v1963 = vunpack.c.h.b16 %v1915
      %v1964 = vpack.c.b16 %v1934, %v1932
      %v1965 = vpack.c.b16 %v1935, %v1933
      %v1966 = vpack.c.b16 %v1938, %v1936
      %v1967 = vpack.c.b16 %v1939, %v1937
      %v1968 = vpack.c.b16 %v1942, %v1940
      %v1969 = vpack.c.b16 %v1943, %v1941
      %v1970 = vpack.c.b16 %v1946, %v1944
      %v1971 = vpack.c.b16 %v1947, %v1945
      %v1972 = vpack.c.b16 %v1950, %v1948
      %v1973 = vpack.c.b16 %v1951, %v1949
      %v1974 = vpack.c.b16 %v1954, %v1952
      %v1975 = vpack.c.b16 %v1955, %v1953
      %v1976 = vpack.c.b16 %v1958, %v1956
      %v1977 = vpack.c.b16 %v1959, %v1957
      %v1978 = vpack.c.b16 %v1962, %v1960
      %v1979 = vpack.c.b16 %v1963, %v1961
      %1996 = vmatpush.bf16.msra.mxu0 %v1978
      %1997 = vmatpush.bf16.msra.mxu0 %v1976
      %1998 = vmatpush.bf16.msra.mxu0 %v1974
      %1999 = vmatpush.bf16.msra.mxu0 %v1972
      %2000 = vmatpush.bf16.msra.mxu0 %v1970
      %2001 = vmatpush.bf16.msra.mxu0 %v1968
      %2002 = vmatpush.bf16.msra.mxu0 %v1966
      %2003 = vmatpush.bf16.msra.mxu0 %v1964
      %2004 = vmatmul.bf16.gmra.mxu0 %v1159
      %v2005 = vpop.f32.mrf.mxu0
      %v2006 = vadd.f32 0.0, %v2005
      %v2007 = vpop.f32.mrf.mxu0
      %2008 = vdwg.mxu0
      %2009 = vmatpush.bf16.msra.mxu0 %v1979
      %2010 = vmatpush.bf16.msra.mxu0 %v1977
      %2011 = vmatpush.bf16.msra.mxu0 %v1975
      %2012 = vmatpush.bf16.msra.mxu0 %v1973
      %2013 = vmatpush.bf16.msra.mxu0 %v1971
      %2014 = vmatpush.bf16.msra.mxu0 %v1969
      %2015 = vmatpush.bf16.msra.mxu0 %v1967
      %2016 = vmatpush.bf16.msra.mxu0 %v1965
      %2017 = vmatmul.bf16.gmra.mxu0 %v1159
      %v2018 = vpop.f32.mrf.mxu0
      %v2019 = vadd.f32 0.0, %v2018
      %v2020 = vpop.f32.mrf.mxu0
      %2021 = vdwg.mxu0
      %v2022 = vadd.f32 %v1898, %v2006
      %v2023 = vadd.f32 %v1899, %v2019
      %v2024 = vld [vmem:[%s881] sm:$0xff]
      %v2025 = vld [vmem:[%s881 + $0x8] sm:$0xff]
      %v2026 = vld [vmem:[%s881 + $0x10] sm:$0xff]
      %v2027 = vld [vmem:[%s881 + $0x18] sm:$0xff]
      %v2028 = vld [vmem:[%s881 + $0x20] sm:$0xff]
      %v2029 = vld [vmem:[%s881 + $0x28] sm:$0xff]
      %v2030 = vld [vmem:[%s881 + $0x30] sm:$0xff]
      %v2031 = vld [vmem:[%s881 + $0x38] sm:$0xff]
      %v2032 = vld [vmem:[%s881 + $0x40] sm:$0xff]
      %v2033 = vld [vmem:[%s881 + $0x48] sm:$0xff]
      %v2034 = vld [vmem:[%s881 + $0x50] sm:$0xff]
      %v2035 = vld [vmem:[%s881 + $0x58] sm:$0xff]
      %v2036 = vld [vmem:[%s881 + $0x60] sm:$0xff]
      %v2037 = vld [vmem:[%s881 + $0x68] sm:$0xff]
      %v2038 = vld [vmem:[%s881 + $0x70] sm:$0xff]
      %v2039 = vld [vmem:[%s881 + $0x78] sm:$0xff]
      %v2056 = vunpack.c.l.b16 %v2024
      %v2057 = vunpack.c.h.b16 %v2024
      %v2058 = vunpack.c.l.b16 %v2025
      %v2059 = vunpack.c.h.b16 %v2025
      %v2060 = vunpack.c.l.b16 %v2026
      %v2061 = vunpack.c.h.b16 %v2026
      %v2062 = vunpack.c.l.b16 %v2027
      %v2063 = vunpack.c.h.b16 %v2027
      %v2064 = vunpack.c.l.b16 %v2028
      %v2065 = vunpack.c.h.b16 %v2028
      %v2066 = vunpack.c.l.b16 %v2029
      %v2067 = vunpack.c.h.b16 %v2029
      %v2068 = vunpack.c.l.b16 %v2030
      %v2069 = vunpack.c.h.b16 %v2030
      %v2070 = vunpack.c.l.b16 %v2031
      %v2071 = vunpack.c.h.b16 %v2031
      %v2072 = vunpack.c.l.b16 %v2032
      %v2073 = vunpack.c.h.b16 %v2032
      %v2074 = vunpack.c.l.b16 %v2033
      %v2075 = vunpack.c.h.b16 %v2033
      %v2076 = vunpack.c.l.b16 %v2034
      %v2077 = vunpack.c.h.b16 %v2034
      %v2078 = vunpack.c.l.b16 %v2035
      %v2079 = vunpack.c.h.b16 %v2035
      %v2080 = vunpack.c.l.b16 %v2036
      %v2081 = vunpack.c.h.b16 %v2036
      %v2082 = vunpack.c.l.b16 %v2037
      %v2083 = vunpack.c.h.b16 %v2037
      %v2084 = vunpack.c.l.b16 %v2038
      %v2085 = vunpack.c.h.b16 %v2038
      %v2086 = vunpack.c.l.b16 %v2039
      %v2087 = vunpack.c.h.b16 %v2039
      %v2088 = vpack.c.b16 %v2058, %v2056
      %v2089 = vpack.c.b16 %v2059, %v2057
      %v2090 = vpack.c.b16 %v2062, %v2060
      %v2091 = vpack.c.b16 %v2063, %v2061
      %v2092 = vpack.c.b16 %v2066, %v2064
      %v2093 = vpack.c.b16 %v2067, %v2065
      %v2094 = vpack.c.b16 %v2070, %v2068
      %v2095 = vpack.c.b16 %v2071, %v2069
      %v2096 = vpack.c.b16 %v2074, %v2072
      %v2097 = vpack.c.b16 %v2075, %v2073
      %v2098 = vpack.c.b16 %v2078, %v2076
      %v2099 = vpack.c.b16 %v2079, %v2077
      %v2100 = vpack.c.b16 %v2082, %v2080
      %v2101 = vpack.c.b16 %v2083, %v2081
      %v2102 = vpack.c.b16 %v2086, %v2084
      %v2103 = vpack.c.b16 %v2087, %v2085
      %2120 = vmatpush.bf16.msra.mxu0 %v2102
      %2121 = vmatpush.bf16.msra.mxu0 %v2100
      %2122 = vmatpush.bf16.msra.mxu0 %v2098
      %2123 = vmatpush.bf16.msra.mxu0 %v2096
      %2124 = vmatpush.bf16.msra.mxu0 %v2094
      %2125 = vmatpush.bf16.msra.mxu0 %v2092
      %2126 = vmatpush.bf16.msra.mxu0 %v2090
      %2127 = vmatpush.bf16.msra.mxu0 %v2088
      %2128 = vmatmul.bf16.gmra.mxu0 %v1286
      %v2129 = vpop.f32.mrf.mxu0
      %v2130 = vadd.f32 0.0, %v2129
      %v2131 = vpop.f32.mrf.mxu0
      %2132 = vdwg.mxu0
      %2133 = vmatpush.bf16.msra.mxu0 %v2103
      %2134 = vmatpush.bf16.msra.mxu0 %v2101
      %2135 = vmatpush.bf16.msra.mxu0 %v2099
      %2136 = vmatpush.bf16.msra.mxu0 %v2097
      %2137 = vmatpush.bf16.msra.mxu0 %v2095
      %2138 = vmatpush.bf16.msra.mxu0 %v2093
      %2139 = vmatpush.bf16.msra.mxu0 %v2091
      %2140 = vmatpush.bf16.msra.mxu0 %v2089
      %2141 = vmatmul.bf16.gmra.mxu0 %v1286
      %v2142 = vpop.f32.mrf.mxu0
      %v2143 = vadd.f32 0.0, %v2142
      %v2144 = vpop.f32.mrf.mxu0
      %2145 = vdwg.mxu0
      %v2146 = vadd.f32 %v2022, %v2130
      %v2147 = vadd.f32 %v2023, %v2143
      %v2148 = vld [vmem:[%s1008] sm:$0xff]
      %v2149 = vld [vmem:[%s1008 + $0x8] sm:$0xff]
      %v2150 = vld [vmem:[%s1008 + $0x10] sm:$0xff]
      %v2151 = vld [vmem:[%s1008 + $0x18] sm:$0xff]
      %v2152 = vld [vmem:[%s1008 + $0x20] sm:$0xff]
      %v2153 = vld [vmem:[%s1008 + $0x28] sm:$0xff]
      %v2154 = vld [vmem:[%s1008 + $0x30] sm:$0xff]
      %v2155 = vld [vmem:[%s1008 + $0x38] sm:$0xff]
      %v2156 = vld [vmem:[%s1008 + $0x40] sm:$0xff]
      %v2157 = vld [vmem:[%s1008 + $0x48] sm:$0xff]
      %v2158 = vld [vmem:[%s1008 + $0x50] sm:$0xff]
      %v2159 = vld [vmem:[%s1008 + $0x58] sm:$0xff]
      %v2160 = vld [vmem:[%s1008 + $0x60] sm:$0xff]
      %v2161 = vld [vmem:[%s1008 + $0x68] sm:$0xff]
      %v2162 = vld [vmem:[%s1008 + $0x70] sm:$0xff]
      %v2163 = vld [vmem:[%s1008 + $0x78] sm:$0xff]
      %v2180 = vunpack.c.l.b16 %v2148
      %v2181 = vunpack.c.h.b16 %v2148
      %v2182 = vunpack.c.l.b16 %v2149
      %v2183 = vunpack.c.h.b16 %v2149
      %v2184 = vunpack.c.l.b16 %v2150
      %v2185 = vunpack.c.h.b16 %v2150
      %v2186 = vunpack.c.l.b16 %v2151
      %v2187 = vunpack.c.h.b16 %v2151
      %v2188 = vunpack.c.l.b16 %v2152
      %v2189 = vunpack.c.h.b16 %v2152
      %v2190 = vunpack.c.l.b16 %v2153
      %v2191 = vunpack.c.h.b16 %v2153
      %v2192 = vunpack.c.l.b16 %v2154
      %v2193 = vunpack.c.h.b16 %v2154
      %v2194 = vunpack.c.l.b16 %v2155
      %v2195 = vunpack.c.h.b16 %v2155
      %v2196 = vunpack.c.l.b16 %v2156
      %v2197 = vunpack.c.h.b16 %v2156
      %v2198 = vunpack.c.l.b16 %v2157
      %v2199 = vunpack.c.h.b16 %v2157
      %v2200 = vunpack.c.l.b16 %v2158
      %v2201 = vunpack.c.h.b16 %v2158
      %v2202 = vunpack.c.l.b16 %v2159
      %v2203 = vunpack.c.h.b16 %v2159
      %v2204 = vunpack.c.l.b16 %v2160
      %v2205 = vunpack.c.h.b16 %v2160
      %v2206 = vunpack.c.l.b16 %v2161
      %v2207 = vunpack.c.h.b16 %v2161
      %v2208 = vunpack.c.l.b16 %v2162
      %v2209 = vunpack.c.h.b16 %v2162
      %v2210 = vunpack.c.l.b16 %v2163
      %v2211 = vunpack.c.h.b16 %v2163
      %v2212 = vpack.c.b16 %v2182, %v2180
      %v2213 = vpack.c.b16 %v2183, %v2181
      %v2214 = vpack.c.b16 %v2186, %v2184
      %v2215 = vpack.c.b16 %v2187, %v2185
      %v2216 = vpack.c.b16 %v2190, %v2188
      %v2217 = vpack.c.b16 %v2191, %v2189
      %v2218 = vpack.c.b16 %v2194, %v2192
      %v2219 = vpack.c.b16 %v2195, %v2193
      %v2220 = vpack.c.b16 %v2198, %v2196
      %v2221 = vpack.c.b16 %v2199, %v2197
      %v2222 = vpack.c.b16 %v2202, %v2200
      %v2223 = vpack.c.b16 %v2203, %v2201
      %v2224 = vpack.c.b16 %v2206, %v2204
      %v2225 = vpack.c.b16 %v2207, %v2205
      %v2226 = vpack.c.b16 %v2210, %v2208
      %v2227 = vpack.c.b16 %v2211, %v2209
      %2244 = vmatpush.bf16.msra.mxu0 %v2226
      %2245 = vmatpush.bf16.msra.mxu0 %v2224
      %2246 = vmatpush.bf16.msra.mxu0 %v2222
      %2247 = vmatpush.bf16.msra.mxu0 %v2220
      %2248 = vmatpush.bf16.msra.mxu0 %v2218
      %2249 = vmatpush.bf16.msra.mxu0 %v2216
      %2250 = vmatpush.bf16.msra.mxu0 %v2214
      %2251 = vmatpush.bf16.msra.mxu0 %v2212
      %2252 = vmatmul.bf16.gmra.mxu0 %v228
      %v2253 = vpop.f32.mrf.mxu0
      %v2254 = vadd.f32 0.0, %v2253
      %v2255 = vpop.f32.mrf.mxu0
      %2256 = vdwg.mxu0
      %2257 = vmatpush.bf16.msra.mxu0 %v2227
      %2258 = vmatpush.bf16.msra.mxu0 %v2225
      %2259 = vmatpush.bf16.msra.mxu0 %v2223
      %2260 = vmatpush.bf16.msra.mxu0 %v2221
      %2261 = vmatpush.bf16.msra.mxu0 %v2219
      %2262 = vmatpush.bf16.msra.mxu0 %v2217
      %2263 = vmatpush.bf16.msra.mxu0 %v2215
      %2264 = vmatpush.bf16.msra.mxu0 %v2213
      %2265 = vmatmul.bf16.gmra.mxu0 %v228
      %v2266 = vpop.f32.mrf.mxu0
      %v2267 = vadd.f32 0.0, %v2266
      %v2268 = vpop.f32.mrf.mxu0
      %2269 = vdwg.mxu0
      %v2270 = vadd.f32 %v2146, %v2254
      %v2271 = vadd.f32 %v2147, %v2267
      %v2272 = vld [vmem:[%s1133] sm:$0xff]
      %v2273 = vld [vmem:[%s1133 + $0x8] sm:$0xff]
      %v2274 = vld [vmem:[%s1133 + $0x10] sm:$0xff]
      %v2275 = vld [vmem:[%s1133 + $0x18] sm:$0xff]
      %v2276 = vld [vmem:[%s1133 + $0x20] sm:$0xff]
      %v2277 = vld [vmem:[%s1133 + $0x28] sm:$0xff]
      %v2278 = vld [vmem:[%s1133 + $0x30] sm:$0xff]
      %v2279 = vld [vmem:[%s1133 + $0x38] sm:$0xff]
      %v2280 = vld [vmem:[%s1133 + $0x40] sm:$0xff]
      %v2281 = vld [vmem:[%s1133 + $0x48] sm:$0xff]
      %v2282 = vld [vmem:[%s1133 + $0x50] sm:$0xff]
      %v2283 = vld [vmem:[%s1133 + $0x58] sm:$0xff]
      %v2284 = vld [vmem:[%s1133 + $0x60] sm:$0xff]
      %v2285 = vld [vmem:[%s1133 + $0x68] sm:$0xff]
      %v2286 = vld [vmem:[%s1133 + $0x70] sm:$0xff]
      %v2287 = vld [vmem:[%s1133 + $0x78] sm:$0xff]
      %v2289 = vunpack.c.l.b16 %v228
      %v2290 = vpack.c.b16 %v2289, %v2289
      %v2292 = vshrl.u32 %v2290, 16
      %v2294 = vshll.u32 %v2290, 16
      %v2296 = vrot.slane %v2294, 1
      %v2297 = vor.u32 %v2292, %v2296
      %v2315 = vunpack.c.l.b16 %v2272
      %v2316 = vunpack.c.h.b16 %v2272
      %v2317 = vunpack.c.l.b16 %v2273
      %v2318 = vunpack.c.h.b16 %v2273
      %v2319 = vunpack.c.l.b16 %v2274
      %v2320 = vunpack.c.h.b16 %v2274
      %v2321 = vunpack.c.l.b16 %v2275
      %v2322 = vunpack.c.h.b16 %v2275
      %v2323 = vunpack.c.l.b16 %v2276
      %v2324 = vunpack.c.h.b16 %v2276
      %v2325 = vunpack.c.l.b16 %v2277
      %v2326 = vunpack.c.h.b16 %v2277
      %v2327 = vunpack.c.l.b16 %v2278
      %v2328 = vunpack.c.h.b16 %v2278
      %v2329 = vunpack.c.l.b16 %v2279
      %v2330 = vunpack.c.h.b16 %v2279
      %v2331 = vunpack.c.l.b16 %v2280
      %v2332 = vunpack.c.h.b16 %v2280
      %v2333 = vunpack.c.l.b16 %v2281
      %v2334 = vunpack.c.h.b16 %v2281
      %v2335 = vunpack.c.l.b16 %v2282
      %v2336 = vunpack.c.h.b16 %v2282
      %v2337 = vunpack.c.l.b16 %v2283
      %v2338 = vunpack.c.h.b16 %v2283
      %v2339 = vunpack.c.l.b16 %v2284
      %v2340 = vunpack.c.h.b16 %v2284
      %v2341 = vunpack.c.l.b16 %v2285
      %v2342 = vunpack.c.h.b16 %v2285
      %v2343 = vunpack.c.l.b16 %v2286
      %v2344 = vunpack.c.h.b16 %v2286
      %v2345 = vunpack.c.l.b16 %v2287
      %v2346 = vunpack.c.h.b16 %v2287
      %v2347 = vpack.c.b16 %v2317, %v2315
      %v2348 = vpack.c.b16 %v2318, %v2316
      %v2349 = vpack.c.b16 %v2321, %v2319
      %v2350 = vpack.c.b16 %v2322, %v2320
      %v2351 = vpack.c.b16 %v2325, %v2323
      %v2352 = vpack.c.b16 %v2326, %v2324
      %v2353 = vpack.c.b16 %v2329, %v2327
      %v2354 = vpack.c.b16 %v2330, %v2328
      %v2355 = vpack.c.b16 %v2333, %v2331
      %v2356 = vpack.c.b16 %v2334, %v2332
      %v2357 = vpack.c.b16 %v2337, %v2335
      %v2358 = vpack.c.b16 %v2338, %v2336
      %v2359 = vpack.c.b16 %v2341, %v2339
      %v2360 = vpack.c.b16 %v2342, %v2340
      %v2361 = vpack.c.b16 %v2345, %v2343
      %v2362 = vpack.c.b16 %v2346, %v2344
      %2379 = vmatpush.bf16.msra.mxu0 %v2361
      %2380 = vmatpush.bf16.msra.mxu0 %v2359
      %2381 = vmatpush.bf16.msra.mxu0 %v2357
      %2382 = vmatpush.bf16.msra.mxu0 %v2355
      %2383 = vmatpush.bf16.msra.mxu0 %v2353
      %2384 = vmatpush.bf16.msra.mxu0 %v2351
      %2385 = vmatpush.bf16.msra.mxu0 %v2349
      %2386 = vmatpush.bf16.msra.mxu0 %v2347
      %2387 = vmatmul.bf16.gmra.mxu0 %v2297
      %v2388 = vpop.f32.mrf.mxu0
      %v2389 = vadd.f32 0.0, %v2388
      %v2390 = vpop.f32.mrf.mxu0
      %2391 = vdwg.mxu0
      %2392 = vmatpush.bf16.msra.mxu0 %v2362
      %2393 = vmatpush.bf16.msra.mxu0 %v2360
      %2394 = vmatpush.bf16.msra.mxu0 %v2358
      %2395 = vmatpush.bf16.msra.mxu0 %v2356
      %2396 = vmatpush.bf16.msra.mxu0 %v2354
      %2397 = vmatpush.bf16.msra.mxu0 %v2352
      %2398 = vmatpush.bf16.msra.mxu0 %v2350
      %2399 = vmatpush.bf16.msra.mxu0 %v2348
      %2400 = vmatmul.bf16.gmra.mxu0 %v2297
      %v2401 = vpop.f32.mrf.mxu0
      %v2402 = vadd.f32 0.0, %v2401
      %v2403 = vpop.f32.mrf.mxu0
      %2404 = vdwg.mxu0
      %v2405 = vadd.f32 %v2270, %v2389
      %v2406 = vadd.f32 %v2271, %v2402
      %v2407 = vld [vmem:[%s1269] sm:$0xff]
      %v2408 = vld [vmem:[%s1269 + $0x8] sm:$0xff]
      %v2409 = vld [vmem:[%s1269 + $0x10] sm:$0xff]
      %v2410 = vld [vmem:[%s1269 + $0x18] sm:$0xff]
      %v2411 = vld [vmem:[%s1269 + $0x20] sm:$0xff]
      %v2412 = vld [vmem:[%s1269 + $0x28] sm:$0xff]
      %v2413 = vld [vmem:[%s1269 + $0x30] sm:$0xff]
      %v2414 = vld [vmem:[%s1269 + $0x38] sm:$0xff]
      %v2415 = vld [vmem:[%s1269 + $0x40] sm:$0xff]
      %v2416 = vld [vmem:[%s1269 + $0x48] sm:$0xff]
      %v2417 = vld [vmem:[%s1269 + $0x50] sm:$0xff]
      %v2418 = vld [vmem:[%s1269 + $0x58] sm:$0xff]
      %v2419 = vld [vmem:[%s1269 + $0x60] sm:$0xff]
      %v2420 = vld [vmem:[%s1269 + $0x68] sm:$0xff]
      %v2421 = vld [vmem:[%s1269 + $0x70] sm:$0xff]
      %v2422 = vld [vmem:[%s1269 + $0x78] sm:$0xff]
      %v2423 = vrot.slane %v2290, 1
      %v2441 = vunpack.c.l.b16 %v2407
      %v2442 = vunpack.c.h.b16 %v2407
      %v2443 = vunpack.c.l.b16 %v2408
      %v2444 = vunpack.c.h.b16 %v2408
      %v2445 = vunpack.c.l.b16 %v2409
      %v2446 = vunpack.c.h.b16 %v2409
      %v2447 = vunpack.c.l.b16 %v2410
      %v2448 = vunpack.c.h.b16 %v2410
      %v2449 = vunpack.c.l.b16 %v2411
      %v2450 = vunpack.c.h.b16 %v2411
      %v2451 = vunpack.c.l.b16 %v2412
      %v2452 = vunpack.c.h.b16 %v2412
      %v2453 = vunpack.c.l.b16 %v2413
      %v2454 = vunpack.c.h.b16 %v2413
      %v2455 = vunpack.c.l.b16 %v2414
      %v2456 = vunpack.c.h.b16 %v2414
      %v2457 = vunpack.c.l.b16 %v2415
      %v2458 = vunpack.c.h.b16 %v2415
      %v2459 = vunpack.c.l.b16 %v2416
      %v2460 = vunpack.c.h.b16 %v2416
      %v2461 = vunpack.c.l.b16 %v2417
      %v2462 = vunpack.c.h.b16 %v2417
      %v2463 = vunpack.c.l.b16 %v2418
      %v2464 = vunpack.c.h.b16 %v2418
      %v2465 = vunpack.c.l.b16 %v2419
      %v2466 = vunpack.c.h.b16 %v2419
      %v2467 = vunpack.c.l.b16 %v2420
      %v2468 = vunpack.c.h.b16 %v2420
      %v2469 = vunpack.c.l.b16 %v2421
      %v2470 = vunpack.c.h.b16 %v2421
      %v2471 = vunpack.c.l.b16 %v2422
      %v2472 = vunpack.c.h.b16 %v2422
      %v2473 = vpack.c.b16 %v2443, %v2441
      %v2474 = vpack.c.b16 %v2444, %v2442
      %v2475 = vpack.c.b16 %v2447, %v2445
      %v2476 = vpack.c.b16 %v2448, %v2446
      %v2477 = vpack.c.b16 %v2451, %v2449
      %v2478 = vpack.c.b16 %v2452, %v2450
      %v2479 = vpack.c.b16 %v2455, %v2453
      %v2480 = vpack.c.b16 %v2456, %v2454
      %v2481 = vpack.c.b16 %v2459, %v2457
      %v2482 = vpack.c.b16 %v2460, %v2458
      %v2483 = vpack.c.b16 %v2463, %v2461
      %v2484 = vpack.c.b16 %v2464, %v2462
      %v2485 = vpack.c.b16 %v2467, %v2465
      %v2486 = vpack.c.b16 %v2468, %v2466
      %v2487 = vpack.c.b16 %v2471, %v2469
      %v2488 = vpack.c.b16 %v2472, %v2470
      %2505 = vmatpush.bf16.msra.mxu0 %v2487
      %2506 = vmatpush.bf16.msra.mxu0 %v2485
      %2507 = vmatpush.bf16.msra.mxu0 %v2483
      %2508 = vmatpush.bf16.msra.mxu0 %v2481
      %2509 = vmatpush.bf16.msra.mxu0 %v2479
      %2510 = vmatpush.bf16.msra.mxu0 %v2477
      %2511 = vmatpush.bf16.msra.mxu0 %v2475
      %2512 = vmatpush.bf16.msra.mxu0 %v2473
      %2513 = vmatmul.bf16.gmra.mxu0 %v2423
      %v2514 = vpop.f32.mrf.mxu0
      %v2515 = vadd.f32 0.0, %v2514
      %v2516 = vpop.f32.mrf.mxu0
      %2517 = vdwg.mxu0
      %2518 = vmatpush.bf16.msra.mxu0 %v2488
      %2519 = vmatpush.bf16.msra.mxu0 %v2486
      %2520 = vmatpush.bf16.msra.mxu0 %v2484
      %2521 = vmatpush.bf16.msra.mxu0 %v2482
      %2522 = vmatpush.bf16.msra.mxu0 %v2480
      %2523 = vmatpush.bf16.msra.mxu0 %v2478
      %2524 = vmatpush.bf16.msra.mxu0 %v2476
      %2525 = vmatpush.bf16.msra.mxu0 %v2474
      %2526 = vmatmul.bf16.gmra.mxu0 %v2423
      %v2527 = vpop.f32.mrf.mxu0
      %v2528 = vadd.f32 0.0, %v2527
      %v2529 = vpop.f32.mrf.mxu0
      %2530 = vdwg.mxu0
      %v2531 = vadd.f32 %v2405, %v2515
      %v2532 = vadd.f32 %v2406, %v2528
      %v2533 = vld [vmem:[%s2] sm:$0x3]
      %v2535 = vperm.slane %v2533, 0
      %v2536 = vperm.slane %v2533, 1
      %v2539 = vadd.f32 %v2531, %v2535
      %v2540 = vadd.f32 %v2532, %v2536
      %v2541 = vmax.f32 %v2539, 0.0
      %s2542 = scalar_lea.vmem [#allocation2], 16
      %2543 = vst [vmem:[%s2542 + $0x1] sm:$0xf] %v2541
      %s2544 = scalar_lea.vmem [#allocation3], 4
      %2545 = vst [vmem:[%s2544] sm:$0xf] %v2540
      %v2546 = vld [vmem:[%s1] sm:$0xff]
      %v2547 = vld [vmem:[%s1 + $0x8] sm:$0xff]
      %v2548 = vld [vmem:[%s1 + $0x10] sm:$0xff]
      %v2549 = vld [vmem:[%s1 + $0x18] sm:$0xff]
      %v2550 = vld [vmem:[%s1 + $0x20] sm:$0xff]
      %v2551 = vld [vmem:[%s1 + $0x28] sm:$0xff]
      %v2552 = vld [vmem:[%s1 + $0x30] sm:$0xff]
      %v2553 = vld [vmem:[%s1 + $0x38] sm:$0xff]
      %v2554 = vld [vmem:[%s1 + $0x40] sm:$0xff]
      %v2555 = vld [vmem:[%s1 + $0x48] sm:$0xff]
      %v2556 = vld [vmem:[%s1 + $0x50] sm:$0xff]
      %v2557 = vld [vmem:[%s1 + $0x58] sm:$0xff]
      %v2558 = vld [vmem:[%s1 + $0x60] sm:$0xff]
      %v2559 = vld [vmem:[%s1 + $0x68] sm:$0xff]
      %v2560 = vld [vmem:[%s1 + $0x70] sm:$0xff]
      %v2561 = vld [vmem:[%s1 + $0x78] sm:$0xff]
      %v2562 = vld [vmem:[%s253] sm:$0xff]
      %v2563 = vld [vmem:[%s253 + $0x8] sm:$0xff]
      %v2564 = vld [vmem:[%s253 + $0x10] sm:$0xff]
      %v2565 = vld [vmem:[%s253 + $0x18] sm:$0xff]
      %v2566 = vld [vmem:[%s253 + $0x20] sm:$0xff]
      %v2567 = vld [vmem:[%s253 + $0x28] sm:$0xff]
      %v2568 = vld [vmem:[%s253 + $0x30] sm:$0xff]
      %v2569 = vld [vmem:[%s253 + $0x38] sm:$0xff]
      %v2570 = vld [vmem:[%s253 + $0x40] sm:$0xff]
      %v2571 = vld [vmem:[%s253 + $0x48] sm:$0xff]
      %v2572 = vld [vmem:[%s253 + $0x50] sm:$0xff]
      %v2573 = vld [vmem:[%s253 + $0x58] sm:$0xff]
      %v2574 = vld [vmem:[%s253 + $0x60] sm:$0xff]
      %v2575 = vld [vmem:[%s253 + $0x68] sm:$0xff]
      %v2576 = vld [vmem:[%s253 + $0x70] sm:$0xff]
      %v2577 = vld [vmem:[%s253 + $0x78] sm:$0xff]
      %v2594 = vunpack.c.l.b16 %v2562
      %v2595 = vunpack.c.h.b16 %v2562
      %v2596 = vunpack.c.l.b16 %v2563
      %v2597 = vunpack.c.h.b16 %v2563
      %v2598 = vunpack.c.l.b16 %v2564
      %v2599 = vunpack.c.h.b16 %v2564
      %v2600 = vunpack.c.l.b16 %v2565
      %v2601 = vunpack.c.h.b16 %v2565
      %v2602 = vunpack.c.l.b16 %v2566
      %v2603 = vunpack.c.h.b16 %v2566
      %v2604 = vunpack.c.l.b16 %v2567
      %v2605 = vunpack.c.h.b16 %v2567
      %v2606 = vunpack.c.l.b16 %v2568
      %v2607 = vunpack.c.h.b16 %v2568
      %v2608 = vunpack.c.l.b16 %v2569
      %v2609 = vunpack.c.h.b16 %v2569
      %v2610 = vunpack.c.l.b16 %v2570
      %v2611 = vunpack.c.h.b16 %v2570
      %v2612 = vunpack.c.l.b16 %v2571
      %v2613 = vunpack.c.h.b16 %v2571
      %v2614 = vunpack.c.l.b16 %v2572
      %v2615 = vunpack.c.h.b16 %v2572
      %v2616 = vunpack.c.l.b16 %v2573
      %v2617 = vunpack.c.h.b16 %v2573
      %v2618 = vunpack.c.l.b16 %v2574
      %v2619 = vunpack.c.h.b16 %v2574
      %v2620 = vunpack.c.l.b16 %v2575
      %v2621 = vunpack.c.h.b16 %v2575
      %v2622 = vunpack.c.l.b16 %v2576
      %v2623 = vunpack.c.h.b16 %v2576
      %v2624 = vunpack.c.l.b16 %v2577
      %v2625 = vunpack.c.h.b16 %v2577
      %v2626 = vpack.c.b16 %v2596, %v2594
      %v2627 = vpack.c.b16 %v2597, %v2595
      %v2628 = vpack.c.b16 %v2600, %v2598
      %v2629 = vpack.c.b16 %v2601, %v2599
      %v2630 = vpack.c.b16 %v2604, %v2602
      %v2631 = vpack.c.b16 %v2605, %v2603
      %v2632 = vpack.c.b16 %v2608, %v2606
      %v2633 = vpack.c.b16 %v2609, %v2607
      %v2634 = vpack.c.b16 %v2612, %v2610
      %v2635 = vpack.c.b16 %v2613, %v2611
      %v2636 = vpack.c.b16 %v2616, %v2614
      %v2637 = vpack.c.b16 %v2617, %v2615
      %v2638 = vpack.c.b16 %v2620, %v2618
      %v2639 = vpack.c.b16 %v2621, %v2619
      %v2640 = vpack.c.b16 %v2624, %v2622
      %v2641 = vpack.c.b16 %v2625, %v2623
      %2658 = vmatpush.bf16.msra.mxu0 %v2640
      %2659 = vmatpush.bf16.msra.mxu0 %v2638
      %2660 = vmatpush.bf16.msra.mxu0 %v2636
      %2661 = vmatpush.bf16.msra.mxu0 %v2634
      %2662 = vmatpush.bf16.msra.mxu0 %v2632
      %2663 = vmatpush.bf16.msra.mxu0 %v2630
      %2664 = vmatpush.bf16.msra.mxu0 %v2628
      %2665 = vmatpush.bf16.msra.mxu0 %v2626
      %2666 = vmatmul.bf16.gmra.mxu0 %v1159
      %v2667 = vpop.f32.mrf.mxu0
      %v2668 = vadd.f32 0.0, %v2667
      %v2669 = vpop.f32.mrf.mxu0
      %2670 = vdwg.mxu0
      %2671 = vmatpush.bf16.msra.mxu0 %v2641
      %2672 = vmatpush.bf16.msra.mxu0 %v2639
      %2673 = vmatpush.bf16.msra.mxu0 %v2637
      %2674 = vmatpush.bf16.msra.mxu0 %v2635
      %2675 = vmatpush.bf16.msra.mxu0 %v2633
      %2676 = vmatpush.bf16.msra.mxu0 %v2631
      %2677 = vmatpush.bf16.msra.mxu0 %v2629
      %2678 = vmatpush.bf16.msra.mxu0 %v2627
      %2679 = vmatmul.bf16.gmra.mxu0 %v1159
      %v2680 = vpop.f32.mrf.mxu0
      %v2681 = vadd.f32 0.0, %v2680
      %v2682 = vpop.f32.mrf.mxu0
      %2683 = vdwg.mxu0
      %v2700 = vunpack.c.l.b16 %v2546
      %v2701 = vunpack.c.h.b16 %v2546
      %v2702 = vunpack.c.l.b16 %v2547
      %v2703 = vunpack.c.h.b16 %v2547
      %v2704 = vunpack.c.l.b16 %v2548
      %v2705 = vunpack.c.h.b16 %v2548
      %v2706 = vunpack.c.l.b16 %v2549
      %v2707 = vunpack.c.h.b16 %v2549
      %v2708 = vunpack.c.l.b16 %v2550
      %v2709 = vunpack.c.h.b16 %v2550
      %v2710 = vunpack.c.l.b16 %v2551
      %v2711 = vunpack.c.h.b16 %v2551
      %v2712 = vunpack.c.l.b16 %v2552
      %v2713 = vunpack.c.h.b16 %v2552
      %v2714 = vunpack.c.l.b16 %v2553
      %v2715 = vunpack.c.h.b16 %v2553
      %v2716 = vunpack.c.l.b16 %v2554
      %v2717 = vunpack.c.h.b16 %v2554
      %v2718 = vunpack.c.l.b16 %v2555
      %v2719 = vunpack.c.h.b16 %v2555
      %v2720 = vunpack.c.l.b16 %v2556
      %v2721 = vunpack.c.h.b16 %v2556
      %v2722 = vunpack.c.l.b16 %v2557
      %v2723 = vunpack.c.h.b16 %v2557
      %v2724 = vunpack.c.l.b16 %v2558
      %v2725 = vunpack.c.h.b16 %v2558
      %v2726 = vunpack.c.l.b16 %v2559
      %v2727 = vunpack.c.h.b16 %v2559
      %v2728 = vunpack.c.l.b16 %v2560
      %v2729 = vunpack.c.h.b16 %v2560
      %v2730 = vunpack.c.l.b16 %v2561
      %v2731 = vunpack.c.h.b16 %v2561
      %v2732 = vpack.c.b16 %v2702, %v2700
      %v2733 = vpack.c.b16 %v2703, %v2701
      %v2734 = vpack.c.b16 %v2706, %v2704
      %v2735 = vpack.c.b16 %v2707, %v2705
      %v2736 = vpack.c.b16 %v2710, %v2708
      %v2737 = vpack.c.b16 %v2711, %v2709
      %v2738 = vpack.c.b16 %v2714, %v2712
      %v2739 = vpack.c.b16 %v2715, %v2713
      %v2740 = vpack.c.b16 %v2718, %v2716
      %v2741 = vpack.c.b16 %v2719, %v2717
      %v2742 = vpack.c.b16 %v2722, %v2720
      %v2743 = vpack.c.b16 %v2723, %v2721
      %v2744 = vpack.c.b16 %v2726, %v2724
      %v2745 = vpack.c.b16 %v2727, %v2725
      %v2746 = vpack.c.b16 %v2730, %v2728
      %v2747 = vpack.c.b16 %v2731, %v2729
      %2764 = vmatpush.bf16.msra.mxu0 %v2746
      %2765 = vmatpush.bf16.msra.mxu0 %v2744
      %2766 = vmatpush.bf16.msra.mxu0 %v2742
      %2767 = vmatpush.bf16.msra.mxu0 %v2740
      %2768 = vmatpush.bf16.msra.mxu0 %v2738
      %2769 = vmatpush.bf16.msra.mxu0 %v2736
      %2770 = vmatpush.bf16.msra.mxu0 %v2734
      %2771 = vmatpush.bf16.msra.mxu0 %v2732
      %2772 = vmatmul.bf16.gmra.mxu0 %v227
      %v2773 = vpop.f32.mrf.mxu0
      %v2774 = vadd.f32 %v2668, %v2773
      %v2775 = vpop.f32.mrf.mxu0
      %2776 = vdwg.mxu0
      %2777 = vmatpush.bf16.msra.mxu0 %v2747
      %2778 = vmatpush.bf16.msra.mxu0 %v2745
      %2779 = vmatpush.bf16.msra.mxu0 %v2743
      %2780 = vmatpush.bf16.msra.mxu0 %v2741
      %2781 = vmatpush.bf16.msra.mxu0 %v2739
      %2782 = vmatpush.bf16.msra.mxu0 %v2737
      %2783 = vmatpush.bf16.msra.mxu0 %v2735
      %2784 = vmatpush.bf16.msra.mxu0 %v2733
      %2785 = vmatmul.bf16.gmra.mxu0 %v227
      %v2786 = vpop.f32.mrf.mxu0
      %v2787 = vadd.f32 %v2681, %v2786
      %v2788 = vpop.f32.mrf.mxu0
      %2789 = vdwg.mxu0
      %v2790 = vld [vmem:[%s493] sm:$0xff]
      %v2791 = vld [vmem:[%s493 + $0x8] sm:$0xff]
      %v2792 = vld [vmem:[%s493 + $0x10] sm:$0xff]
      %v2793 = vld [vmem:[%s493 + $0x18] sm:$0xff]
      %v2794 = vld [vmem:[%s493 + $0x20] sm:$0xff]
      %v2795 = vld [vmem:[%s493 + $0x28] sm:$0xff]
      %v2796 = vld [vmem:[%s493 + $0x30] sm:$0xff]
      %v2797 = vld [vmem:[%s493 + $0x38] sm:$0xff]
      %v2798 = vld [vmem:[%s493 + $0x40] sm:$0xff]
      %v2799 = vld [vmem:[%s493 + $0x48] sm:$0xff]
      %v2800 = vld [vmem:[%s493 + $0x50] sm:$0xff]
      %v2801 = vld [vmem:[%s493 + $0x58] sm:$0xff]
      %v2802 = vld [vmem:[%s493 + $0x60] sm:$0xff]
      %v2803 = vld [vmem:[%s493 + $0x68] sm:$0xff]
      %v2804 = vld [vmem:[%s493 + $0x70] sm:$0xff]
      %v2805 = vld [vmem:[%s493 + $0x78] sm:$0xff]
      %v2822 = vunpack.c.l.b16 %v2790
      %v2823 = vunpack.c.h.b16 %v2790
      %v2824 = vunpack.c.l.b16 %v2791
      %v2825 = vunpack.c.h.b16 %v2791
      %v2826 = vunpack.c.l.b16 %v2792
      %v2827 = vunpack.c.h.b16 %v2792
      %v2828 = vunpack.c.l.b16 %v2793
      %v2829 = vunpack.c.h.b16 %v2793
      %v2830 = vunpack.c.l.b16 %v2794
      %v2831 = vunpack.c.h.b16 %v2794
      %v2832 = vunpack.c.l.b16 %v2795
      %v2833 = vunpack.c.h.b16 %v2795
      %v2834 = vunpack.c.l.b16 %v2796
      %v2835 = vunpack.c.h.b16 %v2796
      %v2836 = vunpack.c.l.b16 %v2797
      %v2837 = vunpack.c.h.b16 %v2797
      %v2838 = vunpack.c.l.b16 %v2798
      %v2839 = vunpack.c.h.b16 %v2798
      %v2840 = vunpack.c.l.b16 %v2799
      %v2841 = vunpack.c.h.b16 %v2799
      %v2842 = vunpack.c.l.b16 %v2800
      %v2843 = vunpack.c.h.b16 %v2800
      %v2844 = vunpack.c.l.b16 %v2801
      %v2845 = vunpack.c.h.b16 %v2801
      %v2846 = vunpack.c.l.b16 %v2802
      %v2847 = vunpack.c.h.b16 %v2802
      %v2848 = vunpack.c.l.b16 %v2803
      %v2849 = vunpack.c.h.b16 %v2803
      %v2850 = vunpack.c.l.b16 %v2804
      %v2851 = vunpack.c.h.b16 %v2804
      %v2852 = vunpack.c.l.b16 %v2805
      %v2853 = vunpack.c.h.b16 %v2805
      %v2854 = vpack.c.b16 %v2824, %v2822
      %v2855 = vpack.c.b16 %v2825, %v2823
      %v2856 = vpack.c.b16 %v2828, %v2826
      %v2857 = vpack.c.b16 %v2829, %v2827
      %v2858 = vpack.c.b16 %v2832, %v2830
      %v2859 = vpack.c.b16 %v2833, %v2831
      %v2860 = vpack.c.b16 %v2836, %v2834
      %v2861 = vpack.c.b16 %v2837, %v2835
      %v2862 = vpack.c.b16 %v2840, %v2838
      %v2863 = vpack.c.b16 %v2841, %v2839
      %v2864 = vpack.c.b16 %v2844, %v2842
      %v2865 = vpack.c.b16 %v2845, %v2843
      %v2866 = vpack.c.b16 %v2848, %v2846
      %v2867 = vpack.c.b16 %v2849, %v2847
      %v2868 = vpack.c.b16 %v2852, %v2850
      %v2869 = vpack.c.b16 %v2853, %v2851
      %2886 = vmatpush.bf16.msra.mxu0 %v2868
      %2887 = vmatpush.bf16.msra.mxu0 %v2866
      %2888 = vmatpush.bf16.msra.mxu0 %v2864
      %2889 = vmatpush.bf16.msra.mxu0 %v2862
      %2890 = vmatpush.bf16.msra.mxu0 %v2860
      %2891 = vmatpush.bf16.msra.mxu0 %v2858
      %2892 = vmatpush.bf16.msra.mxu0 %v2856
      %2893 = vmatpush.bf16.msra.mxu0 %v2854
      %2894 = vmatmul.bf16.gmra.mxu0 %v1286
      %v2895 = vpop.f32.mrf.mxu0
      %v2896 = vadd.f32 0.0, %v2895
      %v2897 = vpop.f32.mrf.mxu0
      %2898 = vdwg.mxu0
      %2899 = vmatpush.bf16.msra.mxu0 %v2869
      %2900 = vmatpush.bf16.msra.mxu0 %v2867
      %2901 = vmatpush.bf16.msra.mxu0 %v2865
      %2902 = vmatpush.bf16.msra.mxu0 %v2863
      %2903 = vmatpush.bf16.msra.mxu0 %v2861
      %2904 = vmatpush.bf16.msra.mxu0 %v2859
      %2905 = vmatpush.bf16.msra.mxu0 %v2857
      %2906 = vmatpush.bf16.msra.mxu0 %v2855
      %2907 = vmatmul.bf16.gmra.mxu0 %v1286
      %v2908 = vpop.f32.mrf.mxu0
      %v2909 = vadd.f32 0.0, %v2908
      %v2910 = vpop.f32.mrf.mxu0
      %2911 = vdwg.mxu0
      %v2912 = vadd.f32 %v2774, %v2896
      %v2913 = vadd.f32 %v2787, %v2909
      %v2914 = vld [vmem:[%s620] sm:$0xff]
      %v2915 = vld [vmem:[%s620 + $0x8] sm:$0xff]
      %v2916 = vld [vmem:[%s620 + $0x10] sm:$0xff]
      %v2917 = vld [vmem:[%s620 + $0x18] sm:$0xff]
      %v2918 = vld [vmem:[%s620 + $0x20] sm:$0xff]
      %v2919 = vld [vmem:[%s620 + $0x28] sm:$0xff]
      %v2920 = vld [vmem:[%s620 + $0x30] sm:$0xff]
      %v2921 = vld [vmem:[%s620 + $0x38] sm:$0xff]
      %v2922 = vld [vmem:[%s620 + $0x40] sm:$0xff]
      %v2923 = vld [vmem:[%s620 + $0x48] sm:$0xff]
      %v2924 = vld [vmem:[%s620 + $0x50] sm:$0xff]
      %v2925 = vld [vmem:[%s620 + $0x58] sm:$0xff]
      %v2926 = vld [vmem:[%s620 + $0x60] sm:$0xff]
      %v2927 = vld [vmem:[%s620 + $0x68] sm:$0xff]
      %v2928 = vld [vmem:[%s620 + $0x70] sm:$0xff]
      %v2929 = vld [vmem:[%s620 + $0x78] sm:$0xff]
      %v2946 = vunpack.c.l.b16 %v2914
      %v2947 = vunpack.c.h.b16 %v2914
      %v2948 = vunpack.c.l.b16 %v2915
      %v2949 = vunpack.c.h.b16 %v2915
      %v2950 = vunpack.c.l.b16 %v2916
      %v2951 = vunpack.c.h.b16 %v2916
      %v2952 = vunpack.c.l.b16 %v2917
      %v2953 = vunpack.c.h.b16 %v2917
      %v2954 = vunpack.c.l.b16 %v2918
      %v2955 = vunpack.c.h.b16 %v2918
      %v2956 = vunpack.c.l.b16 %v2919
      %v2957 = vunpack.c.h.b16 %v2919
      %v2958 = vunpack.c.l.b16 %v2920
      %v2959 = vunpack.c.h.b16 %v2920
      %v2960 = vunpack.c.l.b16 %v2921
      %v2961 = vunpack.c.h.b16 %v2921
      %v2962 = vunpack.c.l.b16 %v2922
      %v2963 = vunpack.c.h.b16 %v2922
      %v2964 = vunpack.c.l.b16 %v2923
      %v2965 = vunpack.c.h.b16 %v2923
      %v2966 = vunpack.c.l.b16 %v2924
      %v2967 = vunpack.c.h.b16 %v2924
      %v2968 = vunpack.c.l.b16 %v2925
      %v2969 = vunpack.c.h.b16 %v2925
      %v2970 = vunpack.c.l.b16 %v2926
      %v2971 = vunpack.c.h.b16 %v2926
      %v2972 = vunpack.c.l.b16 %v2927
      %v2973 = vunpack.c.h.b16 %v2927
      %v2974 = vunpack.c.l.b16 %v2928
      %v2975 = vunpack.c.h.b16 %v2928
      %v2976 = vunpack.c.l.b16 %v2929
      %v2977 = vunpack.c.h.b16 %v2929
      %v2978 = vpack.c.b16 %v2948, %v2946
      %v2979 = vpack.c.b16 %v2949, %v2947
      %v2980 = vpack.c.b16 %v2952, %v2950
      %v2981 = vpack.c.b16 %v2953, %v2951
      %v2982 = vpack.c.b16 %v2956, %v2954
      %v2983 = vpack.c.b16 %v2957, %v2955
      %v2984 = vpack.c.b16 %v2960, %v2958
      %v2985 = vpack.c.b16 %v2961, %v2959
      %v2986 = vpack.c.b16 %v2964, %v2962
      %v2987 = vpack.c.b16 %v2965, %v2963
      %v2988 = vpack.c.b16 %v2968, %v2966
      %v2989 = vpack.c.b16 %v2969, %v2967
      %v2990 = vpack.c.b16 %v2972, %v2970
      %v2991 = vpack.c.b16 %v2973, %v2971
      %v2992 = vpack.c.b16 %v2976, %v2974
      %v2993 = vpack.c.b16 %v2977, %v2975
      %3010 = vmatpush.bf16.msra.mxu0 %v2992
      %3011 = vmatpush.bf16.msra.mxu0 %v2990
      %3012 = vmatpush.bf16.msra.mxu0 %v2988
      %3013 = vmatpush.bf16.msra.mxu0 %v2986
      %3014 = vmatpush.bf16.msra.mxu0 %v2984
      %3015 = vmatpush.bf16.msra.mxu0 %v2982
      %3016 = vmatpush.bf16.msra.mxu0 %v2980
      %3017 = vmatpush.bf16.msra.mxu0 %v2978
      %3018 = vmatmul.bf16.gmra.mxu0 %v228
      %v3019 = vpop.f32.mrf.mxu0
      %v3020 = vadd.f32 0.0, %v3019
      %v3021 = vpop.f32.mrf.mxu0
      %3022 = vdwg.mxu0
      %3023 = vmatpush.bf16.msra.mxu0 %v2993
      %3024 = vmatpush.bf16.msra.mxu0 %v2991
      %3025 = vmatpush.bf16.msra.mxu0 %v2989
      %3026 = vmatpush.bf16.msra.mxu0 %v2987
      %3027 = vmatpush.bf16.msra.mxu0 %v2985
      %3028 = vmatpush.bf16.msra.mxu0 %v2983
      %3029 = vmatpush.bf16.msra.mxu0 %v2981
      %3030 = vmatpush.bf16.msra.mxu0 %v2979
      %3031 = vmatmul.bf16.gmra.mxu0 %v228
      %v3032 = vpop.f32.mrf.mxu0
      %v3033 = vadd.f32 0.0, %v3032
      %v3034 = vpop.f32.mrf.mxu0
      %3035 = vdwg.mxu0
      %v3036 = vadd.f32 %v2912, %v3020
      %v3037 = vadd.f32 %v2913, %v3033
      %v3038 = vld [vmem:[%s745] sm:$0xff]
      %v3039 = vld [vmem:[%s745 + $0x8] sm:$0xff]
      %v3040 = vld [vmem:[%s745 + $0x10] sm:$0xff]
      %v3041 = vld [vmem:[%s745 + $0x18] sm:$0xff]
      %v3042 = vld [vmem:[%s745 + $0x20] sm:$0xff]
      %v3043 = vld [vmem:[%s745 + $0x28] sm:$0xff]
      %v3044 = vld [vmem:[%s745 + $0x30] sm:$0xff]
      %v3045 = vld [vmem:[%s745 + $0x38] sm:$0xff]
      %v3046 = vld [vmem:[%s745 + $0x40] sm:$0xff]
      %v3047 = vld [vmem:[%s745 + $0x48] sm:$0xff]
      %v3048 = vld [vmem:[%s745 + $0x50] sm:$0xff]
      %v3049 = vld [vmem:[%s745 + $0x58] sm:$0xff]
      %v3050 = vld [vmem:[%s745 + $0x60] sm:$0xff]
      %v3051 = vld [vmem:[%s745 + $0x68] sm:$0xff]
      %v3052 = vld [vmem:[%s745 + $0x70] sm:$0xff]
      %v3053 = vld [vmem:[%s745 + $0x78] sm:$0xff]
      %v3070 = vunpack.c.l.b16 %v3038
      %v3071 = vunpack.c.h.b16 %v3038
      %v3072 = vunpack.c.l.b16 %v3039
      %v3073 = vunpack.c.h.b16 %v3039
      %v3074 = vunpack.c.l.b16 %v3040
      %v3075 = vunpack.c.h.b16 %v3040
      %v3076 = vunpack.c.l.b16 %v3041
      %v3077 = vunpack.c.h.b16 %v3041
      %v3078 = vunpack.c.l.b16 %v3042
      %v3079 = vunpack.c.h.b16 %v3042
      %v3080 = vunpack.c.l.b16 %v3043
      %v3081 = vunpack.c.h.b16 %v3043
      %v3082 = vunpack.c.l.b16 %v3044
      %v3083 = vunpack.c.h.b16 %v3044
      %v3084 = vunpack.c.l.b16 %v3045
      %v3085 = vunpack.c.h.b16 %v3045
      %v3086 = vunpack.c.l.b16 %v3046
      %v3087 = vunpack.c.h.b16 %v3046
      %v3088 = vunpack.c.l.b16 %v3047
      %v3089 = vunpack.c.h.b16 %v3047
      %v3090 = vunpack.c.l.b16 %v3048
      %v3091 = vunpack.c.h.b16 %v3048
      %v3092 = vunpack.c.l.b16 %v3049
      %v3093 = vunpack.c.h.b16 %v3049
      %v3094 = vunpack.c.l.b16 %v3050
      %v3095 = vunpack.c.h.b16 %v3050
      %v3096 = vunpack.c.l.b16 %v3051
      %v3097 = vunpack.c.h.b16 %v3051
      %v3098 = vunpack.c.l.b16 %v3052
      %v3099 = vunpack.c.h.b16 %v3052
      %v3100 = vunpack.c.l.b16 %v3053
      %v3101 = vunpack.c.h.b16 %v3053
      %v3102 = vpack.c.b16 %v3072, %v3070
      %v3103 = vpack.c.b16 %v3073, %v3071
      %v3104 = vpack.c.b16 %v3076, %v3074
      %v3105 = vpack.c.b16 %v3077, %v3075
      %v3106 = vpack.c.b16 %v3080, %v3078
      %v3107 = vpack.c.b16 %v3081, %v3079
      %v3108 = vpack.c.b16 %v3084, %v3082
      %v3109 = vpack.c.b16 %v3085, %v3083
      %v3110 = vpack.c.b16 %v3088, %v3086
      %v3111 = vpack.c.b16 %v3089, %v3087
      %v3112 = vpack.c.b16 %v3092, %v3090
      %v3113 = vpack.c.b16 %v3093, %v3091
      %v3114 = vpack.c.b16 %v3096, %v3094
      %v3115 = vpack.c.b16 %v3097, %v3095
      %v3116 = vpack.c.b16 %v3100, %v3098
      %v3117 = vpack.c.b16 %v3101, %v3099
      %3134 = vmatpush.bf16.msra.mxu0 %v3116
      %3135 = vmatpush.bf16.msra.mxu0 %v3114
      %3136 = vmatpush.bf16.msra.mxu0 %v3112
      %3137 = vmatpush.bf16.msra.mxu0 %v3110
      %3138 = vmatpush.bf16.msra.mxu0 %v3108
      %3139 = vmatpush.bf16.msra.mxu0 %v3106
      %3140 = vmatpush.bf16.msra.mxu0 %v3104
      %3141 = vmatpush.bf16.msra.mxu0 %v3102
      %3142 = vmatmul.bf16.gmra.mxu0 %v2297
      %v3143 = vpop.f32.mrf.mxu0
      %v3144 = vadd.f32 0.0, %v3143
      %v3145 = vpop.f32.mrf.mxu0
      %3146 = vdwg.mxu0
      %3147 = vmatpush.bf16.msra.mxu0 %v3117
      %3148 = vmatpush.bf16.msra.mxu0 %v3115
      %3149 = vmatpush.bf16.msra.mxu0 %v3113
      %3150 = vmatpush.bf16.msra.mxu0 %v3111
      %3151 = vmatpush.bf16.msra.mxu0 %v3109
      %3152 = vmatpush.bf16.msra.mxu0 %v3107
      %3153 = vmatpush.bf16.msra.mxu0 %v3105
      %3154 = vmatpush.bf16.msra.mxu0 %v3103
      %3155 = vmatmul.bf16.gmra.mxu0 %v2297
      %v3156 = vpop.f32.mrf.mxu0
      %v3157 = vadd.f32 0.0, %v3156
      %v3158 = vpop.f32.mrf.mxu0
      %3159 = vdwg.mxu0
      %v3160 = vadd.f32 %v3036, %v3144
      %v3161 = vadd.f32 %v3037, %v3157
      %v3162 = vld [vmem:[%s881] sm:$0xff]
      %v3163 = vld [vmem:[%s881 + $0x8] sm:$0xff]
      %v3164 = vld [vmem:[%s881 + $0x10] sm:$0xff]
      %v3165 = vld [vmem:[%s881 + $0x18] sm:$0xff]
      %v3166 = vld [vmem:[%s881 + $0x20] sm:$0xff]
      %v3167 = vld [vmem:[%s881 + $0x28] sm:$0xff]
      %v3168 = vld [vmem:[%s881 + $0x30] sm:$0xff]
      %v3169 = vld [vmem:[%s881 + $0x38] sm:$0xff]
      %v3170 = vld [vmem:[%s881 + $0x40] sm:$0xff]
      %v3171 = vld [vmem:[%s881 + $0x48] sm:$0xff]
      %v3172 = vld [vmem:[%s881 + $0x50] sm:$0xff]
      %v3173 = vld [vmem:[%s881 + $0x58] sm:$0xff]
      %v3174 = vld [vmem:[%s881 + $0x60] sm:$0xff]
      %v3175 = vld [vmem:[%s881 + $0x68] sm:$0xff]
      %v3176 = vld [vmem:[%s881 + $0x70] sm:$0xff]
      %v3177 = vld [vmem:[%s881 + $0x78] sm:$0xff]
      %v3194 = vunpack.c.l.b16 %v3162
      %v3195 = vunpack.c.h.b16 %v3162
      %v3196 = vunpack.c.l.b16 %v3163
      %v3197 = vunpack.c.h.b16 %v3163
      %v3198 = vunpack.c.l.b16 %v3164
      %v3199 = vunpack.c.h.b16 %v3164
      %v3200 = vunpack.c.l.b16 %v3165
      %v3201 = vunpack.c.h.b16 %v3165
      %v3202 = vunpack.c.l.b16 %v3166
      %v3203 = vunpack.c.h.b16 %v3166
      %v3204 = vunpack.c.l.b16 %v3167
      %v3205 = vunpack.c.h.b16 %v3167
      %v3206 = vunpack.c.l.b16 %v3168
      %v3207 = vunpack.c.h.b16 %v3168
      %v3208 = vunpack.c.l.b16 %v3169
      %v3209 = vunpack.c.h.b16 %v3169
      %v3210 = vunpack.c.l.b16 %v3170
      %v3211 = vunpack.c.h.b16 %v3170
      %v3212 = vunpack.c.l.b16 %v3171
      %v3213 = vunpack.c.h.b16 %v3171
      %v3214 = vunpack.c.l.b16 %v3172
      %v3215 = vunpack.c.h.b16 %v3172
      %v3216 = vunpack.c.l.b16 %v3173
      %v3217 = vunpack.c.h.b16 %v3173
      %v3218 = vunpack.c.l.b16 %v3174
      %v3219 = vunpack.c.h.b16 %v3174
      %v3220 = vunpack.c.l.b16 %v3175
      %v3221 = vunpack.c.h.b16 %v3175
      %v3222 = vunpack.c.l.b16 %v3176
      %v3223 = vunpack.c.h.b16 %v3176
      %v3224 = vunpack.c.l.b16 %v3177
      %v3225 = vunpack.c.h.b16 %v3177
      %v3226 = vpack.c.b16 %v3196, %v3194
      %v3227 = vpack.c.b16 %v3197, %v3195
      %v3228 = vpack.c.b16 %v3200, %v3198
      %v3229 = vpack.c.b16 %v3201, %v3199
      %v3230 = vpack.c.b16 %v3204, %v3202
      %v3231 = vpack.c.b16 %v3205, %v3203
      %v3232 = vpack.c.b16 %v3208, %v3206
      %v3233 = vpack.c.b16 %v3209, %v3207
      %v3234 = vpack.c.b16 %v3212, %v3210
      %v3235 = vpack.c.b16 %v3213, %v3211
      %v3236 = vpack.c.b16 %v3216, %v3214
      %v3237 = vpack.c.b16 %v3217, %v3215
      %v3238 = vpack.c.b16 %v3220, %v3218
      %v3239 = vpack.c.b16 %v3221, %v3219
      %v3240 = vpack.c.b16 %v3224, %v3222
      %v3241 = vpack.c.b16 %v3225, %v3223
      %3258 = vmatpush.bf16.msra.mxu0 %v3240
      %3259 = vmatpush.bf16.msra.mxu0 %v3238
      %3260 = vmatpush.bf16.msra.mxu0 %v3236
      %3261 = vmatpush.bf16.msra.mxu0 %v3234
      %3262 = vmatpush.bf16.msra.mxu0 %v3232
      %3263 = vmatpush.bf16.msra.mxu0 %v3230
      %3264 = vmatpush.bf16.msra.mxu0 %v3228
      %3265 = vmatpush.bf16.msra.mxu0 %v3226
      %3266 = vmatmul.bf16.gmra.mxu0 %v2423
      %v3267 = vpop.f32.mrf.mxu0
      %v3268 = vadd.f32 0.0, %v3267
      %v3269 = vpop.f32.mrf.mxu0
      %3270 = vdwg.mxu0
      %3271 = vmatpush.bf16.msra.mxu0 %v3241
      %3272 = vmatpush.bf16.msra.mxu0 %v3239
      %3273 = vmatpush.bf16.msra.mxu0 %v3237
      %3274 = vmatpush.bf16.msra.mxu0 %v3235
      %3275 = vmatpush.bf16.msra.mxu0 %v3233
      %3276 = vmatpush.bf16.msra.mxu0 %v3231
      %3277 = vmatpush.bf16.msra.mxu0 %v3229
      %3278 = vmatpush.bf16.msra.mxu0 %v3227
      %3279 = vmatmul.bf16.gmra.mxu0 %v2423
      %v3280 = vpop.f32.mrf.mxu0
      %v3281 = vadd.f32 0.0, %v3280
      %v3282 = vpop.f32.mrf.mxu0
      %3283 = vdwg.mxu0
      %v3284 = vadd.f32 %v3160, %v3268
      %v3285 = vadd.f32 %v3161, %v3281
      %v3286 = vld [vmem:[%s1008] sm:$0xff]
      %v3287 = vld [vmem:[%s1008 + $0x8] sm:$0xff]
      %v3288 = vld [vmem:[%s1008 + $0x10] sm:$0xff]
      %v3289 = vld [vmem:[%s1008 + $0x18] sm:$0xff]
      %v3290 = vld [vmem:[%s1008 + $0x20] sm:$0xff]
      %v3291 = vld [vmem:[%s1008 + $0x28] sm:$0xff]
      %v3292 = vld [vmem:[%s1008 + $0x30] sm:$0xff]
      %v3293 = vld [vmem:[%s1008 + $0x38] sm:$0xff]
      %v3294 = vld [vmem:[%s1008 + $0x40] sm:$0xff]
      %v3295 = vld [vmem:[%s1008 + $0x48] sm:$0xff]
      %v3296 = vld [vmem:[%s1008 + $0x50] sm:$0xff]
      %v3297 = vld [vmem:[%s1008 + $0x58] sm:$0xff]
      %v3298 = vld [vmem:[%s1008 + $0x60] sm:$0xff]
      %v3299 = vld [vmem:[%s1008 + $0x68] sm:$0xff]
      %v3300 = vld [vmem:[%s1008 + $0x70] sm:$0xff]
      %v3301 = vld [vmem:[%s1008 + $0x78] sm:$0xff]
      %v3318 = vunpack.c.l.b16 %v3286
      %v3319 = vunpack.c.h.b16 %v3286
      %v3320 = vunpack.c.l.b16 %v3287
      %v3321 = vunpack.c.h.b16 %v3287
      %v3322 = vunpack.c.l.b16 %v3288
      %v3323 = vunpack.c.h.b16 %v3288
      %v3324 = vunpack.c.l.b16 %v3289
      %v3325 = vunpack.c.h.b16 %v3289
      %v3326 = vunpack.c.l.b16 %v3290
      %v3327 = vunpack.c.h.b16 %v3290
      %v3328 = vunpack.c.l.b16 %v3291
      %v3329 = vunpack.c.h.b16 %v3291
      %v3330 = vunpack.c.l.b16 %v3292
      %v3331 = vunpack.c.h.b16 %v3292
      %v3332 = vunpack.c.l.b16 %v3293
      %v3333 = vunpack.c.h.b16 %v3293
      %v3334 = vunpack.c.l.b16 %v3294
      %v3335 = vunpack.c.h.b16 %v3294
      %v3336 = vunpack.c.l.b16 %v3295
      %v3337 = vunpack.c.h.b16 %v3295
      %v3338 = vunpack.c.l.b16 %v3296
      %v3339 = vunpack.c.h.b16 %v3296
      %v3340 = vunpack.c.l.b16 %v3297
      %v3341 = vunpack.c.h.b16 %v3297
      %v3342 = vunpack.c.l.b16 %v3298
      %v3343 = vunpack.c.h.b16 %v3298
      %v3344 = vunpack.c.l.b16 %v3299
      %v3345 = vunpack.c.h.b16 %v3299
      %v3346 = vunpack.c.l.b16 %v3300
      %v3347 = vunpack.c.h.b16 %v3300
      %v3348 = vunpack.c.l.b16 %v3301
      %v3349 = vunpack.c.h.b16 %v3301
      %v3350 = vpack.c.b16 %v3320, %v3318
      %v3351 = vpack.c.b16 %v3321, %v3319
      %v3352 = vpack.c.b16 %v3324, %v3322
      %v3353 = vpack.c.b16 %v3325, %v3323
      %v3354 = vpack.c.b16 %v3328, %v3326
      %v3355 = vpack.c.b16 %v3329, %v3327
      %v3356 = vpack.c.b16 %v3332, %v3330
      %v3357 = vpack.c.b16 %v3333, %v3331
      %v3358 = vpack.c.b16 %v3336, %v3334
      %v3359 = vpack.c.b16 %v3337, %v3335
      %v3360 = vpack.c.b16 %v3340, %v3338
      %v3361 = vpack.c.b16 %v3341, %v3339
      %v3362 = vpack.c.b16 %v3344, %v3342
      %v3363 = vpack.c.b16 %v3345, %v3343
      %v3364 = vpack.c.b16 %v3348, %v3346
      %v3365 = vpack.c.b16 %v3349, %v3347
      %3382 = vmatpush.bf16.msra.mxu0 %v3364
      %3383 = vmatpush.bf16.msra.mxu0 %v3362
      %3384 = vmatpush.bf16.msra.mxu0 %v3360
      %3385 = vmatpush.bf16.msra.mxu0 %v3358
      %3386 = vmatpush.bf16.msra.mxu0 %v3356
      %3387 = vmatpush.bf16.msra.mxu0 %v3354
      %3388 = vmatpush.bf16.msra.mxu0 %v3352
      %3389 = vmatpush.bf16.msra.mxu0 %v3350
      %3390 = vmatmul.bf16.gmra.mxu0 %v229
      %v3391 = vpop.f32.mrf.mxu0
      %v3392 = vadd.f32 0.0, %v3391
      %v3393 = vpop.f32.mrf.mxu0
      %3394 = vdwg.mxu0
      %3395 = vmatpush.bf16.msra.mxu0 %v3365
      %3396 = vmatpush.bf16.msra.mxu0 %v3363
      %3397 = vmatpush.bf16.msra.mxu0 %v3361
      %3398 = vmatpush.bf16.msra.mxu0 %v3359
      %3399 = vmatpush.bf16.msra.mxu0 %v3357
      %3400 = vmatpush.bf16.msra.mxu0 %v3355
      %3401 = vmatpush.bf16.msra.mxu0 %v3353
      %3402 = vmatpush.bf16.msra.mxu0 %v3351
      %3403 = vmatmul.bf16.gmra.mxu0 %v229
      %v3404 = vpop.f32.mrf.mxu0
      %v3405 = vadd.f32 0.0, %v3404
      %v3406 = vpop.f32.mrf.mxu0
      %3407 = vdwg.mxu0
      %v3408 = vadd.f32 %v3284, %v3392
      %v3409 = vadd.f32 %v3285, %v3405
      %v3410 = vld [vmem:[%s1133] sm:$0xff]
      %v3411 = vld [vmem:[%s1133 + $0x8] sm:$0xff]
      %v3412 = vld [vmem:[%s1133 + $0x10] sm:$0xff]
      %v3413 = vld [vmem:[%s1133 + $0x18] sm:$0xff]
      %v3414 = vld [vmem:[%s1133 + $0x20] sm:$0xff]
      %v3415 = vld [vmem:[%s1133 + $0x28] sm:$0xff]
      %v3416 = vld [vmem:[%s1133 + $0x30] sm:$0xff]
      %v3417 = vld [vmem:[%s1133 + $0x38] sm:$0xff]
      %v3418 = vld [vmem:[%s1133 + $0x40] sm:$0xff]
      %v3419 = vld [vmem:[%s1133 + $0x48] sm:$0xff]
      %v3420 = vld [vmem:[%s1133 + $0x50] sm:$0xff]
      %v3421 = vld [vmem:[%s1133 + $0x58] sm:$0xff]
      %v3422 = vld [vmem:[%s1133 + $0x60] sm:$0xff]
      %v3423 = vld [vmem:[%s1133 + $0x68] sm:$0xff]
      %v3424 = vld [vmem:[%s1133 + $0x70] sm:$0xff]
      %v3425 = vld [vmem:[%s1133 + $0x78] sm:$0xff]
      %v3427 = vunpack.c.l.b16 %v229
      %v3428 = vpack.c.b16 %v3427, %v3427
      %v3430 = vshrl.u32 %v3428, 16
      %v3432 = vshll.u32 %v3428, 16
      %v3434 = vrot.slane %v3432, 1
      %v3435 = vor.u32 %v3430, %v3434
      %v3453 = vunpack.c.l.b16 %v3410
      %v3454 = vunpack.c.h.b16 %v3410
      %v3455 = vunpack.c.l.b16 %v3411
      %v3456 = vunpack.c.h.b16 %v3411
      %v3457 = vunpack.c.l.b16 %v3412
      %v3458 = vunpack.c.h.b16 %v3412
      %v3459 = vunpack.c.l.b16 %v3413
      %v3460 = vunpack.c.h.b16 %v3413
      %v3461 = vunpack.c.l.b16 %v3414
      %v3462 = vunpack.c.h.b16 %v3414
      %v3463 = vunpack.c.l.b16 %v3415
      %v3464 = vunpack.c.h.b16 %v3415
      %v3465 = vunpack.c.l.b16 %v3416
      %v3466 = vunpack.c.h.b16 %v3416
      %v3467 = vunpack.c.l.b16 %v3417
      %v3468 = vunpack.c.h.b16 %v3417
      %v3469 = vunpack.c.l.b16 %v3418
      %v3470 = vunpack.c.h.b16 %v3418
      %v3471 = vunpack.c.l.b16 %v3419
      %v3472 = vunpack.c.h.b16 %v3419
      %v3473 = vunpack.c.l.b16 %v3420
      %v3474 = vunpack.c.h.b16 %v3420
      %v3475 = vunpack.c.l.b16 %v3421
      %v3476 = vunpack.c.h.b16 %v3421
      %v3477 = vunpack.c.l.b16 %v3422
      %v3478 = vunpack.c.h.b16 %v3422
      %v3479 = vunpack.c.l.b16 %v3423
      %v3480 = vunpack.c.h.b16 %v3423
      %v3481 = vunpack.c.l.b16 %v3424
      %v3482 = vunpack.c.h.b16 %v3424
      %v3483 = vunpack.c.l.b16 %v3425
      %v3484 = vunpack.c.h.b16 %v3425
      %v3485 = vpack.c.b16 %v3455, %v3453
      %v3486 = vpack.c.b16 %v3456, %v3454
      %v3487 = vpack.c.b16 %v3459, %v3457
      %v3488 = vpack.c.b16 %v3460, %v3458
      %v3489 = vpack.c.b16 %v3463, %v3461
      %v3490 = vpack.c.b16 %v3464, %v3462
      %v3491 = vpack.c.b16 %v3467, %v3465
      %v3492 = vpack.c.b16 %v3468, %v3466
      %v3493 = vpack.c.b16 %v3471, %v3469
      %v3494 = vpack.c.b16 %v3472, %v3470
      %v3495 = vpack.c.b16 %v3475, %v3473
      %v3496 = vpack.c.b16 %v3476, %v3474
      %v3497 = vpack.c.b16 %v3479, %v3477
      %v3498 = vpack.c.b16 %v3480, %v3478
      %v3499 = vpack.c.b16 %v3483, %v3481
      %v3500 = vpack.c.b16 %v3484, %v3482
      %3517 = vmatpush.bf16.msra.mxu0 %v3499
      %3518 = vmatpush.bf16.msra.mxu0 %v3497
      %3519 = vmatpush.bf16.msra.mxu0 %v3495
      %3520 = vmatpush.bf16.msra.mxu0 %v3493
      %3521 = vmatpush.bf16.msra.mxu0 %v3491
      %3522 = vmatpush.bf16.msra.mxu0 %v3489
      %3523 = vmatpush.bf16.msra.mxu0 %v3487
      %3524 = vmatpush.bf16.msra.mxu0 %v3485
      %3525 = vmatmul.bf16.gmra.mxu0 %v3435
      %v3526 = vpop.f32.mrf.mxu0
      %v3527 = vadd.f32 0.0, %v3526
      %v3528 = vpop.f32.mrf.mxu0
      %3529 = vdwg.mxu0
      %3530 = vmatpush.bf16.msra.mxu0 %v3500
      %3531 = vmatpush.bf16.msra.mxu0 %v3498
      %3532 = vmatpush.bf16.msra.mxu0 %v3496
      %3533 = vmatpush.bf16.msra.mxu0 %v3494
      %3534 = vmatpush.bf16.msra.mxu0 %v3492
      %3535 = vmatpush.bf16.msra.mxu0 %v3490
      %3536 = vmatpush.bf16.msra.mxu0 %v3488
      %3537 = vmatpush.bf16.msra.mxu0 %v3486
      %3538 = vmatmul.bf16.gmra.mxu0 %v3435
      %v3539 = vpop.f32.mrf.mxu0
      %v3540 = vadd.f32 0.0, %v3539
      %v3541 = vpop.f32.mrf.mxu0
      %3542 = vdwg.mxu0
      %v3543 = vadd.f32 %v3408, %v3527
      %v3544 = vadd.f32 %v3409, %v3540
      %v3545 = vld [vmem:[%s1269] sm:$0xff]
      %v3546 = vld [vmem:[%s1269 + $0x8] sm:$0xff]
      %v3547 = vld [vmem:[%s1269 + $0x10] sm:$0xff]
      %v3548 = vld [vmem:[%s1269 + $0x18] sm:$0xff]
      %v3549 = vld [vmem:[%s1269 + $0x20] sm:$0xff]
      %v3550 = vld [vmem:[%s1269 + $0x28] sm:$0xff]
      %v3551 = vld [vmem:[%s1269 + $0x30] sm:$0xff]
      %v3552 = vld [vmem:[%s1269 + $0x38] sm:$0xff]
      %v3553 = vld [vmem:[%s1269 + $0x40] sm:$0xff]
      %v3554 = vld [vmem:[%s1269 + $0x48] sm:$0xff]
      %v3555 = vld [vmem:[%s1269 + $0x50] sm:$0xff]
      %v3556 = vld [vmem:[%s1269 + $0x58] sm:$0xff]
      %v3557 = vld [vmem:[%s1269 + $0x60] sm:$0xff]
      %v3558 = vld [vmem:[%s1269 + $0x68] sm:$0xff]
      %v3559 = vld [vmem:[%s1269 + $0x70] sm:$0xff]
      %v3560 = vld [vmem:[%s1269 + $0x78] sm:$0xff]
      %v3561 = vrot.slane %v3428, 1
      %v3579 = vunpack.c.l.b16 %v3545
      %v3580 = vunpack.c.h.b16 %v3545
      %v3581 = vunpack.c.l.b16 %v3546
      %v3582 = vunpack.c.h.b16 %v3546
      %v3583 = vunpack.c.l.b16 %v3547
      %v3584 = vunpack.c.h.b16 %v3547
      %v3585 = vunpack.c.l.b16 %v3548
      %v3586 = vunpack.c.h.b16 %v3548
      %v3587 = vunpack.c.l.b16 %v3549
      %v3588 = vunpack.c.h.b16 %v3549
      %v3589 = vunpack.c.l.b16 %v3550
      %v3590 = vunpack.c.h.b16 %v3550
      %v3591 = vunpack.c.l.b16 %v3551
      %v3592 = vunpack.c.h.b16 %v3551
      %v3593 = vunpack.c.l.b16 %v3552
      %v3594 = vunpack.c.h.b16 %v3552
      %v3595 = vunpack.c.l.b16 %v3553
      %v3596 = vunpack.c.h.b16 %v3553
      %v3597 = vunpack.c.l.b16 %v3554
      %v3598 = vunpack.c.h.b16 %v3554
      %v3599 = vunpack.c.l.b16 %v3555
      %v3600 = vunpack.c.h.b16 %v3555
      %v3601 = vunpack.c.l.b16 %v3556
      %v3602 = vunpack.c.h.b16 %v3556
      %v3603 = vunpack.c.l.b16 %v3557
      %v3604 = vunpack.c.h.b16 %v3557
      %v3605 = vunpack.c.l.b16 %v3558
      %v3606 = vunpack.c.h.b16 %v3558
      %v3607 = vunpack.c.l.b16 %v3559
      %v3608 = vunpack.c.h.b16 %v3559
      %v3609 = vunpack.c.l.b16 %v3560
      %v3610 = vunpack.c.h.b16 %v3560
      %v3611 = vpack.c.b16 %v3581, %v3579
      %v3612 = vpack.c.b16 %v3582, %v3580
      %v3613 = vpack.c.b16 %v3585, %v3583
      %v3614 = vpack.c.b16 %v3586, %v3584
      %v3615 = vpack.c.b16 %v3589, %v3587
      %v3616 = vpack.c.b16 %v3590, %v3588
      %v3617 = vpack.c.b16 %v3593, %v3591
      %v3618 = vpack.c.b16 %v3594, %v3592
      %v3619 = vpack.c.b16 %v3597, %v3595
      %v3620 = vpack.c.b16 %v3598, %v3596
      %v3621 = vpack.c.b16 %v3601, %v3599
      %v3622 = vpack.c.b16 %v3602, %v3600
      %v3623 = vpack.c.b16 %v3605, %v3603
      %v3624 = vpack.c.b16 %v3606, %v3604
      %v3625 = vpack.c.b16 %v3609, %v3607
      %v3626 = vpack.c.b16 %v3610, %v3608
      %3643 = vmatpush.bf16.msra.mxu0 %v3625
      %3644 = vmatpush.bf16.msra.mxu0 %v3623
      %3645 = vmatpush.bf16.msra.mxu0 %v3621
      %3646 = vmatpush.bf16.msra.mxu0 %v3619
      %3647 = vmatpush.bf16.msra.mxu0 %v3617
      %3648 = vmatpush.bf16.msra.mxu0 %v3615
      %3649 = vmatpush.bf16.msra.mxu0 %v3613
      %3650 = vmatpush.bf16.msra.mxu0 %v3611
      %3651 = vmatmul.bf16.gmra.mxu0 %v3561
      %v3652 = vpop.f32.mrf.mxu0
      %v3653 = vadd.f32 0.0, %v3652
      %v3654 = vpop.f32.mrf.mxu0
      %3655 = vdwg.mxu0
      %3656 = vmatpush.bf16.msra.mxu0 %v3626
      %3657 = vmatpush.bf16.msra.mxu0 %v3624
      %3658 = vmatpush.bf16.msra.mxu0 %v3622
      %3659 = vmatpush.bf16.msra.mxu0 %v3620
      %3660 = vmatpush.bf16.msra.mxu0 %v3618
      %3661 = vmatpush.bf16.msra.mxu0 %v3616
      %3662 = vmatpush.bf16.msra.mxu0 %v3614
      %3663 = vmatpush.bf16.msra.mxu0 %v3612
      %3664 = vmatmul.bf16.gmra.mxu0 %v3561
      %v3665 = vpop.f32.mrf.mxu0
      %v3666 = vadd.f32 0.0, %v3665
      %v3667 = vpop.f32.mrf.mxu0
      %3668 = vdwg.mxu0
      %v3669 = vadd.f32 %v3543, %v3653
      %v3670 = vadd.f32 %v3544, %v3666
      %v3671 = vld [vmem:[%s2] sm:$0x3]
      %v3673 = vperm.slane %v3671, 0
      %v3674 = vperm.slane %v3671, 1
      %v3677 = vadd.f32 %v3669, %v3673
      %v3678 = vadd.f32 %v3670, %v3674
      %v3679 = vmax.f32 %v3677, 0.0
      %s3680 = scalar_lea.vmem [#allocation2], 24
      %3681 = vst [vmem:[%s3680 + $0x1] sm:$0xf] %v3679
      %s3682 = scalar_lea.vmem [#allocation3], 8
      %3683 = vst [vmem:[%s3682] sm:$0xf] %v3678
      %v3684 = vld [vmem:[%s1] sm:$0xff]
      %v3685 = vld [vmem:[%s1 + $0x8] sm:$0xff]
      %v3686 = vld [vmem:[%s1 + $0x10] sm:$0xff]
      %v3687 = vld [vmem:[%s1 + $0x18] sm:$0xff]
      %v3688 = vld [vmem:[%s1 + $0x20] sm:$0xff]
      %v3689 = vld [vmem:[%s1 + $0x28] sm:$0xff]
      %v3690 = vld [vmem:[%s1 + $0x30] sm:$0xff]
      %v3691 = vld [vmem:[%s1 + $0x38] sm:$0xff]
      %v3692 = vld [vmem:[%s1 + $0x40] sm:$0xff]
      %v3693 = vld [vmem:[%s1 + $0x48] sm:$0xff]
      %v3694 = vld [vmem:[%s1 + $0x50] sm:$0xff]
      %v3695 = vld [vmem:[%s1 + $0x58] sm:$0xff]
      %v3696 = vld [vmem:[%s1 + $0x60] sm:$0xff]
      %v3697 = vld [vmem:[%s1 + $0x68] sm:$0xff]
      %v3698 = vld [vmem:[%s1 + $0x70] sm:$0xff]
      %v3699 = vld [vmem:[%s1 + $0x78] sm:$0xff]
      %v3700 = vld [vmem:[%s253] sm:$0xff]
      %v3701 = vld [vmem:[%s253 + $0x8] sm:$0xff]
      %v3702 = vld [vmem:[%s253 + $0x10] sm:$0xff]
      %v3703 = vld [vmem:[%s253 + $0x18] sm:$0xff]
      %v3704 = vld [vmem:[%s253 + $0x20] sm:$0xff]
      %v3705 = vld [vmem:[%s253 + $0x28] sm:$0xff]
      %v3706 = vld [vmem:[%s253 + $0x30] sm:$0xff]
      %v3707 = vld [vmem:[%s253 + $0x38] sm:$0xff]
      %v3708 = vld [vmem:[%s253 + $0x40] sm:$0xff]
      %v3709 = vld [vmem:[%s253 + $0x48] sm:$0xff]
      %v3710 = vld [vmem:[%s253 + $0x50] sm:$0xff]
      %v3711 = vld [vmem:[%s253 + $0x58] sm:$0xff]
      %v3712 = vld [vmem:[%s253 + $0x60] sm:$0xff]
      %v3713 = vld [vmem:[%s253 + $0x68] sm:$0xff]
      %v3714 = vld [vmem:[%s253 + $0x70] sm:$0xff]
      %v3715 = vld [vmem:[%s253 + $0x78] sm:$0xff]
      %v3732 = vunpack.c.l.b16 %v3700
      %v3733 = vunpack.c.h.b16 %v3700
      %v3734 = vunpack.c.l.b16 %v3701
      %v3735 = vunpack.c.h.b16 %v3701
      %v3736 = vunpack.c.l.b16 %v3702
      %v3737 = vunpack.c.h.b16 %v3702
      %v3738 = vunpack.c.l.b16 %v3703
      %v3739 = vunpack.c.h.b16 %v3703
      %v3740 = vunpack.c.l.b16 %v3704
      %v3741 = vunpack.c.h.b16 %v3704
      %v3742 = vunpack.c.l.b16 %v3705
      %v3743 = vunpack.c.h.b16 %v3705
      %v3744 = vunpack.c.l.b16 %v3706
      %v3745 = vunpack.c.h.b16 %v3706
      %v3746 = vunpack.c.l.b16 %v3707
      %v3747 = vunpack.c.h.b16 %v3707
      %v3748 = vunpack.c.l.b16 %v3708
      %v3749 = vunpack.c.h.b16 %v3708
      %v3750 = vunpack.c.l.b16 %v3709
      %v3751 = vunpack.c.h.b16 %v3709
      %v3752 = vunpack.c.l.b16 %v3710
      %v3753 = vunpack.c.h.b16 %v3710
      %v3754 = vunpack.c.l.b16 %v3711
      %v3755 = vunpack.c.h.b16 %v3711
      %v3756 = vunpack.c.l.b16 %v3712
      %v3757 = vunpack.c.h.b16 %v3712
      %v3758 = vunpack.c.l.b16 %v3713
      %v3759 = vunpack.c.h.b16 %v3713
      %v3760 = vunpack.c.l.b16 %v3714
      %v3761 = vunpack.c.h.b16 %v3714
      %v3762 = vunpack.c.l.b16 %v3715
      %v3763 = vunpack.c.h.b16 %v3715
      %v3764 = vpack.c.b16 %v3734, %v3732
      %v3765 = vpack.c.b16 %v3735, %v3733
      %v3766 = vpack.c.b16 %v3738, %v3736
      %v3767 = vpack.c.b16 %v3739, %v3737
      %v3768 = vpack.c.b16 %v3742, %v3740
      %v3769 = vpack.c.b16 %v3743, %v3741
      %v3770 = vpack.c.b16 %v3746, %v3744
      %v3771 = vpack.c.b16 %v3747, %v3745
      %v3772 = vpack.c.b16 %v3750, %v3748
      %v3773 = vpack.c.b16 %v3751, %v3749
      %v3774 = vpack.c.b16 %v3754, %v3752
      %v3775 = vpack.c.b16 %v3755, %v3753
      %v3776 = vpack.c.b16 %v3758, %v3756
      %v3777 = vpack.c.b16 %v3759, %v3757
      %v3778 = vpack.c.b16 %v3762, %v3760
      %v3779 = vpack.c.b16 %v3763, %v3761
      %3796 = vmatpush.bf16.msra.mxu0 %v3778
      %3797 = vmatpush.bf16.msra.mxu0 %v3776
      %3798 = vmatpush.bf16.msra.mxu0 %v3774
      %3799 = vmatpush.bf16.msra.mxu0 %v3772
      %3800 = vmatpush.bf16.msra.mxu0 %v3770
      %3801 = vmatpush.bf16.msra.mxu0 %v3768
      %3802 = vmatpush.bf16.msra.mxu0 %v3766
      %3803 = vmatpush.bf16.msra.mxu0 %v3764
      %3804 = vmatmul.bf16.gmra.mxu0 %v2297
      %v3805 = vpop.f32.mrf.mxu0
      %v3806 = vadd.f32 0.0, %v3805
      %v3807 = vpop.f32.mrf.mxu0
      %3808 = vdwg.mxu0
      %3809 = vmatpush.bf16.msra.mxu0 %v3779
      %3810 = vmatpush.bf16.msra.mxu0 %v3777
      %3811 = vmatpush.bf16.msra.mxu0 %v3775
      %3812 = vmatpush.bf16.msra.mxu0 %v3773
      %3813 = vmatpush.bf16.msra.mxu0 %v3771
      %3814 = vmatpush.bf16.msra.mxu0 %v3769
      %3815 = vmatpush.bf16.msra.mxu0 %v3767
      %3816 = vmatpush.bf16.msra.mxu0 %v3765
      %3817 = vmatmul.bf16.gmra.mxu0 %v2297
      %v3818 = vpop.f32.mrf.mxu0
      %v3819 = vadd.f32 0.0, %v3818
      %v3820 = vpop.f32.mrf.mxu0
      %3821 = vdwg.mxu0
      %v3838 = vunpack.c.l.b16 %v3684
      %v3839 = vunpack.c.h.b16 %v3684
      %v3840 = vunpack.c.l.b16 %v3685
      %v3841 = vunpack.c.h.b16 %v3685
      %v3842 = vunpack.c.l.b16 %v3686
      %v3843 = vunpack.c.h.b16 %v3686
      %v3844 = vunpack.c.l.b16 %v3687
      %v3845 = vunpack.c.h.b16 %v3687
      %v3846 = vunpack.c.l.b16 %v3688
      %v3847 = vunpack.c.h.b16 %v3688
      %v3848 = vunpack.c.l.b16 %v3689
      %v3849 = vunpack.c.h.b16 %v3689
      %v3850 = vunpack.c.l.b16 %v3690
      %v3851 = vunpack.c.h.b16 %v3690
      %v3852 = vunpack.c.l.b16 %v3691
      %v3853 = vunpack.c.h.b16 %v3691
      %v3854 = vunpack.c.l.b16 %v3692
      %v3855 = vunpack.c.h.b16 %v3692
      %v3856 = vunpack.c.l.b16 %v3693
      %v3857 = vunpack.c.h.b16 %v3693
      %v3858 = vunpack.c.l.b16 %v3694
      %v3859 = vunpack.c.h.b16 %v3694
      %v3860 = vunpack.c.l.b16 %v3695
      %v3861 = vunpack.c.h.b16 %v3695
      %v3862 = vunpack.c.l.b16 %v3696
      %v3863 = vunpack.c.h.b16 %v3696
      %v3864 = vunpack.c.l.b16 %v3697
      %v3865 = vunpack.c.h.b16 %v3697
      %v3866 = vunpack.c.l.b16 %v3698
      %v3867 = vunpack.c.h.b16 %v3698
      %v3868 = vunpack.c.l.b16 %v3699
      %v3869 = vunpack.c.h.b16 %v3699
      %v3870 = vpack.c.b16 %v3840, %v3838
      %v3871 = vpack.c.b16 %v3841, %v3839
      %v3872 = vpack.c.b16 %v3844, %v3842
      %v3873 = vpack.c.b16 %v3845, %v3843
      %v3874 = vpack.c.b16 %v3848, %v3846
      %v3875 = vpack.c.b16 %v3849, %v3847
      %v3876 = vpack.c.b16 %v3852, %v3850
      %v3877 = vpack.c.b16 %v3853, %v3851
      %v3878 = vpack.c.b16 %v3856, %v3854
      %v3879 = vpack.c.b16 %v3857, %v3855
      %v3880 = vpack.c.b16 %v3860, %v3858
      %v3881 = vpack.c.b16 %v3861, %v3859
      %v3882 = vpack.c.b16 %v3864, %v3862
      %v3883 = vpack.c.b16 %v3865, %v3863
      %v3884 = vpack.c.b16 %v3868, %v3866
      %v3885 = vpack.c.b16 %v3869, %v3867
      %3902 = vmatpush.bf16.msra.mxu0 %v3884
      %3903 = vmatpush.bf16.msra.mxu0 %v3882
      %3904 = vmatpush.bf16.msra.mxu0 %v3880
      %3905 = vmatpush.bf16.msra.mxu0 %v3878
      %3906 = vmatpush.bf16.msra.mxu0 %v3876
      %3907 = vmatpush.bf16.msra.mxu0 %v3874
      %3908 = vmatpush.bf16.msra.mxu0 %v3872
      %3909 = vmatpush.bf16.msra.mxu0 %v3870
      %3910 = vmatmul.bf16.gmra.mxu0 %v228
      %v3911 = vpop.f32.mrf.mxu0
      %v3912 = vadd.f32 %v3806, %v3911
      %v3913 = vpop.f32.mrf.mxu0
      %3914 = vdwg.mxu0
      %3915 = vmatpush.bf16.msra.mxu0 %v3885
      %3916 = vmatpush.bf16.msra.mxu0 %v3883
      %3917 = vmatpush.bf16.msra.mxu0 %v3881
      %3918 = vmatpush.bf16.msra.mxu0 %v3879
      %3919 = vmatpush.bf16.msra.mxu0 %v3877
      %3920 = vmatpush.bf16.msra.mxu0 %v3875
      %3921 = vmatpush.bf16.msra.mxu0 %v3873
      %3922 = vmatpush.bf16.msra.mxu0 %v3871
      %3923 = vmatmul.bf16.gmra.mxu0 %v228
      %v3924 = vpop.f32.mrf.mxu0
      %v3925 = vadd.f32 %v3819, %v3924
      %v3926 = vpop.f32.mrf.mxu0
      %3927 = vdwg.mxu0
      %v3928 = vld [vmem:[%s493] sm:$0xff]
      %v3929 = vld [vmem:[%s493 + $0x8] sm:$0xff]
      %v3930 = vld [vmem:[%s493 + $0x10] sm:$0xff]
      %v3931 = vld [vmem:[%s493 + $0x18] sm:$0xff]
      %v3932 = vld [vmem:[%s493 + $0x20] sm:$0xff]
      %v3933 = vld [vmem:[%s493 + $0x28] sm:$0xff]
      %v3934 = vld [vmem:[%s493 + $0x30] sm:$0xff]
      %v3935 = vld [vmem:[%s493 + $0x38] sm:$0xff]
      %v3936 = vld [vmem:[%s493 + $0x40] sm:$0xff]
      %v3937 = vld [vmem:[%s493 + $0x48] sm:$0xff]
      %v3938 = vld [vmem:[%s493 + $0x50] sm:$0xff]
      %v3939 = vld [vmem:[%s493 + $0x58] sm:$0xff]
      %v3940 = vld [vmem:[%s493 + $0x60] sm:$0xff]
      %v3941 = vld [vmem:[%s493 + $0x68] sm:$0xff]
      %v3942 = vld [vmem:[%s493 + $0x70] sm:$0xff]
      %v3943 = vld [vmem:[%s493 + $0x78] sm:$0xff]
      %v3960 = vunpack.c.l.b16 %v3928
      %v3961 = vunpack.c.h.b16 %v3928
      %v3962 = vunpack.c.l.b16 %v3929
      %v3963 = vunpack.c.h.b16 %v3929
      %v3964 = vunpack.c.l.b16 %v3930
      %v3965 = vunpack.c.h.b16 %v3930
      %v3966 = vunpack.c.l.b16 %v3931
      %v3967 = vunpack.c.h.b16 %v3931
      %v3968 = vunpack.c.l.b16 %v3932
      %v3969 = vunpack.c.h.b16 %v3932
      %v3970 = vunpack.c.l.b16 %v3933
      %v3971 = vunpack.c.h.b16 %v3933
      %v3972 = vunpack.c.l.b16 %v3934
      %v3973 = vunpack.c.h.b16 %v3934
      %v3974 = vunpack.c.l.b16 %v3935
      %v3975 = vunpack.c.h.b16 %v3935
      %v3976 = vunpack.c.l.b16 %v3936
      %v3977 = vunpack.c.h.b16 %v3936
      %v3978 = vunpack.c.l.b16 %v3937
      %v3979 = vunpack.c.h.b16 %v3937
      %v3980 = vunpack.c.l.b16 %v3938
      %v3981 = vunpack.c.h.b16 %v3938
      %v3982 = vunpack.c.l.b16 %v3939
      %v3983 = vunpack.c.h.b16 %v3939
      %v3984 = vunpack.c.l.b16 %v3940
      %v3985 = vunpack.c.h.b16 %v3940
      %v3986 = vunpack.c.l.b16 %v3941
      %v3987 = vunpack.c.h.b16 %v3941
      %v3988 = vunpack.c.l.b16 %v3942
      %v3989 = vunpack.c.h.b16 %v3942
      %v3990 = vunpack.c.l.b16 %v3943
      %v3991 = vunpack.c.h.b16 %v3943
      %v3992 = vpack.c.b16 %v3962, %v3960
      %v3993 = vpack.c.b16 %v3963, %v3961
      %v3994 = vpack.c.b16 %v3966, %v3964
      %v3995 = vpack.c.b16 %v3967, %v3965
      %v3996 = vpack.c.b16 %v3970, %v3968
      %v3997 = vpack.c.b16 %v3971, %v3969
      %v3998 = vpack.c.b16 %v3974, %v3972
      %v3999 = vpack.c.b16 %v3975, %v3973
      %v4000 = vpack.c.b16 %v3978, %v3976
      %v4001 = vpack.c.b16 %v3979, %v3977
      %v4002 = vpack.c.b16 %v3982, %v3980
      %v4003 = vpack.c.b16 %v3983, %v3981
      %v4004 = vpack.c.b16 %v3986, %v3984
      %v4005 = vpack.c.b16 %v3987, %v3985
      %v4006 = vpack.c.b16 %v3990, %v3988
      %v4007 = vpack.c.b16 %v3991, %v3989
      %4024 = vmatpush.bf16.msra.mxu0 %v4006
      %4025 = vmatpush.bf16.msra.mxu0 %v4004
      %4026 = vmatpush.bf16.msra.mxu0 %v4002
      %4027 = vmatpush.bf16.msra.mxu0 %v4000
      %4028 = vmatpush.bf16.msra.mxu0 %v3998
      %4029 = vmatpush.bf16.msra.mxu0 %v3996
      %4030 = vmatpush.bf16.msra.mxu0 %v3994
      %4031 = vmatpush.bf16.msra.mxu0 %v3992
      %4032 = vmatmul.bf16.gmra.mxu0 %v2423
      %v4033 = vpop.f32.mrf.mxu0
      %v4034 = vadd.f32 0.0, %v4033
      %v4035 = vpop.f32.mrf.mxu0
      %4036 = vdwg.mxu0
      %4037 = vmatpush.bf16.msra.mxu0 %v4007
      %4038 = vmatpush.bf16.msra.mxu0 %v4005
      %4039 = vmatpush.bf16.msra.mxu0 %v4003
      %4040 = vmatpush.bf16.msra.mxu0 %v4001
      %4041 = vmatpush.bf16.msra.mxu0 %v3999
      %4042 = vmatpush.bf16.msra.mxu0 %v3997
      %4043 = vmatpush.bf16.msra.mxu0 %v3995
      %4044 = vmatpush.bf16.msra.mxu0 %v3993
      %4045 = vmatmul.bf16.gmra.mxu0 %v2423
      %v4046 = vpop.f32.mrf.mxu0
      %v4047 = vadd.f32 0.0, %v4046
      %v4048 = vpop.f32.mrf.mxu0
      %4049 = vdwg.mxu0
      %v4050 = vadd.f32 %v3912, %v4034
      %v4051 = vadd.f32 %v3925, %v4047
      %v4052 = vld [vmem:[%s620] sm:$0xff]
      %v4053 = vld [vmem:[%s620 + $0x8] sm:$0xff]
      %v4054 = vld [vmem:[%s620 + $0x10] sm:$0xff]
      %v4055 = vld [vmem:[%s620 + $0x18] sm:$0xff]
      %v4056 = vld [vmem:[%s620 + $0x20] sm:$0xff]
      %v4057 = vld [vmem:[%s620 + $0x28] sm:$0xff]
      %v4058 = vld [vmem:[%s620 + $0x30] sm:$0xff]
      %v4059 = vld [vmem:[%s620 + $0x38] sm:$0xff]
      %v4060 = vld [vmem:[%s620 + $0x40] sm:$0xff]
      %v4061 = vld [vmem:[%s620 + $0x48] sm:$0xff]
      %v4062 = vld [vmem:[%s620 + $0x50] sm:$0xff]
      %v4063 = vld [vmem:[%s620 + $0x58] sm:$0xff]
      %v4064 = vld [vmem:[%s620 + $0x60] sm:$0xff]
      %v4065 = vld [vmem:[%s620 + $0x68] sm:$0xff]
      %v4066 = vld [vmem:[%s620 + $0x70] sm:$0xff]
      %v4067 = vld [vmem:[%s620 + $0x78] sm:$0xff]
      %v4084 = vunpack.c.l.b16 %v4052
      %v4085 = vunpack.c.h.b16 %v4052
      %v4086 = vunpack.c.l.b16 %v4053
      %v4087 = vunpack.c.h.b16 %v4053
      %v4088 = vunpack.c.l.b16 %v4054
      %v4089 = vunpack.c.h.b16 %v4054
      %v4090 = vunpack.c.l.b16 %v4055
      %v4091 = vunpack.c.h.b16 %v4055
      %v4092 = vunpack.c.l.b16 %v4056
      %v4093 = vunpack.c.h.b16 %v4056
      %v4094 = vunpack.c.l.b16 %v4057
      %v4095 = vunpack.c.h.b16 %v4057
      %v4096 = vunpack.c.l.b16 %v4058
      %v4097 = vunpack.c.h.b16 %v4058
      %v4098 = vunpack.c.l.b16 %v4059
      %v4099 = vunpack.c.h.b16 %v4059
      %v4100 = vunpack.c.l.b16 %v4060
      %v4101 = vunpack.c.h.b16 %v4060
      %v4102 = vunpack.c.l.b16 %v4061
      %v4103 = vunpack.c.h.b16 %v4061
      %v4104 = vunpack.c.l.b16 %v4062
      %v4105 = vunpack.c.h.b16 %v4062
      %v4106 = vunpack.c.l.b16 %v4063
      %v4107 = vunpack.c.h.b16 %v4063
      %v4108 = vunpack.c.l.b16 %v4064
      %v4109 = vunpack.c.h.b16 %v4064
      %v4110 = vunpack.c.l.b16 %v4065
      %v4111 = vunpack.c.h.b16 %v4065
      %v4112 = vunpack.c.l.b16 %v4066
      %v4113 = vunpack.c.h.b16 %v4066
      %v4114 = vunpack.c.l.b16 %v4067
      %v4115 = vunpack.c.h.b16 %v4067
      %v4116 = vpack.c.b16 %v4086, %v4084
      %v4117 = vpack.c.b16 %v4087, %v4085
      %v4118 = vpack.c.b16 %v4090, %v4088
      %v4119 = vpack.c.b16 %v4091, %v4089
      %v4120 = vpack.c.b16 %v4094, %v4092
      %v4121 = vpack.c.b16 %v4095, %v4093
      %v4122 = vpack.c.b16 %v4098, %v4096
      %v4123 = vpack.c.b16 %v4099, %v4097
      %v4124 = vpack.c.b16 %v4102, %v4100
      %v4125 = vpack.c.b16 %v4103, %v4101
      %v4126 = vpack.c.b16 %v4106, %v4104
      %v4127 = vpack.c.b16 %v4107, %v4105
      %v4128 = vpack.c.b16 %v4110, %v4108
      %v4129 = vpack.c.b16 %v4111, %v4109
      %v4130 = vpack.c.b16 %v4114, %v4112
      %v4131 = vpack.c.b16 %v4115, %v4113
      %4148 = vmatpush.bf16.msra.mxu0 %v4130
      %4149 = vmatpush.bf16.msra.mxu0 %v4128
      %4150 = vmatpush.bf16.msra.mxu0 %v4126
      %4151 = vmatpush.bf16.msra.mxu0 %v4124
      %4152 = vmatpush.bf16.msra.mxu0 %v4122
      %4153 = vmatpush.bf16.msra.mxu0 %v4120
      %4154 = vmatpush.bf16.msra.mxu0 %v4118
      %4155 = vmatpush.bf16.msra.mxu0 %v4116
      %4156 = vmatmul.bf16.gmra.mxu0 %v229
      %v4157 = vpop.f32.mrf.mxu0
      %v4158 = vadd.f32 0.0, %v4157
      %v4159 = vpop.f32.mrf.mxu0
      %4160 = vdwg.mxu0
      %4161 = vmatpush.bf16.msra.mxu0 %v4131
      %4162 = vmatpush.bf16.msra.mxu0 %v4129
      %4163 = vmatpush.bf16.msra.mxu0 %v4127
      %4164 = vmatpush.bf16.msra.mxu0 %v4125
      %4165 = vmatpush.bf16.msra.mxu0 %v4123
      %4166 = vmatpush.bf16.msra.mxu0 %v4121
      %4167 = vmatpush.bf16.msra.mxu0 %v4119
      %4168 = vmatpush.bf16.msra.mxu0 %v4117
      %4169 = vmatmul.bf16.gmra.mxu0 %v229
      %v4170 = vpop.f32.mrf.mxu0
      %v4171 = vadd.f32 0.0, %v4170
      %v4172 = vpop.f32.mrf.mxu0
      %4173 = vdwg.mxu0
      %v4174 = vadd.f32 %v4050, %v4158
      %v4175 = vadd.f32 %v4051, %v4171
      %v4176 = vld [vmem:[%s745] sm:$0xff]
      %v4177 = vld [vmem:[%s745 + $0x8] sm:$0xff]
      %v4178 = vld [vmem:[%s745 + $0x10] sm:$0xff]
      %v4179 = vld [vmem:[%s745 + $0x18] sm:$0xff]
      %v4180 = vld [vmem:[%s745 + $0x20] sm:$0xff]
      %v4181 = vld [vmem:[%s745 + $0x28] sm:$0xff]
      %v4182 = vld [vmem:[%s745 + $0x30] sm:$0xff]
      %v4183 = vld [vmem:[%s745 + $0x38] sm:$0xff]
      %v4184 = vld [vmem:[%s745 + $0x40] sm:$0xff]
      %v4185 = vld [vmem:[%s745 + $0x48] sm:$0xff]
      %v4186 = vld [vmem:[%s745 + $0x50] sm:$0xff]
      %v4187 = vld [vmem:[%s745 + $0x58] sm:$0xff]
      %v4188 = vld [vmem:[%s745 + $0x60] sm:$0xff]
      %v4189 = vld [vmem:[%s745 + $0x68] sm:$0xff]
      %v4190 = vld [vmem:[%s745 + $0x70] sm:$0xff]
      %v4191 = vld [vmem:[%s745 + $0x78] sm:$0xff]
      %v4208 = vunpack.c.l.b16 %v4176
      %v4209 = vunpack.c.h.b16 %v4176
      %v4210 = vunpack.c.l.b16 %v4177
      %v4211 = vunpack.c.h.b16 %v4177
      %v4212 = vunpack.c.l.b16 %v4178
      %v4213 = vunpack.c.h.b16 %v4178
      %v4214 = vunpack.c.l.b16 %v4179
      %v4215 = vunpack.c.h.b16 %v4179
      %v4216 = vunpack.c.l.b16 %v4180
      %v4217 = vunpack.c.h.b16 %v4180
      %v4218 = vunpack.c.l.b16 %v4181
      %v4219 = vunpack.c.h.b16 %v4181
      %v4220 = vunpack.c.l.b16 %v4182
      %v4221 = vunpack.c.h.b16 %v4182
      %v4222 = vunpack.c.l.b16 %v4183
      %v4223 = vunpack.c.h.b16 %v4183
      %v4224 = vunpack.c.l.b16 %v4184
      %v4225 = vunpack.c.h.b16 %v4184
      %v4226 = vunpack.c.l.b16 %v4185
      %v4227 = vunpack.c.h.b16 %v4185
      %v4228 = vunpack.c.l.b16 %v4186
      %v4229 = vunpack.c.h.b16 %v4186
      %v4230 = vunpack.c.l.b16 %v4187
      %v4231 = vunpack.c.h.b16 %v4187
      %v4232 = vunpack.c.l.b16 %v4188
      %v4233 = vunpack.c.h.b16 %v4188
      %v4234 = vunpack.c.l.b16 %v4189
      %v4235 = vunpack.c.h.b16 %v4189
      %v4236 = vunpack.c.l.b16 %v4190
      %v4237 = vunpack.c.h.b16 %v4190
      %v4238 = vunpack.c.l.b16 %v4191
      %v4239 = vunpack.c.h.b16 %v4191
      %v4240 = vpack.c.b16 %v4210, %v4208
      %v4241 = vpack.c.b16 %v4211, %v4209
      %v4242 = vpack.c.b16 %v4214, %v4212
      %v4243 = vpack.c.b16 %v4215, %v4213
      %v4244 = vpack.c.b16 %v4218, %v4216
      %v4245 = vpack.c.b16 %v4219, %v4217
      %v4246 = vpack.c.b16 %v4222, %v4220
      %v4247 = vpack.c.b16 %v4223, %v4221
      %v4248 = vpack.c.b16 %v4226, %v4224
      %v4249 = vpack.c.b16 %v4227, %v4225
      %v4250 = vpack.c.b16 %v4230, %v4228
      %v4251 = vpack.c.b16 %v4231, %v4229
      %v4252 = vpack.c.b16 %v4234, %v4232
      %v4253 = vpack.c.b16 %v4235, %v4233
      %v4254 = vpack.c.b16 %v4238, %v4236
      %v4255 = vpack.c.b16 %v4239, %v4237
      %4272 = vmatpush.bf16.msra.mxu0 %v4254
      %4273 = vmatpush.bf16.msra.mxu0 %v4252
      %4274 = vmatpush.bf16.msra.mxu0 %v4250
      %4275 = vmatpush.bf16.msra.mxu0 %v4248
      %4276 = vmatpush.bf16.msra.mxu0 %v4246
      %4277 = vmatpush.bf16.msra.mxu0 %v4244
      %4278 = vmatpush.bf16.msra.mxu0 %v4242
      %4279 = vmatpush.bf16.msra.mxu0 %v4240
      %4280 = vmatmul.bf16.gmra.mxu0 %v3435
      %v4281 = vpop.f32.mrf.mxu0
      %v4282 = vadd.f32 0.0, %v4281
      %v4283 = vpop.f32.mrf.mxu0
      %4284 = vdwg.mxu0
      %4285 = vmatpush.bf16.msra.mxu0 %v4255
      %4286 = vmatpush.bf16.msra.mxu0 %v4253
      %4287 = vmatpush.bf16.msra.mxu0 %v4251
      %4288 = vmatpush.bf16.msra.mxu0 %v4249
      %4289 = vmatpush.bf16.msra.mxu0 %v4247
      %4290 = vmatpush.bf16.msra.mxu0 %v4245
      %4291 = vmatpush.bf16.msra.mxu0 %v4243
      %4292 = vmatpush.bf16.msra.mxu0 %v4241
      %4293 = vmatmul.bf16.gmra.mxu0 %v3435
      %v4294 = vpop.f32.mrf.mxu0
      %v4295 = vadd.f32 0.0, %v4294
      %v4296 = vpop.f32.mrf.mxu0
      %4297 = vdwg.mxu0
      %v4298 = vadd.f32 %v4174, %v4282
      %v4299 = vadd.f32 %v4175, %v4295
      %v4300 = vld [vmem:[%s881] sm:$0xff]
      %v4301 = vld [vmem:[%s881 + $0x8] sm:$0xff]
      %v4302 = vld [vmem:[%s881 + $0x10] sm:$0xff]
      %v4303 = vld [vmem:[%s881 + $0x18] sm:$0xff]
      %v4304 = vld [vmem:[%s881 + $0x20] sm:$0xff]
      %v4305 = vld [vmem:[%s881 + $0x28] sm:$0xff]
      %v4306 = vld [vmem:[%s881 + $0x30] sm:$0xff]
      %v4307 = vld [vmem:[%s881 + $0x38] sm:$0xff]
      %v4308 = vld [vmem:[%s881 + $0x40] sm:$0xff]
      %v4309 = vld [vmem:[%s881 + $0x48] sm:$0xff]
      %v4310 = vld [vmem:[%s881 + $0x50] sm:$0xff]
      %v4311 = vld [vmem:[%s881 + $0x58] sm:$0xff]
      %v4312 = vld [vmem:[%s881 + $0x60] sm:$0xff]
      %v4313 = vld [vmem:[%s881 + $0x68] sm:$0xff]
      %v4314 = vld [vmem:[%s881 + $0x70] sm:$0xff]
      %v4315 = vld [vmem:[%s881 + $0x78] sm:$0xff]
      %v4332 = vunpack.c.l.b16 %v4300
      %v4333 = vunpack.c.h.b16 %v4300
      %v4334 = vunpack.c.l.b16 %v4301
      %v4335 = vunpack.c.h.b16 %v4301
      %v4336 = vunpack.c.l.b16 %v4302
      %v4337 = vunpack.c.h.b16 %v4302
      %v4338 = vunpack.c.l.b16 %v4303
      %v4339 = vunpack.c.h.b16 %v4303
      %v4340 = vunpack.c.l.b16 %v4304
      %v4341 = vunpack.c.h.b16 %v4304
      %v4342 = vunpack.c.l.b16 %v4305
      %v4343 = vunpack.c.h.b16 %v4305
      %v4344 = vunpack.c.l.b16 %v4306
      %v4345 = vunpack.c.h.b16 %v4306
      %v4346 = vunpack.c.l.b16 %v4307
      %v4347 = vunpack.c.h.b16 %v4307
      %v4348 = vunpack.c.l.b16 %v4308
      %v4349 = vunpack.c.h.b16 %v4308
      %v4350 = vunpack.c.l.b16 %v4309
      %v4351 = vunpack.c.h.b16 %v4309
      %v4352 = vunpack.c.l.b16 %v4310
      %v4353 = vunpack.c.h.b16 %v4310
      %v4354 = vunpack.c.l.b16 %v4311
      %v4355 = vunpack.c.h.b16 %v4311
      %v4356 = vunpack.c.l.b16 %v4312
      %v4357 = vunpack.c.h.b16 %v4312
      %v4358 = vunpack.c.l.b16 %v4313
      %v4359 = vunpack.c.h.b16 %v4313
      %v4360 = vunpack.c.l.b16 %v4314
      %v4361 = vunpack.c.h.b16 %v4314
      %v4362 = vunpack.c.l.b16 %v4315
      %v4363 = vunpack.c.h.b16 %v4315
      %v4364 = vpack.c.b16 %v4334, %v4332
      %v4365 = vpack.c.b16 %v4335, %v4333
      %v4366 = vpack.c.b16 %v4338, %v4336
      %v4367 = vpack.c.b16 %v4339, %v4337
      %v4368 = vpack.c.b16 %v4342, %v4340
      %v4369 = vpack.c.b16 %v4343, %v4341
      %v4370 = vpack.c.b16 %v4346, %v4344
      %v4371 = vpack.c.b16 %v4347, %v4345
      %v4372 = vpack.c.b16 %v4350, %v4348
      %v4373 = vpack.c.b16 %v4351, %v4349
      %v4374 = vpack.c.b16 %v4354, %v4352
      %v4375 = vpack.c.b16 %v4355, %v4353
      %v4376 = vpack.c.b16 %v4358, %v4356
      %v4377 = vpack.c.b16 %v4359, %v4357
      %v4378 = vpack.c.b16 %v4362, %v4360
      %v4379 = vpack.c.b16 %v4363, %v4361
      %4396 = vmatpush.bf16.msra.mxu0 %v4378
      %4397 = vmatpush.bf16.msra.mxu0 %v4376
      %4398 = vmatpush.bf16.msra.mxu0 %v4374
      %4399 = vmatpush.bf16.msra.mxu0 %v4372
      %4400 = vmatpush.bf16.msra.mxu0 %v4370
      %4401 = vmatpush.bf16.msra.mxu0 %v4368
      %4402 = vmatpush.bf16.msra.mxu0 %v4366
      %4403 = vmatpush.bf16.msra.mxu0 %v4364
      %4404 = vmatmul.bf16.gmra.mxu0 %v3561
      %v4405 = vpop.f32.mrf.mxu0
      %v4406 = vadd.f32 0.0, %v4405
      %v4407 = vpop.f32.mrf.mxu0
      %4408 = vdwg.mxu0
      %4409 = vmatpush.bf16.msra.mxu0 %v4379
      %4410 = vmatpush.bf16.msra.mxu0 %v4377
      %4411 = vmatpush.bf16.msra.mxu0 %v4375
      %4412 = vmatpush.bf16.msra.mxu0 %v4373
      %4413 = vmatpush.bf16.msra.mxu0 %v4371
      %4414 = vmatpush.bf16.msra.mxu0 %v4369
      %4415 = vmatpush.bf16.msra.mxu0 %v4367
      %4416 = vmatpush.bf16.msra.mxu0 %v4365
      %4417 = vmatmul.bf16.gmra.mxu0 %v3561
      %v4418 = vpop.f32.mrf.mxu0
      %v4419 = vadd.f32 0.0, %v4418
      %v4420 = vpop.f32.mrf.mxu0
      %4421 = vdwg.mxu0
      %v4422 = vadd.f32 %v4298, %v4406
      %v4423 = vadd.f32 %v4299, %v4419
      %v4424 = vld [vmem:[%s1008] sm:$0xff]
      %v4425 = vld [vmem:[%s1008 + $0x8] sm:$0xff]
      %v4426 = vld [vmem:[%s1008 + $0x10] sm:$0xff]
      %v4427 = vld [vmem:[%s1008 + $0x18] sm:$0xff]
      %v4428 = vld [vmem:[%s1008 + $0x20] sm:$0xff]
      %v4429 = vld [vmem:[%s1008 + $0x28] sm:$0xff]
      %v4430 = vld [vmem:[%s1008 + $0x30] sm:$0xff]
      %v4431 = vld [vmem:[%s1008 + $0x38] sm:$0xff]
      %v4432 = vld [vmem:[%s1008 + $0x40] sm:$0xff]
      %v4433 = vld [vmem:[%s1008 + $0x48] sm:$0xff]
      %v4434 = vld [vmem:[%s1008 + $0x50] sm:$0xff]
      %v4435 = vld [vmem:[%s1008 + $0x58] sm:$0xff]
      %v4436 = vld [vmem:[%s1008 + $0x60] sm:$0xff]
      %v4437 = vld [vmem:[%s1008 + $0x68] sm:$0xff]
      %v4438 = vld [vmem:[%s1008 + $0x70] sm:$0xff]
      %v4439 = vld [vmem:[%s1008 + $0x78] sm:$0xff]
      %v4456 = vunpack.c.l.b16 %v4424
      %v4457 = vunpack.c.h.b16 %v4424
      %v4458 = vunpack.c.l.b16 %v4425
      %v4459 = vunpack.c.h.b16 %v4425
      %v4460 = vunpack.c.l.b16 %v4426
      %v4461 = vunpack.c.h.b16 %v4426
      %v4462 = vunpack.c.l.b16 %v4427
      %v4463 = vunpack.c.h.b16 %v4427
      %v4464 = vunpack.c.l.b16 %v4428
      %v4465 = vunpack.c.h.b16 %v4428
      %v4466 = vunpack.c.l.b16 %v4429
      %v4467 = vunpack.c.h.b16 %v4429
      %v4468 = vunpack.c.l.b16 %v4430
      %v4469 = vunpack.c.h.b16 %v4430
      %v4470 = vunpack.c.l.b16 %v4431
      %v4471 = vunpack.c.h.b16 %v4431
      %v4472 = vunpack.c.l.b16 %v4432
      %v4473 = vunpack.c.h.b16 %v4432
      %v4474 = vunpack.c.l.b16 %v4433
      %v4475 = vunpack.c.h.b16 %v4433
      %v4476 = vunpack.c.l.b16 %v4434
      %v4477 = vunpack.c.h.b16 %v4434
      %v4478 = vunpack.c.l.b16 %v4435
      %v4479 = vunpack.c.h.b16 %v4435
      %v4480 = vunpack.c.l.b16 %v4436
      %v4481 = vunpack.c.h.b16 %v4436
      %v4482 = vunpack.c.l.b16 %v4437
      %v4483 = vunpack.c.h.b16 %v4437
      %v4484 = vunpack.c.l.b16 %v4438
      %v4485 = vunpack.c.h.b16 %v4438
      %v4486 = vunpack.c.l.b16 %v4439
      %v4487 = vunpack.c.h.b16 %v4439
      %v4488 = vpack.c.b16 %v4458, %v4456
      %v4489 = vpack.c.b16 %v4459, %v4457
      %v4490 = vpack.c.b16 %v4462, %v4460
      %v4491 = vpack.c.b16 %v4463, %v4461
      %v4492 = vpack.c.b16 %v4466, %v4464
      %v4493 = vpack.c.b16 %v4467, %v4465
      %v4494 = vpack.c.b16 %v4470, %v4468
      %v4495 = vpack.c.b16 %v4471, %v4469
      %v4496 = vpack.c.b16 %v4474, %v4472
      %v4497 = vpack.c.b16 %v4475, %v4473
      %v4498 = vpack.c.b16 %v4478, %v4476
      %v4499 = vpack.c.b16 %v4479, %v4477
      %v4500 = vpack.c.b16 %v4482, %v4480
      %v4501 = vpack.c.b16 %v4483, %v4481
      %v4502 = vpack.c.b16 %v4486, %v4484
      %v4503 = vpack.c.b16 %v4487, %v4485
      %4520 = vmatpush.bf16.msra.mxu0 %v4502
      %4521 = vmatpush.bf16.msra.mxu0 %v4500
      %4522 = vmatpush.bf16.msra.mxu0 %v4498
      %4523 = vmatpush.bf16.msra.mxu0 %v4496
      %4524 = vmatpush.bf16.msra.mxu0 %v4494
      %4525 = vmatpush.bf16.msra.mxu0 %v4492
      %4526 = vmatpush.bf16.msra.mxu0 %v4490
      %4527 = vmatpush.bf16.msra.mxu0 %v4488
      %4528 = vmatmul.bf16.gmra.mxu0 %v230
      %v4529 = vpop.f32.mrf.mxu0
      %v4530 = vadd.f32 0.0, %v4529
      %v4531 = vpop.f32.mrf.mxu0
      %4532 = vdwg.mxu0
      %4533 = vmatpush.bf16.msra.mxu0 %v4503
      %4534 = vmatpush.bf16.msra.mxu0 %v4501
      %4535 = vmatpush.bf16.msra.mxu0 %v4499
      %4536 = vmatpush.bf16.msra.mxu0 %v4497
      %4537 = vmatpush.bf16.msra.mxu0 %v4495
      %4538 = vmatpush.bf16.msra.mxu0 %v4493
      %4539 = vmatpush.bf16.msra.mxu0 %v4491
      %4540 = vmatpush.bf16.msra.mxu0 %v4489
      %4541 = vmatmul.bf16.gmra.mxu0 %v230
      %v4542 = vpop.f32.mrf.mxu0
      %v4543 = vadd.f32 0.0, %v4542
      %v4544 = vpop.f32.mrf.mxu0
      %4545 = vdwg.mxu0
      %v4546 = vadd.f32 %v4422, %v4530
      %v4547 = vadd.f32 %v4423, %v4543
      %v4548 = vld [vmem:[%s1133] sm:$0xff]
      %v4549 = vld [vmem:[%s1133 + $0x8] sm:$0xff]
      %v4550 = vld [vmem:[%s1133 + $0x10] sm:$0xff]
      %v4551 = vld [vmem:[%s1133 + $0x18] sm:$0xff]
      %v4552 = vld [vmem:[%s1133 + $0x20] sm:$0xff]
      %v4553 = vld [vmem:[%s1133 + $0x28] sm:$0xff]
      %v4554 = vld [vmem:[%s1133 + $0x30] sm:$0xff]
      %v4555 = vld [vmem:[%s1133 + $0x38] sm:$0xff]
      %v4556 = vld [vmem:[%s1133 + $0x40] sm:$0xff]
      %v4557 = vld [vmem:[%s1133 + $0x48] sm:$0xff]
      %v4558 = vld [vmem:[%s1133 + $0x50] sm:$0xff]
      %v4559 = vld [vmem:[%s1133 + $0x58] sm:$0xff]
      %v4560 = vld [vmem:[%s1133 + $0x60] sm:$0xff]
      %v4561 = vld [vmem:[%s1133 + $0x68] sm:$0xff]
      %v4562 = vld [vmem:[%s1133 + $0x70] sm:$0xff]
      %v4563 = vld [vmem:[%s1133 + $0x78] sm:$0xff]
      %v4565 = vunpack.c.l.b16 %v230
      %v4566 = vpack.c.b16 %v4565, %v4565
      %v4568 = vshrl.u32 %v4566, 16
      %v4570 = vshll.u32 %v4566, 16
      %v4572 = vrot.slane %v4570, 1
      %v4573 = vor.u32 %v4568, %v4572
      %v4591 = vunpack.c.l.b16 %v4548
      %v4592 = vunpack.c.h.b16 %v4548
      %v4593 = vunpack.c.l.b16 %v4549
      %v4594 = vunpack.c.h.b16 %v4549
      %v4595 = vunpack.c.l.b16 %v4550
      %v4596 = vunpack.c.h.b16 %v4550
      %v4597 = vunpack.c.l.b16 %v4551
      %v4598 = vunpack.c.h.b16 %v4551
      %v4599 = vunpack.c.l.b16 %v4552
      %v4600 = vunpack.c.h.b16 %v4552
      %v4601 = vunpack.c.l.b16 %v4553
      %v4602 = vunpack.c.h.b16 %v4553
      %v4603 = vunpack.c.l.b16 %v4554
      %v4604 = vunpack.c.h.b16 %v4554
      %v4605 = vunpack.c.l.b16 %v4555
      %v4606 = vunpack.c.h.b16 %v4555
      %v4607 = vunpack.c.l.b16 %v4556
      %v4608 = vunpack.c.h.b16 %v4556
      %v4609 = vunpack.c.l.b16 %v4557
      %v4610 = vunpack.c.h.b16 %v4557
      %v4611 = vunpack.c.l.b16 %v4558
      %v4612 = vunpack.c.h.b16 %v4558
      %v4613 = vunpack.c.l.b16 %v4559
      %v4614 = vunpack.c.h.b16 %v4559
      %v4615 = vunpack.c.l.b16 %v4560
      %v4616 = vunpack.c.h.b16 %v4560
      %v4617 = vunpack.c.l.b16 %v4561
      %v4618 = vunpack.c.h.b16 %v4561
      %v4619 = vunpack.c.l.b16 %v4562
      %v4620 = vunpack.c.h.b16 %v4562
      %v4621 = vunpack.c.l.b16 %v4563
      %v4622 = vunpack.c.h.b16 %v4563
      %v4623 = vpack.c.b16 %v4593, %v4591
      %v4624 = vpack.c.b16 %v4594, %v4592
      %v4625 = vpack.c.b16 %v4597, %v4595
      %v4626 = vpack.c.b16 %v4598, %v4596
      %v4627 = vpack.c.b16 %v4601, %v4599
      %v4628 = vpack.c.b16 %v4602, %v4600
      %v4629 = vpack.c.b16 %v4605, %v4603
      %v4630 = vpack.c.b16 %v4606, %v4604
      %v4631 = vpack.c.b16 %v4609, %v4607
      %v4632 = vpack.c.b16 %v4610, %v4608
      %v4633 = vpack.c.b16 %v4613, %v4611
      %v4634 = vpack.c.b16 %v4614, %v4612
      %v4635 = vpack.c.b16 %v4617, %v4615
      %v4636 = vpack.c.b16 %v4618, %v4616
      %v4637 = vpack.c.b16 %v4621, %v4619
      %v4638 = vpack.c.b16 %v4622, %v4620
      %4655 = vmatpush.bf16.msra.mxu0 %v4637
      %4656 = vmatpush.bf16.msra.mxu0 %v4635
      %4657 = vmatpush.bf16.msra.mxu0 %v4633
      %4658 = vmatpush.bf16.msra.mxu0 %v4631
      %4659 = vmatpush.bf16.msra.mxu0 %v4629
      %4660 = vmatpush.bf16.msra.mxu0 %v4627
      %4661 = vmatpush.bf16.msra.mxu0 %v4625
      %4662 = vmatpush.bf16.msra.mxu0 %v4623
      %4663 = vmatmul.bf16.gmra.mxu0 %v4573
      %v4664 = vpop.f32.mrf.mxu0
      %v4665 = vadd.f32 0.0, %v4664
      %v4666 = vpop.f32.mrf.mxu0
      %4667 = vdwg.mxu0
      %4668 = vmatpush.bf16.msra.mxu0 %v4638
      %4669 = vmatpush.bf16.msra.mxu0 %v4636
      %4670 = vmatpush.bf16.msra.mxu0 %v4634
      %4671 = vmatpush.bf16.msra.mxu0 %v4632
      %4672 = vmatpush.bf16.msra.mxu0 %v4630
      %4673 = vmatpush.bf16.msra.mxu0 %v4628
      %4674 = vmatpush.bf16.msra.mxu0 %v4626
      %4675 = vmatpush.bf16.msra.mxu0 %v4624
      %4676 = vmatmul.bf16.gmra.mxu0 %v4573
      %v4677 = vpop.f32.mrf.mxu0
      %v4678 = vadd.f32 0.0, %v4677
      %v4679 = vpop.f32.mrf.mxu0
      %4680 = vdwg.mxu0
      %v4681 = vadd.f32 %v4546, %v4665
      %v4682 = vadd.f32 %v4547, %v4678
      %v4683 = vld [vmem:[%s1269] sm:$0xff]
      %v4684 = vld [vmem:[%s1269 + $0x8] sm:$0xff]
      %v4685 = vld [vmem:[%s1269 + $0x10] sm:$0xff]
      %v4686 = vld [vmem:[%s1269 + $0x18] sm:$0xff]
      %v4687 = vld [vmem:[%s1269 + $0x20] sm:$0xff]
      %v4688 = vld [vmem:[%s1269 + $0x28] sm:$0xff]
      %v4689 = vld [vmem:[%s1269 + $0x30] sm:$0xff]
      %v4690 = vld [vmem:[%s1269 + $0x38] sm:$0xff]
      %v4691 = vld [vmem:[%s1269 + $0x40] sm:$0xff]
      %v4692 = vld [vmem:[%s1269 + $0x48] sm:$0xff]
      %v4693 = vld [vmem:[%s1269 + $0x50] sm:$0xff]
      %v4694 = vld [vmem:[%s1269 + $0x58] sm:$0xff]
      %v4695 = vld [vmem:[%s1269 + $0x60] sm:$0xff]
      %v4696 = vld [vmem:[%s1269 + $0x68] sm:$0xff]
      %v4697 = vld [vmem:[%s1269 + $0x70] sm:$0xff]
      %v4698 = vld [vmem:[%s1269 + $0x78] sm:$0xff]
      %v4699 = vrot.slane %v4566, 1
      %v4717 = vunpack.c.l.b16 %v4683
      %v4718 = vunpack.c.h.b16 %v4683
      %v4719 = vunpack.c.l.b16 %v4684
      %v4720 = vunpack.c.h.b16 %v4684
      %v4721 = vunpack.c.l.b16 %v4685
      %v4722 = vunpack.c.h.b16 %v4685
      %v4723 = vunpack.c.l.b16 %v4686
      %v4724 = vunpack.c.h.b16 %v4686
      %v4725 = vunpack.c.l.b16 %v4687
      %v4726 = vunpack.c.h.b16 %v4687
      %v4727 = vunpack.c.l.b16 %v4688
      %v4728 = vunpack.c.h.b16 %v4688
      %v4729 = vunpack.c.l.b16 %v4689
      %v4730 = vunpack.c.h.b16 %v4689
      %v4731 = vunpack.c.l.b16 %v4690
      %v4732 = vunpack.c.h.b16 %v4690
      %v4733 = vunpack.c.l.b16 %v4691
      %v4734 = vunpack.c.h.b16 %v4691
      %v4735 = vunpack.c.l.b16 %v4692
      %v4736 = vunpack.c.h.b16 %v4692
      %v4737 = vunpack.c.l.b16 %v4693
      %v4738 = vunpack.c.h.b16 %v4693
      %v4739 = vunpack.c.l.b16 %v4694
      %v4740 = vunpack.c.h.b16 %v4694
      %v4741 = vunpack.c.l.b16 %v4695
      %v4742 = vunpack.c.h.b16 %v4695
      %v4743 = vunpack.c.l.b16 %v4696
      %v4744 = vunpack.c.h.b16 %v4696
      %v4745 = vunpack.c.l.b16 %v4697
      %v4746 = vunpack.c.h.b16 %v4697
      %v4747 = vunpack.c.l.b16 %v4698
      %v4748 = vunpack.c.h.b16 %v4698
      %v4749 = vpack.c.b16 %v4719, %v4717
      %v4750 = vpack.c.b16 %v4720, %v4718
      %v4751 = vpack.c.b16 %v4723, %v4721
      %v4752 = vpack.c.b16 %v4724, %v4722
      %v4753 = vpack.c.b16 %v4727, %v4725
      %v4754 = vpack.c.b16 %v4728, %v4726
      %v4755 = vpack.c.b16 %v4731, %v4729
      %v4756 = vpack.c.b16 %v4732, %v4730
      %v4757 = vpack.c.b16 %v4735, %v4733
      %v4758 = vpack.c.b16 %v4736, %v4734
      %v4759 = vpack.c.b16 %v4739, %v4737
      %v4760 = vpack.c.b16 %v4740, %v4738
      %v4761 = vpack.c.b16 %v4743, %v4741
      %v4762 = vpack.c.b16 %v4744, %v4742
      %v4763 = vpack.c.b16 %v4747, %v4745
      %v4764 = vpack.c.b16 %v4748, %v4746
      %4781 = vmatpush.bf16.msra.mxu0 %v4763
      %4782 = vmatpush.bf16.msra.mxu0 %v4761
      %4783 = vmatpush.bf16.msra.mxu0 %v4759
      %4784 = vmatpush.bf16.msra.mxu0 %v4757
      %4785 = vmatpush.bf16.msra.mxu0 %v4755
      %4786 = vmatpush.bf16.msra.mxu0 %v4753
      %4787 = vmatpush.bf16.msra.mxu0 %v4751
      %4788 = vmatpush.bf16.msra.mxu0 %v4749
      %4789 = vmatmul.bf16.gmra.mxu0 %v4699
      %v4790 = vpop.f32.mrf.mxu0
      %v4791 = vadd.f32 0.0, %v4790
      %v4792 = vpop.f32.mrf.mxu0
      %4793 = vdwg.mxu0
      %4794 = vmatpush.bf16.msra.mxu0 %v4764
      %4795 = vmatpush.bf16.msra.mxu0 %v4762
      %4796 = vmatpush.bf16.msra.mxu0 %v4760
      %4797 = vmatpush.bf16.msra.mxu0 %v4758
      %4798 = vmatpush.bf16.msra.mxu0 %v4756
      %4799 = vmatpush.bf16.msra.mxu0 %v4754
      %4800 = vmatpush.bf16.msra.mxu0 %v4752
      %4801 = vmatpush.bf16.msra.mxu0 %v4750
      %4802 = vmatmul.bf16.gmra.mxu0 %v4699
      %v4803 = vpop.f32.mrf.mxu0
      %v4804 = vadd.f32 0.0, %v4803
      %v4805 = vpop.f32.mrf.mxu0
      %4806 = vdwg.mxu0
      %v4807 = vadd.f32 %v4681, %v4791
      %v4808 = vadd.f32 %v4682, %v4804
      %v4809 = vld [vmem:[%s2] sm:$0x3]
      %v4811 = vperm.slane %v4809, 0
      %v4812 = vperm.slane %v4809, 1
      %v4815 = vadd.f32 %v4807, %v4811
      %v4816 = vadd.f32 %v4808, %v4812
      %v4817 = vmax.f32 %v4815, 0.0
      %s4818 = scalar_lea.vmem [#allocation2], 32
      %4819 = vst [vmem:[%s4818 + $0x1] sm:$0xf] %v4817
      %s4820 = scalar_lea.vmem [#allocation3], 12
      %4821 = vst [vmem:[%s4820] sm:$0xf] %v4816
      %v4822 = vld [vmem:[#allocation2] sm:$0x3f]
      %v4823 = vpack.c.bf16 %v4822, %v4822
      %v4824 = vld [vmem:[%s3] sm:$0xf]
      %v4825 = vld [vmem:[%s3 + $0x4] sm:$0xf]
      %v4826 = vld [vmem:[%s3 + $0x8] sm:$0xf]
      %v4827 = vld [vmem:[%s3 + $0xc] sm:$0xf]
      %v4828 = vld [vmem:[%s3 + $0x10] sm:$0xf]
      %v4829 = vld [vmem:[%s3 + $0x14] sm:$0xf]
      %v4830 = vld [vmem:[%s3 + $0x18] sm:$0xf]
      %v4831 = vld [vmem:[%s3 + $0x1c] sm:$0xf]
      %v4832 = vld [vmem:[%s3 + $0x20] sm:$0xf]
      %v4833 = vld [vmem:[%s3 + $0x24] sm:$0xf]
      %v4834 = vld [vmem:[%s3 + $0x28] sm:$0xf]
      %v4835 = vld [vmem:[%s3 + $0x2c] sm:$0xf]
      %v4836 = vld [vmem:[%s3 + $0x30] sm:$0xf]
      %v4837 = vld [vmem:[%s3 + $0x34] sm:$0xf]
      %v4838 = vld [vmem:[%s3 + $0x38] sm:$0xf]
      %v4839 = vld [vmem:[%s3 + $0x3c] sm:$0xf]
      %s4840 = scalar_lea.vmem %s3, 64
      %v4841 = vld [vmem:[%s4840] sm:$0xf]
      %v4842 = vld [vmem:[%s4840 + $0x4] sm:$0xf]
      %v4843 = vld [vmem:[%s4840 + $0x8] sm:$0xf]
      %v4844 = vld [vmem:[%s4840 + $0xc] sm:$0xf]
      %v4845 = vld [vmem:[%s4840 + $0x10] sm:$0xf]
      %v4846 = vld [vmem:[%s4840 + $0x14] sm:$0xf]
      %v4847 = vld [vmem:[%s4840 + $0x18] sm:$0xf]
      %v4848 = vld [vmem:[%s4840 + $0x1c] sm:$0xf]
      %v4849 = vld [vmem:[%s4840 + $0x20] sm:$0xf]
      %v4850 = vld [vmem:[%s4840 + $0x24] sm:$0xf]
      %v4851 = vld [vmem:[%s4840 + $0x28] sm:$0xf]
      %v4852 = vld [vmem:[%s4840 + $0x2c] sm:$0xf]
      %v4853 = vld [vmem:[%s4840 + $0x30] sm:$0xf]
      %v4854 = vld [vmem:[%s4840 + $0x34] sm:$0xf]
      %v4855 = vld [vmem:[%s4840 + $0x38] sm:$0xf]
      %v4856 = vld [vmem:[%s4840 + $0x3c] sm:$0xf]
      %v4858 = vshrl.u32 %v4823, 16
      %v4860 = vshll.u32 %v4823, 16
      %v4862 = vrot.slane %v4860, 1
      %v4863 = vor.u32 %v4858, %v4862
      %v4881 = vunpack.c.l.b16 %v4841
      %v4882 = vunpack.c.l.b16 %v4842
      %v4883 = vunpack.c.l.b16 %v4843
      %v4884 = vunpack.c.l.b16 %v4844
      %v4885 = vunpack.c.l.b16 %v4845
      %v4886 = vunpack.c.l.b16 %v4846
      %v4887 = vunpack.c.l.b16 %v4847
      %v4888 = vunpack.c.l.b16 %v4848
      %v4889 = vunpack.c.l.b16 %v4849
      %v4890 = vunpack.c.l.b16 %v4850
      %v4891 = vunpack.c.l.b16 %v4851
      %v4892 = vunpack.c.l.b16 %v4852
      %v4893 = vunpack.c.l.b16 %v4853
      %v4894 = vunpack.c.l.b16 %v4854
      %v4895 = vunpack.c.l.b16 %v4855
      %v4896 = vunpack.c.l.b16 %v4856
      %v4897 = vpack.c.b16 %v4882, %v4881
      %v4898 = vpack.c.b16 %v4884, %v4883
      %v4899 = vpack.c.b16 %v4886, %v4885
      %v4900 = vpack.c.b16 %v4888, %v4887
      %v4901 = vpack.c.b16 %v4890, %v4889
      %v4902 = vpack.c.b16 %v4892, %v4891
      %v4903 = vpack.c.b16 %v4894, %v4893
      %v4904 = vpack.c.b16 %v4896, %v4895
      %4913 = vmatpush.bf16.msra.mxu0 %v4904
      %4914 = vmatpush.bf16.msra.mxu0 %v4903
      %4915 = vmatpush.bf16.msra.mxu0 %v4902
      %4916 = vmatpush.bf16.msra.mxu0 %v4901
      %4917 = vmatpush.bf16.msra.mxu0 %v4900
      %4918 = vmatpush.bf16.msra.mxu0 %v4899
      %4919 = vmatpush.bf16.msra.mxu0 %v4898
      %4920 = vmatpush.bf16.msra.mxu0 %v4897
      %4921 = vmatmul.bf16.gmra.mxu0 %v4863
      %v4922 = vpop.f32.mrf.mxu0
      %v4923 = vadd.f32 0.0, %v4922
      %v4924 = vpop.f32.mrf.mxu0
      %4925 = vdwg.mxu0
      %v4942 = vunpack.c.l.b16 %v4824
      %v4943 = vunpack.c.l.b16 %v4825
      %v4944 = vunpack.c.l.b16 %v4826
      %v4945 = vunpack.c.l.b16 %v4827
      %v4946 = vunpack.c.l.b16 %v4828
      %v4947 = vunpack.c.l.b16 %v4829
      %v4948 = vunpack.c.l.b16 %v4830
      %v4949 = vunpack.c.l.b16 %v4831
      %v4950 = vunpack.c.l.b16 %v4832
      %v4951 = vunpack.c.l.b16 %v4833
      %v4952 = vunpack.c.l.b16 %v4834
      %v4953 = vunpack.c.l.b16 %v4835
      %v4954 = vunpack.c.l.b16 %v4836
      %v4955 = vunpack.c.l.b16 %v4837
      %v4956 = vunpack.c.l.b16 %v4838
      %v4957 = vunpack.c.l.b16 %v4839
      %v4958 = vpack.c.b16 %v4943, %v4942
      %v4959 = vpack.c.b16 %v4945, %v4944
      %v4960 = vpack.c.b16 %v4947, %v4946
      %v4961 = vpack.c.b16 %v4949, %v4948
      %v4962 = vpack.c.b16 %v4951, %v4950
      %v4963 = vpack.c.b16 %v4953, %v4952
      %v4964 = vpack.c.b16 %v4955, %v4954
      %v4965 = vpack.c.b16 %v4957, %v4956
      %4974 = vmatpush.bf16.msra.mxu0 %v4965
      %4975 = vmatpush.bf16.msra.mxu0 %v4964
      %4976 = vmatpush.bf16.msra.mxu0 %v4963
      %4977 = vmatpush.bf16.msra.mxu0 %v4962
      %4978 = vmatpush.bf16.msra.mxu0 %v4961
      %4979 = vmatpush.bf16.msra.mxu0 %v4960
      %4980 = vmatpush.bf16.msra.mxu0 %v4959
      %4981 = vmatpush.bf16.msra.mxu0 %v4958
      %4982 = vmatmul.bf16.gmra.mxu0 %v4823
      %v4983 = vpop.f32.mrf.mxu0
      %v4984 = vadd.f32 %v4923, %v4983
      %v4985 = vpop.f32.mrf.mxu0
      %4986 = vdwg.mxu0
      %s4987 = scalar_lea.vmem %s3, 128
      %v4988 = vld [vmem:[%s4987] sm:$0xf]
      %v4989 = vld [vmem:[%s4987 + $0x4] sm:$0xf]
      %v4990 = vld [vmem:[%s4987 + $0x8] sm:$0xf]
      %v4991 = vld [vmem:[%s4987 + $0xc] sm:$0xf]
      %v4992 = vld [vmem:[%s4987 + $0x10] sm:$0xf]
      %v4993 = vld [vmem:[%s4987 + $0x14] sm:$0xf]
      %v4994 = vld [vmem:[%s4987 + $0x18] sm:$0xf]
      %v4995 = vld [vmem:[%s4987 + $0x1c] sm:$0xf]
      %v4996 = vld [vmem:[%s4987 + $0x20] sm:$0xf]
      %v4997 = vld [vmem:[%s4987 + $0x24] sm:$0xf]
      %v4998 = vld [vmem:[%s4987 + $0x28] sm:$0xf]
      %v4999 = vld [vmem:[%s4987 + $0x2c] sm:$0xf]
      %v5000 = vld [vmem:[%s4987 + $0x30] sm:$0xf]
      %v5001 = vld [vmem:[%s4987 + $0x34] sm:$0xf]
      %v5002 = vld [vmem:[%s4987 + $0x38] sm:$0xf]
      %v5003 = vld [vmem:[%s4987 + $0x3c] sm:$0xf]
      %v5005 = vrot.slane %v4823, 1
      %v5023 = vunpack.c.l.b16 %v4988
      %v5024 = vunpack.c.l.b16 %v4989
      %v5025 = vunpack.c.l.b16 %v4990
      %v5026 = vunpack.c.l.b16 %v4991
      %v5027 = vunpack.c.l.b16 %v4992
      %v5028 = vunpack.c.l.b16 %v4993
      %v5029 = vunpack.c.l.b16 %v4994
      %v5030 = vunpack.c.l.b16 %v4995
      %v5031 = vunpack.c.l.b16 %v4996
      %v5032 = vunpack.c.l.b16 %v4997
      %v5033 = vunpack.c.l.b16 %v4998
      %v5034 = vunpack.c.l.b16 %v4999
      %v5035 = vunpack.c.l.b16 %v5000
      %v5036 = vunpack.c.l.b16 %v5001
      %v5037 = vunpack.c.l.b16 %v5002
      %v5038 = vunpack.c.l.b16 %v5003
      %v5039 = vpack.c.b16 %v5024, %v5023
      %v5040 = vpack.c.b16 %v5026, %v5025
      %v5041 = vpack.c.b16 %v5028, %v5027
      %v5042 = vpack.c.b16 %v5030, %v5029
      %v5043 = vpack.c.b16 %v5032, %v5031
      %v5044 = vpack.c.b16 %v5034, %v5033
      %v5045 = vpack.c.b16 %v5036, %v5035
      %v5046 = vpack.c.b16 %v5038, %v5037
      %5055 = vmatpush.bf16.msra.mxu0 %v5046
      %5056 = vmatpush.bf16.msra.mxu0 %v5045
      %5057 = vmatpush.bf16.msra.mxu0 %v5044
      %5058 = vmatpush.bf16.msra.mxu0 %v5043
      %5059 = vmatpush.bf16.msra.mxu0 %v5042
      %5060 = vmatpush.bf16.msra.mxu0 %v5041
      %5061 = vmatpush.bf16.msra.mxu0 %v5040
      %5062 = vmatpush.bf16.msra.mxu0 %v5039
      %5063 = vmatmul.bf16.gmra.mxu0 %v5005
      %v5064 = vpop.f32.mrf.mxu0
      %v5065 = vadd.f32 0.0, %v5064
      %v5066 = vpop.f32.mrf.mxu0
      %5067 = vdwg.mxu0
      %v5068 = vadd.f32 %v4984, %v5065
      %v5069 = vld [vmem:[%s1405] sm:$0x3f]
      %v5070 = vpack.c.bf16 %v5069, %v5069
      %s5071 = scalar_lea.vmem %s3, 192
      %v5072 = vld [vmem:[%s5071] sm:$0xf]
      %v5073 = vld [vmem:[%s5071 + $0x4] sm:$0xf]
      %v5074 = vld [vmem:[%s5071 + $0x8] sm:$0xf]
      %v5075 = vld [vmem:[%s5071 + $0xc] sm:$0xf]
      %v5076 = vld [vmem:[%s5071 + $0x10] sm:$0xf]
      %v5077 = vld [vmem:[%s5071 + $0x14] sm:$0xf]
      %v5078 = vld [vmem:[%s5071 + $0x18] sm:$0xf]
      %v5079 = vld [vmem:[%s5071 + $0x1c] sm:$0xf]
      %v5080 = vld [vmem:[%s5071 + $0x20] sm:$0xf]
      %v5081 = vld [vmem:[%s5071 + $0x24] sm:$0xf]
      %v5082 = vld [vmem:[%s5071 + $0x28] sm:$0xf]
      %v5083 = vld [vmem:[%s5071 + $0x2c] sm:$0xf]
      %v5084 = vld [vmem:[%s5071 + $0x30] sm:$0xf]
      %v5085 = vld [vmem:[%s5071 + $0x34] sm:$0xf]
      %v5086 = vld [vmem:[%s5071 + $0x38] sm:$0xf]
      %v5087 = vld [vmem:[%s5071 + $0x3c] sm:$0xf]
      %v5104 = vunpack.c.l.b16 %v5072
      %v5105 = vunpack.c.l.b16 %v5073
      %v5106 = vunpack.c.l.b16 %v5074
      %v5107 = vunpack.c.l.b16 %v5075
      %v5108 = vunpack.c.l.b16 %v5076
      %v5109 = vunpack.c.l.b16 %v5077
      %v5110 = vunpack.c.l.b16 %v5078
      %v5111 = vunpack.c.l.b16 %v5079
      %v5112 = vunpack.c.l.b16 %v5080
      %v5113 = vunpack.c.l.b16 %v5081
      %v5114 = vunpack.c.l.b16 %v5082
      %v5115 = vunpack.c.l.b16 %v5083
      %v5116 = vunpack.c.l.b16 %v5084
      %v5117 = vunpack.c.l.b16 %v5085
      %v5118 = vunpack.c.l.b16 %v5086
      %v5119 = vunpack.c.l.b16 %v5087
      %v5120 = vpack.c.b16 %v5105, %v5104
      %v5121 = vpack.c.b16 %v5107, %v5106
      %v5122 = vpack.c.b16 %v5109, %v5108
      %v5123 = vpack.c.b16 %v5111, %v5110
      %v5124 = vpack.c.b16 %v5113, %v5112
      %v5125 = vpack.c.b16 %v5115, %v5114
      %v5126 = vpack.c.b16 %v5117, %v5116
      %v5127 = vpack.c.b16 %v5119, %v5118
      %5136 = vmatpush.bf16.msra.mxu0 %v5127
      %5137 = vmatpush.bf16.msra.mxu0 %v5126
      %5138 = vmatpush.bf16.msra.mxu0 %v5125
      %5139 = vmatpush.bf16.msra.mxu0 %v5124
      %5140 = vmatpush.bf16.msra.mxu0 %v5123
      %5141 = vmatpush.bf16.msra.mxu0 %v5122
      %5142 = vmatpush.bf16.msra.mxu0 %v5121
      %5143 = vmatpush.bf16.msra.mxu0 %v5120
      %5144 = vmatmul.bf16.gmra.mxu0 %v5070
      %v5145 = vpop.f32.mrf.mxu0
      %v5146 = vadd.f32 0.0, %v5145
      %v5147 = vpop.f32.mrf.mxu0
      %5148 = vdwg.mxu0
      %v5149 = vadd.f32 %v5068, %v5146
      %s5150 = scalar_lea.vmem %s3, 256
      %v5151 = vld [vmem:[%s5150] sm:$0xf]
      %v5152 = vld [vmem:[%s5150 + $0x4] sm:$0xf]
      %v5153 = vld [vmem:[%s5150 + $0x8] sm:$0xf]
      %v5154 = vld [vmem:[%s5150 + $0xc] sm:$0xf]
      %v5155 = vld [vmem:[%s5150 + $0x10] sm:$0xf]
      %v5156 = vld [vmem:[%s5150 + $0x14] sm:$0xf]
      %v5157 = vld [vmem:[%s5150 + $0x18] sm:$0xf]
      %v5158 = vld [vmem:[%s5150 + $0x1c] sm:$0xf]
      %v5159 = vld [vmem:[%s5150 + $0x20] sm:$0xf]
      %v5160 = vld [vmem:[%s5150 + $0x24] sm:$0xf]
      %v5161 = vld [vmem:[%s5150 + $0x28] sm:$0xf]
      %v5162 = vld [vmem:[%s5150 + $0x2c] sm:$0xf]
      %v5163 = vld [vmem:[%s5150 + $0x30] sm:$0xf]
      %v5164 = vld [vmem:[%s5150 + $0x34] sm:$0xf]
      %v5165 = vld [vmem:[%s5150 + $0x38] sm:$0xf]
      %v5166 = vld [vmem:[%s5150 + $0x3c] sm:$0xf]
      %v5168 = vshrl.u32 %v5070, 16
      %v5170 = vshll.u32 %v5070, 16
      %v5172 = vrot.slane %v5170, 1
      %v5173 = vor.u32 %v5168, %v5172
      %v5191 = vunpack.c.l.b16 %v5151
      %v5192 = vunpack.c.l.b16 %v5152
      %v5193 = vunpack.c.l.b16 %v5153
      %v5194 = vunpack.c.l.b16 %v5154
      %v5195 = vunpack.c.l.b16 %v5155
      %v5196 = vunpack.c.l.b16 %v5156
      %v5197 = vunpack.c.l.b16 %v5157
      %v5198 = vunpack.c.l.b16 %v5158
      %v5199 = vunpack.c.l.b16 %v5159
      %v5200 = vunpack.c.l.b16 %v5160
      %v5201 = vunpack.c.l.b16 %v5161
      %v5202 = vunpack.c.l.b16 %v5162
      %v5203 = vunpack.c.l.b16 %v5163
      %v5204 = vunpack.c.l.b16 %v5164
      %v5205 = vunpack.c.l.b16 %v5165
      %v5206 = vunpack.c.l.b16 %v5166
      %v5207 = vpack.c.b16 %v5192, %v5191
      %v5208 = vpack.c.b16 %v5194, %v5193
      %v5209 = vpack.c.b16 %v5196, %v5195
      %v5210 = vpack.c.b16 %v5198, %v5197
      %v5211 = vpack.c.b16 %v5200, %v5199
      %v5212 = vpack.c.b16 %v5202, %v5201
      %v5213 = vpack.c.b16 %v5204, %v5203
      %v5214 = vpack.c.b16 %v5206, %v5205
      %5223 = vmatpush.bf16.msra.mxu0 %v5214
      %5224 = vmatpush.bf16.msra.mxu0 %v5213
      %5225 = vmatpush.bf16.msra.mxu0 %v5212
      %5226 = vmatpush.bf16.msra.mxu0 %v5211
      %5227 = vmatpush.bf16.msra.mxu0 %v5210
      %5228 = vmatpush.bf16.msra.mxu0 %v5209
      %5229 = vmatpush.bf16.msra.mxu0 %v5208
      %5230 = vmatpush.bf16.msra.mxu0 %v5207
      %5231 = vmatmul.bf16.gmra.mxu0 %v5173
      %v5232 = vpop.f32.mrf.mxu0
      %v5233 = vadd.f32 0.0, %v5232
      %v5234 = vpop.f32.mrf.mxu0
      %5235 = vdwg.mxu0
      %v5236 = vadd.f32 %v5149, %v5233
      %s5237 = scalar_lea.vmem %s3, 320
      %v5238 = vld [vmem:[%s5237] sm:$0xf]
      %v5239 = vld [vmem:[%s5237 + $0x4] sm:$0xf]
      %v5240 = vld [vmem:[%s5237 + $0x8] sm:$0xf]
      %v5241 = vld [vmem:[%s5237 + $0xc] sm:$0xf]
      %v5242 = vld [vmem:[%s5237 + $0x10] sm:$0xf]
      %v5243 = vld [vmem:[%s5237 + $0x14] sm:$0xf]
      %v5244 = vld [vmem:[%s5237 + $0x18] sm:$0xf]
      %v5245 = vld [vmem:[%s5237 + $0x1c] sm:$0xf]
      %v5246 = vld [vmem:[%s5237 + $0x20] sm:$0xf]
      %v5247 = vld [vmem:[%s5237 + $0x24] sm:$0xf]
      %v5248 = vld [vmem:[%s5237 + $0x28] sm:$0xf]
      %v5249 = vld [vmem:[%s5237 + $0x2c] sm:$0xf]
      %v5250 = vld [vmem:[%s5237 + $0x30] sm:$0xf]
      %v5251 = vld [vmem:[%s5237 + $0x34] sm:$0xf]
      %v5252 = vld [vmem:[%s5237 + $0x38] sm:$0xf]
      %v5253 = vld [vmem:[%s5237 + $0x3c] sm:$0xf]
      %v5255 = vrot.slane %v5070, 1
      %v5273 = vunpack.c.l.b16 %v5238
      %v5274 = vunpack.c.l.b16 %v5239
      %v5275 = vunpack.c.l.b16 %v5240
      %v5276 = vunpack.c.l.b16 %v5241
      %v5277 = vunpack.c.l.b16 %v5242
      %v5278 = vunpack.c.l.b16 %v5243
      %v5279 = vunpack.c.l.b16 %v5244
      %v5280 = vunpack.c.l.b16 %v5245
      %v5281 = vunpack.c.l.b16 %v5246
      %v5282 = vunpack.c.l.b16 %v5247
      %v5283 = vunpack.c.l.b16 %v5248
      %v5284 = vunpack.c.l.b16 %v5249
      %v5285 = vunpack.c.l.b16 %v5250
      %v5286 = vunpack.c.l.b16 %v5251
      %v5287 = vunpack.c.l.b16 %v5252
      %v5288 = vunpack.c.l.b16 %v5253
      %v5289 = vpack.c.b16 %v5274, %v5273
      %v5290 = vpack.c.b16 %v5276, %v5275
      %v5291 = vpack.c.b16 %v5278, %v5277
      %v5292 = vpack.c.b16 %v5280, %v5279
      %v5293 = vpack.c.b16 %v5282, %v5281
      %v5294 = vpack.c.b16 %v5284, %v5283
      %v5295 = vpack.c.b16 %v5286, %v5285
      %v5296 = vpack.c.b16 %v5288, %v5287
      %5305 = vmatpush.bf16.msra.mxu0 %v5296
      %5306 = vmatpush.bf16.msra.mxu0 %v5295
      %5307 = vmatpush.bf16.msra.mxu0 %v5294
      %5308 = vmatpush.bf16.msra.mxu0 %v5293
      %5309 = vmatpush.bf16.msra.mxu0 %v5292
      %5310 = vmatpush.bf16.msra.mxu0 %v5291
      %5311 = vmatpush.bf16.msra.mxu0 %v5290
      %5312 = vmatpush.bf16.msra.mxu0 %v5289
      %5313 = vmatmul.bf16.gmra.mxu0 %v5255
      %v5314 = vpop.f32.mrf.mxu0
      %v5315 = vadd.f32 0.0, %v5314
      %v5316 = vpop.f32.mrf.mxu0
      %5317 = vdwg.mxu0
      %v5318 = vadd.f32 %v5236, %v5315
      %v5319 = vld [vmem:[%s2542] sm:$0x3f]
      %v5320 = vpack.c.bf16 %v5319, %v5319
      %s5321 = scalar_lea.vmem %s3, 384
      %v5322 = vld [vmem:[%s5321] sm:$0xf]
      %v5323 = vld [vmem:[%s5321 + $0x4] sm:$0xf]
      %v5324 = vld [vmem:[%s5321 + $0x8] sm:$0xf]
      %v5325 = vld [vmem:[%s5321 + $0xc] sm:$0xf]
      %v5326 = vld [vmem:[%s5321 + $0x10] sm:$0xf]
      %v5327 = vld [vmem:[%s5321 + $0x14] sm:$0xf]
      %v5328 = vld [vmem:[%s5321 + $0x18] sm:$0xf]
      %v5329 = vld [vmem:[%s5321 + $0x1c] sm:$0xf]
      %v5330 = vld [vmem:[%s5321 + $0x20] sm:$0xf]
      %v5331 = vld [vmem:[%s5321 + $0x24] sm:$0xf]
      %v5332 = vld [vmem:[%s5321 + $0x28] sm:$0xf]
      %v5333 = vld [vmem:[%s5321 + $0x2c] sm:$0xf]
      %v5334 = vld [vmem:[%s5321 + $0x30] sm:$0xf]
      %v5335 = vld [vmem:[%s5321 + $0x34] sm:$0xf]
      %v5336 = vld [vmem:[%s5321 + $0x38] sm:$0xf]
      %v5337 = vld [vmem:[%s5321 + $0x3c] sm:$0xf]
      %v5354 = vunpack.c.l.b16 %v5322
      %v5355 = vunpack.c.l.b16 %v5323
      %v5356 = vunpack.c.l.b16 %v5324
      %v5357 = vunpack.c.l.b16 %v5325
      %v5358 = vunpack.c.l.b16 %v5326
      %v5359 = vunpack.c.l.b16 %v5327
      %v5360 = vunpack.c.l.b16 %v5328
      %v5361 = vunpack.c.l.b16 %v5329
      %v5362 = vunpack.c.l.b16 %v5330
      %v5363 = vunpack.c.l.b16 %v5331
      %v5364 = vunpack.c.l.b16 %v5332
      %v5365 = vunpack.c.l.b16 %v5333
      %v5366 = vunpack.c.l.b16 %v5334
      %v5367 = vunpack.c.l.b16 %v5335
      %v5368 = vunpack.c.l.b16 %v5336
      %v5369 = vunpack.c.l.b16 %v5337
      %v5370 = vpack.c.b16 %v5355, %v5354
      %v5371 = vpack.c.b16 %v5357, %v5356
      %v5372 = vpack.c.b16 %v5359, %v5358
      %v5373 = vpack.c.b16 %v5361, %v5360
      %v5374 = vpack.c.b16 %v5363, %v5362
      %v5375 = vpack.c.b16 %v5365, %v5364
      %v5376 = vpack.c.b16 %v5367, %v5366
      %v5377 = vpack.c.b16 %v5369, %v5368
      %5386 = vmatpush.bf16.msra.mxu0 %v5377
      %5387 = vmatpush.bf16.msra.mxu0 %v5376
      %5388 = vmatpush.bf16.msra.mxu0 %v5375
      %5389 = vmatpush.bf16.msra.mxu0 %v5374
      %5390 = vmatpush.bf16.msra.mxu0 %v5373
      %5391 = vmatpush.bf16.msra.mxu0 %v5372
      %5392 = vmatpush.bf16.msra.mxu0 %v5371
      %5393 = vmatpush.bf16.msra.mxu0 %v5370
      %5394 = vmatmul.bf16.gmra.mxu0 %v5320
      %v5395 = vpop.f32.mrf.mxu0
      %v5396 = vadd.f32 0.0, %v5395
      %v5397 = vpop.f32.mrf.mxu0
      %5398 = vdwg.mxu0
      %v5399 = vadd.f32 %v5318, %v5396
      %s5400 = scalar_lea.vmem %s3, 448
      %v5401 = vld [vmem:[%s5400] sm:$0xf]
      %v5402 = vld [vmem:[%s5400 + $0x4] sm:$0xf]
      %v5403 = vld [vmem:[%s5400 + $0x8] sm:$0xf]
      %v5404 = vld [vmem:[%s5400 + $0xc] sm:$0xf]
      %v5405 = vld [vmem:[%s5400 + $0x10] sm:$0xf]
      %v5406 = vld [vmem:[%s5400 + $0x14] sm:$0xf]
      %v5407 = vld [vmem:[%s5400 + $0x18] sm:$0xf]
      %v5408 = vld [vmem:[%s5400 + $0x1c] sm:$0xf]
      %v5409 = vld [vmem:[%s5400 + $0x20] sm:$0xf]
      %v5410 = vld [vmem:[%s5400 + $0x24] sm:$0xf]
      %v5411 = vld [vmem:[%s5400 + $0x28] sm:$0xf]
      %v5412 = vld [vmem:[%s5400 + $0x2c] sm:$0xf]
      %v5413 = vld [vmem:[%s5400 + $0x30] sm:$0xf]
      %v5414 = vld [vmem:[%s5400 + $0x34] sm:$0xf]
      %v5415 = vld [vmem:[%s5400 + $0x38] sm:$0xf]
      %v5416 = vld [vmem:[%s5400 + $0x3c] sm:$0xf]
      %v5418 = vshrl.u32 %v5320, 16
      %v5420 = vshll.u32 %v5320, 16
      %v5422 = vrot.slane %v5420, 1
      %v5423 = vor.u32 %v5418, %v5422
      %v5441 = vunpack.c.l.b16 %v5401
      %v5442 = vunpack.c.l.b16 %v5402
      %v5443 = vunpack.c.l.b16 %v5403
      %v5444 = vunpack.c.l.b16 %v5404
      %v5445 = vunpack.c.l.b16 %v5405
      %v5446 = vunpack.c.l.b16 %v5406
      %v5447 = vunpack.c.l.b16 %v5407
      %v5448 = vunpack.c.l.b16 %v5408
      %v5449 = vunpack.c.l.b16 %v5409
      %v5450 = vunpack.c.l.b16 %v5410
      %v5451 = vunpack.c.l.b16 %v5411
      %v5452 = vunpack.c.l.b16 %v5412
      %v5453 = vunpack.c.l.b16 %v5413
      %v5454 = vunpack.c.l.b16 %v5414
      %v5455 = vunpack.c.l.b16 %v5415
      %v5456 = vunpack.c.l.b16 %v5416
      %v5457 = vpack.c.b16 %v5442, %v5441
      %v5458 = vpack.c.b16 %v5444, %v5443
      %v5459 = vpack.c.b16 %v5446, %v5445
      %v5460 = vpack.c.b16 %v5448, %v5447
      %v5461 = vpack.c.b16 %v5450, %v5449
      %v5462 = vpack.c.b16 %v5452, %v5451
      %v5463 = vpack.c.b16 %v5454, %v5453
      %v5464 = vpack.c.b16 %v5456, %v5455
      %5473 = vmatpush.bf16.msra.mxu0 %v5464
      %5474 = vmatpush.bf16.msra.mxu0 %v5463
      %5475 = vmatpush.bf16.msra.mxu0 %v5462
      %5476 = vmatpush.bf16.msra.mxu0 %v5461
      %5477 = vmatpush.bf16.msra.mxu0 %v5460
      %5478 = vmatpush.bf16.msra.mxu0 %v5459
      %5479 = vmatpush.bf16.msra.mxu0 %v5458
      %5480 = vmatpush.bf16.msra.mxu0 %v5457
      %5481 = vmatmul.bf16.gmra.mxu0 %v5423
      %v5482 = vpop.f32.mrf.mxu0
      %v5483 = vadd.f32 0.0, %v5482
      %v5484 = vpop.f32.mrf.mxu0
      %5485 = vdwg.mxu0
      %v5486 = vadd.f32 %v5399, %v5483
      %s5487 = scalar_lea.vmem %s3, 512
      %v5488 = vld [vmem:[%s5487] sm:$0xf]
      %v5489 = vld [vmem:[%s5487 + $0x4] sm:$0xf]
      %v5490 = vld [vmem:[%s5487 + $0x8] sm:$0xf]
      %v5491 = vld [vmem:[%s5487 + $0xc] sm:$0xf]
      %v5492 = vld [vmem:[%s5487 + $0x10] sm:$0xf]
      %v5493 = vld [vmem:[%s5487 + $0x14] sm:$0xf]
      %v5494 = vld [vmem:[%s5487 + $0x18] sm:$0xf]
      %v5495 = vld [vmem:[%s5487 + $0x1c] sm:$0xf]
      %v5496 = vld [vmem:[%s5487 + $0x20] sm:$0xf]
      %v5497 = vld [vmem:[%s5487 + $0x24] sm:$0xf]
      %v5498 = vld [vmem:[%s5487 + $0x28] sm:$0xf]
      %v5499 = vld [vmem:[%s5487 + $0x2c] sm:$0xf]
      %v5500 = vld [vmem:[%s5487 + $0x30] sm:$0xf]
      %v5501 = vld [vmem:[%s5487 + $0x34] sm:$0xf]
      %v5502 = vld [vmem:[%s5487 + $0x38] sm:$0xf]
      %v5503 = vld [vmem:[%s5487 + $0x3c] sm:$0xf]
      %v5505 = vrot.slane %v5320, 1
      %v5523 = vunpack.c.l.b16 %v5488
      %v5524 = vunpack.c.l.b16 %v5489
      %v5525 = vunpack.c.l.b16 %v5490
      %v5526 = vunpack.c.l.b16 %v5491
      %v5527 = vunpack.c.l.b16 %v5492
      %v5528 = vunpack.c.l.b16 %v5493
      %v5529 = vunpack.c.l.b16 %v5494
      %v5530 = vunpack.c.l.b16 %v5495
      %v5531 = vunpack.c.l.b16 %v5496
      %v5532 = vunpack.c.l.b16 %v5497
      %v5533 = vunpack.c.l.b16 %v5498
      %v5534 = vunpack.c.l.b16 %v5499
      %v5535 = vunpack.c.l.b16 %v5500
      %v5536 = vunpack.c.l.b16 %v5501
      %v5537 = vunpack.c.l.b16 %v5502
      %v5538 = vunpack.c.l.b16 %v5503
      %v5539 = vpack.c.b16 %v5524, %v5523
      %v5540 = vpack.c.b16 %v5526, %v5525
      %v5541 = vpack.c.b16 %v5528, %v5527
      %v5542 = vpack.c.b16 %v5530, %v5529
      %v5543 = vpack.c.b16 %v5532, %v5531
      %v5544 = vpack.c.b16 %v5534, %v5533
      %v5545 = vpack.c.b16 %v5536, %v5535
      %v5546 = vpack.c.b16 %v5538, %v5537
      %5555 = vmatpush.bf16.msra.mxu0 %v5546
      %5556 = vmatpush.bf16.msra.mxu0 %v5545
      %5557 = vmatpush.bf16.msra.mxu0 %v5544
      %5558 = vmatpush.bf16.msra.mxu0 %v5543
      %5559 = vmatpush.bf16.msra.mxu0 %v5542
      %5560 = vmatpush.bf16.msra.mxu0 %v5541
      %5561 = vmatpush.bf16.msra.mxu0 %v5540
      %5562 = vmatpush.bf16.msra.mxu0 %v5539
      %5563 = vmatmul.bf16.gmra.mxu0 %v5505
      %v5564 = vpop.f32.mrf.mxu0
      %v5565 = vadd.f32 0.0, %v5564
      %v5566 = vpop.f32.mrf.mxu0
      %5567 = vdwg.mxu0
      %v5568 = vadd.f32 %v5486, %v5565
      %v5569 = vld [vmem:[%s4] sm:$0x1]
      %v5571 = vperm.slane %v5569, 0
      %v5573 = vadd.f32 %v5568, %v5571
      %v5574 = vld [vmem:[#allocation3] sm:$0xf]
      %v5575 = vadd.f32 %v5573, %v5574
      %v5576 = vmax.f32 %v5575, 0.0
      %v5577 = vpack.c.bf16 %v5576, %v5576
      %5578 = vst [vmem:[%s224] sm:$0x3] %v5577
      %v5579 = vld [vmem:[%s1405] sm:$0x3f]
      %v5580 = vpack.c.bf16 %v5579, %v5579
      %v5581 = vld [vmem:[%s3] sm:$0xf]
      %v5582 = vld [vmem:[%s3 + $0x4] sm:$0xf]
      %v5583 = vld [vmem:[%s3 + $0x8] sm:$0xf]
      %v5584 = vld [vmem:[%s3 + $0xc] sm:$0xf]
      %v5585 = vld [vmem:[%s3 + $0x10] sm:$0xf]
      %v5586 = vld [vmem:[%s3 + $0x14] sm:$0xf]
      %v5587 = vld [vmem:[%s3 + $0x18] sm:$0xf]
      %v5588 = vld [vmem:[%s3 + $0x1c] sm:$0xf]
      %v5589 = vld [vmem:[%s3 + $0x20] sm:$0xf]
      %v5590 = vld [vmem:[%s3 + $0x24] sm:$0xf]
      %v5591 = vld [vmem:[%s3 + $0x28] sm:$0xf]
      %v5592 = vld [vmem:[%s3 + $0x2c] sm:$0xf]
      %v5593 = vld [vmem:[%s3 + $0x30] sm:$0xf]
      %v5594 = vld [vmem:[%s3 + $0x34] sm:$0xf]
      %v5595 = vld [vmem:[%s3 + $0x38] sm:$0xf]
      %v5596 = vld [vmem:[%s3 + $0x3c] sm:$0xf]
      %v5597 = vld [vmem:[%s4840] sm:$0xf]
      %v5598 = vld [vmem:[%s4840 + $0x4] sm:$0xf]
      %v5599 = vld [vmem:[%s4840 + $0x8] sm:$0xf]
      %v5600 = vld [vmem:[%s4840 + $0xc] sm:$0xf]
      %v5601 = vld [vmem:[%s4840 + $0x10] sm:$0xf]
      %v5602 = vld [vmem:[%s4840 + $0x14] sm:$0xf]
      %v5603 = vld [vmem:[%s4840 + $0x18] sm:$0xf]
      %v5604 = vld [vmem:[%s4840 + $0x1c] sm:$0xf]
      %v5605 = vld [vmem:[%s4840 + $0x20] sm:$0xf]
      %v5606 = vld [vmem:[%s4840 + $0x24] sm:$0xf]
      %v5607 = vld [vmem:[%s4840 + $0x28] sm:$0xf]
      %v5608 = vld [vmem:[%s4840 + $0x2c] sm:$0xf]
      %v5609 = vld [vmem:[%s4840 + $0x30] sm:$0xf]
      %v5610 = vld [vmem:[%s4840 + $0x34] sm:$0xf]
      %v5611 = vld [vmem:[%s4840 + $0x38] sm:$0xf]
      %v5612 = vld [vmem:[%s4840 + $0x3c] sm:$0xf]
      %v5614 = vshrl.u32 %v5580, 16
      %v5616 = vshll.u32 %v5580, 16
      %v5618 = vrot.slane %v5616, 1
      %v5619 = vor.u32 %v5614, %v5618
      %v5637 = vunpack.c.l.b16 %v5597
      %v5638 = vunpack.c.l.b16 %v5598
      %v5639 = vunpack.c.l.b16 %v5599
      %v5640 = vunpack.c.l.b16 %v5600
      %v5641 = vunpack.c.l.b16 %v5601
      %v5642 = vunpack.c.l.b16 %v5602
      %v5643 = vunpack.c.l.b16 %v5603
      %v5644 = vunpack.c.l.b16 %v5604
      %v5645 = vunpack.c.l.b16 %v5605
      %v5646 = vunpack.c.l.b16 %v5606
      %v5647 = vunpack.c.l.b16 %v5607
      %v5648 = vunpack.c.l.b16 %v5608
      %v5649 = vunpack.c.l.b16 %v5609
      %v5650 = vunpack.c.l.b16 %v5610
      %v5651 = vunpack.c.l.b16 %v5611
      %v5652 = vunpack.c.l.b16 %v5612
      %v5653 = vpack.c.b16 %v5638, %v5637
      %v5654 = vpack.c.b16 %v5640, %v5639
      %v5655 = vpack.c.b16 %v5642, %v5641
      %v5656 = vpack.c.b16 %v5644, %v5643
      %v5657 = vpack.c.b16 %v5646, %v5645
      %v5658 = vpack.c.b16 %v5648, %v5647
      %v5659 = vpack.c.b16 %v5650, %v5649
      %v5660 = vpack.c.b16 %v5652, %v5651
      %5669 = vmatpush.bf16.msra.mxu0 %v5660
      %5670 = vmatpush.bf16.msra.mxu0 %v5659
      %5671 = vmatpush.bf16.msra.mxu0 %v5658
      %5672 = vmatpush.bf16.msra.mxu0 %v5657
      %5673 = vmatpush.bf16.msra.mxu0 %v5656
      %5674 = vmatpush.bf16.msra.mxu0 %v5655
      %5675 = vmatpush.bf16.msra.mxu0 %v5654
      %5676 = vmatpush.bf16.msra.mxu0 %v5653
      %5677 = vmatmul.bf16.gmra.mxu0 %v5619
      %v5678 = vpop.f32.mrf.mxu0
      %v5679 = vadd.f32 0.0, %v5678
      %v5680 = vpop.f32.mrf.mxu0
      %5681 = vdwg.mxu0
      %v5698 = vunpack.c.l.b16 %v5581
      %v5699 = vunpack.c.l.b16 %v5582
      %v5700 = vunpack.c.l.b16 %v5583
      %v5701 = vunpack.c.l.b16 %v5584
      %v5702 = vunpack.c.l.b16 %v5585
      %v5703 = vunpack.c.l.b16 %v5586
      %v5704 = vunpack.c.l.b16 %v5587
      %v5705 = vunpack.c.l.b16 %v5588
      %v5706 = vunpack.c.l.b16 %v5589
      %v5707 = vunpack.c.l.b16 %v5590
      %v5708 = vunpack.c.l.b16 %v5591
      %v5709 = vunpack.c.l.b16 %v5592
      %v5710 = vunpack.c.l.b16 %v5593
      %v5711 = vunpack.c.l.b16 %v5594
      %v5712 = vunpack.c.l.b16 %v5595
      %v5713 = vunpack.c.l.b16 %v5596
      %v5714 = vpack.c.b16 %v5699, %v5698
      %v5715 = vpack.c.b16 %v5701, %v5700
      %v5716 = vpack.c.b16 %v5703, %v5702
      %v5717 = vpack.c.b16 %v5705, %v5704
      %v5718 = vpack.c.b16 %v5707, %v5706
      %v5719 = vpack.c.b16 %v5709, %v5708
      %v5720 = vpack.c.b16 %v5711, %v5710
      %v5721 = vpack.c.b16 %v5713, %v5712
      %5730 = vmatpush.bf16.msra.mxu0 %v5721
      %5731 = vmatpush.bf16.msra.mxu0 %v5720
      %5732 = vmatpush.bf16.msra.mxu0 %v5719
      %5733 = vmatpush.bf16.msra.mxu0 %v5718
      %5734 = vmatpush.bf16.msra.mxu0 %v5717
      %5735 = vmatpush.bf16.msra.mxu0 %v5716
      %5736 = vmatpush.bf16.msra.mxu0 %v5715
      %5737 = vmatpush.bf16.msra.mxu0 %v5714
      %5738 = vmatmul.bf16.gmra.mxu0 %v5580
      %v5739 = vpop.f32.mrf.mxu0
      %v5740 = vadd.f32 %v5679, %v5739
      %v5741 = vpop.f32.mrf.mxu0
      %5742 = vdwg.mxu0
      %v5743 = vld [vmem:[%s4987] sm:$0xf]
      %v5744 = vld [vmem:[%s4987 + $0x4] sm:$0xf]
      %v5745 = vld [vmem:[%s4987 + $0x8] sm:$0xf]
      %v5746 = vld [vmem:[%s4987 + $0xc] sm:$0xf]
      %v5747 = vld [vmem:[%s4987 + $0x10] sm:$0xf]
      %v5748 = vld [vmem:[%s4987 + $0x14] sm:$0xf]
      %v5749 = vld [vmem:[%s4987 + $0x18] sm:$0xf]
      %v5750 = vld [vmem:[%s4987 + $0x1c] sm:$0xf]
      %v5751 = vld [vmem:[%s4987 + $0x20] sm:$0xf]
      %v5752 = vld [vmem:[%s4987 + $0x24] sm:$0xf]
      %v5753 = vld [vmem:[%s4987 + $0x28] sm:$0xf]
      %v5754 = vld [vmem:[%s4987 + $0x2c] sm:$0xf]
      %v5755 = vld [vmem:[%s4987 + $0x30] sm:$0xf]
      %v5756 = vld [vmem:[%s4987 + $0x34] sm:$0xf]
      %v5757 = vld [vmem:[%s4987 + $0x38] sm:$0xf]
      %v5758 = vld [vmem:[%s4987 + $0x3c] sm:$0xf]
      %v5760 = vrot.slane %v5580, 1
      %v5778 = vunpack.c.l.b16 %v5743
      %v5779 = vunpack.c.l.b16 %v5744
      %v5780 = vunpack.c.l.b16 %v5745
      %v5781 = vunpack.c.l.b16 %v5746
      %v5782 = vunpack.c.l.b16 %v5747
      %v5783 = vunpack.c.l.b16 %v5748
      %v5784 = vunpack.c.l.b16 %v5749
      %v5785 = vunpack.c.l.b16 %v5750
      %v5786 = vunpack.c.l.b16 %v5751
      %v5787 = vunpack.c.l.b16 %v5752
      %v5788 = vunpack.c.l.b16 %v5753
      %v5789 = vunpack.c.l.b16 %v5754
      %v5790 = vunpack.c.l.b16 %v5755
      %v5791 = vunpack.c.l.b16 %v5756
      %v5792 = vunpack.c.l.b16 %v5757
      %v5793 = vunpack.c.l.b16 %v5758
      %v5794 = vpack.c.b16 %v5779, %v5778
      %v5795 = vpack.c.b16 %v5781, %v5780
      %v5796 = vpack.c.b16 %v5783, %v5782
      %v5797 = vpack.c.b16 %v5785, %v5784
      %v5798 = vpack.c.b16 %v5787, %v5786
      %v5799 = vpack.c.b16 %v5789, %v5788
      %v5800 = vpack.c.b16 %v5791, %v5790
      %v5801 = vpack.c.b16 %v5793, %v5792
      %5810 = vmatpush.bf16.msra.mxu0 %v5801
      %5811 = vmatpush.bf16.msra.mxu0 %v5800
      %5812 = vmatpush.bf16.msra.mxu0 %v5799
      %5813 = vmatpush.bf16.msra.mxu0 %v5798
      %5814 = vmatpush.bf16.msra.mxu0 %v5797
      %5815 = vmatpush.bf16.msra.mxu0 %v5796
      %5816 = vmatpush.bf16.msra.mxu0 %v5795
      %5817 = vmatpush.bf16.msra.mxu0 %v5794
      %5818 = vmatmul.bf16.gmra.mxu0 %v5760
      %v5819 = vpop.f32.mrf.mxu0
      %v5820 = vadd.f32 0.0, %v5819
      %v5821 = vpop.f32.mrf.mxu0
      %5822 = vdwg.mxu0
      %v5823 = vadd.f32 %v5740, %v5820
      %v5824 = vld [vmem:[%s2542] sm:$0x3f]
      %v5825 = vpack.c.bf16 %v5824, %v5824
      %v5826 = vld [vmem:[%s5071] sm:$0xf]
      %v5827 = vld [vmem:[%s5071 + $0x4] sm:$0xf]
      %v5828 = vld [vmem:[%s5071 + $0x8] sm:$0xf]
      %v5829 = vld [vmem:[%s5071 + $0xc] sm:$0xf]
      %v5830 = vld [vmem:[%s5071 + $0x10] sm:$0xf]
      %v5831 = vld [vmem:[%s5071 + $0x14] sm:$0xf]
      %v5832 = vld [vmem:[%s5071 + $0x18] sm:$0xf]
      %v5833 = vld [vmem:[%s5071 + $0x1c] sm:$0xf]
      %v5834 = vld [vmem:[%s5071 + $0x20] sm:$0xf]
      %v5835 = vld [vmem:[%s5071 + $0x24] sm:$0xf]
      %v5836 = vld [vmem:[%s5071 + $0x28] sm:$0xf]
      %v5837 = vld [vmem:[%s5071 + $0x2c] sm:$0xf]
      %v5838 = vld [vmem:[%s5071 + $0x30] sm:$0xf]
      %v5839 = vld [vmem:[%s5071 + $0x34] sm:$0xf]
      %v5840 = vld [vmem:[%s5071 + $0x38] sm:$0xf]
      %v5841 = vld [vmem:[%s5071 + $0x3c] sm:$0xf]
      %v5858 = vunpack.c.l.b16 %v5826
      %v5859 = vunpack.c.l.b16 %v5827
      %v5860 = vunpack.c.l.b16 %v5828
      %v5861 = vunpack.c.l.b16 %v5829
      %v5862 = vunpack.c.l.b16 %v5830
      %v5863 = vunpack.c.l.b16 %v5831
      %v5864 = vunpack.c.l.b16 %v5832
      %v5865 = vunpack.c.l.b16 %v5833
      %v5866 = vunpack.c.l.b16 %v5834
      %v5867 = vunpack.c.l.b16 %v5835
      %v5868 = vunpack.c.l.b16 %v5836
      %v5869 = vunpack.c.l.b16 %v5837
      %v5870 = vunpack.c.l.b16 %v5838
      %v5871 = vunpack.c.l.b16 %v5839
      %v5872 = vunpack.c.l.b16 %v5840
      %v5873 = vunpack.c.l.b16 %v5841
      %v5874 = vpack.c.b16 %v5859, %v5858
      %v5875 = vpack.c.b16 %v5861, %v5860
      %v5876 = vpack.c.b16 %v5863, %v5862
      %v5877 = vpack.c.b16 %v5865, %v5864
      %v5878 = vpack.c.b16 %v5867, %v5866
      %v5879 = vpack.c.b16 %v5869, %v5868
      %v5880 = vpack.c.b16 %v5871, %v5870
      %v5881 = vpack.c.b16 %v5873, %v5872
      %5890 = vmatpush.bf16.msra.mxu0 %v5881
      %5891 = vmatpush.bf16.msra.mxu0 %v5880
      %5892 = vmatpush.bf16.msra.mxu0 %v5879
      %5893 = vmatpush.bf16.msra.mxu0 %v5878
      %5894 = vmatpush.bf16.msra.mxu0 %v5877
      %5895 = vmatpush.bf16.msra.mxu0 %v5876
      %5896 = vmatpush.bf16.msra.mxu0 %v5875
      %5897 = vmatpush.bf16.msra.mxu0 %v5874
      %5898 = vmatmul.bf16.gmra.mxu0 %v5825
      %v5899 = vpop.f32.mrf.mxu0
      %v5900 = vadd.f32 0.0, %v5899
      %v5901 = vpop.f32.mrf.mxu0
      %5902 = vdwg.mxu0
      %v5903 = vadd.f32 %v5823, %v5900
      %v5904 = vld [vmem:[%s5150] sm:$0xf]
      %v5905 = vld [vmem:[%s5150 + $0x4] sm:$0xf]
      %v5906 = vld [vmem:[%s5150 + $0x8] sm:$0xf]
      %v5907 = vld [vmem:[%s5150 + $0xc] sm:$0xf]
      %v5908 = vld [vmem:[%s5150 + $0x10] sm:$0xf]
      %v5909 = vld [vmem:[%s5150 + $0x14] sm:$0xf]
      %v5910 = vld [vmem:[%s5150 + $0x18] sm:$0xf]
      %v5911 = vld [vmem:[%s5150 + $0x1c] sm:$0xf]
      %v5912 = vld [vmem:[%s5150 + $0x20] sm:$0xf]
      %v5913 = vld [vmem:[%s5150 + $0x24] sm:$0xf]
      %v5914 = vld [vmem:[%s5150 + $0x28] sm:$0xf]
      %v5915 = vld [vmem:[%s5150 + $0x2c] sm:$0xf]
      %v5916 = vld [vmem:[%s5150 + $0x30] sm:$0xf]
      %v5917 = vld [vmem:[%s5150 + $0x34] sm:$0xf]
      %v5918 = vld [vmem:[%s5150 + $0x38] sm:$0xf]
      %v5919 = vld [vmem:[%s5150 + $0x3c] sm:$0xf]
      %v5921 = vshrl.u32 %v5825, 16
      %v5923 = vshll.u32 %v5825, 16
      %v5925 = vrot.slane %v5923, 1
      %v5926 = vor.u32 %v5921, %v5925
      %v5944 = vunpack.c.l.b16 %v5904
      %v5945 = vunpack.c.l.b16 %v5905
      %v5946 = vunpack.c.l.b16 %v5906
      %v5947 = vunpack.c.l.b16 %v5907
      %v5948 = vunpack.c.l.b16 %v5908
      %v5949 = vunpack.c.l.b16 %v5909
      %v5950 = vunpack.c.l.b16 %v5910
      %v5951 = vunpack.c.l.b16 %v5911
      %v5952 = vunpack.c.l.b16 %v5912
      %v5953 = vunpack.c.l.b16 %v5913
      %v5954 = vunpack.c.l.b16 %v5914
      %v5955 = vunpack.c.l.b16 %v5915
      %v5956 = vunpack.c.l.b16 %v5916
      %v5957 = vunpack.c.l.b16 %v5917
      %v5958 = vunpack.c.l.b16 %v5918
      %v5959 = vunpack.c.l.b16 %v5919
      %v5960 = vpack.c.b16 %v5945, %v5944
      %v5961 = vpack.c.b16 %v5947, %v5946
      %v5962 = vpack.c.b16 %v5949, %v5948
      %v5963 = vpack.c.b16 %v5951, %v5950
      %v5964 = vpack.c.b16 %v5953, %v5952
      %v5965 = vpack.c.b16 %v5955, %v5954
      %v5966 = vpack.c.b16 %v5957, %v5956
      %v5967 = vpack.c.b16 %v5959, %v5958
      %5976 = vmatpush.bf16.msra.mxu0 %v5967
      %5977 = vmatpush.bf16.msra.mxu0 %v5966
      %5978 = vmatpush.bf16.msra.mxu0 %v5965
      %5979 = vmatpush.bf16.msra.mxu0 %v5964
      %5980 = vmatpush.bf16.msra.mxu0 %v5963
      %5981 = vmatpush.bf16.msra.mxu0 %v5962
      %5982 = vmatpush.bf16.msra.mxu0 %v5961
      %5983 = vmatpush.bf16.msra.mxu0 %v5960
      %5984 = vmatmul.bf16.gmra.mxu0 %v5926
      %v5985 = vpop.f32.mrf.mxu0
      %v5986 = vadd.f32 0.0, %v5985
      %v5987 = vpop.f32.mrf.mxu0
      %5988 = vdwg.mxu0
      %v5989 = vadd.f32 %v5903, %v5986
      %v5990 = vld [vmem:[%s5237] sm:$0xf]
      %v5991 = vld [vmem:[%s5237 + $0x4] sm:$0xf]
      %v5992 = vld [vmem:[%s5237 + $0x8] sm:$0xf]
      %v5993 = vld [vmem:[%s5237 + $0xc] sm:$0xf]
      %v5994 = vld [vmem:[%s5237 + $0x10] sm:$0xf]
      %v5995 = vld [vmem:[%s5237 + $0x14] sm:$0xf]
      %v5996 = vld [vmem:[%s5237 + $0x18] sm:$0xf]
      %v5997 = vld [vmem:[%s5237 + $0x1c] sm:$0xf]
      %v5998 = vld [vmem:[%s5237 + $0x20] sm:$0xf]
      %v5999 = vld [vmem:[%s5237 + $0x24] sm:$0xf]
      %v6000 = vld [vmem:[%s5237 + $0x28] sm:$0xf]
      %v6001 = vld [vmem:[%s5237 + $0x2c] sm:$0xf]
      %v6002 = vld [vmem:[%s5237 + $0x30] sm:$0xf]
      %v6003 = vld [vmem:[%s5237 + $0x34] sm:$0xf]
      %v6004 = vld [vmem:[%s5237 + $0x38] sm:$0xf]
      %v6005 = vld [vmem:[%s5237 + $0x3c] sm:$0xf]
      %v6007 = vrot.slane %v5825, 1
      %v6025 = vunpack.c.l.b16 %v5990
      %v6026 = vunpack.c.l.b16 %v5991
      %v6027 = vunpack.c.l.b16 %v5992
      %v6028 = vunpack.c.l.b16 %v5993
      %v6029 = vunpack.c.l.b16 %v5994
      %v6030 = vunpack.c.l.b16 %v5995
      %v6031 = vunpack.c.l.b16 %v5996
      %v6032 = vunpack.c.l.b16 %v5997
      %v6033 = vunpack.c.l.b16 %v5998
      %v6034 = vunpack.c.l.b16 %v5999
      %v6035 = vunpack.c.l.b16 %v6000
      %v6036 = vunpack.c.l.b16 %v6001
      %v6037 = vunpack.c.l.b16 %v6002
      %v6038 = vunpack.c.l.b16 %v6003
      %v6039 = vunpack.c.l.b16 %v6004
      %v6040 = vunpack.c.l.b16 %v6005
      %v6041 = vpack.c.b16 %v6026, %v6025
      %v6042 = vpack.c.b16 %v6028, %v6027
      %v6043 = vpack.c.b16 %v6030, %v6029
      %v6044 = vpack.c.b16 %v6032, %v6031
      %v6045 = vpack.c.b16 %v6034, %v6033
      %v6046 = vpack.c.b16 %v6036, %v6035
      %v6047 = vpack.c.b16 %v6038, %v6037
      %v6048 = vpack.c.b16 %v6040, %v6039
      %6057 = vmatpush.bf16.msra.mxu0 %v6048
      %6058 = vmatpush.bf16.msra.mxu0 %v6047
      %6059 = vmatpush.bf16.msra.mxu0 %v6046
      %6060 = vmatpush.bf16.msra.mxu0 %v6045
      %6061 = vmatpush.bf16.msra.mxu0 %v6044
      %6062 = vmatpush.bf16.msra.mxu0 %v6043
      %6063 = vmatpush.bf16.msra.mxu0 %v6042
      %6064 = vmatpush.bf16.msra.mxu0 %v6041
      %6065 = vmatmul.bf16.gmra.mxu0 %v6007
      %v6066 = vpop.f32.mrf.mxu0
      %v6067 = vadd.f32 0.0, %v6066
      %v6068 = vpop.f32.mrf.mxu0
      %6069 = vdwg.mxu0
      %v6070 = vadd.f32 %v5989, %v6067
      %v6071 = vld [vmem:[%s3680] sm:$0x3f]
      %v6072 = vpack.c.bf16 %v6071, %v6071
      %v6073 = vld [vmem:[%s5321] sm:$0xf]
      %v6074 = vld [vmem:[%s5321 + $0x4] sm:$0xf]
      %v6075 = vld [vmem:[%s5321 + $0x8] sm:$0xf]
      %v6076 = vld [vmem:[%s5321 + $0xc] sm:$0xf]
      %v6077 = vld [vmem:[%s5321 + $0x10] sm:$0xf]
      %v6078 = vld [vmem:[%s5321 + $0x14] sm:$0xf]
      %v6079 = vld [vmem:[%s5321 + $0x18] sm:$0xf]
      %v6080 = vld [vmem:[%s5321 + $0x1c] sm:$0xf]
      %v6081 = vld [vmem:[%s5321 + $0x20] sm:$0xf]
      %v6082 = vld [vmem:[%s5321 + $0x24] sm:$0xf]
      %v6083 = vld [vmem:[%s5321 + $0x28] sm:$0xf]
      %v6084 = vld [vmem:[%s5321 + $0x2c] sm:$0xf]
      %v6085 = vld [vmem:[%s5321 + $0x30] sm:$0xf]
      %v6086 = vld [vmem:[%s5321 + $0x34] sm:$0xf]
      %v6087 = vld [vmem:[%s5321 + $0x38] sm:$0xf]
      %v6088 = vld [vmem:[%s5321 + $0x3c] sm:$0xf]
      %v6105 = vunpack.c.l.b16 %v6073
      %v6106 = vunpack.c.l.b16 %v6074
      %v6107 = vunpack.c.l.b16 %v6075
      %v6108 = vunpack.c.l.b16 %v6076
      %v6109 = vunpack.c.l.b16 %v6077
      %v6110 = vunpack.c.l.b16 %v6078
      %v6111 = vunpack.c.l.b16 %v6079
      %v6112 = vunpack.c.l.b16 %v6080
      %v6113 = vunpack.c.l.b16 %v6081
      %v6114 = vunpack.c.l.b16 %v6082
      %v6115 = vunpack.c.l.b16 %v6083
      %v6116 = vunpack.c.l.b16 %v6084
      %v6117 = vunpack.c.l.b16 %v6085
      %v6118 = vunpack.c.l.b16 %v6086
      %v6119 = vunpack.c.l.b16 %v6087
      %v6120 = vunpack.c.l.b16 %v6088
      %v6121 = vpack.c.b16 %v6106, %v6105
      %v6122 = vpack.c.b16 %v6108, %v6107
      %v6123 = vpack.c.b16 %v6110, %v6109
      %v6124 = vpack.c.b16 %v6112, %v6111
      %v6125 = vpack.c.b16 %v6114, %v6113
      %v6126 = vpack.c.b16 %v6116, %v6115
      %v6127 = vpack.c.b16 %v6118, %v6117
      %v6128 = vpack.c.b16 %v6120, %v6119
      %6137 = vmatpush.bf16.msra.mxu0 %v6128
      %6138 = vmatpush.bf16.msra.mxu0 %v6127
      %6139 = vmatpush.bf16.msra.mxu0 %v6126
      %6140 = vmatpush.bf16.msra.mxu0 %v6125
      %6141 = vmatpush.bf16.msra.mxu0 %v6124
      %6142 = vmatpush.bf16.msra.mxu0 %v6123
      %6143 = vmatpush.bf16.msra.mxu0 %v6122
      %6144 = vmatpush.bf16.msra.mxu0 %v6121
      %6145 = vmatmul.bf16.gmra.mxu0 %v6072
      %v6146 = vpop.f32.mrf.mxu0
      %v6147 = vadd.f32 0.0, %v6146
      %v6148 = vpop.f32.mrf.mxu0
      %6149 = vdwg.mxu0
      %v6150 = vadd.f32 %v6070, %v6147
      %v6151 = vld [vmem:[%s5400] sm:$0xf]
      %v6152 = vld [vmem:[%s5400 + $0x4] sm:$0xf]
      %v6153 = vld [vmem:[%s5400 + $0x8] sm:$0xf]
      %v6154 = vld [vmem:[%s5400 + $0xc] sm:$0xf]
      %v6155 = vld [vmem:[%s5400 + $0x10] sm:$0xf]
      %v6156 = vld [vmem:[%s5400 + $0x14] sm:$0xf]
      %v6157 = vld [vmem:[%s5400 + $0x18] sm:$0xf]
      %v6158 = vld [vmem:[%s5400 + $0x1c] sm:$0xf]
      %v6159 = vld [vmem:[%s5400 + $0x20] sm:$0xf]
      %v6160 = vld [vmem:[%s5400 + $0x24] sm:$0xf]
      %v6161 = vld [vmem:[%s5400 + $0x28] sm:$0xf]
      %v6162 = vld [vmem:[%s5400 + $0x2c] sm:$0xf]
      %v6163 = vld [vmem:[%s5400 + $0x30] sm:$0xf]
      %v6164 = vld [vmem:[%s5400 + $0x34] sm:$0xf]
      %v6165 = vld [vmem:[%s5400 + $0x38] sm:$0xf]
      %v6166 = vld [vmem:[%s5400 + $0x3c] sm:$0xf]
      %v6168 = vshrl.u32 %v6072, 16
      %v6170 = vshll.u32 %v6072, 16
      %v6172 = vrot.slane %v6170, 1
      %v6173 = vor.u32 %v6168, %v6172
      %v6191 = vunpack.c.l.b16 %v6151
      %v6192 = vunpack.c.l.b16 %v6152
      %v6193 = vunpack.c.l.b16 %v6153
      %v6194 = vunpack.c.l.b16 %v6154
      %v6195 = vunpack.c.l.b16 %v6155
      %v6196 = vunpack.c.l.b16 %v6156
      %v6197 = vunpack.c.l.b16 %v6157
      %v6198 = vunpack.c.l.b16 %v6158
      %v6199 = vunpack.c.l.b16 %v6159
      %v6200 = vunpack.c.l.b16 %v6160
      %v6201 = vunpack.c.l.b16 %v6161
      %v6202 = vunpack.c.l.b16 %v6162
      %v6203 = vunpack.c.l.b16 %v6163
      %v6204 = vunpack.c.l.b16 %v6164
      %v6205 = vunpack.c.l.b16 %v6165
      %v6206 = vunpack.c.l.b16 %v6166
      %v6207 = vpack.c.b16 %v6192, %v6191
      %v6208 = vpack.c.b16 %v6194, %v6193
      %v6209 = vpack.c.b16 %v6196, %v6195
      %v6210 = vpack.c.b16 %v6198, %v6197
      %v6211 = vpack.c.b16 %v6200, %v6199
      %v6212 = vpack.c.b16 %v6202, %v6201
      %v6213 = vpack.c.b16 %v6204, %v6203
      %v6214 = vpack.c.b16 %v6206, %v6205
      %6223 = vmatpush.bf16.msra.mxu0 %v6214
      %6224 = vmatpush.bf16.msra.mxu0 %v6213
      %6225 = vmatpush.bf16.msra.mxu0 %v6212
      %6226 = vmatpush.bf16.msra.mxu0 %v6211
      %6227 = vmatpush.bf16.msra.mxu0 %v6210
      %6228 = vmatpush.bf16.msra.mxu0 %v6209
      %6229 = vmatpush.bf16.msra.mxu0 %v6208
      %6230 = vmatpush.bf16.msra.mxu0 %v6207
      %6231 = vmatmul.bf16.gmra.mxu0 %v6173
      %v6232 = vpop.f32.mrf.mxu0
      %v6233 = vadd.f32 0.0, %v6232
      %v6234 = vpop.f32.mrf.mxu0
      %6235 = vdwg.mxu0
      %v6236 = vadd.f32 %v6150, %v6233
      %v6237 = vld [vmem:[%s5487] sm:$0xf]
      %v6238 = vld [vmem:[%s5487 + $0x4] sm:$0xf]
      %v6239 = vld [vmem:[%s5487 + $0x8] sm:$0xf]
      %v6240 = vld [vmem:[%s5487 + $0xc] sm:$0xf]
      %v6241 = vld [vmem:[%s5487 + $0x10] sm:$0xf]
      %v6242 = vld [vmem:[%s5487 + $0x14] sm:$0xf]
      %v6243 = vld [vmem:[%s5487 + $0x18] sm:$0xf]
      %v6244 = vld [vmem:[%s5487 + $0x1c] sm:$0xf]
      %v6245 = vld [vmem:[%s5487 + $0x20] sm:$0xf]
      %v6246 = vld [vmem:[%s5487 + $0x24] sm:$0xf]
      %v6247 = vld [vmem:[%s5487 + $0x28] sm:$0xf]
      %v6248 = vld [vmem:[%s5487 + $0x2c] sm:$0xf]
      %v6249 = vld [vmem:[%s5487 + $0x30] sm:$0xf]
      %v6250 = vld [vmem:[%s5487 + $0x34] sm:$0xf]
      %v6251 = vld [vmem:[%s5487 + $0x38] sm:$0xf]
      %v6252 = vld [vmem:[%s5487 + $0x3c] sm:$0xf]
      %v6254 = vrot.slane %v6072, 1
      %v6272 = vunpack.c.l.b16 %v6237
      %v6273 = vunpack.c.l.b16 %v6238
      %v6274 = vunpack.c.l.b16 %v6239
      %v6275 = vunpack.c.l.b16 %v6240
      %v6276 = vunpack.c.l.b16 %v6241
      %v6277 = vunpack.c.l.b16 %v6242
      %v6278 = vunpack.c.l.b16 %v6243
      %v6279 = vunpack.c.l.b16 %v6244
      %v6280 = vunpack.c.l.b16 %v6245
      %v6281 = vunpack.c.l.b16 %v6246
      %v6282 = vunpack.c.l.b16 %v6247
      %v6283 = vunpack.c.l.b16 %v6248
      %v6284 = vunpack.c.l.b16 %v6249
      %v6285 = vunpack.c.l.b16 %v6250
      %v6286 = vunpack.c.l.b16 %v6251
      %v6287 = vunpack.c.l.b16 %v6252
      %v6288 = vpack.c.b16 %v6273, %v6272
      %v6289 = vpack.c.b16 %v6275, %v6274
      %v6290 = vpack.c.b16 %v6277, %v6276
      %v6291 = vpack.c.b16 %v6279, %v6278
      %v6292 = vpack.c.b16 %v6281, %v6280
      %v6293 = vpack.c.b16 %v6283, %v6282
      %v6294 = vpack.c.b16 %v6285, %v6284
      %v6295 = vpack.c.b16 %v6287, %v6286
      %6304 = vmatpush.bf16.msra.mxu0 %v6295
      %6305 = vmatpush.bf16.msra.mxu0 %v6294
      %6306 = vmatpush.bf16.msra.mxu0 %v6293
      %6307 = vmatpush.bf16.msra.mxu0 %v6292
      %6308 = vmatpush.bf16.msra.mxu0 %v6291
      %6309 = vmatpush.bf16.msra.mxu0 %v6290
      %6310 = vmatpush.bf16.msra.mxu0 %v6289
      %6311 = vmatpush.bf16.msra.mxu0 %v6288
      %6312 = vmatmul.bf16.gmra.mxu0 %v6254
      %v6313 = vpop.f32.mrf.mxu0
      %v6314 = vadd.f32 0.0, %v6313
      %v6315 = vpop.f32.mrf.mxu0
      %6316 = vdwg.mxu0
      %v6317 = vadd.f32 %v6236, %v6314
      %v6318 = vld [vmem:[%s4] sm:$0x1]
      %v6320 = vperm.slane %v6318, 0
      %v6322 = vadd.f32 %v6317, %v6320
      %v6323 = vld [vmem:[%s2544] sm:$0xf]
      %v6324 = vadd.f32 %v6322, %v6323
      %v6325 = vmax.f32 %v6324, 0.0
      %v6326 = vpack.c.bf16 %v6325, %v6325
      %s6327 = scalar_lea.vmem %s224, 2
      %6328 = vst [vmem:[%s6327] sm:$0x3] %v6326
      %v6329 = vld [vmem:[%s2542] sm:$0x3f]
      %v6330 = vpack.c.bf16 %v6329, %v6329
      %v6331 = vld [vmem:[%s3] sm:$0xf]
      %v6332 = vld [vmem:[%s3 + $0x4] sm:$0xf]
      %v6333 = vld [vmem:[%s3 + $0x8] sm:$0xf]
      %v6334 = vld [vmem:[%s3 + $0xc] sm:$0xf]
      %v6335 = vld [vmem:[%s3 + $0x10] sm:$0xf]
      %v6336 = vld [vmem:[%s3 + $0x14] sm:$0xf]
      %v6337 = vld [vmem:[%s3 + $0x18] sm:$0xf]
      %v6338 = vld [vmem:[%s3 + $0x1c] sm:$0xf]
      %v6339 = vld [vmem:[%s3 + $0x20] sm:$0xf]
      %v6340 = vld [vmem:[%s3 + $0x24] sm:$0xf]
      %v6341 = vld [vmem:[%s3 + $0x28] sm:$0xf]
      %v6342 = vld [vmem:[%s3 + $0x2c] sm:$0xf]
      %v6343 = vld [vmem:[%s3 + $0x30] sm:$0xf]
      %v6344 = vld [vmem:[%s3 + $0x34] sm:$0xf]
      %v6345 = vld [vmem:[%s3 + $0x38] sm:$0xf]
      %v6346 = vld [vmem:[%s3 + $0x3c] sm:$0xf]
      %v6347 = vld [vmem:[%s4840] sm:$0xf]
      %v6348 = vld [vmem:[%s4840 + $0x4] sm:$0xf]
      %v6349 = vld [vmem:[%s4840 + $0x8] sm:$0xf]
      %v6350 = vld [vmem:[%s4840 + $0xc] sm:$0xf]
      %v6351 = vld [vmem:[%s4840 + $0x10] sm:$0xf]
      %v6352 = vld [vmem:[%s4840 + $0x14] sm:$0xf]
      %v6353 = vld [vmem:[%s4840 + $0x18] sm:$0xf]
      %v6354 = vld [vmem:[%s4840 + $0x1c] sm:$0xf]
      %v6355 = vld [vmem:[%s4840 + $0x20] sm:$0xf]
      %v6356 = vld [vmem:[%s4840 + $0x24] sm:$0xf]
      %v6357 = vld [vmem:[%s4840 + $0x28] sm:$0xf]
      %v6358 = vld [vmem:[%s4840 + $0x2c] sm:$0xf]
      %v6359 = vld [vmem:[%s4840 + $0x30] sm:$0xf]
      %v6360 = vld [vmem:[%s4840 + $0x34] sm:$0xf]
      %v6361 = vld [vmem:[%s4840 + $0x38] sm:$0xf]
      %v6362 = vld [vmem:[%s4840 + $0x3c] sm:$0xf]
      %v6364 = vshrl.u32 %v6330, 16
      %v6366 = vshll.u32 %v6330, 16
      %v6368 = vrot.slane %v6366, 1
      %v6369 = vor.u32 %v6364, %v6368
      %v6387 = vunpack.c.l.b16 %v6347
      %v6388 = vunpack.c.l.b16 %v6348
      %v6389 = vunpack.c.l.b16 %v6349
      %v6390 = vunpack.c.l.b16 %v6350
      %v6391 = vunpack.c.l.b16 %v6351
      %v6392 = vunpack.c.l.b16 %v6352
      %v6393 = vunpack.c.l.b16 %v6353
      %v6394 = vunpack.c.l.b16 %v6354
      %v6395 = vunpack.c.l.b16 %v6355
      %v6396 = vunpack.c.l.b16 %v6356
      %v6397 = vunpack.c.l.b16 %v6357
      %v6398 = vunpack.c.l.b16 %v6358
      %v6399 = vunpack.c.l.b16 %v6359
      %v6400 = vunpack.c.l.b16 %v6360
      %v6401 = vunpack.c.l.b16 %v6361
      %v6402 = vunpack.c.l.b16 %v6362
      %v6403 = vpack.c.b16 %v6388, %v6387
      %v6404 = vpack.c.b16 %v6390, %v6389
      %v6405 = vpack.c.b16 %v6392, %v6391
      %v6406 = vpack.c.b16 %v6394, %v6393
      %v6407 = vpack.c.b16 %v6396, %v6395
      %v6408 = vpack.c.b16 %v6398, %v6397
      %v6409 = vpack.c.b16 %v6400, %v6399
      %v6410 = vpack.c.b16 %v6402, %v6401
      %6419 = vmatpush.bf16.msra.mxu0 %v6410
      %6420 = vmatpush.bf16.msra.mxu0 %v6409
      %6421 = vmatpush.bf16.msra.mxu0 %v6408
      %6422 = vmatpush.bf16.msra.mxu0 %v6407
      %6423 = vmatpush.bf16.msra.mxu0 %v6406
      %6424 = vmatpush.bf16.msra.mxu0 %v6405
      %6425 = vmatpush.bf16.msra.mxu0 %v6404
      %6426 = vmatpush.bf16.msra.mxu0 %v6403
      %6427 = vmatmul.bf16.gmra.mxu0 %v6369
      %v6428 = vpop.f32.mrf.mxu0
      %v6429 = vadd.f32 0.0, %v6428
      %v6430 = vpop.f32.mrf.mxu0
      %6431 = vdwg.mxu0
      %v6448 = vunpack.c.l.b16 %v6331
      %v6449 = vunpack.c.l.b16 %v6332
      %v6450 = vunpack.c.l.b16 %v6333
      %v6451 = vunpack.c.l.b16 %v6334
      %v6452 = vunpack.c.l.b16 %v6335
      %v6453 = vunpack.c.l.b16 %v6336
      %v6454 = vunpack.c.l.b16 %v6337
      %v6455 = vunpack.c.l.b16 %v6338
      %v6456 = vunpack.c.l.b16 %v6339
      %v6457 = vunpack.c.l.b16 %v6340
      %v6458 = vunpack.c.l.b16 %v6341
      %v6459 = vunpack.c.l.b16 %v6342
      %v6460 = vunpack.c.l.b16 %v6343
      %v6461 = vunpack.c.l.b16 %v6344
      %v6462 = vunpack.c.l.b16 %v6345
      %v6463 = vunpack.c.l.b16 %v6346
      %v6464 = vpack.c.b16 %v6449, %v6448
      %v6465 = vpack.c.b16 %v6451, %v6450
      %v6466 = vpack.c.b16 %v6453, %v6452
      %v6467 = vpack.c.b16 %v6455, %v6454
      %v6468 = vpack.c.b16 %v6457, %v6456
      %v6469 = vpack.c.b16 %v6459, %v6458
      %v6470 = vpack.c.b16 %v6461, %v6460
      %v6471 = vpack.c.b16 %v6463, %v6462
      %6480 = vmatpush.bf16.msra.mxu0 %v6471
      %6481 = vmatpush.bf16.msra.mxu0 %v6470
      %6482 = vmatpush.bf16.msra.mxu0 %v6469
      %6483 = vmatpush.bf16.msra.mxu0 %v6468
      %6484 = vmatpush.bf16.msra.mxu0 %v6467
      %6485 = vmatpush.bf16.msra.mxu0 %v6466
      %6486 = vmatpush.bf16.msra.mxu0 %v6465
      %6487 = vmatpush.bf16.msra.mxu0 %v6464
      %6488 = vmatmul.bf16.gmra.mxu0 %v6330
      %v6489 = vpop.f32.mrf.mxu0
      %v6490 = vadd.f32 %v6429, %v6489
      %v6491 = vpop.f32.mrf.mxu0
      %6492 = vdwg.mxu0
      %v6493 = vld [vmem:[%s4987] sm:$0xf]
      %v6494 = vld [vmem:[%s4987 + $0x4] sm:$0xf]
      %v6495 = vld [vmem:[%s4987 + $0x8] sm:$0xf]
      %v6496 = vld [vmem:[%s4987 + $0xc] sm:$0xf]
      %v6497 = vld [vmem:[%s4987 + $0x10] sm:$0xf]
      %v6498 = vld [vmem:[%s4987 + $0x14] sm:$0xf]
      %v6499 = vld [vmem:[%s4987 + $0x18] sm:$0xf]
      %v6500 = vld [vmem:[%s4987 + $0x1c] sm:$0xf]
      %v6501 = vld [vmem:[%s4987 + $0x20] sm:$0xf]
      %v6502 = vld [vmem:[%s4987 + $0x24] sm:$0xf]
      %v6503 = vld [vmem:[%s4987 + $0x28] sm:$0xf]
      %v6504 = vld [vmem:[%s4987 + $0x2c] sm:$0xf]
      %v6505 = vld [vmem:[%s4987 + $0x30] sm:$0xf]
      %v6506 = vld [vmem:[%s4987 + $0x34] sm:$0xf]
      %v6507 = vld [vmem:[%s4987 + $0x38] sm:$0xf]
      %v6508 = vld [vmem:[%s4987 + $0x3c] sm:$0xf]
      %v6510 = vrot.slane %v6330, 1
      %v6528 = vunpack.c.l.b16 %v6493
      %v6529 = vunpack.c.l.b16 %v6494
      %v6530 = vunpack.c.l.b16 %v6495
      %v6531 = vunpack.c.l.b16 %v6496
      %v6532 = vunpack.c.l.b16 %v6497
      %v6533 = vunpack.c.l.b16 %v6498
      %v6534 = vunpack.c.l.b16 %v6499
      %v6535 = vunpack.c.l.b16 %v6500
      %v6536 = vunpack.c.l.b16 %v6501
      %v6537 = vunpack.c.l.b16 %v6502
      %v6538 = vunpack.c.l.b16 %v6503
      %v6539 = vunpack.c.l.b16 %v6504
      %v6540 = vunpack.c.l.b16 %v6505
      %v6541 = vunpack.c.l.b16 %v6506
      %v6542 = vunpack.c.l.b16 %v6507
      %v6543 = vunpack.c.l.b16 %v6508
      %v6544 = vpack.c.b16 %v6529, %v6528
      %v6545 = vpack.c.b16 %v6531, %v6530
      %v6546 = vpack.c.b16 %v6533, %v6532
      %v6547 = vpack.c.b16 %v6535, %v6534
      %v6548 = vpack.c.b16 %v6537, %v6536
      %v6549 = vpack.c.b16 %v6539, %v6538
      %v6550 = vpack.c.b16 %v6541, %v6540
      %v6551 = vpack.c.b16 %v6543, %v6542
      %6560 = vmatpush.bf16.msra.mxu0 %v6551
      %6561 = vmatpush.bf16.msra.mxu0 %v6550
      %6562 = vmatpush.bf16.msra.mxu0 %v6549
      %6563 = vmatpush.bf16.msra.mxu0 %v6548
      %6564 = vmatpush.bf16.msra.mxu0 %v6547
      %6565 = vmatpush.bf16.msra.mxu0 %v6546
      %6566 = vmatpush.bf16.msra.mxu0 %v6545
      %6567 = vmatpush.bf16.msra.mxu0 %v6544
      %6568 = vmatmul.bf16.gmra.mxu0 %v6510
      %v6569 = vpop.f32.mrf.mxu0
      %v6570 = vadd.f32 0.0, %v6569
      %v6571 = vpop.f32.mrf.mxu0
      %6572 = vdwg.mxu0
      %v6573 = vadd.f32 %v6490, %v6570
      %v6574 = vld [vmem:[%s3680] sm:$0x3f]
      %v6575 = vpack.c.bf16 %v6574, %v6574
      %v6576 = vld [vmem:[%s5071] sm:$0xf]
      %v6577 = vld [vmem:[%s5071 + $0x4] sm:$0xf]
      %v6578 = vld [vmem:[%s5071 + $0x8] sm:$0xf]
      %v6579 = vld [vmem:[%s5071 + $0xc] sm:$0xf]
      %v6580 = vld [vmem:[%s5071 + $0x10] sm:$0xf]
      %v6581 = vld [vmem:[%s5071 + $0x14] sm:$0xf]
      %v6582 = vld [vmem:[%s5071 + $0x18] sm:$0xf]
      %v6583 = vld [vmem:[%s5071 + $0x1c] sm:$0xf]
      %v6584 = vld [vmem:[%s5071 + $0x20] sm:$0xf]
      %v6585 = vld [vmem:[%s5071 + $0x24] sm:$0xf]
      %v6586 = vld [vmem:[%s5071 + $0x28] sm:$0xf]
      %v6587 = vld [vmem:[%s5071 + $0x2c] sm:$0xf]
      %v6588 = vld [vmem:[%s5071 + $0x30] sm:$0xf]
      %v6589 = vld [vmem:[%s5071 + $0x34] sm:$0xf]
      %v6590 = vld [vmem:[%s5071 + $0x38] sm:$0xf]
      %v6591 = vld [vmem:[%s5071 + $0x3c] sm:$0xf]
      %v6608 = vunpack.c.l.b16 %v6576
      %v6609 = vunpack.c.l.b16 %v6577
      %v6610 = vunpack.c.l.b16 %v6578
      %v6611 = vunpack.c.l.b16 %v6579
      %v6612 = vunpack.c.l.b16 %v6580
      %v6613 = vunpack.c.l.b16 %v6581
      %v6614 = vunpack.c.l.b16 %v6582
      %v6615 = vunpack.c.l.b16 %v6583
      %v6616 = vunpack.c.l.b16 %v6584
      %v6617 = vunpack.c.l.b16 %v6585
      %v6618 = vunpack.c.l.b16 %v6586
      %v6619 = vunpack.c.l.b16 %v6587
      %v6620 = vunpack.c.l.b16 %v6588
      %v6621 = vunpack.c.l.b16 %v6589
      %v6622 = vunpack.c.l.b16 %v6590
      %v6623 = vunpack.c.l.b16 %v6591
      %v6624 = vpack.c.b16 %v6609, %v6608
      %v6625 = vpack.c.b16 %v6611, %v6610
      %v6626 = vpack.c.b16 %v6613, %v6612
      %v6627 = vpack.c.b16 %v6615, %v6614
      %v6628 = vpack.c.b16 %v6617, %v6616
      %v6629 = vpack.c.b16 %v6619, %v6618
      %v6630 = vpack.c.b16 %v6621, %v6620
      %v6631 = vpack.c.b16 %v6623, %v6622
      %6640 = vmatpush.bf16.msra.mxu0 %v6631
      %6641 = vmatpush.bf16.msra.mxu0 %v6630
      %6642 = vmatpush.bf16.msra.mxu0 %v6629
      %6643 = vmatpush.bf16.msra.mxu0 %v6628
      %6644 = vmatpush.bf16.msra.mxu0 %v6627
      %6645 = vmatpush.bf16.msra.mxu0 %v6626
      %6646 = vmatpush.bf16.msra.mxu0 %v6625
      %6647 = vmatpush.bf16.msra.mxu0 %v6624
      %6648 = vmatmul.bf16.gmra.mxu0 %v6575
      %v6649 = vpop.f32.mrf.mxu0
      %v6650 = vadd.f32 0.0, %v6649
      %v6651 = vpop.f32.mrf.mxu0
      %6652 = vdwg.mxu0
      %v6653 = vadd.f32 %v6573, %v6650
      %v6654 = vld [vmem:[%s5150] sm:$0xf]
      %v6655 = vld [vmem:[%s5150 + $0x4] sm:$0xf]
      %v6656 = vld [vmem:[%s5150 + $0x8] sm:$0xf]
      %v6657 = vld [vmem:[%s5150 + $0xc] sm:$0xf]
      %v6658 = vld [vmem:[%s5150 + $0x10] sm:$0xf]
      %v6659 = vld [vmem:[%s5150 + $0x14] sm:$0xf]
      %v6660 = vld [vmem:[%s5150 + $0x18] sm:$0xf]
      %v6661 = vld [vmem:[%s5150 + $0x1c] sm:$0xf]
      %v6662 = vld [vmem:[%s5150 + $0x20] sm:$0xf]
      %v6663 = vld [vmem:[%s5150 + $0x24] sm:$0xf]
      %v6664 = vld [vmem:[%s5150 + $0x28] sm:$0xf]
      %v6665 = vld [vmem:[%s5150 + $0x2c] sm:$0xf]
      %v6666 = vld [vmem:[%s5150 + $0x30] sm:$0xf]
      %v6667 = vld [vmem:[%s5150 + $0x34] sm:$0xf]
      %v6668 = vld [vmem:[%s5150 + $0x38] sm:$0xf]
      %v6669 = vld [vmem:[%s5150 + $0x3c] sm:$0xf]
      %v6671 = vshrl.u32 %v6575, 16
      %v6673 = vshll.u32 %v6575, 16
      %v6675 = vrot.slane %v6673, 1
      %v6676 = vor.u32 %v6671, %v6675
      %v6694 = vunpack.c.l.b16 %v6654
      %v6695 = vunpack.c.l.b16 %v6655
      %v6696 = vunpack.c.l.b16 %v6656
      %v6697 = vunpack.c.l.b16 %v6657
      %v6698 = vunpack.c.l.b16 %v6658
      %v6699 = vunpack.c.l.b16 %v6659
      %v6700 = vunpack.c.l.b16 %v6660
      %v6701 = vunpack.c.l.b16 %v6661
      %v6702 = vunpack.c.l.b16 %v6662
      %v6703 = vunpack.c.l.b16 %v6663
      %v6704 = vunpack.c.l.b16 %v6664
      %v6705 = vunpack.c.l.b16 %v6665
      %v6706 = vunpack.c.l.b16 %v6666
      %v6707 = vunpack.c.l.b16 %v6667
      %v6708 = vunpack.c.l.b16 %v6668
      %v6709 = vunpack.c.l.b16 %v6669
      %v6710 = vpack.c.b16 %v6695, %v6694
      %v6711 = vpack.c.b16 %v6697, %v6696
      %v6712 = vpack.c.b16 %v6699, %v6698
      %v6713 = vpack.c.b16 %v6701, %v6700
      %v6714 = vpack.c.b16 %v6703, %v6702
      %v6715 = vpack.c.b16 %v6705, %v6704
      %v6716 = vpack.c.b16 %v6707, %v6706
      %v6717 = vpack.c.b16 %v6709, %v6708
      %6726 = vmatpush.bf16.msra.mxu0 %v6717
      %6727 = vmatpush.bf16.msra.mxu0 %v6716
      %6728 = vmatpush.bf16.msra.mxu0 %v6715
      %6729 = vmatpush.bf16.msra.mxu0 %v6714
      %6730 = vmatpush.bf16.msra.mxu0 %v6713
      %6731 = vmatpush.bf16.msra.mxu0 %v6712
      %6732 = vmatpush.bf16.msra.mxu0 %v6711
      %6733 = vmatpush.bf16.msra.mxu0 %v6710
      %6734 = vmatmul.bf16.gmra.mxu0 %v6676
      %v6735 = vpop.f32.mrf.mxu0
      %v6736 = vadd.f32 0.0, %v6735
      %v6737 = vpop.f32.mrf.mxu0
      %6738 = vdwg.mxu0
      %v6739 = vadd.f32 %v6653, %v6736
      %v6740 = vld [vmem:[%s5237] sm:$0xf]
      %v6741 = vld [vmem:[%s5237 + $0x4] sm:$0xf]
      %v6742 = vld [vmem:[%s5237 + $0x8] sm:$0xf]
      %v6743 = vld [vmem:[%s5237 + $0xc] sm:$0xf]
      %v6744 = vld [vmem:[%s5237 + $0x10] sm:$0xf]
      %v6745 = vld [vmem:[%s5237 + $0x14] sm:$0xf]
      %v6746 = vld [vmem:[%s5237 + $0x18] sm:$0xf]
      %v6747 = vld [vmem:[%s5237 + $0x1c] sm:$0xf]
      %v6748 = vld [vmem:[%s5237 + $0x20] sm:$0xf]
      %v6749 = vld [vmem:[%s5237 + $0x24] sm:$0xf]
      %v6750 = vld [vmem:[%s5237 + $0x28] sm:$0xf]
      %v6751 = vld [vmem:[%s5237 + $0x2c] sm:$0xf]
      %v6752 = vld [vmem:[%s5237 + $0x30] sm:$0xf]
      %v6753 = vld [vmem:[%s5237 + $0x34] sm:$0xf]
      %v6754 = vld [vmem:[%s5237 + $0x38] sm:$0xf]
      %v6755 = vld [vmem:[%s5237 + $0x3c] sm:$0xf]
      %v6757 = vrot.slane %v6575, 1
      %v6775 = vunpack.c.l.b16 %v6740
      %v6776 = vunpack.c.l.b16 %v6741
      %v6777 = vunpack.c.l.b16 %v6742
      %v6778 = vunpack.c.l.b16 %v6743
      %v6779 = vunpack.c.l.b16 %v6744
      %v6780 = vunpack.c.l.b16 %v6745
      %v6781 = vunpack.c.l.b16 %v6746
      %v6782 = vunpack.c.l.b16 %v6747
      %v6783 = vunpack.c.l.b16 %v6748
      %v6784 = vunpack.c.l.b16 %v6749
      %v6785 = vunpack.c.l.b16 %v6750
      %v6786 = vunpack.c.l.b16 %v6751
      %v6787 = vunpack.c.l.b16 %v6752
      %v6788 = vunpack.c.l.b16 %v6753
      %v6789 = vunpack.c.l.b16 %v6754
      %v6790 = vunpack.c.l.b16 %v6755
      %v6791 = vpack.c.b16 %v6776, %v6775
      %v6792 = vpack.c.b16 %v6778, %v6777
      %v6793 = vpack.c.b16 %v6780, %v6779
      %v6794 = vpack.c.b16 %v6782, %v6781
      %v6795 = vpack.c.b16 %v6784, %v6783
      %v6796 = vpack.c.b16 %v6786, %v6785
      %v6797 = vpack.c.b16 %v6788, %v6787
      %v6798 = vpack.c.b16 %v6790, %v6789
      %6807 = vmatpush.bf16.msra.mxu0 %v6798
      %6808 = vmatpush.bf16.msra.mxu0 %v6797
      %6809 = vmatpush.bf16.msra.mxu0 %v6796
      %6810 = vmatpush.bf16.msra.mxu0 %v6795
      %6811 = vmatpush.bf16.msra.mxu0 %v6794
      %6812 = vmatpush.bf16.msra.mxu0 %v6793
      %6813 = vmatpush.bf16.msra.mxu0 %v6792
      %6814 = vmatpush.bf16.msra.mxu0 %v6791
      %6815 = vmatmul.bf16.gmra.mxu0 %v6757
      %v6816 = vpop.f32.mrf.mxu0
      %v6817 = vadd.f32 0.0, %v6816
      %v6818 = vpop.f32.mrf.mxu0
      %6819 = vdwg.mxu0
      %v6820 = vadd.f32 %v6739, %v6817
      %v6821 = vld [vmem:[%s4818] sm:$0x3f]
      %v6822 = vpack.c.bf16 %v6821, %v6821
      %v6823 = vld [vmem:[%s5321] sm:$0xf]
      %v6824 = vld [vmem:[%s5321 + $0x4] sm:$0xf]
      %v6825 = vld [vmem:[%s5321 + $0x8] sm:$0xf]
      %v6826 = vld [vmem:[%s5321 + $0xc] sm:$0xf]
      %v6827 = vld [vmem:[%s5321 + $0x10] sm:$0xf]
      %v6828 = vld [vmem:[%s5321 + $0x14] sm:$0xf]
      %v6829 = vld [vmem:[%s5321 + $0x18] sm:$0xf]
      %v6830 = vld [vmem:[%s5321 + $0x1c] sm:$0xf]
      %v6831 = vld [vmem:[%s5321 + $0x20] sm:$0xf]
      %v6832 = vld [vmem:[%s5321 + $0x24] sm:$0xf]
      %v6833 = vld [vmem:[%s5321 + $0x28] sm:$0xf]
      %v6834 = vld [vmem:[%s5321 + $0x2c] sm:$0xf]
      %v6835 = vld [vmem:[%s5321 + $0x30] sm:$0xf]
      %v6836 = vld [vmem:[%s5321 + $0x34] sm:$0xf]
      %v6837 = vld [vmem:[%s5321 + $0x38] sm:$0xf]
      %v6838 = vld [vmem:[%s5321 + $0x3c] sm:$0xf]
      %v6855 = vunpack.c.l.b16 %v6823
      %v6856 = vunpack.c.l.b16 %v6824
      %v6857 = vunpack.c.l.b16 %v6825
      %v6858 = vunpack.c.l.b16 %v6826
      %v6859 = vunpack.c.l.b16 %v6827
      %v6860 = vunpack.c.l.b16 %v6828
      %v6861 = vunpack.c.l.b16 %v6829
      %v6862 = vunpack.c.l.b16 %v6830
      %v6863 = vunpack.c.l.b16 %v6831
      %v6864 = vunpack.c.l.b16 %v6832
      %v6865 = vunpack.c.l.b16 %v6833
      %v6866 = vunpack.c.l.b16 %v6834
      %v6867 = vunpack.c.l.b16 %v6835
      %v6868 = vunpack.c.l.b16 %v6836
      %v6869 = vunpack.c.l.b16 %v6837
      %v6870 = vunpack.c.l.b16 %v6838
      %v6871 = vpack.c.b16 %v6856, %v6855
      %v6872 = vpack.c.b16 %v6858, %v6857
      %v6873 = vpack.c.b16 %v6860, %v6859
      %v6874 = vpack.c.b16 %v6862, %v6861
      %v6875 = vpack.c.b16 %v6864, %v6863
      %v6876 = vpack.c.b16 %v6866, %v6865
      %v6877 = vpack.c.b16 %v6868, %v6867
      %v6878 = vpack.c.b16 %v6870, %v6869
      %6887 = vmatpush.bf16.msra.mxu0 %v6878
      %6888 = vmatpush.bf16.msra.mxu0 %v6877
      %6889 = vmatpush.bf16.msra.mxu0 %v6876
      %6890 = vmatpush.bf16.msra.mxu0 %v6875
      %6891 = vmatpush.bf16.msra.mxu0 %v6874
      %6892 = vmatpush.bf16.msra.mxu0 %v6873
      %6893 = vmatpush.bf16.msra.mxu0 %v6872
      %6894 = vmatpush.bf16.msra.mxu0 %v6871
      %6895 = vmatmul.bf16.gmra.mxu0 %v6822
      %v6896 = vpop.f32.mrf.mxu0
      %v6897 = vadd.f32 0.0, %v6896
      %v6898 = vpop.f32.mrf.mxu0
      %6899 = vdwg.mxu0
      %v6900 = vadd.f32 %v6820, %v6897
      %v6901 = vld [vmem:[%s5400] sm:$0xf]
      %v6902 = vld [vmem:[%s5400 + $0x4] sm:$0xf]
      %v6903 = vld [vmem:[%s5400 + $0x8] sm:$0xf]
      %v6904 = vld [vmem:[%s5400 + $0xc] sm:$0xf]
      %v6905 = vld [vmem:[%s5400 + $0x10] sm:$0xf]
      %v6906 = vld [vmem:[%s5400 + $0x14] sm:$0xf]
      %v6907 = vld [vmem:[%s5400 + $0x18] sm:$0xf]
      %v6908 = vld [vmem:[%s5400 + $0x1c] sm:$0xf]
      %v6909 = vld [vmem:[%s5400 + $0x20] sm:$0xf]
      %v6910 = vld [vmem:[%s5400 + $0x24] sm:$0xf]
      %v6911 = vld [vmem:[%s5400 + $0x28] sm:$0xf]
      %v6912 = vld [vmem:[%s5400 + $0x2c] sm:$0xf]
      %v6913 = vld [vmem:[%s5400 + $0x30] sm:$0xf]
      %v6914 = vld [vmem:[%s5400 + $0x34] sm:$0xf]
      %v6915 = vld [vmem:[%s5400 + $0x38] sm:$0xf]
      %v6916 = vld [vmem:[%s5400 + $0x3c] sm:$0xf]
      %v6918 = vshrl.u32 %v6822, 16
      %v6920 = vshll.u32 %v6822, 16
      %v6922 = vrot.slane %v6920, 1
      %v6923 = vor.u32 %v6918, %v6922
      %v6941 = vunpack.c.l.b16 %v6901
      %v6942 = vunpack.c.l.b16 %v6902
      %v6943 = vunpack.c.l.b16 %v6903
      %v6944 = vunpack.c.l.b16 %v6904
      %v6945 = vunpack.c.l.b16 %v6905
      %v6946 = vunpack.c.l.b16 %v6906
      %v6947 = vunpack.c.l.b16 %v6907
      %v6948 = vunpack.c.l.b16 %v6908
      %v6949 = vunpack.c.l.b16 %v6909
      %v6950 = vunpack.c.l.b16 %v6910
      %v6951 = vunpack.c.l.b16 %v6911
      %v6952 = vunpack.c.l.b16 %v6912
      %v6953 = vunpack.c.l.b16 %v6913
      %v6954 = vunpack.c.l.b16 %v6914
      %v6955 = vunpack.c.l.b16 %v6915
      %v6956 = vunpack.c.l.b16 %v6916
      %v6957 = vpack.c.b16 %v6942, %v6941
      %v6958 = vpack.c.b16 %v6944, %v6943
      %v6959 = vpack.c.b16 %v6946, %v6945
      %v6960 = vpack.c.b16 %v6948, %v6947
      %v6961 = vpack.c.b16 %v6950, %v6949
      %v6962 = vpack.c.b16 %v6952, %v6951
      %v6963 = vpack.c.b16 %v6954, %v6953
      %v6964 = vpack.c.b16 %v6956, %v6955
      %6973 = vmatpush.bf16.msra.mxu0 %v6964
      %6974 = vmatpush.bf16.msra.mxu0 %v6963
      %6975 = vmatpush.bf16.msra.mxu0 %v6962
      %6976 = vmatpush.bf16.msra.mxu0 %v6961
      %6977 = vmatpush.bf16.msra.mxu0 %v6960
      %6978 = vmatpush.bf16.msra.mxu0 %v6959
      %6979 = vmatpush.bf16.msra.mxu0 %v6958
      %6980 = vmatpush.bf16.msra.mxu0 %v6957
      %6981 = vmatmul.bf16.gmra.mxu0 %v6923
      %v6982 = vpop.f32.mrf.mxu0
      %v6983 = vadd.f32 0.0, %v6982
      %v6984 = vpop.f32.mrf.mxu0
      %6985 = vdwg.mxu0
      %v6986 = vadd.f32 %v6900, %v6983
      %v6987 = vld [vmem:[%s5487] sm:$0xf]
      %v6988 = vld [vmem:[%s5487 + $0x4] sm:$0xf]
      %v6989 = vld [vmem:[%s5487 + $0x8] sm:$0xf]
      %v6990 = vld [vmem:[%s5487 + $0xc] sm:$0xf]
      %v6991 = vld [vmem:[%s5487 + $0x10] sm:$0xf]
      %v6992 = vld [vmem:[%s5487 + $0x14] sm:$0xf]
      %v6993 = vld [vmem:[%s5487 + $0x18] sm:$0xf]
      %v6994 = vld [vmem:[%s5487 + $0x1c] sm:$0xf]
      %v6995 = vld [vmem:[%s5487 + $0x20] sm:$0xf]
      %v6996 = vld [vmem:[%s5487 + $0x24] sm:$0xf]
      %v6997 = vld [vmem:[%s5487 + $0x28] sm:$0xf]
      %v6998 = vld [vmem:[%s5487 + $0x2c] sm:$0xf]
      %v6999 = vld [vmem:[%s5487 + $0x30] sm:$0xf]
      %v7000 = vld [vmem:[%s5487 + $0x34] sm:$0xf]
      %v7001 = vld [vmem:[%s5487 + $0x38] sm:$0xf]
      %v7002 = vld [vmem:[%s5487 + $0x3c] sm:$0xf]
      %v7004 = vrot.slane %v6822, 1
      %v7022 = vunpack.c.l.b16 %v6987
      %v7023 = vunpack.c.l.b16 %v6988
      %v7024 = vunpack.c.l.b16 %v6989
      %v7025 = vunpack.c.l.b16 %v6990
      %v7026 = vunpack.c.l.b16 %v6991
      %v7027 = vunpack.c.l.b16 %v6992
      %v7028 = vunpack.c.l.b16 %v6993
      %v7029 = vunpack.c.l.b16 %v6994
      %v7030 = vunpack.c.l.b16 %v6995
      %v7031 = vunpack.c.l.b16 %v6996
      %v7032 = vunpack.c.l.b16 %v6997
      %v7033 = vunpack.c.l.b16 %v6998
      %v7034 = vunpack.c.l.b16 %v6999
      %v7035 = vunpack.c.l.b16 %v7000
      %v7036 = vunpack.c.l.b16 %v7001
      %v7037 = vunpack.c.l.b16 %v7002
      %v7038 = vpack.c.b16 %v7023, %v7022
      %v7039 = vpack.c.b16 %v7025, %v7024
      %v7040 = vpack.c.b16 %v7027, %v7026
      %v7041 = vpack.c.b16 %v7029, %v7028
      %v7042 = vpack.c.b16 %v7031, %v7030
      %v7043 = vpack.c.b16 %v7033, %v7032
      %v7044 = vpack.c.b16 %v7035, %v7034
      %v7045 = vpack.c.b16 %v7037, %v7036
      %7054 = vmatpush.bf16.msra.mxu0 %v7045
      %7055 = vmatpush.bf16.msra.mxu0 %v7044
      %7056 = vmatpush.bf16.msra.mxu0 %v7043
      %7057 = vmatpush.bf16.msra.mxu0 %v7042
      %7058 = vmatpush.bf16.msra.mxu0 %v7041
      %7059 = vmatpush.bf16.msra.mxu0 %v7040
      %7060 = vmatpush.bf16.msra.mxu0 %v7039
      %7061 = vmatpush.bf16.msra.mxu0 %v7038
      %7062 = vmatmul.bf16.gmra.mxu0 %v7004
      %v7063 = vpop.f32.mrf.mxu0
      %v7064 = vadd.f32 0.0, %v7063
      %v7065 = vpop.f32.mrf.mxu0
      %7066 = vdwg.mxu0
      %v7067 = vadd.f32 %v6986, %v7064
      %v7068 = vld [vmem:[%s4] sm:$0x1]
      %v7070 = vperm.slane %v7068, 0
      %v7072 = vadd.f32 %v7067, %v7070
      %v7073 = vld [vmem:[%s3682] sm:$0xf]
      %v7074 = vadd.f32 %v7072, %v7073
      %v7075 = vmax.f32 %v7074, 0.0
      %v7076 = vpack.c.bf16 %v7075, %v7075
      %s7077 = scalar_lea.vmem %s224, 4
      %7078 = vst [vmem:[%s7077] sm:$0x3] %v7076
      %v7079 = vld [vmem:[%s3680] sm:$0x3f]
      %v7080 = vpack.c.bf16 %v7079, %v7079
      %v7081 = vld [vmem:[%s3] sm:$0xf]
      %v7082 = vld [vmem:[%s3 + $0x4] sm:$0xf]
      %v7083 = vld [vmem:[%s3 + $0x8] sm:$0xf]
      %v7084 = vld [vmem:[%s3 + $0xc] sm:$0xf]
      %v7085 = vld [vmem:[%s3 + $0x10] sm:$0xf]
      %v7086 = vld [vmem:[%s3 + $0x14] sm:$0xf]
      %v7087 = vld [vmem:[%s3 + $0x18] sm:$0xf]
      %v7088 = vld [vmem:[%s3 + $0x1c] sm:$0xf]
      %v7089 = vld [vmem:[%s3 + $0x20] sm:$0xf]
      %v7090 = vld [vmem:[%s3 + $0x24] sm:$0xf]
      %v7091 = vld [vmem:[%s3 + $0x28] sm:$0xf]
      %v7092 = vld [vmem:[%s3 + $0x2c] sm:$0xf]
      %v7093 = vld [vmem:[%s3 + $0x30] sm:$0xf]
      %v7094 = vld [vmem:[%s3 + $0x34] sm:$0xf]
      %v7095 = vld [vmem:[%s3 + $0x38] sm:$0xf]
      %v7096 = vld [vmem:[%s3 + $0x3c] sm:$0xf]
      %v7097 = vld [vmem:[%s4840] sm:$0xf]
      %v7098 = vld [vmem:[%s4840 + $0x4] sm:$0xf]
      %v7099 = vld [vmem:[%s4840 + $0x8] sm:$0xf]
      %v7100 = vld [vmem:[%s4840 + $0xc] sm:$0xf]
      %v7101 = vld [vmem:[%s4840 + $0x10] sm:$0xf]
      %v7102 = vld [vmem:[%s4840 + $0x14] sm:$0xf]
      %v7103 = vld [vmem:[%s4840 + $0x18] sm:$0xf]
      %v7104 = vld [vmem:[%s4840 + $0x1c] sm:$0xf]
      %v7105 = vld [vmem:[%s4840 + $0x20] sm:$0xf]
      %v7106 = vld [vmem:[%s4840 + $0x24] sm:$0xf]
      %v7107 = vld [vmem:[%s4840 + $0x28] sm:$0xf]
      %v7108 = vld [vmem:[%s4840 + $0x2c] sm:$0xf]
      %v7109 = vld [vmem:[%s4840 + $0x30] sm:$0xf]
      %v7110 = vld [vmem:[%s4840 + $0x34] sm:$0xf]
      %v7111 = vld [vmem:[%s4840 + $0x38] sm:$0xf]
      %v7112 = vld [vmem:[%s4840 + $0x3c] sm:$0xf]
      %v7114 = vshrl.u32 %v7080, 16
      %v7116 = vshll.u32 %v7080, 16
      %v7118 = vrot.slane %v7116, 1
      %v7119 = vor.u32 %v7114, %v7118
      %v7137 = vunpack.c.l.b16 %v7097
      %v7138 = vunpack.c.l.b16 %v7098
      %v7139 = vunpack.c.l.b16 %v7099
      %v7140 = vunpack.c.l.b16 %v7100
      %v7141 = vunpack.c.l.b16 %v7101
      %v7142 = vunpack.c.l.b16 %v7102
      %v7143 = vunpack.c.l.b16 %v7103
      %v7144 = vunpack.c.l.b16 %v7104
      %v7145 = vunpack.c.l.b16 %v7105
      %v7146 = vunpack.c.l.b16 %v7106
      %v7147 = vunpack.c.l.b16 %v7107
      %v7148 = vunpack.c.l.b16 %v7108
      %v7149 = vunpack.c.l.b16 %v7109
      %v7150 = vunpack.c.l.b16 %v7110
      %v7151 = vunpack.c.l.b16 %v7111
      %v7152 = vunpack.c.l.b16 %v7112
      %v7153 = vpack.c.b16 %v7138, %v7137
      %v7154 = vpack.c.b16 %v7140, %v7139
      %v7155 = vpack.c.b16 %v7142, %v7141
      %v7156 = vpack.c.b16 %v7144, %v7143
      %v7157 = vpack.c.b16 %v7146, %v7145
      %v7158 = vpack.c.b16 %v7148, %v7147
      %v7159 = vpack.c.b16 %v7150, %v7149
      %v7160 = vpack.c.b16 %v7152, %v7151
      %7169 = vmatpush.bf16.msra.mxu0 %v7160
      %7170 = vmatpush.bf16.msra.mxu0 %v7159
      %7171 = vmatpush.bf16.msra.mxu0 %v7158
      %7172 = vmatpush.bf16.msra.mxu0 %v7157
      %7173 = vmatpush.bf16.msra.mxu0 %v7156
      %7174 = vmatpush.bf16.msra.mxu0 %v7155
      %7175 = vmatpush.bf16.msra.mxu0 %v7154
      %7176 = vmatpush.bf16.msra.mxu0 %v7153
      %7177 = vmatmul.bf16.gmra.mxu0 %v7119
      %v7178 = vpop.f32.mrf.mxu0
      %v7179 = vadd.f32 0.0, %v7178
      %v7180 = vpop.f32.mrf.mxu0
      %7181 = vdwg.mxu0
      %v7198 = vunpack.c.l.b16 %v7081
      %v7199 = vunpack.c.l.b16 %v7082
      %v7200 = vunpack.c.l.b16 %v7083
      %v7201 = vunpack.c.l.b16 %v7084
      %v7202 = vunpack.c.l.b16 %v7085
      %v7203 = vunpack.c.l.b16 %v7086
      %v7204 = vunpack.c.l.b16 %v7087
      %v7205 = vunpack.c.l.b16 %v7088
      %v7206 = vunpack.c.l.b16 %v7089
      %v7207 = vunpack.c.l.b16 %v7090
      %v7208 = vunpack.c.l.b16 %v7091
      %v7209 = vunpack.c.l.b16 %v7092
      %v7210 = vunpack.c.l.b16 %v7093
      %v7211 = vunpack.c.l.b16 %v7094
      %v7212 = vunpack.c.l.b16 %v7095
      %v7213 = vunpack.c.l.b16 %v7096
      %v7214 = vpack.c.b16 %v7199, %v7198
      %v7215 = vpack.c.b16 %v7201, %v7200
      %v7216 = vpack.c.b16 %v7203, %v7202
      %v7217 = vpack.c.b16 %v7205, %v7204
      %v7218 = vpack.c.b16 %v7207, %v7206
      %v7219 = vpack.c.b16 %v7209, %v7208
      %v7220 = vpack.c.b16 %v7211, %v7210
      %v7221 = vpack.c.b16 %v7213, %v7212
      %7230 = vmatpush.bf16.msra.mxu0 %v7221
      %7231 = vmatpush.bf16.msra.mxu0 %v7220
      %7232 = vmatpush.bf16.msra.mxu0 %v7219
      %7233 = vmatpush.bf16.msra.mxu0 %v7218
      %7234 = vmatpush.bf16.msra.mxu0 %v7217
      %7235 = vmatpush.bf16.msra.mxu0 %v7216
      %7236 = vmatpush.bf16.msra.mxu0 %v7215
      %7237 = vmatpush.bf16.msra.mxu0 %v7214
      %7238 = vmatmul.bf16.gmra.mxu0 %v7080
      %v7239 = vpop.f32.mrf.mxu0
      %v7240 = vadd.f32 %v7179, %v7239
      %v7241 = vpop.f32.mrf.mxu0
      %7242 = vdwg.mxu0
      %v7243 = vld [vmem:[%s4987] sm:$0xf]
      %v7244 = vld [vmem:[%s4987 + $0x4] sm:$0xf]
      %v7245 = vld [vmem:[%s4987 + $0x8] sm:$0xf]
      %v7246 = vld [vmem:[%s4987 + $0xc] sm:$0xf]
      %v7247 = vld [vmem:[%s4987 + $0x10] sm:$0xf]
      %v7248 = vld [vmem:[%s4987 + $0x14] sm:$0xf]
      %v7249 = vld [vmem:[%s4987 + $0x18] sm:$0xf]
      %v7250 = vld [vmem:[%s4987 + $0x1c] sm:$0xf]
      %v7251 = vld [vmem:[%s4987 + $0x20] sm:$0xf]
      %v7252 = vld [vmem:[%s4987 + $0x24] sm:$0xf]
      %v7253 = vld [vmem:[%s4987 + $0x28] sm:$0xf]
      %v7254 = vld [vmem:[%s4987 + $0x2c] sm:$0xf]
      %v7255 = vld [vmem:[%s4987 + $0x30] sm:$0xf]
      %v7256 = vld [vmem:[%s4987 + $0x34] sm:$0xf]
      %v7257 = vld [vmem:[%s4987 + $0x38] sm:$0xf]
      %v7258 = vld [vmem:[%s4987 + $0x3c] sm:$0xf]
      %v7260 = vrot.slane %v7080, 1
      %v7278 = vunpack.c.l.b16 %v7243
      %v7279 = vunpack.c.l.b16 %v7244
      %v7280 = vunpack.c.l.b16 %v7245
      %v7281 = vunpack.c.l.b16 %v7246
      %v7282 = vunpack.c.l.b16 %v7247
      %v7283 = vunpack.c.l.b16 %v7248
      %v7284 = vunpack.c.l.b16 %v7249
      %v7285 = vunpack.c.l.b16 %v7250
      %v7286 = vunpack.c.l.b16 %v7251
      %v7287 = vunpack.c.l.b16 %v7252
      %v7288 = vunpack.c.l.b16 %v7253
      %v7289 = vunpack.c.l.b16 %v7254
      %v7290 = vunpack.c.l.b16 %v7255
      %v7291 = vunpack.c.l.b16 %v7256
      %v7292 = vunpack.c.l.b16 %v7257
      %v7293 = vunpack.c.l.b16 %v7258
      %v7294 = vpack.c.b16 %v7279, %v7278
      %v7295 = vpack.c.b16 %v7281, %v7280
      %v7296 = vpack.c.b16 %v7283, %v7282
      %v7297 = vpack.c.b16 %v7285, %v7284
      %v7298 = vpack.c.b16 %v7287, %v7286
      %v7299 = vpack.c.b16 %v7289, %v7288
      %v7300 = vpack.c.b16 %v7291, %v7290
      %v7301 = vpack.c.b16 %v7293, %v7292
      %7310 = vmatpush.bf16.msra.mxu0 %v7301
      %7311 = vmatpush.bf16.msra.mxu0 %v7300
      %7312 = vmatpush.bf16.msra.mxu0 %v7299
      %7313 = vmatpush.bf16.msra.mxu0 %v7298
      %7314 = vmatpush.bf16.msra.mxu0 %v7297
      %7315 = vmatpush.bf16.msra.mxu0 %v7296
      %7316 = vmatpush.bf16.msra.mxu0 %v7295
      %7317 = vmatpush.bf16.msra.mxu0 %v7294
      %7318 = vmatmul.bf16.gmra.mxu0 %v7260
      %v7319 = vpop.f32.mrf.mxu0
      %v7320 = vadd.f32 0.0, %v7319
      %v7321 = vpop.f32.mrf.mxu0
      %7322 = vdwg.mxu0
      %v7323 = vadd.f32 %v7240, %v7320
      %v7324 = vld [vmem:[%s4818] sm:$0x3f]
      %v7325 = vpack.c.bf16 %v7324, %v7324
      %v7326 = vld [vmem:[%s5071] sm:$0xf]
      %v7327 = vld [vmem:[%s5071 + $0x4] sm:$0xf]
      %v7328 = vld [vmem:[%s5071 + $0x8] sm:$0xf]
      %v7329 = vld [vmem:[%s5071 + $0xc] sm:$0xf]
      %v7330 = vld [vmem:[%s5071 + $0x10] sm:$0xf]
      %v7331 = vld [vmem:[%s5071 + $0x14] sm:$0xf]
      %v7332 = vld [vmem:[%s5071 + $0x18] sm:$0xf]
      %v7333 = vld [vmem:[%s5071 + $0x1c] sm:$0xf]
      %v7334 = vld [vmem:[%s5071 + $0x20] sm:$0xf]
      %v7335 = vld [vmem:[%s5071 + $0x24] sm:$0xf]
      %v7336 = vld [vmem:[%s5071 + $0x28] sm:$0xf]
      %v7337 = vld [vmem:[%s5071 + $0x2c] sm:$0xf]
      %v7338 = vld [vmem:[%s5071 + $0x30] sm:$0xf]
      %v7339 = vld [vmem:[%s5071 + $0x34] sm:$0xf]
      %v7340 = vld [vmem:[%s5071 + $0x38] sm:$0xf]
      %v7341 = vld [vmem:[%s5071 + $0x3c] sm:$0xf]
      %v7358 = vunpack.c.l.b16 %v7326
      %v7359 = vunpack.c.l.b16 %v7327
      %v7360 = vunpack.c.l.b16 %v7328
      %v7361 = vunpack.c.l.b16 %v7329
      %v7362 = vunpack.c.l.b16 %v7330
      %v7363 = vunpack.c.l.b16 %v7331
      %v7364 = vunpack.c.l.b16 %v7332
      %v7365 = vunpack.c.l.b16 %v7333
      %v7366 = vunpack.c.l.b16 %v7334
      %v7367 = vunpack.c.l.b16 %v7335
      %v7368 = vunpack.c.l.b16 %v7336
      %v7369 = vunpack.c.l.b16 %v7337
      %v7370 = vunpack.c.l.b16 %v7338
      %v7371 = vunpack.c.l.b16 %v7339
      %v7372 = vunpack.c.l.b16 %v7340
      %v7373 = vunpack.c.l.b16 %v7341
      %v7374 = vpack.c.b16 %v7359, %v7358
      %v7375 = vpack.c.b16 %v7361, %v7360
      %v7376 = vpack.c.b16 %v7363, %v7362
      %v7377 = vpack.c.b16 %v7365, %v7364
      %v7378 = vpack.c.b16 %v7367, %v7366
      %v7379 = vpack.c.b16 %v7369, %v7368
      %v7380 = vpack.c.b16 %v7371, %v7370
      %v7381 = vpack.c.b16 %v7373, %v7372
      %7390 = vmatpush.bf16.msra.mxu0 %v7381
      %7391 = vmatpush.bf16.msra.mxu0 %v7380
      %7392 = vmatpush.bf16.msra.mxu0 %v7379
      %7393 = vmatpush.bf16.msra.mxu0 %v7378
      %7394 = vmatpush.bf16.msra.mxu0 %v7377
      %7395 = vmatpush.bf16.msra.mxu0 %v7376
      %7396 = vmatpush.bf16.msra.mxu0 %v7375
      %7397 = vmatpush.bf16.msra.mxu0 %v7374
      %7398 = vmatmul.bf16.gmra.mxu0 %v7325
      %v7399 = vpop.f32.mrf.mxu0
      %v7400 = vadd.f32 0.0, %v7399
      %v7401 = vpop.f32.mrf.mxu0
      %7402 = vdwg.mxu0
      %v7403 = vadd.f32 %v7323, %v7400
      %v7404 = vld [vmem:[%s5150] sm:$0xf]
      %v7405 = vld [vmem:[%s5150 + $0x4] sm:$0xf]
      %v7406 = vld [vmem:[%s5150 + $0x8] sm:$0xf]
      %v7407 = vld [vmem:[%s5150 + $0xc] sm:$0xf]
      %v7408 = vld [vmem:[%s5150 + $0x10] sm:$0xf]
      %v7409 = vld [vmem:[%s5150 + $0x14] sm:$0xf]
      %v7410 = vld [vmem:[%s5150 + $0x18] sm:$0xf]
      %v7411 = vld [vmem:[%s5150 + $0x1c] sm:$0xf]
      %v7412 = vld [vmem:[%s5150 + $0x20] sm:$0xf]
      %v7413 = vld [vmem:[%s5150 + $0x24] sm:$0xf]
      %v7414 = vld [vmem:[%s5150 + $0x28] sm:$0xf]
      %v7415 = vld [vmem:[%s5150 + $0x2c] sm:$0xf]
      %v7416 = vld [vmem:[%s5150 + $0x30] sm:$0xf]
      %v7417 = vld [vmem:[%s5150 + $0x34] sm:$0xf]
      %v7418 = vld [vmem:[%s5150 + $0x38] sm:$0xf]
      %v7419 = vld [vmem:[%s5150 + $0x3c] sm:$0xf]
      %v7421 = vshrl.u32 %v7325, 16
      %v7423 = vshll.u32 %v7325, 16
      %v7425 = vrot.slane %v7423, 1
      %v7426 = vor.u32 %v7421, %v7425
      %v7444 = vunpack.c.l.b16 %v7404
      %v7445 = vunpack.c.l.b16 %v7405
      %v7446 = vunpack.c.l.b16 %v7406
      %v7447 = vunpack.c.l.b16 %v7407
      %v7448 = vunpack.c.l.b16 %v7408
      %v7449 = vunpack.c.l.b16 %v7409
      %v7450 = vunpack.c.l.b16 %v7410
      %v7451 = vunpack.c.l.b16 %v7411
      %v7452 = vunpack.c.l.b16 %v7412
      %v7453 = vunpack.c.l.b16 %v7413
      %v7454 = vunpack.c.l.b16 %v7414
      %v7455 = vunpack.c.l.b16 %v7415
      %v7456 = vunpack.c.l.b16 %v7416
      %v7457 = vunpack.c.l.b16 %v7417
      %v7458 = vunpack.c.l.b16 %v7418
      %v7459 = vunpack.c.l.b16 %v7419
      %v7460 = vpack.c.b16 %v7445, %v7444
      %v7461 = vpack.c.b16 %v7447, %v7446
      %v7462 = vpack.c.b16 %v7449, %v7448
      %v7463 = vpack.c.b16 %v7451, %v7450
      %v7464 = vpack.c.b16 %v7453, %v7452
      %v7465 = vpack.c.b16 %v7455, %v7454
      %v7466 = vpack.c.b16 %v7457, %v7456
      %v7467 = vpack.c.b16 %v7459, %v7458
      %7476 = vmatpush.bf16.msra.mxu0 %v7467
      %7477 = vmatpush.bf16.msra.mxu0 %v7466
      %7478 = vmatpush.bf16.msra.mxu0 %v7465
      %7479 = vmatpush.bf16.msra.mxu0 %v7464
      %7480 = vmatpush.bf16.msra.mxu0 %v7463
      %7481 = vmatpush.bf16.msra.mxu0 %v7462
      %7482 = vmatpush.bf16.msra.mxu0 %v7461
      %7483 = vmatpush.bf16.msra.mxu0 %v7460
      %7484 = vmatmul.bf16.gmra.mxu0 %v7426
      %v7485 = vpop.f32.mrf.mxu0
      %v7486 = vadd.f32 0.0, %v7485
      %v7487 = vpop.f32.mrf.mxu0
      %7488 = vdwg.mxu0
      %v7489 = vadd.f32 %v7403, %v7486
      %v7490 = vld [vmem:[%s5237] sm:$0xf]
      %v7491 = vld [vmem:[%s5237 + $0x4] sm:$0xf]
      %v7492 = vld [vmem:[%s5237 + $0x8] sm:$0xf]
      %v7493 = vld [vmem:[%s5237 + $0xc] sm:$0xf]
      %v7494 = vld [vmem:[%s5237 + $0x10] sm:$0xf]
      %v7495 = vld [vmem:[%s5237 + $0x14] sm:$0xf]
      %v7496 = vld [vmem:[%s5237 + $0x18] sm:$0xf]
      %v7497 = vld [vmem:[%s5237 + $0x1c] sm:$0xf]
      %v7498 = vld [vmem:[%s5237 + $0x20] sm:$0xf]
      %v7499 = vld [vmem:[%s5237 + $0x24] sm:$0xf]
      %v7500 = vld [vmem:[%s5237 + $0x28] sm:$0xf]
      %v7501 = vld [vmem:[%s5237 + $0x2c] sm:$0xf]
      %v7502 = vld [vmem:[%s5237 + $0x30] sm:$0xf]
      %v7503 = vld [vmem:[%s5237 + $0x34] sm:$0xf]
      %v7504 = vld [vmem:[%s5237 + $0x38] sm:$0xf]
      %v7505 = vld [vmem:[%s5237 + $0x3c] sm:$0xf]
      %v7507 = vrot.slane %v7325, 1
      %v7525 = vunpack.c.l.b16 %v7490
      %v7526 = vunpack.c.l.b16 %v7491
      %v7527 = vunpack.c.l.b16 %v7492
      %v7528 = vunpack.c.l.b16 %v7493
      %v7529 = vunpack.c.l.b16 %v7494
      %v7530 = vunpack.c.l.b16 %v7495
      %v7531 = vunpack.c.l.b16 %v7496
      %v7532 = vunpack.c.l.b16 %v7497
      %v7533 = vunpack.c.l.b16 %v7498
      %v7534 = vunpack.c.l.b16 %v7499
      %v7535 = vunpack.c.l.b16 %v7500
      %v7536 = vunpack.c.l.b16 %v7501
      %v7537 = vunpack.c.l.b16 %v7502
      %v7538 = vunpack.c.l.b16 %v7503
      %v7539 = vunpack.c.l.b16 %v7504
      %v7540 = vunpack.c.l.b16 %v7505
      %v7541 = vpack.c.b16 %v7526, %v7525
      %v7542 = vpack.c.b16 %v7528, %v7527
      %v7543 = vpack.c.b16 %v7530, %v7529
      %v7544 = vpack.c.b16 %v7532, %v7531
      %v7545 = vpack.c.b16 %v7534, %v7533
      %v7546 = vpack.c.b16 %v7536, %v7535
      %v7547 = vpack.c.b16 %v7538, %v7537
      %v7548 = vpack.c.b16 %v7540, %v7539
      %7557 = vmatpush.bf16.msra.mxu0 %v7548
      %7558 = vmatpush.bf16.msra.mxu0 %v7547
      %7559 = vmatpush.bf16.msra.mxu0 %v7546
      %7560 = vmatpush.bf16.msra.mxu0 %v7545
      %7561 = vmatpush.bf16.msra.mxu0 %v7544
      %7562 = vmatpush.bf16.msra.mxu0 %v7543
      %7563 = vmatpush.bf16.msra.mxu0 %v7542
      %7564 = vmatpush.bf16.msra.mxu0 %v7541
      %7565 = vmatmul.bf16.gmra.mxu0 %v7507
      %v7566 = vpop.f32.mrf.mxu0
      %v7567 = vadd.f32 0.0, %v7566
      %v7568 = vpop.f32.mrf.mxu0
      %7569 = vdwg.mxu0
      %v7570 = vadd.f32 %v7489, %v7567
      %s7571 = scalar_lea.vmem [#allocation2], 40
      %v7572 = vld [vmem:[%s7571] sm:$0x3f]
      %v7573 = vpack.c.bf16 %v7572, %v7572
      %v7574 = vld [vmem:[%s5321] sm:$0xf]
      %v7575 = vld [vmem:[%s5321 + $0x4] sm:$0xf]
      %v7576 = vld [vmem:[%s5321 + $0x8] sm:$0xf]
      %v7577 = vld [vmem:[%s5321 + $0xc] sm:$0xf]
      %v7578 = vld [vmem:[%s5321 + $0x10] sm:$0xf]
      %v7579 = vld [vmem:[%s5321 + $0x14] sm:$0xf]
      %v7580 = vld [vmem:[%s5321 + $0x18] sm:$0xf]
      %v7581 = vld [vmem:[%s5321 + $0x1c] sm:$0xf]
      %v7582 = vld [vmem:[%s5321 + $0x20] sm:$0xf]
      %v7583 = vld [vmem:[%s5321 + $0x24] sm:$0xf]
      %v7584 = vld [vmem:[%s5321 + $0x28] sm:$0xf]
      %v7585 = vld [vmem:[%s5321 + $0x2c] sm:$0xf]
      %v7586 = vld [vmem:[%s5321 + $0x30] sm:$0xf]
      %v7587 = vld [vmem:[%s5321 + $0x34] sm:$0xf]
      %v7588 = vld [vmem:[%s5321 + $0x38] sm:$0xf]
      %v7589 = vld [vmem:[%s5321 + $0x3c] sm:$0xf]
      %v7606 = vunpack.c.l.b16 %v7574
      %v7607 = vunpack.c.l.b16 %v7575
      %v7608 = vunpack.c.l.b16 %v7576
      %v7609 = vunpack.c.l.b16 %v7577
      %v7610 = vunpack.c.l.b16 %v7578
      %v7611 = vunpack.c.l.b16 %v7579
      %v7612 = vunpack.c.l.b16 %v7580
      %v7613 = vunpack.c.l.b16 %v7581
      %v7614 = vunpack.c.l.b16 %v7582
      %v7615 = vunpack.c.l.b16 %v7583
      %v7616 = vunpack.c.l.b16 %v7584
      %v7617 = vunpack.c.l.b16 %v7585
      %v7618 = vunpack.c.l.b16 %v7586
      %v7619 = vunpack.c.l.b16 %v7587
      %v7620 = vunpack.c.l.b16 %v7588
      %v7621 = vunpack.c.l.b16 %v7589
      %v7622 = vpack.c.b16 %v7607, %v7606
      %v7623 = vpack.c.b16 %v7609, %v7608
      %v7624 = vpack.c.b16 %v7611, %v7610
      %v7625 = vpack.c.b16 %v7613, %v7612
      %v7626 = vpack.c.b16 %v7615, %v7614
      %v7627 = vpack.c.b16 %v7617, %v7616
      %v7628 = vpack.c.b16 %v7619, %v7618
      %v7629 = vpack.c.b16 %v7621, %v7620
      %7638 = vmatpush.bf16.msra.mxu0 %v7629
      %7639 = vmatpush.bf16.msra.mxu0 %v7628
      %7640 = vmatpush.bf16.msra.mxu0 %v7627
      %7641 = vmatpush.bf16.msra.mxu0 %v7626
      %7642 = vmatpush.bf16.msra.mxu0 %v7625
      %7643 = vmatpush.bf16.msra.mxu0 %v7624
      %7644 = vmatpush.bf16.msra.mxu0 %v7623
      %7645 = vmatpush.bf16.msra.mxu0 %v7622
      %7646 = vmatmul.bf16.gmra.mxu0 %v7573
      %v7647 = vpop.f32.mrf.mxu0
      %v7648 = vadd.f32 0.0, %v7647
      %v7649 = vpop.f32.mrf.mxu0
      %7650 = vdwg.mxu0
      %v7651 = vadd.f32 %v7570, %v7648
      %v7652 = vld [vmem:[%s5400] sm:$0xf]
      %v7653 = vld [vmem:[%s5400 + $0x4] sm:$0xf]
      %v7654 = vld [vmem:[%s5400 + $0x8] sm:$0xf]
      %v7655 = vld [vmem:[%s5400 + $0xc] sm:$0xf]
      %v7656 = vld [vmem:[%s5400 + $0x10] sm:$0xf]
      %v7657 = vld [vmem:[%s5400 + $0x14] sm:$0xf]
      %v7658 = vld [vmem:[%s5400 + $0x18] sm:$0xf]
      %v7659 = vld [vmem:[%s5400 + $0x1c] sm:$0xf]
      %v7660 = vld [vmem:[%s5400 + $0x20] sm:$0xf]
      %v7661 = vld [vmem:[%s5400 + $0x24] sm:$0xf]
      %v7662 = vld [vmem:[%s5400 + $0x28] sm:$0xf]
      %v7663 = vld [vmem:[%s5400 + $0x2c] sm:$0xf]
      %v7664 = vld [vmem:[%s5400 + $0x30] sm:$0xf]
      %v7665 = vld [vmem:[%s5400 + $0x34] sm:$0xf]
      %v7666 = vld [vmem:[%s5400 + $0x38] sm:$0xf]
      %v7667 = vld [vmem:[%s5400 + $0x3c] sm:$0xf]
      %v7669 = vshrl.u32 %v7573, 16
      %v7671 = vshll.u32 %v7573, 16
      %v7673 = vrot.slane %v7671, 1
      %v7674 = vor.u32 %v7669, %v7673
      %v7692 = vunpack.c.l.b16 %v7652
      %v7693 = vunpack.c.l.b16 %v7653
      %v7694 = vunpack.c.l.b16 %v7654
      %v7695 = vunpack.c.l.b16 %v7655
      %v7696 = vunpack.c.l.b16 %v7656
      %v7697 = vunpack.c.l.b16 %v7657
      %v7698 = vunpack.c.l.b16 %v7658
      %v7699 = vunpack.c.l.b16 %v7659
      %v7700 = vunpack.c.l.b16 %v7660
      %v7701 = vunpack.c.l.b16 %v7661
      %v7702 = vunpack.c.l.b16 %v7662
      %v7703 = vunpack.c.l.b16 %v7663
      %v7704 = vunpack.c.l.b16 %v7664
      %v7705 = vunpack.c.l.b16 %v7665
      %v7706 = vunpack.c.l.b16 %v7666
      %v7707 = vunpack.c.l.b16 %v7667
      %v7708 = vpack.c.b16 %v7693, %v7692
      %v7709 = vpack.c.b16 %v7695, %v7694
      %v7710 = vpack.c.b16 %v7697, %v7696
      %v7711 = vpack.c.b16 %v7699, %v7698
      %v7712 = vpack.c.b16 %v7701, %v7700
      %v7713 = vpack.c.b16 %v7703, %v7702
      %v7714 = vpack.c.b16 %v7705, %v7704
      %v7715 = vpack.c.b16 %v7707, %v7706
      %7724 = vmatpush.bf16.msra.mxu0 %v7715
      %7725 = vmatpush.bf16.msra.mxu0 %v7714
      %7726 = vmatpush.bf16.msra.mxu0 %v7713
      %7727 = vmatpush.bf16.msra.mxu0 %v7712
      %7728 = vmatpush.bf16.msra.mxu0 %v7711
      %7729 = vmatpush.bf16.msra.mxu0 %v7710
      %7730 = vmatpush.bf16.msra.mxu0 %v7709
      %7731 = vmatpush.bf16.msra.mxu0 %v7708
      %7732 = vmatmul.bf16.gmra.mxu0 %v7674
      %v7733 = vpop.f32.mrf.mxu0
      %v7734 = vadd.f32 0.0, %v7733
      %v7735 = vpop.f32.mrf.mxu0
      %7736 = vdwg.mxu0
      %v7737 = vadd.f32 %v7651, %v7734
      %v7738 = vld [vmem:[%s5487] sm:$0xf]
      %v7739 = vld [vmem:[%s5487 + $0x4] sm:$0xf]
      %v7740 = vld [vmem:[%s5487 + $0x8] sm:$0xf]
      %v7741 = vld [vmem:[%s5487 + $0xc] sm:$0xf]
      %v7742 = vld [vmem:[%s5487 + $0x10] sm:$0xf]
      %v7743 = vld [vmem:[%s5487 + $0x14] sm:$0xf]
      %v7744 = vld [vmem:[%s5487 + $0x18] sm:$0xf]
      %v7745 = vld [vmem:[%s5487 + $0x1c] sm:$0xf]
      %v7746 = vld [vmem:[%s5487 + $0x20] sm:$0xf]
      %v7747 = vld [vmem:[%s5487 + $0x24] sm:$0xf]
      %v7748 = vld [vmem:[%s5487 + $0x28] sm:$0xf]
      %v7749 = vld [vmem:[%s5487 + $0x2c] sm:$0xf]
      %v7750 = vld [vmem:[%s5487 + $0x30] sm:$0xf]
      %v7751 = vld [vmem:[%s5487 + $0x34] sm:$0xf]
      %v7752 = vld [vmem:[%s5487 + $0x38] sm:$0xf]
      %v7753 = vld [vmem:[%s5487 + $0x3c] sm:$0xf]
      %v7755 = vrot.slane %v7573, 1
      %v7773 = vunpack.c.l.b16 %v7738
      %v7774 = vunpack.c.l.b16 %v7739
      %v7775 = vunpack.c.l.b16 %v7740
      %v7776 = vunpack.c.l.b16 %v7741
      %v7777 = vunpack.c.l.b16 %v7742
      %v7778 = vunpack.c.l.b16 %v7743
      %v7779 = vunpack.c.l.b16 %v7744
      %v7780 = vunpack.c.l.b16 %v7745
      %v7781 = vunpack.c.l.b16 %v7746
      %v7782 = vunpack.c.l.b16 %v7747
      %v7783 = vunpack.c.l.b16 %v7748
      %v7784 = vunpack.c.l.b16 %v7749
      %v7785 = vunpack.c.l.b16 %v7750
      %v7786 = vunpack.c.l.b16 %v7751
      %v7787 = vunpack.c.l.b16 %v7752
      %v7788 = vunpack.c.l.b16 %v7753
      %v7789 = vpack.c.b16 %v7774, %v7773
      %v7790 = vpack.c.b16 %v7776, %v7775
      %v7791 = vpack.c.b16 %v7778, %v7777
      %v7792 = vpack.c.b16 %v7780, %v7779
      %v7793 = vpack.c.b16 %v7782, %v7781
      %v7794 = vpack.c.b16 %v7784, %v7783
      %v7795 = vpack.c.b16 %v7786, %v7785
      %v7796 = vpack.c.b16 %v7788, %v7787
      %7805 = vmatpush.bf16.msra.mxu0 %v7796
      %7806 = vmatpush.bf16.msra.mxu0 %v7795
      %7807 = vmatpush.bf16.msra.mxu0 %v7794
      %7808 = vmatpush.bf16.msra.mxu0 %v7793
      %7809 = vmatpush.bf16.msra.mxu0 %v7792
      %7810 = vmatpush.bf16.msra.mxu0 %v7791
      %7811 = vmatpush.bf16.msra.mxu0 %v7790
      %7812 = vmatpush.bf16.msra.mxu0 %v7789
      %7813 = vmatmul.bf16.gmra.mxu0 %v7755
      %v7814 = vpop.f32.mrf.mxu0
      %v7815 = vadd.f32 0.0, %v7814
      %v7816 = vpop.f32.mrf.mxu0
      %7817 = vdwg.mxu0
      %v7818 = vadd.f32 %v7737, %v7815
      %v7819 = vld [vmem:[%s4] sm:$0x1]
      %v7821 = vperm.slane %v7819, 0
      %v7823 = vadd.f32 %v7818, %v7821
      %v7824 = vld [vmem:[%s4820] sm:$0xf]
      %v7825 = vadd.f32 %v7823, %v7824
      %v7826 = vmax.f32 %v7825, 0.0
      %v7827 = vpack.c.bf16 %v7826, %v7826
      %s7828 = scalar_lea.vmem %s224, 6
      %7829 = vst [vmem:[%s7828] sm:$0x3] %v7827
      %p7830 = scmp.lt.s32.totalorder %s16, 1
      %s7831 = scalar_select %p7830, %s16, 1
      %s7832 = smul.addr %s7831, 4
      %s7833 = smul.addr %s7832, 2
      %s7834 = scalar_lea.vmem %s5, %s7833
      // Predicated region
      $region41: #{enricher_forward.4} parent=39 // pred_check
        %p7835 = pneg %p144
      $region42: #{enricher_forward.4} parent=39 // pred_check_branch
        %7837 = sbr.rel (%p7835) target = $region44
      $region43: #{enricher_forward.4} parent=39 // pred_region
        _
      $region44: #{enricher_forward.4} parent=39 // pred_fallthru
        _
    $region40: #{enricher_forward.4} parent=5 // pred_fallthru
      _
    %p7838 = scmp.le.s32.totalorder 2, %s11
    // Predicated region
    $region45: #{enricher_forward.4} parent=5 // pred_check
      %p7839 = pneg %p7838
    $region46: #{enricher_forward.4} parent=5 // pred_check_branch
      %7841 = sbr.rel (%p7839) target = $region48
    $region47: #{enricher_forward.4} parent=5 // pred_region
      %s7842 = ssub.s32 %s11, 2
      // Predicated region
      $region49: #{enricher_forward.4} parent=47 // pred_check
        %p7843 = pneg %p150
      $region50: #{enricher_forward.4} parent=47 // pred_check_branch
        %7845 = sbr.rel (%p7843) target = $region52
      $region51: #{enricher_forward.4} parent=47 // pred_region
        %p7846 = scmp.lt.s32.totalorder %s17, 1
        %s7847 = scalar_select %p7846, %s17, 1
        %s7848 = smul.addr %s7847, 4
        %s7849 = smul.addr %s7848, 2
        %s7850 = scalar_lea.vmem %s5, %s7849
      $region52: #{enricher_forward.4} parent=47 // pred_fallthru
        _
    $region48: #{enricher_forward.4} parent=5 // pred_fallthru
      _
  $region6: #{enricher_forward.4} parent=0 // loop_footer
    %s15 = sadd.s32 1, %s11
  $region7: #{enricher_forward.4} parent=0 // loop_footer_branch
    %10 = sbr.rel target = $region3
  $region8: #{enricher_forward.4} parent=0 // loop_exit
    _

</llo_original>
